<compile_context>
chip_gen: v6e
topology: v6e:2x2x1
jax: 0.10.0
libtpu: 0.0.40
codegen_flags: <defaults>
</compile_context>

<pallas_src>
import numpy as np
import jax
import jax.numpy as jnp
from jax.experimental import pallas as pl
from jax.experimental.pallas import tpu as pltpu

MAX_DEGREE = 127                    # module default
INPUT_DIM = 2                       # module default
NUM_POLY = MAX_DEGREE + 1           # 128 polynomial degrees (P_0 .. P_127)
OUT_DIM = NUM_POLY * INPUT_DIM      # 256

LANES = 128                         # lane width
SUB = 8                             # sublanes per f32 vreg
GROUP = SUB * LANES                 # 1024 points per compute group (1 vreg / op)
MAX_GROUPS_PER_TILE = 8             # up to 8192 points / grid step (8 MiB out block)

# Folded Bonnet-recurrence constants:  P_{n+1} = a_n * x * P_n - b_n * P_{n-1}
_A = [np.float32((2.0 * n + 1.0) / (n + 1.0)) for n in range(MAX_DEGREE)]
_B = [np.float32(n / (n + 1.0)) for n in range(MAX_DEGREE)]


def _make_kernel(n_groups):
    """Kernel for a tile of n_groups * 1024 points."""

    def kernel(x_ref, o_ref, scratch_ref):
        # x_ref:       (INPUT_DIM, n_groups*8, 128)  coords in [0,1]; point = row*128 + lane
        # o_ref:       (n_groups*1024, OUT_DIM)      out[p, i*128 + n] = P_n(2*x_i(p) - 1)
        # scratch_ref: (OUT_DIM*8, 128)              degree-major staging (full-vreg stores)

        @pl.loop(0, n_groups)
        def _(g):
            g_sub = pl.multiple_of(g * SUB, SUB)

            # ---- Bonnet recurrence on full (8,128) vregs, degree-major staging ----
            for i in range(INPUT_DIM):
                xi = 2.0 * x_ref[i, pl.ds(g_sub, SUB), :] - 1.0      # (8,128), [-1,1]
                base = i * NUM_POLY * SUB
                p_prev = jnp.ones_like(xi)                           # P_0
                p_curr = xi                                          # P_1
                scratch_ref[base:base + SUB, :] = p_prev
                scratch_ref[base + SUB:base + 2 * SUB, :] = p_curr
                for n in range(1, MAX_DEGREE):                       # static unroll
                    p_next = _A[n] * xi * p_curr - _B[n] * p_prev
                    row = base + (n + 1) * SUB
                    scratch_ref[row:row + SUB, :] = p_next
                    p_prev, p_curr = p_curr, p_next

            # ---- epilogue: (degree, point) -> (point, degree), lane-dense stores ----
            for i in range(INPUT_DIM):
                for s in range(SUB):
                    # gather sublane s of every degree: scratch rows n*8 + s, n = 0..127
                    mat = scratch_ref[
                        pl.ds(i * NUM_POLY * SUB + s, NUM_POLY, stride=SUB), :]
                    row0 = pl.multiple_of((g_sub + s) * LANES, LANES)
                    # TODO(synk): optional `activation` (None by default in the module)
                    # would be applied elementwise to `mat.T` right here if required.
                    o_ref[pl.ds(row0, LANES), pl.ds(i * NUM_POLY, NUM_POLY)] = mat.T

    return kernel


def legendre_projection(x, *, max_groups_per_tile=MAX_GROUPS_PER_TILE):
    """x: [..., INPUT_DIM] float in [0,1]  ->  [..., OUT_DIM] (PyTorch layout)."""
    assert x.shape[-1] == INPUT_DIM
    lead = x.shape[:-1]
    n = int(np.prod(lead)) if lead else 1

    n_groups = max(1, min(int(max_groups_per_tile), -(-n // GROUP)))
    tile = n_groups * GROUP
    s_tile = tile // LANES
    n_pad = ((n + tile - 1) // tile) * tile

    xf = x.reshape(n, INPUT_DIM).astype(jnp.float32)
    if n_pad != n:
        xf = jnp.pad(xf, ((0, n_pad - n), (0, 0)))     # padded rows sliced off below
    # Tiny layout glue on the 8-byte/point input: (n,2) -> (2, n/128, 128).
    x_in = xf.T.reshape(INPUT_DIM, n_pad // LANES, LANES)

    out = pl.pallas_call(
        _make_kernel(n_groups),
        out_shape=jax.ShapeDtypeStruct((n_pad, OUT_DIM), jnp.float32),
        grid_spec=pltpu.PrefetchScalarGridSpec(
            num_scalar_prefetch=0,
            grid=(n_pad // tile,),
            in_specs=[pl.BlockSpec((INPUT_DIM, s_tile, LANES), lambda j: (0, j, 0))],
            out_specs=pl.BlockSpec((tile, OUT_DIM), lambda j: (j, 0)),
            scratch_shapes=[pltpu.VMEM((OUT_DIM * SUB, LANES), jnp.float32)],
        ),
        compiler_params=pltpu.CompilerParams(
            dimension_semantics=("parallel",),
            vmem_limit_bytes=32 * 1024 * 1024,
        ),
        cost_estimate=pl.CostEstimate(
            flops=int(n_pad) * INPUT_DIM * (4 * (MAX_DEGREE - 1) + 2),
            transcendentals=0,
            bytes_accessed=int(n_pad) * 4 * (OUT_DIM + INPUT_DIM),
        ),
    )(x_in)

    return out[:n].reshape(*lead, OUT_DIM)


def legendre_ref(x):
    """Pure-JAX mirror of the PyTorch forward (same op order, with the divide)."""
    xs = 2.0 * x - 1.0
    feats = []
    for i in range(INPUT_DIM):
        xi = xs[..., i]
        results = [jnp.ones_like(xi), xi]
        for n in range(1, MAX_DEGREE):
            results.append(((2 * n + 1) * xi * results[n] - n * results[n - 1]) / (n + 1))
        feats.append(jnp.stack(results, axis=-1))
    return jnp.concatenate(feats, axis=-1)


if __name__ == "__main__":
    # Registered buffer of the module (identity); not used by forward.
    coefficients = jnp.eye(MAX_DEGREE + 1, dtype=jnp.float32)

    key0, key1, key2 = jax.random.split(jax.random.PRNGKey(0), 3)

    # Primary case: 4096 points -> one 4-group tile, no padding.
    x = jax.random.uniform(key0, (4, 32, 32, INPUT_DIM), dtype=jnp.float32)
    out = jax.block_until_ready(legendre_projection(x))
    assert out.shape == (4, 32, 32, OUT_DIM), out.shape
    np.testing.assert_allclose(np.asarray(out), np.asarray(legendre_ref(x)),
                               rtol=2e-4, atol=2e-4)

    # Ragged case: 105 points, exercises padding + tail slice (single group).
    x2 = jax.random.uniform(key1, (3, 5, 7, INPUT_DIM), dtype=jnp.float32)
    out2 = jax.block_until_ready(legendre_projection(x2))
    assert out2.shape == (3, 5, 7, OUT_DIM), out2.shape
    np.testing.assert_allclose(np.asarray(out2), np.asarray(legendre_ref(x2)),
                               rtol=2e-4, atol=2e-4)

    # Multi-grid-step case: 4096 points with 2-group tiles -> grid of 2.
    x3 = jax.random.uniform(key2, (4096, INPUT_DIM), dtype=jnp.float32)
    out3 = jax.block_until_ready(legendre_projection(x3, max_groups_per_tile=2))
    assert out3.shape == (4096, OUT_DIM), out3.shape
    np.testing.assert_allclose(np.asarray(out3), np.asarray(legendre_ref(x3)),
                               rtol=2e-4, atol=2e-4)

    print("KERNEL_OK")
</pallas_src>

<mosaic_0001>
module attributes {stable_mosaic.version = 11 : i64} {
  func.func @kernel(%arg0: i32, %arg1: memref<2x32x128xf32, #tpu.memory_space<vmem>>, %arg2: memref<4096x256xf32, #tpu.memory_space<vmem>>, %arg3: memref<2048x128xf32, #tpu.memory_space<vmem>>) attributes {dimension_semantics = [#tpu.dimension_semantics<parallel>], iteration_bounds = array<i64: 1>, scalar_prefetch = 0 : i64, scratch_operands = 1 : i64, tpu.core_type = #tpu.core_type<tc>, window_params = [{transform_indices = @transform_0, window_bounds = array<i64: 2, 32, 128>}, {transform_indices = @transform_1, window_bounds = array<i64: 4096, 256>}]} {
    %c0_i32 = arith.constant 0 : i32
    %c4_i32 = arith.constant 4 : i32
    %0 = arith.addi %c0_i32, %c4_i32 : i32
    %c1_i32 = arith.constant 1 : i32
    scf.for %arg4 = %c0_i32 to %0 step %c1_i32  : i32 {
      %c1_i32_1 = arith.constant 1 : i32
      %1 = arith.muli %arg4, %c1_i32_1 : i32
      %c0_i32_2 = arith.constant 0 : i32
      %2 = arith.addi %c0_i32_2, %1 : i32
      %c8_i32 = arith.constant 8 : i32
      %3 = arith.muli %2, %c8_i32 : i32
      %4 = tpu.assume_multiple %3, 8 : i32
      %c0 = arith.constant 0 : index
      %5 = arith.index_cast %4 : i32 to index
      %c0_3 = arith.constant 0 : index
      %6 = vector.load %arg1[%c0, %5, %c0_3] : memref<2x32x128xf32, #tpu.memory_space<vmem>>, vector<1x8x128xf32>
      %7 = vector.shape_cast %6 : vector<1x8x128xf32> to vector<8x128xf32>
      %cst = arith.constant 2.000000e+00 : f32
      %8 = vector.broadcast %cst : f32 to vector<8x128xf32>
      %9 = arith.mulf %8, %7 : vector<8x128xf32>
      %cst_4 = arith.constant 1.000000e+00 : f32
      %10 = vector.broadcast %cst_4 : f32 to vector<8x128xf32>
      %11 = arith.subf %9, %10 : vector<8x128xf32>
      %cst_5 = arith.constant 1.000000e+00 : f32
      %12 = vector.broadcast %cst_5 : f32 to vector<8x128xf32>
      %c0_6 = arith.constant 0 : index
      %c0_7 = arith.constant 0 : index
      %13 = vector.load %arg3[%c0_6, %c0_7] : memref<2048x128xf32, #tpu.memory_space<vmem>>, vector<8x128xf32>
      tpu.vector_store %arg3[%c0_6, %c0_7], %12 {strides = array<i32>} : memref<2048x128xf32, #tpu.memory_space<vmem>>, vector<8x128xf32>,
      %c8 = arith.constant 8 : index
      %c0_8 = arith.constant 0 : index
      %14 = vector.load %arg3[%c8, %c0_8] : memref<2048x128xf32, #tpu.memory_space<vmem>>, vector<8x128xf32>
      tpu.vector_store %arg3[%c8, %c0_8], %11 {strides = array<i32>} : memref<2048x128xf32, #tpu.memory_space<vmem>>, vector<8x128xf32>,
      %cst_9 = arith.constant 1.500000e+00 : f32
      %15 = vector.broadcast %cst_9 : f32 to vector<8x128xf32>
      %16 = arith.mulf %15, %11 : vector<8x128xf32>
      %17 = arith.mulf %16, %11 : vector<8x128xf32>
      %cst_10 = arith.constant 5.000000e-01 : f32
      %18 = vector.broadcast %cst_10 : f32 to vector<8x128xf32>
      %19 = arith.mulf %18, %12 : vector<8x128xf32>
      %20 = arith.subf %17, %19 : vector<8x128xf32>
      %c16 = arith.constant 16 : index
      %c0_11 = arith.constant 0 : index
      %21 = vector.load %arg3[%c16, %c0_11] : memref<2048x128xf32, #tpu.memory_space<vmem>>, vector<8x128xf32>
      tpu.vector_store %arg3[%c16, %c0_11], %20 {strides = array<i32>} : memref<2048x128xf32, #tpu.memory_space<vmem>>, vector<8x128xf32>,
      %cst_12 = arith.constant 1.66666663 : f32
      %22 = vector.broadcast %cst_12 : f32 to vector<8x128xf32>
      %23 = arith.mulf %22, %11 : vector<8x128xf32>
      %24 = arith.mulf %23, %20 : vector<8x128xf32>
      %cst_13 = arith.constant 0.666666686 : f32
      %25 = vector.broadcast %cst_13 : f32 to vector<8x128xf32>
      %26 = arith.mulf %25, %11 : vector<8x128xf32>
      %27 = arith.subf %24, %26 : vector<8x128xf32>
      %c24 = arith.constant 24 : index
      %c0_14 = arith.constant 0 : index
      %28 = vector.load %arg3[%c24, %c0_14] : memref<2048x128xf32, #tpu.memory_space<vmem>>, vector<8x128xf32>
      tpu.vector_store %arg3[%c24, %c0_14], %27 {strides = array<i32>} : memref<2048x128xf32, #tpu.memory_space<vmem>>, vector<8x128xf32>,
      %cst_15 = arith.constant 1.750000e+00 : f32
      %29 = vector.broadcast %cst_15 : f32 to vector<8x128xf32>
      %30 = arith.mulf %29, %11 : vector<8x128xf32>
      %31 = arith.mulf %30, %27 : vector<8x128xf32>
      %cst_16 = arith.constant 7.500000e-01 : f32
      %32 = vector.broadcast %cst_16 : f32 to vector<8x128xf32>
      %33 = arith.mulf %32, %20 : vector<8x128xf32>
      %34 = arith.subf %31, %33 : vector<8x128xf32>
      %c32 = arith.constant 32 : index
      %c0_17 = arith.constant 0 : index
      %35 = vector.load %arg3[%c32, %c0_17] : memref<2048x128xf32, #tpu.memory_space<vmem>>, vector<8x128xf32>
      tpu.vector_store %arg3[%c32, %c0_17], %34 {strides = array<i32>} : memref<2048x128xf32, #tpu.memory_space<vmem>>, vector<8x128xf32>,
      %cst_18 = arith.constant 1.800000e+00 : f32
      %36 = vector.broadcast %cst_18 : f32 to vector<8x128xf32>
      %37 = arith.mulf %36, %11 : vector<8x128xf32>
      %38 = arith.mulf %37, %34 : vector<8x128xf32>
      %cst_19 = arith.constant 8.000000e-01 : f32
      %39 = vector.broadcast %cst_19 : f32 to vector<8x128xf32>
      %40 = arith.mulf %39, %27 : vector<8x128xf32>
      %41 = arith.subf %38, %40 : vector<8x128xf32>
      %c40 = arith.constant 40 : index
      %c0_20 = arith.constant 0 : index
      %42 = vector.load %arg3[%c40, %c0_20] : memref<2048x128xf32, #tpu.memory_space<vmem>>, vector<8x128xf32>
      tpu.vector_store %arg3[%c40, %c0_20], %41 {strides = array<i32>} : memref<2048x128xf32, #tpu.memory_space<vmem>>, vector<8x128xf32>,
      %cst_21 = arith.constant 1.83333337 : f32
      %43 = vector.broadcast %cst_21 : f32 to vector<8x128xf32>
      %44 = arith.mulf %43, %11 : vector<8x128xf32>
      %45 = arith.mulf %44, %41 : vector<8x128xf32>
      %cst_22 = arith.constant 0.833333313 : f32
      %46 = vector.broadcast %cst_22 : f32 to vector<8x128xf32>
      %47 = arith.mulf %46, %34 : vector<8x128xf32>
      %48 = arith.subf %45, %47 : vector<8x128xf32>
      %c48 = arith.constant 48 : index
      %c0_23 = arith.constant 0 : index
      %49 = vector.load %arg3[%c48, %c0_23] : memref<2048x128xf32, #tpu.memory_space<vmem>>, vector<8x128xf32>
      tpu.vector_store %arg3[%c48, %c0_23], %48 {strides = array<i32>} : memref<2048x128xf32, #tpu.memory_space<vmem>>, vector<8x128xf32>,
      %cst_24 = arith.constant 1.85714281 : f32
      %50 = vector.broadcast %cst_24 : f32 to vector<8x128xf32>
      %51 = arith.mulf %50, %11 : vector<8x128xf32>
      %52 = arith.mulf %51, %48 : vector<8x128xf32>
      %cst_25 = arith.constant 0.857142865 : f32
      %53 = vector.broadcast %cst_25 : f32 to vector<8x128xf32>
      %54 = arith.mulf %53, %41 : vector<8x128xf32>
      %55 = arith.subf %52, %54 : vector<8x128xf32>
      %c56 = arith.constant 56 : index
      %c0_26 = arith.constant 0 : index
      %56 = vector.load %arg3[%c56, %c0_26] : memref<2048x128xf32, #tpu.memory_space<vmem>>, vector<8x128xf32>
      tpu.vector_store %arg3[%c56, %c0_26], %55 {strides = array<i32>} : memref<2048x128xf32, #tpu.memory_space<vmem>>, vector<8x128xf32>,
      %cst_27 = arith.constant 1.875000e+00 : f32
      %57 = vector.broadcast %cst_27 : f32 to vector<8x128xf32>
      %58 = arith.mulf %57, %11 : vector<8x128xf32>
      %59 = arith.mulf %58, %55 : vector<8x128xf32>
      %cst_28 = arith.constant 8.750000e-01 : f32
      %60 = vector.broadcast %cst_28 : f32 to vector<8x128xf32>
      %61 = arith.mulf %60, %48 : vector<8x128xf32>
      %62 = arith.subf %59, %61 : vector<8x128xf32>
      %c64 = arith.constant 64 : index
      %c0_29 = arith.constant 0 : index
      %63 = vector.load %arg3[%c64, %c0_29] : memref<2048x128xf32, #tpu.memory_space<vmem>>, vector<8x128xf32>
      tpu.vector_store %arg3[%c64, %c0_29], %62 {strides = array<i32>} : memref<2048x128xf32, #tpu.memory_space<vmem>>, vector<8x128xf32>,
      %cst_30 = arith.constant 1.88888884 : f32
      %64 = vector.broadcast %cst_30 : f32 to vector<8x128xf32>
      %65 = arith.mulf %64, %11 : vector<8x128xf32>
      %66 = arith.mulf %65, %62 : vector<8x128xf32>
      %cst_31 = arith.constant 0.888888895 : f32
      %67 = vector.broadcast %cst_31 : f32 to vector<8x128xf32>
      %68 = arith.mulf %67, %55 : vector<8x128xf32>
      %69 = arith.subf %66, %68 : vector<8x128xf32>
      %c72 = arith.constant 72 : index
      %c0_32 = arith.constant 0 : index
      %70 = vector.load %arg3[%c72, %c0_32] : memref<2048x128xf32, #tpu.memory_space<vmem>>, vector<8x128xf32>
      tpu.vector_store %arg3[%c72, %c0_32], %69 {strides = array<i32>} : memref<2048x128xf32, #tpu.memory_space<vmem>>, vector<8x128xf32>,
      %cst_33 = arith.constant 1.900000e+00 : f32
      %71 = vector.broadcast %cst_33 : f32 to vector<8x128xf32>
      %72 = arith.mulf %71, %11 : vector<8x128xf32>
      %73 = arith.mulf %72, %69 : vector<8x128xf32>
      %cst_34 = arith.constant 0.899999976 : f32
      %74 = vector.broadcast %cst_34 : f32 to vector<8x128xf32>
      %75 = arith.mulf %74, %62 : vector<8x128xf32>
      %76 = arith.subf %73, %75 : vector<8x128xf32>
      %c80 = arith.constant 80 : index
      %c0_35 = arith.constant 0 : index
      %77 = vector.load %arg3[%c80, %c0_35] : memref<2048x128xf32, #tpu.memory_space<vmem>>, vector<8x128xf32>
      tpu.vector_store %arg3[%c80, %c0_35], %76 {strides = array<i32>} : memref<2048x128xf32, #tpu.memory_space<vmem>>, vector<8x128xf32>,
      %cst_36 = arith.constant 1.90909088 : f32
      %78 = vector.broadcast %cst_36 : f32 to vector<8x128xf32>
      %79 = arith.mulf %78, %11 : vector<8x128xf32>
      %80 = arith.mulf %79, %76 : vector<8x128xf32>
      %cst_37 = arith.constant 0.909090936 : f32
      %81 = vector.broadcast %cst_37 : f32 to vector<8x128xf32>
      %82 = arith.mulf %81, %69 : vector<8x128xf32>
      %83 = arith.subf %80, %82 : vector<8x128xf32>
      %c88 = arith.constant 88 : index
      %c0_38 = arith.constant 0 : index
      %84 = vector.load %arg3[%c88, %c0_38] : memref<2048x128xf32, #tpu.memory_space<vmem>>, vector<8x128xf32>
      tpu.vector_store %arg3[%c88, %c0_38], %83 {strides = array<i32>} : memref<2048x128xf32, #tpu.memory_space<vmem>>, vector<8x128xf32>,
      %cst_39 = arith.constant 1.91666663 : f32
      %85 = vector.broadcast %cst_39 : f32 to vector<8x128xf32>
      %86 = arith.mulf %85, %11 : vector<8x128xf32>
      %87 = arith.mulf %86, %83 : vector<8x128xf32>
      %cst_40 = arith.constant 0.916666686 : f32
      %88 = vector.broadcast %cst_40 : f32 to vector<8x128xf32>
      %89 = arith.mulf %88, %76 : vector<8x128xf32>
      %90 = arith.subf %87, %89 : vector<8x128xf32>
      %c96 = arith.constant 96 : index
      %c0_41 = arith.constant 0 : index
      %91 = vector.load %arg3[%c96, %c0_41] : memref<2048x128xf32, #tpu.memory_space<vmem>>, vector<8x128xf32>
      tpu.vector_store %arg3[%c96, %c0_41], %90 {strides = array<i32>} : memref<2048x128xf32, #tpu.memory_space<vmem>>, vector<8x128xf32>,
      %cst_42 = arith.constant 1.92307687 : f32
      %92 = vector.broadcast %cst_42 : f32 to vector<8x128xf32>
      %93 = arith.mulf %92, %11 : vector<8x128xf32>
      %94 = arith.mulf %93, %90 : vector<8x128xf32>
      %cst_43 = arith.constant 0.923076927 : f32
      %95 = vector.broadcast %cst_43 : f32 to vector<8x128xf32>
      %96 = arith.mulf %95, %83 : vector<8x128xf32>
      %97 = arith.subf %94, %96 : vector<8x128xf32>
      %c104 = arith.constant 104 : index
      %c0_44 = arith.constant 0 : index
      %98 = vector.load %arg3[%c104, %c0_44] : memref<2048x128xf32, #tpu.memory_space<vmem>>, vector<8x128xf32>
      tpu.vector_store %arg3[%c104, %c0_44], %97 {strides = array<i32>} : memref<2048x128xf32, #tpu.memory_space<vmem>>, vector<8x128xf32>,
      %cst_45 = arith.constant 1.92857146 : f32
      %99 = vector.broadcast %cst_45 : f32 to vector<8x128xf32>
      %100 = arith.mulf %99, %11 : vector<8x128xf32>
      %101 = arith.mulf %100, %97 : vector<8x128xf32>
      %cst_46 = arith.constant 0.928571403 : f32
      %102 = vector.broadcast %cst_46 : f32 to vector<8x128xf32>
      %103 = arith.mulf %102, %90 : vector<8x128xf32>
      %104 = arith.subf %101, %103 : vector<8x128xf32>
      %c112 = arith.constant 112 : index
      %c0_47 = arith.constant 0 : index
      %105 = vector.load %arg3[%c112, %c0_47] : memref<2048x128xf32, #tpu.memory_space<vmem>>, vector<8x128xf32>
      tpu.vector_store %arg3[%c112, %c0_47], %104 {strides = array<i32>} : memref<2048x128xf32, #tpu.memory_space<vmem>>, vector<8x128xf32>,
      %cst_48 = arith.constant 1.93333328 : f32
      %106 = vector.broadcast %cst_48 : f32 to vector<8x128xf32>
      %107 = arith.mulf %106, %11 : vector<8x128xf32>
      %108 = arith.mulf %107, %104 : vector<8x128xf32>
      %cst_49 = arith.constant 0.933333337 : f32
      %109 = vector.broadcast %cst_49 : f32 to vector<8x128xf32>
      %110 = arith.mulf %109, %97 : vector<8x128xf32>
      %111 = arith.subf %108, %110 : vector<8x128xf32>
      %c120 = arith.constant 120 : index
      %c0_50 = arith.constant 0 : index
      %112 = vector.load %arg3[%c120, %c0_50] : memref<2048x128xf32, #tpu.memory_space<vmem>>, vector<8x128xf32>
      tpu.vector_store %arg3[%c120, %c0_50], %111 {strides = array<i32>} : memref<2048x128xf32, #tpu.memory_space<vmem>>, vector<8x128xf32>,
      %cst_51 = arith.constant 1.937500e+00 : f32
      %113 = vector.broadcast %cst_51 : f32 to vector<8x128xf32>
      %114 = arith.mulf %113, %11 : vector<8x128xf32>
      %115 = arith.mulf %114, %111 : vector<8x128xf32>
      %cst_52 = arith.constant 9.375000e-01 : f32
      %116 = vector.broadcast %cst_52 : f32 to vector<8x128xf32>
      %117 = arith.mulf %116, %104 : vector<8x128xf32>
      %118 = arith.subf %115, %117 : vector<8x128xf32>
      %c128 = arith.constant 128 : index
      %c0_53 = arith.constant 0 : index
      %119 = vector.load %arg3[%c128, %c0_53] : memref<2048x128xf32, #tpu.memory_space<vmem>>, vector<8x128xf32>
      tpu.vector_store %arg3[%c128, %c0_53], %118 {strides = array<i32>} : memref<2048x128xf32, #tpu.memory_space<vmem>>, vector<8x128xf32>,
      %cst_54 = arith.constant 1.94117641 : f32
      %120 = vector.broadcast %cst_54 : f32 to vector<8x128xf32>
      %121 = arith.mulf %120, %11 : vector<8x128xf32>
      %122 = arith.mulf %121, %118 : vector<8x128xf32>
      %cst_55 = arith.constant 0.941176474 : f32
      %123 = vector.broadcast %cst_55 : f32 to vector<8x128xf32>
      %124 = arith.mulf %123, %111 : vector<8x128xf32>
      %125 = arith.subf %122, %124 : vector<8x128xf32>
      %c136 = arith.constant 136 : index
      %c0_56 = arith.constant 0 : index
      %126 = vector.load %arg3[%c136, %c0_56] : memref<2048x128xf32, #tpu.memory_space<vmem>>, vector<8x128xf32>
      tpu.vector_store %arg3[%c136, %c0_56], %125 {strides = array<i32>} : memref<2048x128xf32, #tpu.memory_space<vmem>>, vector<8x128xf32>,
      %cst_57 = arith.constant 1.94444442 : f32
      %127 = vector.broadcast %cst_57 : f32 to vector<8x128xf32>
      %128 = arith.mulf %127, %11 : vector<8x128xf32>
      %129 = arith.mulf %128, %125 : vector<8x128xf32>
      %cst_58 = arith.constant 0.944444418 : f32
      %130 = vector.broadcast %cst_58 : f32 to vector<8x128xf32>
      %131 = arith.mulf %130, %118 : vector<8x128xf32>
      %132 = arith.subf %129, %131 : vector<8x128xf32>
      %c144 = arith.constant 144 : index
      %c0_59 = arith.constant 0 : index
      %133 = vector.load %arg3[%c144, %c0_59] : memref<2048x128xf32, #tpu.memory_space<vmem>>, vector<8x128xf32>
      tpu.vector_store %arg3[%c144, %c0_59], %132 {strides = array<i32>} : memref<2048x128xf32, #tpu.memory_space<vmem>>, vector<8x128xf32>,
      %cst_60 = arith.constant 1.94736838 : f32
      %134 = vector.broadcast %cst_60 : f32 to vector<8x128xf32>
      %135 = arith.mulf %134, %11 : vector<8x128xf32>
      %136 = arith.mulf %135, %132 : vector<8x128xf32>
      %cst_61 = arith.constant 0.947368443 : f32
      %137 = vector.broadcast %cst_61 : f32 to vector<8x128xf32>
      %138 = arith.mulf %137, %125 : vector<8x128xf32>
      %139 = arith.subf %136, %138 : vector<8x128xf32>
      %c152 = arith.constant 152 : index
      %c0_62 = arith.constant 0 : index
      %140 = vector.load %arg3[%c152, %c0_62] : memref<2048x128xf32, #tpu.memory_space<vmem>>, vector<8x128xf32>
      tpu.vector_store %arg3[%c152, %c0_62], %139 {strides = array<i32>} : memref<2048x128xf32, #tpu.memory_space<vmem>>, vector<8x128xf32>,
      %cst_63 = arith.constant 1.950000e+00 : f32
      %141 = vector.broadcast %cst_63 : f32 to vector<8x128xf32>
      %142 = arith.mulf %141, %11 : vector<8x128xf32>
      %143 = arith.mulf %142, %139 : vector<8x128xf32>
      %cst_64 = arith.constant 0.949999988 : f32
      %144 = vector.broadcast %cst_64 : f32 to vector<8x128xf32>
      %145 = arith.mulf %144, %132 : vector<8x128xf32>
      %146 = arith.subf %143, %145 : vector<8x128xf32>
      %c160 = arith.constant 160 : index
      %c0_65 = arith.constant 0 : index
      %147 = vector.load %arg3[%c160, %c0_65] : memref<2048x128xf32, #tpu.memory_space<vmem>>, vector<8x128xf32>
      tpu.vector_store %arg3[%c160, %c0_65], %146 {strides = array<i32>} : memref<2048x128xf32, #tpu.memory_space<vmem>>, vector<8x128xf32>,
      %cst_66 = arith.constant 1.9523809 : f32
      %148 = vector.broadcast %cst_66 : f32 to vector<8x128xf32>
      %149 = arith.mulf %148, %11 : vector<8x128xf32>
      %150 = arith.mulf %149, %146 : vector<8x128xf32>
      %cst_67 = arith.constant 0.952380955 : f32
      %151 = vector.broadcast %cst_67 : f32 to vector<8x128xf32>
      %152 = arith.mulf %151, %139 : vector<8x128xf32>
      %153 = arith.subf %150, %152 : vector<8x128xf32>
      %c168 = arith.constant 168 : index
      %c0_68 = arith.constant 0 : index
      %154 = vector.load %arg3[%c168, %c0_68] : memref<2048x128xf32, #tpu.memory_space<vmem>>, vector<8x128xf32>
      tpu.vector_store %arg3[%c168, %c0_68], %153 {strides = array<i32>} : memref<2048x128xf32, #tpu.memory_space<vmem>>, vector<8x128xf32>,
      %cst_69 = arith.constant 1.9545455 : f32
      %155 = vector.broadcast %cst_69 : f32 to vector<8x128xf32>
      %156 = arith.mulf %155, %11 : vector<8x128xf32>
      %157 = arith.mulf %156, %153 : vector<8x128xf32>
      %cst_70 = arith.constant 0.954545438 : f32
      %158 = vector.broadcast %cst_70 : f32 to vector<8x128xf32>
      %159 = arith.mulf %158, %146 : vector<8x128xf32>
      %160 = arith.subf %157, %159 : vector<8x128xf32>
      %c176 = arith.constant 176 : index
      %c0_71 = arith.constant 0 : index
      %161 = vector.load %arg3[%c176, %c0_71] : memref<2048x128xf32, #tpu.memory_space<vmem>>, vector<8x128xf32>
      tpu.vector_store %arg3[%c176, %c0_71], %160 {strides = array<i32>} : memref<2048x128xf32, #tpu.memory_space<vmem>>, vector<8x128xf32>,
      %cst_72 = arith.constant 1.95652175 : f32
      %162 = vector.broadcast %cst_72 : f32 to vector<8x128xf32>
      %163 = arith.mulf %162, %11 : vector<8x128xf32>
      %164 = arith.mulf %163, %160 : vector<8x128xf32>
      %cst_73 = arith.constant 0.956521749 : f32
      %165 = vector.broadcast %cst_73 : f32 to vector<8x128xf32>
      %166 = arith.mulf %165, %153 : vector<8x128xf32>
      %167 = arith.subf %164, %166 : vector<8x128xf32>
      %c184 = arith.constant 184 : index
      %c0_74 = arith.constant 0 : index
      %168 = vector.load %arg3[%c184, %c0_74] : memref<2048x128xf32, #tpu.memory_space<vmem>>, vector<8x128xf32>
      tpu.vector_store %arg3[%c184, %c0_74], %167 {strides = array<i32>} : memref<2048x128xf32, #tpu.memory_space<vmem>>, vector<8x128xf32>,
      %cst_75 = arith.constant 1.95833337 : f32
      %169 = vector.broadcast %cst_75 : f32 to vector<8x128xf32>
      %170 = arith.mulf %169, %11 : vector<8x128xf32>
      %171 = arith.mulf %170, %167 : vector<8x128xf32>
      %cst_76 = arith.constant 0.958333313 : f32
      %172 = vector.broadcast %cst_76 : f32 to vector<8x128xf32>
      %173 = arith.mulf %172, %160 : vector<8x128xf32>
      %174 = arith.subf %171, %173 : vector<8x128xf32>
      %c192 = arith.constant 192 : index
      %c0_77 = arith.constant 0 : index
      %175 = vector.load %arg3[%c192, %c0_77] : memref<2048x128xf32, #tpu.memory_space<vmem>>, vector<8x128xf32>
      tpu.vector_store %arg3[%c192, %c0_77], %174 {strides = array<i32>} : memref<2048x128xf32, #tpu.memory_space<vmem>>, vector<8x128xf32>,
      %cst_78 = arith.constant 1.960000e+00 : f32
      %176 = vector.broadcast %cst_78 : f32 to vector<8x128xf32>
      %177 = arith.mulf %176, %11 : vector<8x128xf32>
      %178 = arith.mulf %177, %174 : vector<8x128xf32>
      %cst_79 = arith.constant 0.959999978 : f32
      %179 = vector.broadcast %cst_79 : f32 to vector<8x128xf32>
      %180 = arith.mulf %179, %167 : vector<8x128xf32>
      %181 = arith.subf %178, %180 : vector<8x128xf32>
      %c200 = arith.constant 200 : index
      %c0_80 = arith.constant 0 : index
      %182 = vector.load %arg3[%c200, %c0_80] : memref<2048x128xf32, #tpu.memory_space<vmem>>, vector<8x128xf32>
      tpu.vector_store %arg3[%c200, %c0_80], %181 {strides = array<i32>} : memref<2048x128xf32, #tpu.memory_space<vmem>>, vector<8x128xf32>,
      %cst_81 = arith.constant 1.96153843 : f32
      %183 = vector.broadcast %cst_81 : f32 to vector<8x128xf32>
      %184 = arith.mulf %183, %11 : vector<8x128xf32>
      %185 = arith.mulf %184, %181 : vector<8x128xf32>
      %cst_82 = arith.constant 0.961538434 : f32
      %186 = vector.broadcast %cst_82 : f32 to vector<8x128xf32>
      %187 = arith.mulf %186, %174 : vector<8x128xf32>
      %188 = arith.subf %185, %187 : vector<8x128xf32>
      %c208 = arith.constant 208 : index
      %c0_83 = arith.constant 0 : index
      %189 = vector.load %arg3[%c208, %c0_83] : memref<2048x128xf32, #tpu.memory_space<vmem>>, vector<8x128xf32>
      tpu.vector_store %arg3[%c208, %c0_83], %188 {strides = array<i32>} : memref<2048x128xf32, #tpu.memory_space<vmem>>, vector<8x128xf32>,
      %cst_84 = arith.constant 1.96296299 : f32
      %190 = vector.broadcast %cst_84 : f32 to vector<8x128xf32>
      %191 = arith.mulf %190, %11 : vector<8x128xf32>
      %192 = arith.mulf %191, %188 : vector<8x128xf32>
      %cst_85 = arith.constant 0.962962985 : f32
      %193 = vector.broadcast %cst_85 : f32 to vector<8x128xf32>
      %194 = arith.mulf %193, %181 : vector<8x128xf32>
      %195 = arith.subf %192, %194 : vector<8x128xf32>
      %c216 = arith.constant 216 : index
      %c0_86 = arith.constant 0 : index
      %196 = vector.load %arg3[%c216, %c0_86] : memref<2048x128xf32, #tpu.memory_space<vmem>>, vector<8x128xf32>
      tpu.vector_store %arg3[%c216, %c0_86], %195 {strides = array<i32>} : memref<2048x128xf32, #tpu.memory_space<vmem>>, vector<8x128xf32>,
      %cst_87 = arith.constant 1.96428573 : f32
      %197 = vector.broadcast %cst_87 : f32 to vector<8x128xf32>
      %198 = arith.mulf %197, %11 : vector<8x128xf32>
      %199 = arith.mulf %198, %195 : vector<8x128xf32>
      %cst_88 = arith.constant 0.964285731 : f32
      %200 = vector.broadcast %cst_88 : f32 to vector<8x128xf32>
      %201 = arith.mulf %200, %188 : vector<8x128xf32>
      %202 = arith.subf %199, %201 : vector<8x128xf32>
      %c224 = arith.constant 224 : index
      %c0_89 = arith.constant 0 : index
      %203 = vector.load %arg3[%c224, %c0_89] : memref<2048x128xf32, #tpu.memory_space<vmem>>, vector<8x128xf32>
      tpu.vector_store %arg3[%c224, %c0_89], %202 {strides = array<i32>} : memref<2048x128xf32, #tpu.memory_space<vmem>>, vector<8x128xf32>,
      %cst_90 = arith.constant 1.96551728 : f32
      %204 = vector.broadcast %cst_90 : f32 to vector<8x128xf32>
      %205 = arith.mulf %204, %11 : vector<8x128xf32>
      %206 = arith.mulf %205, %202 : vector<8x128xf32>
      %cst_91 = arith.constant 0.965517222 : f32
      %207 = vector.broadcast %cst_91 : f32 to vector<8x128xf32>
      %208 = arith.mulf %207, %195 : vector<8x128xf32>
      %209 = arith.subf %206, %208 : vector<8x128xf32>
      %c232 = arith.constant 232 : index
      %c0_92 = arith.constant 0 : index
      %210 = vector.load %arg3[%c232, %c0_92] : memref<2048x128xf32, #tpu.memory_space<vmem>>, vector<8x128xf32>
      tpu.vector_store %arg3[%c232, %c0_92], %209 {strides = array<i32>} : memref<2048x128xf32, #tpu.memory_space<vmem>>, vector<8x128xf32>,
      %cst_93 = arith.constant 1.9666667 : f32
      %211 = vector.broadcast %cst_93 : f32 to vector<8x128xf32>
      %212 = arith.mulf %211, %11 : vector<8x128xf32>
      %213 = arith.mulf %212, %209 : vector<8x128xf32>
      %cst_94 = arith.constant 0.966666638 : f32
      %214 = vector.broadcast %cst_94 : f32 to vector<8x128xf32>
      %215 = arith.mulf %214, %202 : vector<8x128xf32>
      %216 = arith.subf %213, %215 : vector<8x128xf32>
      %c240 = arith.constant 240 : index
      %c0_95 = arith.constant 0 : index
      %217 = vector.load %arg3[%c240, %c0_95] : memref<2048x128xf32, #tpu.memory_space<vmem>>, vector<8x128xf32>
      tpu.vector_store %arg3[%c240, %c0_95], %216 {strides = array<i32>} : memref<2048x128xf32, #tpu.memory_space<vmem>>, vector<8x128xf32>,
      %cst_96 = arith.constant 1.96774197 : f32
      %218 = vector.broadcast %cst_96 : f32 to vector<8x128xf32>
      %219 = arith.mulf %218, %11 : vector<8x128xf32>
      %220 = arith.mulf %219, %216 : vector<8x128xf32>
      %cst_97 = arith.constant 0.967741906 : f32
      %221 = vector.broadcast %cst_97 : f32 to vector<8x128xf32>
      %222 = arith.mulf %221, %209 : vector<8x128xf32>
      %223 = arith.subf %220, %222 : vector<8x128xf32>
      %c248 = arith.constant 248 : index
      %c0_98 = arith.constant 0 : index
      %224 = vector.load %arg3[%c248, %c0_98] : memref<2048x128xf32, #tpu.memory_space<vmem>>, vector<8x128xf32>
      tpu.vector_store %arg3[%c248, %c0_98], %223 {strides = array<i32>} : memref<2048x128xf32, #tpu.memory_space<vmem>>, vector<8x128xf32>,
      %cst_99 = arith.constant 1.968750e+00 : f32
      %225 = vector.broadcast %cst_99 : f32 to vector<8x128xf32>
      %226 = arith.mulf %225, %11 : vector<8x128xf32>
      %227 = arith.mulf %226, %223 : vector<8x128xf32>
      %cst_100 = arith.constant 9.687500e-01 : f32
      %228 = vector.broadcast %cst_100 : f32 to vector<8x128xf32>
      %229 = arith.mulf %228, %216 : vector<8x128xf32>
      %230 = arith.subf %227, %229 : vector<8x128xf32>
      %c256 = arith.constant 256 : index
      %c0_101 = arith.constant 0 : index
      %231 = vector.load %arg3[%c256, %c0_101] : memref<2048x128xf32, #tpu.memory_space<vmem>>, vector<8x128xf32>
      tpu.vector_store %arg3[%c256, %c0_101], %230 {strides = array<i32>} : memref<2048x128xf32, #tpu.memory_space<vmem>>, vector<8x128xf32>,
      %cst_102 = arith.constant 1.969697 : f32
      %232 = vector.broadcast %cst_102 : f32 to vector<8x128xf32>
      %233 = arith.mulf %232, %11 : vector<8x128xf32>
      %234 = arith.mulf %233, %230 : vector<8x128xf32>
      %cst_103 = arith.constant 0.969696998 : f32
      %235 = vector.broadcast %cst_103 : f32 to vector<8x128xf32>
      %236 = arith.mulf %235, %223 : vector<8x128xf32>
      %237 = arith.subf %234, %236 : vector<8x128xf32>
      %c264 = arith.constant 264 : index
      %c0_104 = arith.constant 0 : index
      %238 = vector.load %arg3[%c264, %c0_104] : memref<2048x128xf32, #tpu.memory_space<vmem>>, vector<8x128xf32>
      tpu.vector_store %arg3[%c264, %c0_104], %237 {strides = array<i32>} : memref<2048x128xf32, #tpu.memory_space<vmem>>, vector<8x128xf32>,
      %cst_105 = arith.constant 1.97058821 : f32
      %239 = vector.broadcast %cst_105 : f32 to vector<8x128xf32>
      %240 = arith.mulf %239, %11 : vector<8x128xf32>
      %241 = arith.mulf %240, %237 : vector<8x128xf32>
      %cst_106 = arith.constant 0.970588207 : f32
      %242 = vector.broadcast %cst_106 : f32 to vector<8x128xf32>
      %243 = arith.mulf %242, %230 : vector<8x128xf32>
      %244 = arith.subf %241, %243 : vector<8x128xf32>
      %c272 = arith.constant 272 : index
      %c0_107 = arith.constant 0 : index
      %245 = vector.load %arg3[%c272, %c0_107] : memref<2048x128xf32, #tpu.memory_space<vmem>>, vector<8x128xf32>
      tpu.vector_store %arg3[%c272, %c0_107], %244 {strides = array<i32>} : memref<2048x128xf32, #tpu.memory_space<vmem>>, vector<8x128xf32>,
      %cst_108 = arith.constant 1.97142851 : f32
      %246 = vector.broadcast %cst_108 : f32 to vector<8x128xf32>
      %247 = arith.mulf %246, %11 : vector<8x128xf32>
      %248 = arith.mulf %247, %244 : vector<8x128xf32>
      %cst_109 = arith.constant 0.971428573 : f32
      %249 = vector.broadcast %cst_109 : f32 to vector<8x128xf32>
      %250 = arith.mulf %249, %237 : vector<8x128xf32>
      %251 = arith.subf %248, %250 : vector<8x128xf32>
      %c280 = arith.constant 280 : index
      %c0_110 = arith.constant 0 : index
      %252 = vector.load %arg3[%c280, %c0_110] : memref<2048x128xf32, #tpu.memory_space<vmem>>, vector<8x128xf32>
      tpu.vector_store %arg3[%c280, %c0_110], %251 {strides = array<i32>} : memref<2048x128xf32, #tpu.memory_space<vmem>>, vector<8x128xf32>,
      %cst_111 = arith.constant 1.97222221 : f32
      %253 = vector.broadcast %cst_111 : f32 to vector<8x128xf32>
      %254 = arith.mulf %253, %11 : vector<8x128xf32>
      %255 = arith.mulf %254, %251 : vector<8x128xf32>
      %cst_112 = arith.constant 0.972222208 : f32
      %256 = vector.broadcast %cst_112 : f32 to vector<8x128xf32>
      %257 = arith.mulf %256, %244 : vector<8x128xf32>
      %258 = arith.subf %255, %257 : vector<8x128xf32>
      %c288 = arith.constant 288 : index
      %c0_113 = arith.constant 0 : index
      %259 = vector.load %arg3[%c288, %c0_113] : memref<2048x128xf32, #tpu.memory_space<vmem>>, vector<8x128xf32>
      tpu.vector_store %arg3[%c288, %c0_113], %258 {strides = array<i32>} : memref<2048x128xf32, #tpu.memory_space<vmem>>, vector<8x128xf32>,
      %cst_114 = arith.constant 1.97297299 : f32
      %260 = vector.broadcast %cst_114 : f32 to vector<8x128xf32>
      %261 = arith.mulf %260, %11 : vector<8x128xf32>
      %262 = arith.mulf %261, %258 : vector<8x128xf32>
      %cst_115 = arith.constant 0.972972989 : f32
      %263 = vector.broadcast %cst_115 : f32 to vector<8x128xf32>
      %264 = arith.mulf %263, %251 : vector<8x128xf32>
      %265 = arith.subf %262, %264 : vector<8x128xf32>
      %c296 = arith.constant 296 : index
      %c0_116 = arith.constant 0 : index
      %266 = vector.load %arg3[%c296, %c0_116] : memref<2048x128xf32, #tpu.memory_space<vmem>>, vector<8x128xf32>
      tpu.vector_store %arg3[%c296, %c0_116], %265 {strides = array<i32>} : memref<2048x128xf32, #tpu.memory_space<vmem>>, vector<8x128xf32>,
      %cst_117 = arith.constant 1.97368419 : f32
      %267 = vector.broadcast %cst_117 : f32 to vector<8x128xf32>
      %268 = arith.mulf %267, %11 : vector<8x128xf32>
      %269 = arith.mulf %268, %265 : vector<8x128xf32>
      %cst_118 = arith.constant 0.973684191 : f32
      %270 = vector.broadcast %cst_118 : f32 to vector<8x128xf32>
      %271 = arith.mulf %270, %258 : vector<8x128xf32>
      %272 = arith.subf %269, %271 : vector<8x128xf32>
      %c304 = arith.constant 304 : index
      %c0_119 = arith.constant 0 : index
      %273 = vector.load %arg3[%c304, %c0_119] : memref<2048x128xf32, #tpu.memory_space<vmem>>, vector<8x128xf32>
      tpu.vector_store %arg3[%c304, %c0_119], %272 {strides = array<i32>} : memref<2048x128xf32, #tpu.memory_space<vmem>>, vector<8x128xf32>,
      %cst_120 = arith.constant 1.97435892 : f32
      %274 = vector.broadcast %cst_120 : f32 to vector<8x128xf32>
      %275 = arith.mulf %274, %11 : vector<8x128xf32>
      %276 = arith.mulf %275, %272 : vector<8x128xf32>
      %cst_121 = arith.constant 0.974358975 : f32
      %277 = vector.broadcast %cst_121 : f32 to vector<8x128xf32>
      %278 = arith.mulf %277, %265 : vector<8x128xf32>
      %279 = arith.subf %276, %278 : vector<8x128xf32>
      %c312 = arith.constant 312 : index
      %c0_122 = arith.constant 0 : index
      %280 = vector.load %arg3[%c312, %c0_122] : memref<2048x128xf32, #tpu.memory_space<vmem>>, vector<8x128xf32>
      tpu.vector_store %arg3[%c312, %c0_122], %279 {strides = array<i32>} : memref<2048x128xf32, #tpu.memory_space<vmem>>, vector<8x128xf32>,
      %cst_123 = arith.constant 1.975000e+00 : f32
      %281 = vector.broadcast %cst_123 : f32 to vector<8x128xf32>
      %282 = arith.mulf %281, %11 : vector<8x128xf32>
      %283 = arith.mulf %282, %279 : vector<8x128xf32>
      %cst_124 = arith.constant 9.750000e-01 : f32
      %284 = vector.broadcast %cst_124 : f32 to vector<8x128xf32>
      %285 = arith.mulf %284, %272 : vector<8x128xf32>
      %286 = arith.subf %283, %285 : vector<8x128xf32>
      %c320 = arith.constant 320 : index
      %c0_125 = arith.constant 0 : index
      %287 = vector.load %arg3[%c320, %c0_125] : memref<2048x128xf32, #tpu.memory_space<vmem>>, vector<8x128xf32>
      tpu.vector_store %arg3[%c320, %c0_125], %286 {strides = array<i32>} : memref<2048x128xf32, #tpu.memory_space<vmem>>, vector<8x128xf32>,
      %cst_126 = arith.constant 1.97560978 : f32
      %288 = vector.broadcast %cst_126 : f32 to vector<8x128xf32>
      %289 = arith.mulf %288, %11 : vector<8x128xf32>
      %290 = arith.mulf %289, %286 : vector<8x128xf32>
      %cst_127 = arith.constant 0.975609779 : f32
      %291 = vector.broadcast %cst_127 : f32 to vector<8x128xf32>
      %292 = arith.mulf %291, %279 : vector<8x128xf32>
      %293 = arith.subf %290, %292 : vector<8x128xf32>
      %c328 = arith.constant 328 : index
      %c0_128 = arith.constant 0 : index
      %294 = vector.load %arg3[%c328, %c0_128] : memref<2048x128xf32, #tpu.memory_space<vmem>>, vector<8x128xf32>
      tpu.vector_store %arg3[%c328, %c0_128], %293 {strides = array<i32>} : memref<2048x128xf32, #tpu.memory_space<vmem>>, vector<8x128xf32>,
      %cst_129 = arith.constant 1.97619045 : f32
      %295 = vector.broadcast %cst_129 : f32 to vector<8x128xf32>
      %296 = arith.mulf %295, %11 : vector<8x128xf32>
      %297 = arith.mulf %296, %293 : vector<8x128xf32>
      %cst_130 = arith.constant 0.976190447 : f32
      %298 = vector.broadcast %cst_130 : f32 to vector<8x128xf32>
      %299 = arith.mulf %298, %286 : vector<8x128xf32>
      %300 = arith.subf %297, %299 : vector<8x128xf32>
      %c336 = arith.constant 336 : index
      %c0_131 = arith.constant 0 : index
      %301 = vector.load %arg3[%c336, %c0_131] : memref<2048x128xf32, #tpu.memory_space<vmem>>, vector<8x128xf32>
      tpu.vector_store %arg3[%c336, %c0_131], %300 {strides = array<i32>} : memref<2048x128xf32, #tpu.memory_space<vmem>>, vector<8x128xf32>,
      %cst_132 = arith.constant 1.97674417 : f32
      %302 = vector.broadcast %cst_132 : f32 to vector<8x128xf32>
      %303 = arith.mulf %302, %11 : vector<8x128xf32>
      %304 = arith.mulf %303, %300 : vector<8x128xf32>
      %cst_133 = arith.constant 0.976744174 : f32
      %305 = vector.broadcast %cst_133 : f32 to vector<8x128xf32>
      %306 = arith.mulf %305, %293 : vector<8x128xf32>
      %307 = arith.subf %304, %306 : vector<8x128xf32>
      %c344 = arith.constant 344 : index
      %c0_134 = arith.constant 0 : index
      %308 = vector.load %arg3[%c344, %c0_134] : memref<2048x128xf32, #tpu.memory_space<vmem>>, vector<8x128xf32>
      tpu.vector_store %arg3[%c344, %c0_134], %307 {strides = array<i32>} : memref<2048x128xf32, #tpu.memory_space<vmem>>, vector<8x128xf32>,
      %cst_135 = arith.constant 1.97727275 : f32
      %309 = vector.broadcast %cst_135 : f32 to vector<8x128xf32>
      %310 = arith.mulf %309, %11 : vector<8x128xf32>
      %311 = arith.mulf %310, %307 : vector<8x128xf32>
      %cst_136 = arith.constant 0.977272748 : f32
      %312 = vector.broadcast %cst_136 : f32 to vector<8x128xf32>
      %313 = arith.mulf %312, %300 : vector<8x128xf32>
      %314 = arith.subf %311, %313 : vector<8x128xf32>
      %c352 = arith.constant 352 : index
      %c0_137 = arith.constant 0 : index
      %315 = vector.load %arg3[%c352, %c0_137] : memref<2048x128xf32, #tpu.memory_space<vmem>>, vector<8x128xf32>
      tpu.vector_store %arg3[%c352, %c0_137], %314 {strides = array<i32>} : memref<2048x128xf32, #tpu.memory_space<vmem>>, vector<8x128xf32>,
      %cst_138 = arith.constant 1.97777772 : f32
      %316 = vector.broadcast %cst_138 : f32 to vector<8x128xf32>
      %317 = arith.mulf %316, %11 : vector<8x128xf32>
      %318 = arith.mulf %317, %314 : vector<8x128xf32>
      %cst_139 = arith.constant 0.977777779 : f32
      %319 = vector.broadcast %cst_139 : f32 to vector<8x128xf32>
      %320 = arith.mulf %319, %307 : vector<8x128xf32>
      %321 = arith.subf %318, %320 : vector<8x128xf32>
      %c360 = arith.constant 360 : index
      %c0_140 = arith.constant 0 : index
      %322 = vector.load %arg3[%c360, %c0_140] : memref<2048x128xf32, #tpu.memory_space<vmem>>, vector<8x128xf32>
      tpu.vector_store %arg3[%c360, %c0_140], %321 {strides = array<i32>} : memref<2048x128xf32, #tpu.memory_space<vmem>>, vector<8x128xf32>,
      %cst_141 = arith.constant 1.97826087 : f32
      %323 = vector.broadcast %cst_141 : f32 to vector<8x128xf32>
      %324 = arith.mulf %323, %11 : vector<8x128xf32>
      %325 = arith.mulf %324, %321 : vector<8x128xf32>
      %cst_142 = arith.constant 0.978260874 : f32
      %326 = vector.broadcast %cst_142 : f32 to vector<8x128xf32>
      %327 = arith.mulf %326, %314 : vector<8x128xf32>
      %328 = arith.subf %325, %327 : vector<8x128xf32>
      %c368 = arith.constant 368 : index
      %c0_143 = arith.constant 0 : index
      %329 = vector.load %arg3[%c368, %c0_143] : memref<2048x128xf32, #tpu.memory_space<vmem>>, vector<8x128xf32>
      tpu.vector_store %arg3[%c368, %c0_143], %328 {strides = array<i32>} : memref<2048x128xf32, #tpu.memory_space<vmem>>, vector<8x128xf32>,
      %cst_144 = arith.constant 1.97872341 : f32
      %330 = vector.broadcast %cst_144 : f32 to vector<8x128xf32>
      %331 = arith.mulf %330, %11 : vector<8x128xf32>
      %332 = arith.mulf %331, %328 : vector<8x128xf32>
      %cst_145 = arith.constant 0.978723406 : f32
      %333 = vector.broadcast %cst_145 : f32 to vector<8x128xf32>
      %334 = arith.mulf %333, %321 : vector<8x128xf32>
      %335 = arith.subf %332, %334 : vector<8x128xf32>
      %c376 = arith.constant 376 : index
      %c0_146 = arith.constant 0 : index
      %336 = vector.load %arg3[%c376, %c0_146] : memref<2048x128xf32, #tpu.memory_space<vmem>>, vector<8x128xf32>
      tpu.vector_store %arg3[%c376, %c0_146], %335 {strides = array<i32>} : memref<2048x128xf32, #tpu.memory_space<vmem>>, vector<8x128xf32>,
      %cst_147 = arith.constant 1.97916663 : f32
      %337 = vector.broadcast %cst_147 : f32 to vector<8x128xf32>
      %338 = arith.mulf %337, %11 : vector<8x128xf32>
      %339 = arith.mulf %338, %335 : vector<8x128xf32>
      %cst_148 = arith.constant 0.979166686 : f32
      %340 = vector.broadcast %cst_148 : f32 to vector<8x128xf32>
      %341 = arith.mulf %340, %328 : vector<8x128xf32>
      %342 = arith.subf %339, %341 : vector<8x128xf32>
      %c384 = arith.constant 384 : index
      %c0_149 = arith.constant 0 : index
      %343 = vector.load %arg3[%c384, %c0_149] : memref<2048x128xf32, #tpu.memory_space<vmem>>, vector<8x128xf32>
      tpu.vector_store %arg3[%c384, %c0_149], %342 {strides = array<i32>} : memref<2048x128xf32, #tpu.memory_space<vmem>>, vector<8x128xf32>,
      %cst_150 = arith.constant 1.97959185 : f32
      %344 = vector.broadcast %cst_150 : f32 to vector<8x128xf32>
      %345 = arith.mulf %344, %11 : vector<8x128xf32>
      %346 = arith.mulf %345, %342 : vector<8x128xf32>
      %cst_151 = arith.constant 0.979591846 : f32
      %347 = vector.broadcast %cst_151 : f32 to vector<8x128xf32>
      %348 = arith.mulf %347, %335 : vector<8x128xf32>
      %349 = arith.subf %346, %348 : vector<8x128xf32>
      %c392 = arith.constant 392 : index
      %c0_152 = arith.constant 0 : index
      %350 = vector.load %arg3[%c392, %c0_152] : memref<2048x128xf32, #tpu.memory_space<vmem>>, vector<8x128xf32>
      tpu.vector_store %arg3[%c392, %c0_152], %349 {strides = array<i32>} : memref<2048x128xf32, #tpu.memory_space<vmem>>, vector<8x128xf32>,
      %cst_153 = arith.constant 1.980000e+00 : f32
      %351 = vector.broadcast %cst_153 : f32 to vector<8x128xf32>
      %352 = arith.mulf %351, %11 : vector<8x128xf32>
      %353 = arith.mulf %352, %349 : vector<8x128xf32>
      %cst_154 = arith.constant 9.800000e-01 : f32
      %354 = vector.broadcast %cst_154 : f32 to vector<8x128xf32>
      %355 = arith.mulf %354, %342 : vector<8x128xf32>
      %356 = arith.subf %353, %355 : vector<8x128xf32>
      %c400 = arith.constant 400 : index
      %c0_155 = arith.constant 0 : index
      %357 = vector.load %arg3[%c400, %c0_155] : memref<2048x128xf32, #tpu.memory_space<vmem>>, vector<8x128xf32>
      tpu.vector_store %arg3[%c400, %c0_155], %356 {strides = array<i32>} : memref<2048x128xf32, #tpu.memory_space<vmem>>, vector<8x128xf32>,
      %cst_156 = arith.constant 1.9803921 : f32
      %358 = vector.broadcast %cst_156 : f32 to vector<8x128xf32>
      %359 = arith.mulf %358, %11 : vector<8x128xf32>
      %360 = arith.mulf %359, %356 : vector<8x128xf32>
      %cst_157 = arith.constant 0.980392158 : f32
      %361 = vector.broadcast %cst_157 : f32 to vector<8x128xf32>
      %362 = arith.mulf %361, %349 : vector<8x128xf32>
      %363 = arith.subf %360, %362 : vector<8x128xf32>
      %c408 = arith.constant 408 : index
      %c0_158 = arith.constant 0 : index
      %364 = vector.load %arg3[%c408, %c0_158] : memref<2048x128xf32, #tpu.memory_space<vmem>>, vector<8x128xf32>
      tpu.vector_store %arg3[%c408, %c0_158], %363 {strides = array<i32>} : memref<2048x128xf32, #tpu.memory_space<vmem>>, vector<8x128xf32>,
      %cst_159 = arith.constant 1.98076928 : f32
      %365 = vector.broadcast %cst_159 : f32 to vector<8x128xf32>
      %366 = arith.mulf %365, %11 : vector<8x128xf32>
      %367 = arith.mulf %366, %363 : vector<8x128xf32>
      %cst_160 = arith.constant 0.980769217 : f32
      %368 = vector.broadcast %cst_160 : f32 to vector<8x128xf32>
      %369 = arith.mulf %368, %356 : vector<8x128xf32>
      %370 = arith.subf %367, %369 : vector<8x128xf32>
      %c416 = arith.constant 416 : index
      %c0_161 = arith.constant 0 : index
      %371 = vector.load %arg3[%c416, %c0_161] : memref<2048x128xf32, #tpu.memory_space<vmem>>, vector<8x128xf32>
      tpu.vector_store %arg3[%c416, %c0_161], %370 {strides = array<i32>} : memref<2048x128xf32, #tpu.memory_space<vmem>>, vector<8x128xf32>,
      %cst_162 = arith.constant 1.98113203 : f32
      %372 = vector.broadcast %cst_162 : f32 to vector<8x128xf32>
      %373 = arith.mulf %372, %11 : vector<8x128xf32>
      %374 = arith.mulf %373, %370 : vector<8x128xf32>
      %cst_163 = arith.constant 0.98113209 : f32
      %375 = vector.broadcast %cst_163 : f32 to vector<8x128xf32>
      %376 = arith.mulf %375, %363 : vector<8x128xf32>
      %377 = arith.subf %374, %376 : vector<8x128xf32>
      %c424 = arith.constant 424 : index
      %c0_164 = arith.constant 0 : index
      %378 = vector.load %arg3[%c424, %c0_164] : memref<2048x128xf32, #tpu.memory_space<vmem>>, vector<8x128xf32>
      tpu.vector_store %arg3[%c424, %c0_164], %377 {strides = array<i32>} : memref<2048x128xf32, #tpu.memory_space<vmem>>, vector<8x128xf32>,
      %cst_165 = arith.constant 1.98148143 : f32
      %379 = vector.broadcast %cst_165 : f32 to vector<8x128xf32>
      %380 = arith.mulf %379, %11 : vector<8x128xf32>
      %381 = arith.mulf %380, %377 : vector<8x128xf32>
      %cst_166 = arith.constant 0.981481492 : f32
      %382 = vector.broadcast %cst_166 : f32 to vector<8x128xf32>
      %383 = arith.mulf %382, %370 : vector<8x128xf32>
      %384 = arith.subf %381, %383 : vector<8x128xf32>
      %c432 = arith.constant 432 : index
      %c0_167 = arith.constant 0 : index
      %385 = vector.load %arg3[%c432, %c0_167] : memref<2048x128xf32, #tpu.memory_space<vmem>>, vector<8x128xf32>
      tpu.vector_store %arg3[%c432, %c0_167], %384 {strides = array<i32>} : memref<2048x128xf32, #tpu.memory_space<vmem>>, vector<8x128xf32>,
      %cst_168 = arith.constant 1.9818182 : f32
      %386 = vector.broadcast %cst_168 : f32 to vector<8x128xf32>
      %387 = arith.mulf %386, %11 : vector<8x128xf32>
      %388 = arith.mulf %387, %384 : vector<8x128xf32>
      %cst_169 = arith.constant 0.981818199 : f32
      %389 = vector.broadcast %cst_169 : f32 to vector<8x128xf32>
      %390 = arith.mulf %389, %377 : vector<8x128xf32>
      %391 = arith.subf %388, %390 : vector<8x128xf32>
      %c440 = arith.constant 440 : index
      %c0_170 = arith.constant 0 : index
      %392 = vector.load %arg3[%c440, %c0_170] : memref<2048x128xf32, #tpu.memory_space<vmem>>, vector<8x128xf32>
      tpu.vector_store %arg3[%c440, %c0_170], %391 {strides = array<i32>} : memref<2048x128xf32, #tpu.memory_space<vmem>>, vector<8x128xf32>,
      %cst_171 = arith.constant 1.98214281 : f32
      %393 = vector.broadcast %cst_171 : f32 to vector<8x128xf32>
      %394 = arith.mulf %393, %11 : vector<8x128xf32>
      %395 = arith.mulf %394, %391 : vector<8x128xf32>
      %cst_172 = arith.constant 0.982142865 : f32
      %396 = vector.broadcast %cst_172 : f32 to vector<8x128xf32>
      %397 = arith.mulf %396, %384 : vector<8x128xf32>
      %398 = arith.subf %395, %397 : vector<8x128xf32>
      %c448 = arith.constant 448 : index
      %c0_173 = arith.constant 0 : index
      %399 = vector.load %arg3[%c448, %c0_173] : memref<2048x128xf32, #tpu.memory_space<vmem>>, vector<8x128xf32>
      tpu.vector_store %arg3[%c448, %c0_173], %398 {strides = array<i32>} : memref<2048x128xf32, #tpu.memory_space<vmem>>, vector<8x128xf32>,
      %cst_174 = arith.constant 1.98245609 : f32
      %400 = vector.broadcast %cst_174 : f32 to vector<8x128xf32>
      %401 = arith.mulf %400, %11 : vector<8x128xf32>
      %402 = arith.mulf %401, %398 : vector<8x128xf32>
      %cst_175 = arith.constant 0.982456147 : f32
      %403 = vector.broadcast %cst_175 : f32 to vector<8x128xf32>
      %404 = arith.mulf %403, %391 : vector<8x128xf32>
      %405 = arith.subf %402, %404 : vector<8x128xf32>
      %c456 = arith.constant 456 : index
      %c0_176 = arith.constant 0 : index
      %406 = vector.load %arg3[%c456, %c0_176] : memref<2048x128xf32, #tpu.memory_space<vmem>>, vector<8x128xf32>
      tpu.vector_store %arg3[%c456, %c0_176], %405 {strides = array<i32>} : memref<2048x128xf32, #tpu.memory_space<vmem>>, vector<8x128xf32>,
      %cst_177 = arith.constant 1.98275864 : f32
      %407 = vector.broadcast %cst_177 : f32 to vector<8x128xf32>
      %408 = arith.mulf %407, %11 : vector<8x128xf32>
      %409 = arith.mulf %408, %405 : vector<8x128xf32>
      %cst_178 = arith.constant 0.982758641 : f32
      %410 = vector.broadcast %cst_178 : f32 to vector<8x128xf32>
      %411 = arith.mulf %410, %398 : vector<8x128xf32>
      %412 = arith.subf %409, %411 : vector<8x128xf32>
      %c464 = arith.constant 464 : index
      %c0_179 = arith.constant 0 : index
      %413 = vector.load %arg3[%c464, %c0_179] : memref<2048x128xf32, #tpu.memory_space<vmem>>, vector<8x128xf32>
      tpu.vector_store %arg3[%c464, %c0_179], %412 {strides = array<i32>} : memref<2048x128xf32, #tpu.memory_space<vmem>>, vector<8x128xf32>,
      %cst_180 = arith.constant 1.98305082 : f32
      %414 = vector.broadcast %cst_180 : f32 to vector<8x128xf32>
      %415 = arith.mulf %414, %11 : vector<8x128xf32>
      %416 = arith.mulf %415, %412 : vector<8x128xf32>
      %cst_181 = arith.constant 0.983050823 : f32
      %417 = vector.broadcast %cst_181 : f32 to vector<8x128xf32>
      %418 = arith.mulf %417, %405 : vector<8x128xf32>
      %419 = arith.subf %416, %418 : vector<8x128xf32>
      %c472 = arith.constant 472 : index
      %c0_182 = arith.constant 0 : index
      %420 = vector.load %arg3[%c472, %c0_182] : memref<2048x128xf32, #tpu.memory_space<vmem>>, vector<8x128xf32>
      tpu.vector_store %arg3[%c472, %c0_182], %419 {strides = array<i32>} : memref<2048x128xf32, #tpu.memory_space<vmem>>, vector<8x128xf32>,
      %cst_183 = arith.constant 1.98333335 : f32
      %421 = vector.broadcast %cst_183 : f32 to vector<8x128xf32>
      %422 = arith.mulf %421, %11 : vector<8x128xf32>
      %423 = arith.mulf %422, %419 : vector<8x128xf32>
      %cst_184 = arith.constant 0.983333349 : f32
      %424 = vector.broadcast %cst_184 : f32 to vector<8x128xf32>
      %425 = arith.mulf %424, %412 : vector<8x128xf32>
      %426 = arith.subf %423, %425 : vector<8x128xf32>
      %c480 = arith.constant 480 : index
      %c0_185 = arith.constant 0 : index
      %427 = vector.load %arg3[%c480, %c0_185] : memref<2048x128xf32, #tpu.memory_space<vmem>>, vector<8x128xf32>
      tpu.vector_store %arg3[%c480, %c0_185], %426 {strides = array<i32>} : memref<2048x128xf32, #tpu.memory_space<vmem>>, vector<8x128xf32>,
      %cst_186 = arith.constant 1.98360658 : f32
      %428 = vector.broadcast %cst_186 : f32 to vector<8x128xf32>
      %429 = arith.mulf %428, %11 : vector<8x128xf32>
      %430 = arith.mulf %429, %426 : vector<8x128xf32>
      %cst_187 = arith.constant 0.983606576 : f32
      %431 = vector.broadcast %cst_187 : f32 to vector<8x128xf32>
      %432 = arith.mulf %431, %419 : vector<8x128xf32>
      %433 = arith.subf %430, %432 : vector<8x128xf32>
      %c488 = arith.constant 488 : index
      %c0_188 = arith.constant 0 : index
      %434 = vector.load %arg3[%c488, %c0_188] : memref<2048x128xf32, #tpu.memory_space<vmem>>, vector<8x128xf32>
      tpu.vector_store %arg3[%c488, %c0_188], %433 {strides = array<i32>} : memref<2048x128xf32, #tpu.memory_space<vmem>>, vector<8x128xf32>,
      %cst_189 = arith.constant 1.98387098 : f32
      %435 = vector.broadcast %cst_189 : f32 to vector<8x128xf32>
      %436 = arith.mulf %435, %11 : vector<8x128xf32>
      %437 = arith.mulf %436, %433 : vector<8x128xf32>
      %cst_190 = arith.constant 0.983870983 : f32
      %438 = vector.broadcast %cst_190 : f32 to vector<8x128xf32>
      %439 = arith.mulf %438, %426 : vector<8x128xf32>
      %440 = arith.subf %437, %439 : vector<8x128xf32>
      %c496 = arith.constant 496 : index
      %c0_191 = arith.constant 0 : index
      %441 = vector.load %arg3[%c496, %c0_191] : memref<2048x128xf32, #tpu.memory_space<vmem>>, vector<8x128xf32>
      tpu.vector_store %arg3[%c496, %c0_191], %440 {strides = array<i32>} : memref<2048x128xf32, #tpu.memory_space<vmem>>, vector<8x128xf32>,
      %cst_192 = arith.constant 1.98412693 : f32
      %442 = vector.broadcast %cst_192 : f32 to vector<8x128xf32>
      %443 = arith.mulf %442, %11 : vector<8x128xf32>
      %444 = arith.mulf %443, %440 : vector<8x128xf32>
      %cst_193 = arith.constant 0.984126985 : f32
      %445 = vector.broadcast %cst_193 : f32 to vector<8x128xf32>
      %446 = arith.mulf %445, %433 : vector<8x128xf32>
      %447 = arith.subf %444, %446 : vector<8x128xf32>
      %c504 = arith.constant 504 : index
      %c0_194 = arith.constant 0 : index
      %448 = vector.load %arg3[%c504, %c0_194] : memref<2048x128xf32, #tpu.memory_space<vmem>>, vector<8x128xf32>
      tpu.vector_store %arg3[%c504, %c0_194], %447 {strides = array<i32>} : memref<2048x128xf32, #tpu.memory_space<vmem>>, vector<8x128xf32>,
      %cst_195 = arith.constant 1.984375 : f32
      %449 = vector.broadcast %cst_195 : f32 to vector<8x128xf32>
      %450 = arith.mulf %449, %11 : vector<8x128xf32>
      %451 = arith.mulf %450, %447 : vector<8x128xf32>
      %cst_196 = arith.constant 9.843750e-01 : f32
      %452 = vector.broadcast %cst_196 : f32 to vector<8x128xf32>
      %453 = arith.mulf %452, %440 : vector<8x128xf32>
      %454 = arith.subf %451, %453 : vector<8x128xf32>
      %c512 = arith.constant 512 : index
      %c0_197 = arith.constant 0 : index
      %455 = vector.load %arg3[%c512, %c0_197] : memref<2048x128xf32, #tpu.memory_space<vmem>>, vector<8x128xf32>
      tpu.vector_store %arg3[%c512, %c0_197], %454 {strides = array<i32>} : memref<2048x128xf32, #tpu.memory_space<vmem>>, vector<8x128xf32>,
      %cst_198 = arith.constant 1.98461533 : f32
      %456 = vector.broadcast %cst_198 : f32 to vector<8x128xf32>
      %457 = arith.mulf %456, %11 : vector<8x128xf32>
      %458 = arith.mulf %457, %454 : vector<8x128xf32>
      %cst_199 = arith.constant 0.984615385 : f32
      %459 = vector.broadcast %cst_199 : f32 to vector<8x128xf32>
      %460 = arith.mulf %459, %447 : vector<8x128xf32>
      %461 = arith.subf %458, %460 : vector<8x128xf32>
      %c520 = arith.constant 520 : index
      %c0_200 = arith.constant 0 : index
      %462 = vector.load %arg3[%c520, %c0_200] : memref<2048x128xf32, #tpu.memory_space<vmem>>, vector<8x128xf32>
      tpu.vector_store %arg3[%c520, %c0_200], %461 {strides = array<i32>} : memref<2048x128xf32, #tpu.memory_space<vmem>>, vector<8x128xf32>,
      %cst_201 = arith.constant 1.9848485 : f32
      %463 = vector.broadcast %cst_201 : f32 to vector<8x128xf32>
      %464 = arith.mulf %463, %11 : vector<8x128xf32>
      %465 = arith.mulf %464, %461 : vector<8x128xf32>
      %cst_202 = arith.constant 0.984848499 : f32
      %466 = vector.broadcast %cst_202 : f32 to vector<8x128xf32>
      %467 = arith.mulf %466, %454 : vector<8x128xf32>
      %468 = arith.subf %465, %467 : vector<8x128xf32>
      %c528 = arith.constant 528 : index
      %c0_203 = arith.constant 0 : index
      %469 = vector.load %arg3[%c528, %c0_203] : memref<2048x128xf32, #tpu.memory_space<vmem>>, vector<8x128xf32>
      tpu.vector_store %arg3[%c528, %c0_203], %468 {strides = array<i32>} : memref<2048x128xf32, #tpu.memory_space<vmem>>, vector<8x128xf32>,
      %cst_204 = arith.constant 1.98507464 : f32
      %470 = vector.broadcast %cst_204 : f32 to vector<8x128xf32>
      %471 = arith.mulf %470, %11 : vector<8x128xf32>
      %472 = arith.mulf %471, %468 : vector<8x128xf32>
      %cst_205 = arith.constant 0.985074639 : f32
      %473 = vector.broadcast %cst_205 : f32 to vector<8x128xf32>
      %474 = arith.mulf %473, %461 : vector<8x128xf32>
      %475 = arith.subf %472, %474 : vector<8x128xf32>
      %c536 = arith.constant 536 : index
      %c0_206 = arith.constant 0 : index
      %476 = vector.load %arg3[%c536, %c0_206] : memref<2048x128xf32, #tpu.memory_space<vmem>>, vector<8x128xf32>
      tpu.vector_store %arg3[%c536, %c0_206], %475 {strides = array<i32>} : memref<2048x128xf32, #tpu.memory_space<vmem>>, vector<8x128xf32>,
      %cst_207 = arith.constant 1.9852941 : f32
      %477 = vector.broadcast %cst_207 : f32 to vector<8x128xf32>
      %478 = arith.mulf %477, %11 : vector<8x128xf32>
      %479 = arith.mulf %478, %475 : vector<8x128xf32>
      %cst_208 = arith.constant 0.985294103 : f32
      %480 = vector.broadcast %cst_208 : f32 to vector<8x128xf32>
      %481 = arith.mulf %480, %468 : vector<8x128xf32>
      %482 = arith.subf %479, %481 : vector<8x128xf32>
      %c544 = arith.constant 544 : index
      %c0_209 = arith.constant 0 : index
      %483 = vector.load %arg3[%c544, %c0_209] : memref<2048x128xf32, #tpu.memory_space<vmem>>, vector<8x128xf32>
      tpu.vector_store %arg3[%c544, %c0_209], %482 {strides = array<i32>} : memref<2048x128xf32, #tpu.memory_space<vmem>>, vector<8x128xf32>,
      %cst_210 = arith.constant 1.98550725 : f32
      %484 = vector.broadcast %cst_210 : f32 to vector<8x128xf32>
      %485 = arith.mulf %484, %11 : vector<8x128xf32>
      %486 = arith.mulf %485, %482 : vector<8x128xf32>
      %cst_211 = arith.constant 0.985507249 : f32
      %487 = vector.broadcast %cst_211 : f32 to vector<8x128xf32>
      %488 = arith.mulf %487, %475 : vector<8x128xf32>
      %489 = arith.subf %486, %488 : vector<8x128xf32>
      %c552 = arith.constant 552 : index
      %c0_212 = arith.constant 0 : index
      %490 = vector.load %arg3[%c552, %c0_212] : memref<2048x128xf32, #tpu.memory_space<vmem>>, vector<8x128xf32>
      tpu.vector_store %arg3[%c552, %c0_212], %489 {strides = array<i32>} : memref<2048x128xf32, #tpu.memory_space<vmem>>, vector<8x128xf32>,
      %cst_213 = arith.constant 1.98571432 : f32
      %491 = vector.broadcast %cst_213 : f32 to vector<8x128xf32>
      %492 = arith.mulf %491, %11 : vector<8x128xf32>
      %493 = arith.mulf %492, %489 : vector<8x128xf32>
      %cst_214 = arith.constant 0.985714256 : f32
      %494 = vector.broadcast %cst_214 : f32 to vector<8x128xf32>
      %495 = arith.mulf %494, %482 : vector<8x128xf32>
      %496 = arith.subf %493, %495 : vector<8x128xf32>
      %c560 = arith.constant 560 : index
      %c0_215 = arith.constant 0 : index
      %497 = vector.load %arg3[%c560, %c0_215] : memref<2048x128xf32, #tpu.memory_space<vmem>>, vector<8x128xf32>
      tpu.vector_store %arg3[%c560, %c0_215], %496 {strides = array<i32>} : memref<2048x128xf32, #tpu.memory_space<vmem>>, vector<8x128xf32>,
      %cst_216 = arith.constant 1.98591554 : f32
      %498 = vector.broadcast %cst_216 : f32 to vector<8x128xf32>
      %499 = arith.mulf %498, %11 : vector<8x128xf32>
      %500 = arith.mulf %499, %496 : vector<8x128xf32>
      %cst_217 = arith.constant 0.985915482 : f32
      %501 = vector.broadcast %cst_217 : f32 to vector<8x128xf32>
      %502 = arith.mulf %501, %489 : vector<8x128xf32>
      %503 = arith.subf %500, %502 : vector<8x128xf32>
      %c568 = arith.constant 568 : index
      %c0_218 = arith.constant 0 : index
      %504 = vector.load %arg3[%c568, %c0_218] : memref<2048x128xf32, #tpu.memory_space<vmem>>, vector<8x128xf32>
      tpu.vector_store %arg3[%c568, %c0_218], %503 {strides = array<i32>} : memref<2048x128xf32, #tpu.memory_space<vmem>>, vector<8x128xf32>,
      %cst_219 = arith.constant 1.98611116 : f32
      %505 = vector.broadcast %cst_219 : f32 to vector<8x128xf32>
      %506 = arith.mulf %505, %11 : vector<8x128xf32>
      %507 = arith.mulf %506, %503 : vector<8x128xf32>
      %cst_220 = arith.constant 0.986111104 : f32
      %508 = vector.broadcast %cst_220 : f32 to vector<8x128xf32>
      %509 = arith.mulf %508, %496 : vector<8x128xf32>
      %510 = arith.subf %507, %509 : vector<8x128xf32>
      %c576 = arith.constant 576 : index
      %c0_221 = arith.constant 0 : index
      %511 = vector.load %arg3[%c576, %c0_221] : memref<2048x128xf32, #tpu.memory_space<vmem>>, vector<8x128xf32>
      tpu.vector_store %arg3[%c576, %c0_221], %510 {strides = array<i32>} : memref<2048x128xf32, #tpu.memory_space<vmem>>, vector<8x128xf32>,
      %cst_222 = arith.constant 1.98630142 : f32
      %512 = vector.broadcast %cst_222 : f32 to vector<8x128xf32>
      %513 = arith.mulf %512, %11 : vector<8x128xf32>
      %514 = arith.mulf %513, %510 : vector<8x128xf32>
      %cst_223 = arith.constant 0.986301362 : f32
      %515 = vector.broadcast %cst_223 : f32 to vector<8x128xf32>
      %516 = arith.mulf %515, %503 : vector<8x128xf32>
      %517 = arith.subf %514, %516 : vector<8x128xf32>
      %c584 = arith.constant 584 : index
      %c0_224 = arith.constant 0 : index
      %518 = vector.load %arg3[%c584, %c0_224] : memref<2048x128xf32, #tpu.memory_space<vmem>>, vector<8x128xf32>
      tpu.vector_store %arg3[%c584, %c0_224], %517 {strides = array<i32>} : memref<2048x128xf32, #tpu.memory_space<vmem>>, vector<8x128xf32>,
      %cst_225 = arith.constant 1.98648643 : f32
      %519 = vector.broadcast %cst_225 : f32 to vector<8x128xf32>
      %520 = arith.mulf %519, %11 : vector<8x128xf32>
      %521 = arith.mulf %520, %517 : vector<8x128xf32>
      %cst_226 = arith.constant 0.986486494 : f32
      %522 = vector.broadcast %cst_226 : f32 to vector<8x128xf32>
      %523 = arith.mulf %522, %510 : vector<8x128xf32>
      %524 = arith.subf %521, %523 : vector<8x128xf32>
      %c592 = arith.constant 592 : index
      %c0_227 = arith.constant 0 : index
      %525 = vector.load %arg3[%c592, %c0_227] : memref<2048x128xf32, #tpu.memory_space<vmem>>, vector<8x128xf32>
      tpu.vector_store %arg3[%c592, %c0_227], %524 {strides = array<i32>} : memref<2048x128xf32, #tpu.memory_space<vmem>>, vector<8x128xf32>,
      %cst_228 = arith.constant 1.98666668 : f32
      %526 = vector.broadcast %cst_228 : f32 to vector<8x128xf32>
      %527 = arith.mulf %526, %11 : vector<8x128xf32>
      %528 = arith.mulf %527, %524 : vector<8x128xf32>
      %cst_229 = arith.constant 0.986666679 : f32
      %529 = vector.broadcast %cst_229 : f32 to vector<8x128xf32>
      %530 = arith.mulf %529, %517 : vector<8x128xf32>
      %531 = arith.subf %528, %530 : vector<8x128xf32>
      %c600 = arith.constant 600 : index
      %c0_230 = arith.constant 0 : index
      %532 = vector.load %arg3[%c600, %c0_230] : memref<2048x128xf32, #tpu.memory_space<vmem>>, vector<8x128xf32>
      tpu.vector_store %arg3[%c600, %c0_230], %531 {strides = array<i32>} : memref<2048x128xf32, #tpu.memory_space<vmem>>, vector<8x128xf32>,
      %cst_231 = arith.constant 1.98684216 : f32
      %533 = vector.broadcast %cst_231 : f32 to vector<8x128xf32>
      %534 = arith.mulf %533, %11 : vector<8x128xf32>
      %535 = arith.mulf %534, %531 : vector<8x128xf32>
      %cst_232 = arith.constant 0.986842095 : f32
      %536 = vector.broadcast %cst_232 : f32 to vector<8x128xf32>
      %537 = arith.mulf %536, %524 : vector<8x128xf32>
      %538 = arith.subf %535, %537 : vector<8x128xf32>
      %c608 = arith.constant 608 : index
      %c0_233 = arith.constant 0 : index
      %539 = vector.load %arg3[%c608, %c0_233] : memref<2048x128xf32, #tpu.memory_space<vmem>>, vector<8x128xf32>
      tpu.vector_store %arg3[%c608, %c0_233], %538 {strides = array<i32>} : memref<2048x128xf32, #tpu.memory_space<vmem>>, vector<8x128xf32>,
      %cst_234 = arith.constant 1.98701298 : f32
      %540 = vector.broadcast %cst_234 : f32 to vector<8x128xf32>
      %541 = arith.mulf %540, %11 : vector<8x128xf32>
      %542 = arith.mulf %541, %538 : vector<8x128xf32>
      %cst_235 = arith.constant 0.987012982 : f32
      %543 = vector.broadcast %cst_235 : f32 to vector<8x128xf32>
      %544 = arith.mulf %543, %531 : vector<8x128xf32>
      %545 = arith.subf %542, %544 : vector<8x128xf32>
      %c616 = arith.constant 616 : index
      %c0_236 = arith.constant 0 : index
      %546 = vector.load %arg3[%c616, %c0_236] : memref<2048x128xf32, #tpu.memory_space<vmem>>, vector<8x128xf32>
      tpu.vector_store %arg3[%c616, %c0_236], %545 {strides = array<i32>} : memref<2048x128xf32, #tpu.memory_space<vmem>>, vector<8x128xf32>,
      %cst_237 = arith.constant 1.98717952 : f32
      %547 = vector.broadcast %cst_237 : f32 to vector<8x128xf32>
      %548 = arith.mulf %547, %11 : vector<8x128xf32>
      %549 = arith.mulf %548, %545 : vector<8x128xf32>
      %cst_238 = arith.constant 0.987179458 : f32
      %550 = vector.broadcast %cst_238 : f32 to vector<8x128xf32>
      %551 = arith.mulf %550, %538 : vector<8x128xf32>
      %552 = arith.subf %549, %551 : vector<8x128xf32>
      %c624 = arith.constant 624 : index
      %c0_239 = arith.constant 0 : index
      %553 = vector.load %arg3[%c624, %c0_239] : memref<2048x128xf32, #tpu.memory_space<vmem>>, vector<8x128xf32>
      tpu.vector_store %arg3[%c624, %c0_239], %552 {strides = array<i32>} : memref<2048x128xf32, #tpu.memory_space<vmem>>, vector<8x128xf32>,
      %cst_240 = arith.constant 1.98734176 : f32
      %554 = vector.broadcast %cst_240 : f32 to vector<8x128xf32>
      %555 = arith.mulf %554, %11 : vector<8x128xf32>
      %556 = arith.mulf %555, %552 : vector<8x128xf32>
      %cst_241 = arith.constant 0.987341761 : f32
      %557 = vector.broadcast %cst_241 : f32 to vector<8x128xf32>
      %558 = arith.mulf %557, %545 : vector<8x128xf32>
      %559 = arith.subf %556, %558 : vector<8x128xf32>
      %c632 = arith.constant 632 : index
      %c0_242 = arith.constant 0 : index
      %560 = vector.load %arg3[%c632, %c0_242] : memref<2048x128xf32, #tpu.memory_space<vmem>>, vector<8x128xf32>
      tpu.vector_store %arg3[%c632, %c0_242], %559 {strides = array<i32>} : memref<2048x128xf32, #tpu.memory_space<vmem>>, vector<8x128xf32>,
      %cst_243 = arith.constant 1.987500e+00 : f32
      %561 = vector.broadcast %cst_243 : f32 to vector<8x128xf32>
      %562 = arith.mulf %561, %11 : vector<8x128xf32>
      %563 = arith.mulf %562, %559 : vector<8x128xf32>
      %cst_244 = arith.constant 9.875000e-01 : f32
      %564 = vector.broadcast %cst_244 : f32 to vector<8x128xf32>
      %565 = arith.mulf %564, %552 : vector<8x128xf32>
      %566 = arith.subf %563, %565 : vector<8x128xf32>
      %c640 = arith.constant 640 : index
      %c0_245 = arith.constant 0 : index
      %567 = vector.load %arg3[%c640, %c0_245] : memref<2048x128xf32, #tpu.memory_space<vmem>>, vector<8x128xf32>
      tpu.vector_store %arg3[%c640, %c0_245], %566 {strides = array<i32>} : memref<2048x128xf32, #tpu.memory_space<vmem>>, vector<8x128xf32>,
      %cst_246 = arith.constant 1.98765433 : f32
      %568 = vector.broadcast %cst_246 : f32 to vector<8x128xf32>
      %569 = arith.mulf %568, %11 : vector<8x128xf32>
      %570 = arith.mulf %569, %566 : vector<8x128xf32>
      %cst_247 = arith.constant 0.987654328 : f32
      %571 = vector.broadcast %cst_247 : f32 to vector<8x128xf32>
      %572 = arith.mulf %571, %559 : vector<8x128xf32>
      %573 = arith.subf %570, %572 : vector<8x128xf32>
      %c648 = arith.constant 648 : index
      %c0_248 = arith.constant 0 : index
      %574 = vector.load %arg3[%c648, %c0_248] : memref<2048x128xf32, #tpu.memory_space<vmem>>, vector<8x128xf32>
      tpu.vector_store %arg3[%c648, %c0_248], %573 {strides = array<i32>} : memref<2048x128xf32, #tpu.memory_space<vmem>>, vector<8x128xf32>,
      %cst_249 = arith.constant 1.98780489 : f32
      %575 = vector.broadcast %cst_249 : f32 to vector<8x128xf32>
      %576 = arith.mulf %575, %11 : vector<8x128xf32>
      %577 = arith.mulf %576, %573 : vector<8x128xf32>
      %cst_250 = arith.constant 0.987804889 : f32
      %578 = vector.broadcast %cst_250 : f32 to vector<8x128xf32>
      %579 = arith.mulf %578, %566 : vector<8x128xf32>
      %580 = arith.subf %577, %579 : vector<8x128xf32>
      %c656 = arith.constant 656 : index
      %c0_251 = arith.constant 0 : index
      %581 = vector.load %arg3[%c656, %c0_251] : memref<2048x128xf32, #tpu.memory_space<vmem>>, vector<8x128xf32>
      tpu.vector_store %arg3[%c656, %c0_251], %580 {strides = array<i32>} : memref<2048x128xf32, #tpu.memory_space<vmem>>, vector<8x128xf32>,
      %cst_252 = arith.constant 1.98795176 : f32
      %582 = vector.broadcast %cst_252 : f32 to vector<8x128xf32>
      %583 = arith.mulf %582, %11 : vector<8x128xf32>
      %584 = arith.mulf %583, %580 : vector<8x128xf32>
      %cst_253 = arith.constant 0.987951815 : f32
      %585 = vector.broadcast %cst_253 : f32 to vector<8x128xf32>
      %586 = arith.mulf %585, %573 : vector<8x128xf32>
      %587 = arith.subf %584, %586 : vector<8x128xf32>
      %c664 = arith.constant 664 : index
      %c0_254 = arith.constant 0 : index
      %588 = vector.load %arg3[%c664, %c0_254] : memref<2048x128xf32, #tpu.memory_space<vmem>>, vector<8x128xf32>
      tpu.vector_store %arg3[%c664, %c0_254], %587 {strides = array<i32>} : memref<2048x128xf32, #tpu.memory_space<vmem>>, vector<8x128xf32>,
      %cst_255 = arith.constant 1.98809528 : f32
      %589 = vector.broadcast %cst_255 : f32 to vector<8x128xf32>
      %590 = arith.mulf %589, %11 : vector<8x128xf32>
      %591 = arith.mulf %590, %587 : vector<8x128xf32>
      %cst_256 = arith.constant 0.988095223 : f32
      %592 = vector.broadcast %cst_256 : f32 to vector<8x128xf32>
      %593 = arith.mulf %592, %580 : vector<8x128xf32>
      %594 = arith.subf %591, %593 : vector<8x128xf32>
      %c672 = arith.constant 672 : index
      %c0_257 = arith.constant 0 : index
      %595 = vector.load %arg3[%c672, %c0_257] : memref<2048x128xf32, #tpu.memory_space<vmem>>, vector<8x128xf32>
      tpu.vector_store %arg3[%c672, %c0_257], %594 {strides = array<i32>} : memref<2048x128xf32, #tpu.memory_space<vmem>>, vector<8x128xf32>,
      %cst_258 = arith.constant 1.98823524 : f32
      %596 = vector.broadcast %cst_258 : f32 to vector<8x128xf32>
      %597 = arith.mulf %596, %11 : vector<8x128xf32>
      %598 = arith.mulf %597, %594 : vector<8x128xf32>
      %cst_259 = arith.constant 0.988235294 : f32
      %599 = vector.broadcast %cst_259 : f32 to vector<8x128xf32>
      %600 = arith.mulf %599, %587 : vector<8x128xf32>
      %601 = arith.subf %598, %600 : vector<8x128xf32>
      %c680 = arith.constant 680 : index
      %c0_260 = arith.constant 0 : index
      %602 = vector.load %arg3[%c680, %c0_260] : memref<2048x128xf32, #tpu.memory_space<vmem>>, vector<8x128xf32>
      tpu.vector_store %arg3[%c680, %c0_260], %601 {strides = array<i32>} : memref<2048x128xf32, #tpu.memory_space<vmem>>, vector<8x128xf32>,
      %cst_261 = arith.constant 1.98837209 : f32
      %603 = vector.broadcast %cst_261 : f32 to vector<8x128xf32>
      %604 = arith.mulf %603, %11 : vector<8x128xf32>
      %605 = arith.mulf %604, %601 : vector<8x128xf32>
      %cst_262 = arith.constant 0.988372087 : f32
      %606 = vector.broadcast %cst_262 : f32 to vector<8x128xf32>
      %607 = arith.mulf %606, %594 : vector<8x128xf32>
      %608 = arith.subf %605, %607 : vector<8x128xf32>
      %c688 = arith.constant 688 : index
      %c0_263 = arith.constant 0 : index
      %609 = vector.load %arg3[%c688, %c0_263] : memref<2048x128xf32, #tpu.memory_space<vmem>>, vector<8x128xf32>
      tpu.vector_store %arg3[%c688, %c0_263], %608 {strides = array<i32>} : memref<2048x128xf32, #tpu.memory_space<vmem>>, vector<8x128xf32>,
      %cst_264 = arith.constant 1.98850572 : f32
      %610 = vector.broadcast %cst_264 : f32 to vector<8x128xf32>
      %611 = arith.mulf %610, %11 : vector<8x128xf32>
      %612 = arith.mulf %611, %608 : vector<8x128xf32>
      %cst_265 = arith.constant 0.988505721 : f32
      %613 = vector.broadcast %cst_265 : f32 to vector<8x128xf32>
      %614 = arith.mulf %613, %601 : vector<8x128xf32>
      %615 = arith.subf %612, %614 : vector<8x128xf32>
      %c696 = arith.constant 696 : index
      %c0_266 = arith.constant 0 : index
      %616 = vector.load %arg3[%c696, %c0_266] : memref<2048x128xf32, #tpu.memory_space<vmem>>, vector<8x128xf32>
      tpu.vector_store %arg3[%c696, %c0_266], %615 {strides = array<i32>} : memref<2048x128xf32, #tpu.memory_space<vmem>>, vector<8x128xf32>,
      %cst_267 = arith.constant 1.98863637 : f32
      %617 = vector.broadcast %cst_267 : f32 to vector<8x128xf32>
      %618 = arith.mulf %617, %11 : vector<8x128xf32>
      %619 = arith.mulf %618, %615 : vector<8x128xf32>
      %cst_268 = arith.constant 0.988636374 : f32
      %620 = vector.broadcast %cst_268 : f32 to vector<8x128xf32>
      %621 = arith.mulf %620, %608 : vector<8x128xf32>
      %622 = arith.subf %619, %621 : vector<8x128xf32>
      %c704 = arith.constant 704 : index
      %c0_269 = arith.constant 0 : index
      %623 = vector.load %arg3[%c704, %c0_269] : memref<2048x128xf32, #tpu.memory_space<vmem>>, vector<8x128xf32>
      tpu.vector_store %arg3[%c704, %c0_269], %622 {strides = array<i32>} : memref<2048x128xf32, #tpu.memory_space<vmem>>, vector<8x128xf32>,
      %cst_270 = arith.constant 1.98876405 : f32
      %624 = vector.broadcast %cst_270 : f32 to vector<8x128xf32>
      %625 = arith.mulf %624, %11 : vector<8x128xf32>
      %626 = arith.mulf %625, %622 : vector<8x128xf32>
      %cst_271 = arith.constant 0.988764047 : f32
      %627 = vector.broadcast %cst_271 : f32 to vector<8x128xf32>
      %628 = arith.mulf %627, %615 : vector<8x128xf32>
      %629 = arith.subf %626, %628 : vector<8x128xf32>
      %c712 = arith.constant 712 : index
      %c0_272 = arith.constant 0 : index
      %630 = vector.load %arg3[%c712, %c0_272] : memref<2048x128xf32, #tpu.memory_space<vmem>>, vector<8x128xf32>
      tpu.vector_store %arg3[%c712, %c0_272], %629 {strides = array<i32>} : memref<2048x128xf32, #tpu.memory_space<vmem>>, vector<8x128xf32>,
      %cst_273 = arith.constant 1.98888886 : f32
      %631 = vector.broadcast %cst_273 : f32 to vector<8x128xf32>
      %632 = arith.mulf %631, %11 : vector<8x128xf32>
      %633 = arith.mulf %632, %629 : vector<8x128xf32>
      %cst_274 = arith.constant 0.988888859 : f32
      %634 = vector.broadcast %cst_274 : f32 to vector<8x128xf32>
      %635 = arith.mulf %634, %622 : vector<8x128xf32>
      %636 = arith.subf %633, %635 : vector<8x128xf32>
      %c720 = arith.constant 720 : index
      %c0_275 = arith.constant 0 : index
      %637 = vector.load %arg3[%c720, %c0_275] : memref<2048x128xf32, #tpu.memory_space<vmem>>, vector<8x128xf32>
      tpu.vector_store %arg3[%c720, %c0_275], %636 {strides = array<i32>} : memref<2048x128xf32, #tpu.memory_space<vmem>>, vector<8x128xf32>,
      %cst_276 = arith.constant 1.98901093 : f32
      %638 = vector.broadcast %cst_276 : f32 to vector<8x128xf32>
      %639 = arith.mulf %638, %11 : vector<8x128xf32>
      %640 = arith.mulf %639, %636 : vector<8x128xf32>
      %cst_277 = arith.constant 0.989010989 : f32
      %641 = vector.broadcast %cst_277 : f32 to vector<8x128xf32>
      %642 = arith.mulf %641, %629 : vector<8x128xf32>
      %643 = arith.subf %640, %642 : vector<8x128xf32>
      %c728 = arith.constant 728 : index
      %c0_278 = arith.constant 0 : index
      %644 = vector.load %arg3[%c728, %c0_278] : memref<2048x128xf32, #tpu.memory_space<vmem>>, vector<8x128xf32>
      tpu.vector_store %arg3[%c728, %c0_278], %643 {strides = array<i32>} : memref<2048x128xf32, #tpu.memory_space<vmem>>, vector<8x128xf32>,
      %cst_279 = arith.constant 1.98913038 : f32
      %645 = vector.broadcast %cst_279 : f32 to vector<8x128xf32>
      %646 = arith.mulf %645, %11 : vector<8x128xf32>
      %647 = arith.mulf %646, %643 : vector<8x128xf32>
      %cst_280 = arith.constant 0.989130437 : f32
      %648 = vector.broadcast %cst_280 : f32 to vector<8x128xf32>
      %649 = arith.mulf %648, %636 : vector<8x128xf32>
      %650 = arith.subf %647, %649 : vector<8x128xf32>
      %c736 = arith.constant 736 : index
      %c0_281 = arith.constant 0 : index
      %651 = vector.load %arg3[%c736, %c0_281] : memref<2048x128xf32, #tpu.memory_space<vmem>>, vector<8x128xf32>
      tpu.vector_store %arg3[%c736, %c0_281], %650 {strides = array<i32>} : memref<2048x128xf32, #tpu.memory_space<vmem>>, vector<8x128xf32>,
      %cst_282 = arith.constant 1.98924732 : f32
      %652 = vector.broadcast %cst_282 : f32 to vector<8x128xf32>
      %653 = arith.mulf %652, %11 : vector<8x128xf32>
      %654 = arith.mulf %653, %650 : vector<8x128xf32>
      %cst_283 = arith.constant 0.989247322 : f32
      %655 = vector.broadcast %cst_283 : f32 to vector<8x128xf32>
      %656 = arith.mulf %655, %643 : vector<8x128xf32>
      %657 = arith.subf %654, %656 : vector<8x128xf32>
      %c744 = arith.constant 744 : index
      %c0_284 = arith.constant 0 : index
      %658 = vector.load %arg3[%c744, %c0_284] : memref<2048x128xf32, #tpu.memory_space<vmem>>, vector<8x128xf32>
      tpu.vector_store %arg3[%c744, %c0_284], %657 {strides = array<i32>} : memref<2048x128xf32, #tpu.memory_space<vmem>>, vector<8x128xf32>,
      %cst_285 = arith.constant 1.98936164 : f32
      %659 = vector.broadcast %cst_285 : f32 to vector<8x128xf32>
      %660 = arith.mulf %659, %11 : vector<8x128xf32>
      %661 = arith.mulf %660, %657 : vector<8x128xf32>
      %cst_286 = arith.constant 0.989361703 : f32
      %662 = vector.broadcast %cst_286 : f32 to vector<8x128xf32>
      %663 = arith.mulf %662, %650 : vector<8x128xf32>
      %664 = arith.subf %661, %663 : vector<8x128xf32>
      %c752 = arith.constant 752 : index
      %c0_287 = arith.constant 0 : index
      %665 = vector.load %arg3[%c752, %c0_287] : memref<2048x128xf32, #tpu.memory_space<vmem>>, vector<8x128xf32>
      tpu.vector_store %arg3[%c752, %c0_287], %664 {strides = array<i32>} : memref<2048x128xf32, #tpu.memory_space<vmem>>, vector<8x128xf32>,
      %cst_288 = arith.constant 1.9894737 : f32
      %666 = vector.broadcast %cst_288 : f32 to vector<8x128xf32>
      %667 = arith.mulf %666, %11 : vector<8x128xf32>
      %668 = arith.mulf %667, %664 : vector<8x128xf32>
      %cst_289 = arith.constant 0.9894737 : f32
      %669 = vector.broadcast %cst_289 : f32 to vector<8x128xf32>
      %670 = arith.mulf %669, %657 : vector<8x128xf32>
      %671 = arith.subf %668, %670 : vector<8x128xf32>
      %c760 = arith.constant 760 : index
      %c0_290 = arith.constant 0 : index
      %672 = vector.load %arg3[%c760, %c0_290] : memref<2048x128xf32, #tpu.memory_space<vmem>>, vector<8x128xf32>
      tpu.vector_store %arg3[%c760, %c0_290], %671 {strides = array<i32>} : memref<2048x128xf32, #tpu.memory_space<vmem>>, vector<8x128xf32>,
      %cst_291 = arith.constant 1.98958337 : f32
      %673 = vector.broadcast %cst_291 : f32 to vector<8x128xf32>
      %674 = arith.mulf %673, %11 : vector<8x128xf32>
      %675 = arith.mulf %674, %671 : vector<8x128xf32>
      %cst_292 = arith.constant 0.989583313 : f32
      %676 = vector.broadcast %cst_292 : f32 to vector<8x128xf32>
      %677 = arith.mulf %676, %664 : vector<8x128xf32>
      %678 = arith.subf %675, %677 : vector<8x128xf32>
      %c768 = arith.constant 768 : index
      %c0_293 = arith.constant 0 : index
      %679 = vector.load %arg3[%c768, %c0_293] : memref<2048x128xf32, #tpu.memory_space<vmem>>, vector<8x128xf32>
      tpu.vector_store %arg3[%c768, %c0_293], %678 {strides = array<i32>} : memref<2048x128xf32, #tpu.memory_space<vmem>>, vector<8x128xf32>,
      %cst_294 = arith.constant 1.98969078 : f32
      %680 = vector.broadcast %cst_294 : f32 to vector<8x128xf32>
      %681 = arith.mulf %680, %11 : vector<8x128xf32>
      %682 = arith.mulf %681, %678 : vector<8x128xf32>
      %cst_295 = arith.constant 0.989690721 : f32
      %683 = vector.broadcast %cst_295 : f32 to vector<8x128xf32>
      %684 = arith.mulf %683, %671 : vector<8x128xf32>
      %685 = arith.subf %682, %684 : vector<8x128xf32>
      %c776 = arith.constant 776 : index
      %c0_296 = arith.constant 0 : index
      %686 = vector.load %arg3[%c776, %c0_296] : memref<2048x128xf32, #tpu.memory_space<vmem>>, vector<8x128xf32>
      tpu.vector_store %arg3[%c776, %c0_296], %685 {strides = array<i32>} : memref<2048x128xf32, #tpu.memory_space<vmem>>, vector<8x128xf32>,
      %cst_297 = arith.constant 1.98979592 : f32
      %687 = vector.broadcast %cst_297 : f32 to vector<8x128xf32>
      %688 = arith.mulf %687, %11 : vector<8x128xf32>
      %689 = arith.mulf %688, %685 : vector<8x128xf32>
      %cst_298 = arith.constant 0.989795923 : f32
      %690 = vector.broadcast %cst_298 : f32 to vector<8x128xf32>
      %691 = arith.mulf %690, %678 : vector<8x128xf32>
      %692 = arith.subf %689, %691 : vector<8x128xf32>
      %c784 = arith.constant 784 : index
      %c0_299 = arith.constant 0 : index
      %693 = vector.load %arg3[%c784, %c0_299] : memref<2048x128xf32, #tpu.memory_space<vmem>>, vector<8x128xf32>
      tpu.vector_store %arg3[%c784, %c0_299], %692 {strides = array<i32>} : memref<2048x128xf32, #tpu.memory_space<vmem>>, vector<8x128xf32>,
      %cst_300 = arith.constant 1.98989904 : f32
      %694 = vector.broadcast %cst_300 : f32 to vector<8x128xf32>
      %695 = arith.mulf %694, %11 : vector<8x128xf32>
      %696 = arith.mulf %695, %692 : vector<8x128xf32>
      %cst_301 = arith.constant 0.989898979 : f32
      %697 = vector.broadcast %cst_301 : f32 to vector<8x128xf32>
      %698 = arith.mulf %697, %685 : vector<8x128xf32>
      %699 = arith.subf %696, %698 : vector<8x128xf32>
      %c792 = arith.constant 792 : index
      %c0_302 = arith.constant 0 : index
      %700 = vector.load %arg3[%c792, %c0_302] : memref<2048x128xf32, #tpu.memory_space<vmem>>, vector<8x128xf32>
      tpu.vector_store %arg3[%c792, %c0_302], %699 {strides = array<i32>} : memref<2048x128xf32, #tpu.memory_space<vmem>>, vector<8x128xf32>,
      %cst_303 = arith.constant 1.990000e+00 : f32
      %701 = vector.broadcast %cst_303 : f32 to vector<8x128xf32>
      %702 = arith.mulf %701, %11 : vector<8x128xf32>
      %703 = arith.mulf %702, %699 : vector<8x128xf32>
      %cst_304 = arith.constant 9.900000e-01 : f32
      %704 = vector.broadcast %cst_304 : f32 to vector<8x128xf32>
      %705 = arith.mulf %704, %692 : vector<8x128xf32>
      %706 = arith.subf %703, %705 : vector<8x128xf32>
      %c800 = arith.constant 800 : index
      %c0_305 = arith.constant 0 : index
      %707 = vector.load %arg3[%c800, %c0_305] : memref<2048x128xf32, #tpu.memory_space<vmem>>, vector<8x128xf32>
      tpu.vector_store %arg3[%c800, %c0_305], %706 {strides = array<i32>} : memref<2048x128xf32, #tpu.memory_space<vmem>>, vector<8x128xf32>,
      %cst_306 = arith.constant 1.99009895 : f32
      %708 = vector.broadcast %cst_306 : f32 to vector<8x128xf32>
      %709 = arith.mulf %708, %11 : vector<8x128xf32>
      %710 = arith.mulf %709, %706 : vector<8x128xf32>
      %cst_307 = arith.constant 9.900990e-01 : f32
      %711 = vector.broadcast %cst_307 : f32 to vector<8x128xf32>
      %712 = arith.mulf %711, %699 : vector<8x128xf32>
      %713 = arith.subf %710, %712 : vector<8x128xf32>
      %c808 = arith.constant 808 : index
      %c0_308 = arith.constant 0 : index
      %714 = vector.load %arg3[%c808, %c0_308] : memref<2048x128xf32, #tpu.memory_space<vmem>>, vector<8x128xf32>
      tpu.vector_store %arg3[%c808, %c0_308], %713 {strides = array<i32>} : memref<2048x128xf32, #tpu.memory_space<vmem>>, vector<8x128xf32>,
      %cst_309 = arith.constant 1.99019611 : f32
      %715 = vector.broadcast %cst_309 : f32 to vector<8x128xf32>
      %716 = arith.mulf %715, %11 : vector<8x128xf32>
      %717 = arith.mulf %716, %713 : vector<8x128xf32>
      %cst_310 = arith.constant 0.990196049 : f32
      %718 = vector.broadcast %cst_310 : f32 to vector<8x128xf32>
      %719 = arith.mulf %718, %706 : vector<8x128xf32>
      %720 = arith.subf %717, %719 : vector<8x128xf32>
      %c816 = arith.constant 816 : index
      %c0_311 = arith.constant 0 : index
      %721 = vector.load %arg3[%c816, %c0_311] : memref<2048x128xf32, #tpu.memory_space<vmem>>, vector<8x128xf32>
      tpu.vector_store %arg3[%c816, %c0_311], %720 {strides = array<i32>} : memref<2048x128xf32, #tpu.memory_space<vmem>>, vector<8x128xf32>,
      %cst_312 = arith.constant 1.99029124 : f32
      %722 = vector.broadcast %cst_312 : f32 to vector<8x128xf32>
      %723 = arith.mulf %722, %11 : vector<8x128xf32>
      %724 = arith.mulf %723, %720 : vector<8x128xf32>
      %cst_313 = arith.constant 0.990291237 : f32
      %725 = vector.broadcast %cst_313 : f32 to vector<8x128xf32>
      %726 = arith.mulf %725, %713 : vector<8x128xf32>
      %727 = arith.subf %724, %726 : vector<8x128xf32>
      %c824 = arith.constant 824 : index
      %c0_314 = arith.constant 0 : index
      %728 = vector.load %arg3[%c824, %c0_314] : memref<2048x128xf32, #tpu.memory_space<vmem>>, vector<8x128xf32>
      tpu.vector_store %arg3[%c824, %c0_314], %727 {strides = array<i32>} : memref<2048x128xf32, #tpu.memory_space<vmem>>, vector<8x128xf32>,
      %cst_315 = arith.constant 1.99038458 : f32
      %729 = vector.broadcast %cst_315 : f32 to vector<8x128xf32>
      %730 = arith.mulf %729, %11 : vector<8x128xf32>
      %731 = arith.mulf %730, %727 : vector<8x128xf32>
      %cst_316 = arith.constant 0.990384638 : f32
      %732 = vector.broadcast %cst_316 : f32 to vector<8x128xf32>
      %733 = arith.mulf %732, %720 : vector<8x128xf32>
      %734 = arith.subf %731, %733 : vector<8x128xf32>
      %c832 = arith.constant 832 : index
      %c0_317 = arith.constant 0 : index
      %735 = vector.load %arg3[%c832, %c0_317] : memref<2048x128xf32, #tpu.memory_space<vmem>>, vector<8x128xf32>
      tpu.vector_store %arg3[%c832, %c0_317], %734 {strides = array<i32>} : memref<2048x128xf32, #tpu.memory_space<vmem>>, vector<8x128xf32>,
      %cst_318 = arith.constant 1.99047613 : f32
      %736 = vector.broadcast %cst_318 : f32 to vector<8x128xf32>
      %737 = arith.mulf %736, %11 : vector<8x128xf32>
      %738 = arith.mulf %737, %734 : vector<8x128xf32>
      %cst_319 = arith.constant 0.990476191 : f32
      %739 = vector.broadcast %cst_319 : f32 to vector<8x128xf32>
      %740 = arith.mulf %739, %727 : vector<8x128xf32>
      %741 = arith.subf %738, %740 : vector<8x128xf32>
      %c840 = arith.constant 840 : index
      %c0_320 = arith.constant 0 : index
      %742 = vector.load %arg3[%c840, %c0_320] : memref<2048x128xf32, #tpu.memory_space<vmem>>, vector<8x128xf32>
      tpu.vector_store %arg3[%c840, %c0_320], %741 {strides = array<i32>} : memref<2048x128xf32, #tpu.memory_space<vmem>>, vector<8x128xf32>,
      %cst_321 = arith.constant 1.99056602 : f32
      %743 = vector.broadcast %cst_321 : f32 to vector<8x128xf32>
      %744 = arith.mulf %743, %11 : vector<8x128xf32>
      %745 = arith.mulf %744, %741 : vector<8x128xf32>
      %cst_322 = arith.constant 9.905660e-01 : f32
      %746 = vector.broadcast %cst_322 : f32 to vector<8x128xf32>
      %747 = arith.mulf %746, %734 : vector<8x128xf32>
      %748 = arith.subf %745, %747 : vector<8x128xf32>
      %c848 = arith.constant 848 : index
      %c0_323 = arith.constant 0 : index
      %749 = vector.load %arg3[%c848, %c0_323] : memref<2048x128xf32, #tpu.memory_space<vmem>>, vector<8x128xf32>
      tpu.vector_store %arg3[%c848, %c0_323], %748 {strides = array<i32>} : memref<2048x128xf32, #tpu.memory_space<vmem>>, vector<8x128xf32>,
      %cst_324 = arith.constant 1.99065423 : f32
      %750 = vector.broadcast %cst_324 : f32 to vector<8x128xf32>
      %751 = arith.mulf %750, %11 : vector<8x128xf32>
      %752 = arith.mulf %751, %748 : vector<8x128xf32>
      %cst_325 = arith.constant 0.99065423 : f32
      %753 = vector.broadcast %cst_325 : f32 to vector<8x128xf32>
      %754 = arith.mulf %753, %741 : vector<8x128xf32>
      %755 = arith.subf %752, %754 : vector<8x128xf32>
      %c856 = arith.constant 856 : index
      %c0_326 = arith.constant 0 : index
      %756 = vector.load %arg3[%c856, %c0_326] : memref<2048x128xf32, #tpu.memory_space<vmem>>, vector<8x128xf32>
      tpu.vector_store %arg3[%c856, %c0_326], %755 {strides = array<i32>} : memref<2048x128xf32, #tpu.memory_space<vmem>>, vector<8x128xf32>,
      %cst_327 = arith.constant 1.99074078 : f32
      %757 = vector.broadcast %cst_327 : f32 to vector<8x128xf32>
      %758 = arith.mulf %757, %11 : vector<8x128xf32>
      %759 = arith.mulf %758, %755 : vector<8x128xf32>
      %cst_328 = arith.constant 0.990740716 : f32
      %760 = vector.broadcast %cst_328 : f32 to vector<8x128xf32>
      %761 = arith.mulf %760, %748 : vector<8x128xf32>
      %762 = arith.subf %759, %761 : vector<8x128xf32>
      %c864 = arith.constant 864 : index
      %c0_329 = arith.constant 0 : index
      %763 = vector.load %arg3[%c864, %c0_329] : memref<2048x128xf32, #tpu.memory_space<vmem>>, vector<8x128xf32>
      tpu.vector_store %arg3[%c864, %c0_329], %762 {strides = array<i32>} : memref<2048x128xf32, #tpu.memory_space<vmem>>, vector<8x128xf32>,
      %cst_330 = arith.constant 1.99082565 : f32
      %764 = vector.broadcast %cst_330 : f32 to vector<8x128xf32>
      %765 = arith.mulf %764, %11 : vector<8x128xf32>
      %766 = arith.mulf %765, %762 : vector<8x128xf32>
      %cst_331 = arith.constant 0.990825712 : f32
      %767 = vector.broadcast %cst_331 : f32 to vector<8x128xf32>
      %768 = arith.mulf %767, %755 : vector<8x128xf32>
      %769 = arith.subf %766, %768 : vector<8x128xf32>
      %c872 = arith.constant 872 : index
      %c0_332 = arith.constant 0 : index
      %770 = vector.load %arg3[%c872, %c0_332] : memref<2048x128xf32, #tpu.memory_space<vmem>>, vector<8x128xf32>
      tpu.vector_store %arg3[%c872, %c0_332], %769 {strides = array<i32>} : memref<2048x128xf32, #tpu.memory_space<vmem>>, vector<8x128xf32>,
      %cst_333 = arith.constant 1.9909091 : f32
      %771 = vector.broadcast %cst_333 : f32 to vector<8x128xf32>
      %772 = arith.mulf %771, %11 : vector<8x128xf32>
      %773 = arith.mulf %772, %769 : vector<8x128xf32>
      %cst_334 = arith.constant 0.990909099 : f32
      %774 = vector.broadcast %cst_334 : f32 to vector<8x128xf32>
      %775 = arith.mulf %774, %762 : vector<8x128xf32>
      %776 = arith.subf %773, %775 : vector<8x128xf32>
      %c880 = arith.constant 880 : index
      %c0_335 = arith.constant 0 : index
      %777 = vector.load %arg3[%c880, %c0_335] : memref<2048x128xf32, #tpu.memory_space<vmem>>, vector<8x128xf32>
      tpu.vector_store %arg3[%c880, %c0_335], %776 {strides = array<i32>} : memref<2048x128xf32, #tpu.memory_space<vmem>>, vector<8x128xf32>,
      %cst_336 = arith.constant 1.990991 : f32
      %778 = vector.broadcast %cst_336 : f32 to vector<8x128xf32>
      %779 = arith.mulf %778, %11 : vector<8x128xf32>
      %780 = arith.mulf %779, %776 : vector<8x128xf32>
      %cst_337 = arith.constant 0.990990996 : f32
      %781 = vector.broadcast %cst_337 : f32 to vector<8x128xf32>
      %782 = arith.mulf %781, %769 : vector<8x128xf32>
      %783 = arith.subf %780, %782 : vector<8x128xf32>
      %c888 = arith.constant 888 : index
      %c0_338 = arith.constant 0 : index
      %784 = vector.load %arg3[%c888, %c0_338] : memref<2048x128xf32, #tpu.memory_space<vmem>>, vector<8x128xf32>
      tpu.vector_store %arg3[%c888, %c0_338], %783 {strides = array<i32>} : memref<2048x128xf32, #tpu.memory_space<vmem>>, vector<8x128xf32>,
      %cst_339 = arith.constant 1.99107146 : f32
      %785 = vector.broadcast %cst_339 : f32 to vector<8x128xf32>
      %786 = arith.mulf %785, %11 : vector<8x128xf32>
      %787 = arith.mulf %786, %783 : vector<8x128xf32>
      %cst_340 = arith.constant 0.991071403 : f32
      %788 = vector.broadcast %cst_340 : f32 to vector<8x128xf32>
      %789 = arith.mulf %788, %776 : vector<8x128xf32>
      %790 = arith.subf %787, %789 : vector<8x128xf32>
      %c896 = arith.constant 896 : index
      %c0_341 = arith.constant 0 : index
      %791 = vector.load %arg3[%c896, %c0_341] : memref<2048x128xf32, #tpu.memory_space<vmem>>, vector<8x128xf32>
      tpu.vector_store %arg3[%c896, %c0_341], %790 {strides = array<i32>} : memref<2048x128xf32, #tpu.memory_space<vmem>>, vector<8x128xf32>,
      %cst_342 = arith.constant 1.9911505 : f32
      %792 = vector.broadcast %cst_342 : f32 to vector<8x128xf32>
      %793 = arith.mulf %792, %11 : vector<8x128xf32>
      %794 = arith.mulf %793, %790 : vector<8x128xf32>
      %cst_343 = arith.constant 0.991150438 : f32
      %795 = vector.broadcast %cst_343 : f32 to vector<8x128xf32>
      %796 = arith.mulf %795, %783 : vector<8x128xf32>
      %797 = arith.subf %794, %796 : vector<8x128xf32>
      %c904 = arith.constant 904 : index
      %c0_344 = arith.constant 0 : index
      %798 = vector.load %arg3[%c904, %c0_344] : memref<2048x128xf32, #tpu.memory_space<vmem>>, vector<8x128xf32>
      tpu.vector_store %arg3[%c904, %c0_344], %797 {strides = array<i32>} : memref<2048x128xf32, #tpu.memory_space<vmem>>, vector<8x128xf32>,
      %cst_345 = arith.constant 1.9912281 : f32
      %799 = vector.broadcast %cst_345 : f32 to vector<8x128xf32>
      %800 = arith.mulf %799, %11 : vector<8x128xf32>
      %801 = arith.mulf %800, %797 : vector<8x128xf32>
      %cst_346 = arith.constant 0.991228044 : f32
      %802 = vector.broadcast %cst_346 : f32 to vector<8x128xf32>
      %803 = arith.mulf %802, %790 : vector<8x128xf32>
      %804 = arith.subf %801, %803 : vector<8x128xf32>
      %c912 = arith.constant 912 : index
      %c0_347 = arith.constant 0 : index
      %805 = vector.load %arg3[%c912, %c0_347] : memref<2048x128xf32, #tpu.memory_space<vmem>>, vector<8x128xf32>
      tpu.vector_store %arg3[%c912, %c0_347], %804 {strides = array<i32>} : memref<2048x128xf32, #tpu.memory_space<vmem>>, vector<8x128xf32>,
      %cst_348 = arith.constant 1.9913044 : f32
      %806 = vector.broadcast %cst_348 : f32 to vector<8x128xf32>
      %807 = arith.mulf %806, %11 : vector<8x128xf32>
      %808 = arith.mulf %807, %804 : vector<8x128xf32>
      %cst_349 = arith.constant 0.991304337 : f32
      %809 = vector.broadcast %cst_349 : f32 to vector<8x128xf32>
      %810 = arith.mulf %809, %797 : vector<8x128xf32>
      %811 = arith.subf %808, %810 : vector<8x128xf32>
      %c920 = arith.constant 920 : index
      %c0_350 = arith.constant 0 : index
      %812 = vector.load %arg3[%c920, %c0_350] : memref<2048x128xf32, #tpu.memory_space<vmem>>, vector<8x128xf32>
      tpu.vector_store %arg3[%c920, %c0_350], %811 {strides = array<i32>} : memref<2048x128xf32, #tpu.memory_space<vmem>>, vector<8x128xf32>,
      %cst_351 = arith.constant 1.99137926 : f32
      %813 = vector.broadcast %cst_351 : f32 to vector<8x128xf32>
      %814 = arith.mulf %813, %11 : vector<8x128xf32>
      %815 = arith.mulf %814, %811 : vector<8x128xf32>
      %cst_352 = arith.constant 0.99137932 : f32
      %816 = vector.broadcast %cst_352 : f32 to vector<8x128xf32>
      %817 = arith.mulf %816, %804 : vector<8x128xf32>
      %818 = arith.subf %815, %817 : vector<8x128xf32>
      %c928 = arith.constant 928 : index
      %c0_353 = arith.constant 0 : index
      %819 = vector.load %arg3[%c928, %c0_353] : memref<2048x128xf32, #tpu.memory_space<vmem>>, vector<8x128xf32>
      tpu.vector_store %arg3[%c928, %c0_353], %818 {strides = array<i32>} : memref<2048x128xf32, #tpu.memory_space<vmem>>, vector<8x128xf32>,
      %cst_354 = arith.constant 1.99145293 : f32
      %820 = vector.broadcast %cst_354 : f32 to vector<8x128xf32>
      %821 = arith.mulf %820, %11 : vector<8x128xf32>
      %822 = arith.mulf %821, %818 : vector<8x128xf32>
      %cst_355 = arith.constant 0.991452991 : f32
      %823 = vector.broadcast %cst_355 : f32 to vector<8x128xf32>
      %824 = arith.mulf %823, %811 : vector<8x128xf32>
      %825 = arith.subf %822, %824 : vector<8x128xf32>
      %c936 = arith.constant 936 : index
      %c0_356 = arith.constant 0 : index
      %826 = vector.load %arg3[%c936, %c0_356] : memref<2048x128xf32, #tpu.memory_space<vmem>>, vector<8x128xf32>
      tpu.vector_store %arg3[%c936, %c0_356], %825 {strides = array<i32>} : memref<2048x128xf32, #tpu.memory_space<vmem>>, vector<8x128xf32>,
      %cst_357 = arith.constant 1.99152541 : f32
      %827 = vector.broadcast %cst_357 : f32 to vector<8x128xf32>
      %828 = arith.mulf %827, %11 : vector<8x128xf32>
      %829 = arith.mulf %828, %825 : vector<8x128xf32>
      %cst_358 = arith.constant 0.991525411 : f32
      %830 = vector.broadcast %cst_358 : f32 to vector<8x128xf32>
      %831 = arith.mulf %830, %818 : vector<8x128xf32>
      %832 = arith.subf %829, %831 : vector<8x128xf32>
      %c944 = arith.constant 944 : index
      %c0_359 = arith.constant 0 : index
      %833 = vector.load %arg3[%c944, %c0_359] : memref<2048x128xf32, #tpu.memory_space<vmem>>, vector<8x128xf32>
      tpu.vector_store %arg3[%c944, %c0_359], %832 {strides = array<i32>} : memref<2048x128xf32, #tpu.memory_space<vmem>>, vector<8x128xf32>,
      %cst_360 = arith.constant 1.99159658 : f32
      %834 = vector.broadcast %cst_360 : f32 to vector<8x128xf32>
      %835 = arith.mulf %834, %11 : vector<8x128xf32>
      %836 = arith.mulf %835, %832 : vector<8x128xf32>
      %cst_361 = arith.constant 0.991596639 : f32
      %837 = vector.broadcast %cst_361 : f32 to vector<8x128xf32>
      %838 = arith.mulf %837, %825 : vector<8x128xf32>
      %839 = arith.subf %836, %838 : vector<8x128xf32>
      %c952 = arith.constant 952 : index
      %c0_362 = arith.constant 0 : index
      %840 = vector.load %arg3[%c952, %c0_362] : memref<2048x128xf32, #tpu.memory_space<vmem>>, vector<8x128xf32>
      tpu.vector_store %arg3[%c952, %c0_362], %839 {strides = array<i32>} : memref<2048x128xf32, #tpu.memory_space<vmem>>, vector<8x128xf32>,
      %cst_363 = arith.constant 1.99166667 : f32
      %841 = vector.broadcast %cst_363 : f32 to vector<8x128xf32>
      %842 = arith.mulf %841, %11 : vector<8x128xf32>
      %843 = arith.mulf %842, %839 : vector<8x128xf32>
      %cst_364 = arith.constant 0.991666674 : f32
      %844 = vector.broadcast %cst_364 : f32 to vector<8x128xf32>
      %845 = arith.mulf %844, %832 : vector<8x128xf32>
      %846 = arith.subf %843, %845 : vector<8x128xf32>
      %c960 = arith.constant 960 : index
      %c0_365 = arith.constant 0 : index
      %847 = vector.load %arg3[%c960, %c0_365] : memref<2048x128xf32, #tpu.memory_space<vmem>>, vector<8x128xf32>
      tpu.vector_store %arg3[%c960, %c0_365], %846 {strides = array<i32>} : memref<2048x128xf32, #tpu.memory_space<vmem>>, vector<8x128xf32>,
      %cst_366 = arith.constant 1.99173558 : f32
      %848 = vector.broadcast %cst_366 : f32 to vector<8x128xf32>
      %849 = arith.mulf %848, %11 : vector<8x128xf32>
      %850 = arith.mulf %849, %846 : vector<8x128xf32>
      %cst_367 = arith.constant 0.991735517 : f32
      %851 = vector.broadcast %cst_367 : f32 to vector<8x128xf32>
      %852 = arith.mulf %851, %839 : vector<8x128xf32>
      %853 = arith.subf %850, %852 : vector<8x128xf32>
      %c968 = arith.constant 968 : index
      %c0_368 = arith.constant 0 : index
      %854 = vector.load %arg3[%c968, %c0_368] : memref<2048x128xf32, #tpu.memory_space<vmem>>, vector<8x128xf32>
      tpu.vector_store %arg3[%c968, %c0_368], %853 {strides = array<i32>} : memref<2048x128xf32, #tpu.memory_space<vmem>>, vector<8x128xf32>,
      %cst_369 = arith.constant 1.99180329 : f32
      %855 = vector.broadcast %cst_369 : f32 to vector<8x128xf32>
      %856 = arith.mulf %855, %11 : vector<8x128xf32>
      %857 = arith.mulf %856, %853 : vector<8x128xf32>
      %cst_370 = arith.constant 0.991803288 : f32
      %858 = vector.broadcast %cst_370 : f32 to vector<8x128xf32>
      %859 = arith.mulf %858, %846 : vector<8x128xf32>
      %860 = arith.subf %857, %859 : vector<8x128xf32>
      %c976 = arith.constant 976 : index
      %c0_371 = arith.constant 0 : index
      %861 = vector.load %arg3[%c976, %c0_371] : memref<2048x128xf32, #tpu.memory_space<vmem>>, vector<8x128xf32>
      tpu.vector_store %arg3[%c976, %c0_371], %860 {strides = array<i32>} : memref<2048x128xf32, #tpu.memory_space<vmem>>, vector<8x128xf32>,
      %cst_372 = arith.constant 1.99186993 : f32
      %862 = vector.broadcast %cst_372 : f32 to vector<8x128xf32>
      %863 = arith.mulf %862, %11 : vector<8x128xf32>
      %864 = arith.mulf %863, %860 : vector<8x128xf32>
      %cst_373 = arith.constant 0.991869926 : f32
      %865 = vector.broadcast %cst_373 : f32 to vector<8x128xf32>
      %866 = arith.mulf %865, %853 : vector<8x128xf32>
      %867 = arith.subf %864, %866 : vector<8x128xf32>
      %c984 = arith.constant 984 : index
      %c0_374 = arith.constant 0 : index
      %868 = vector.load %arg3[%c984, %c0_374] : memref<2048x128xf32, #tpu.memory_space<vmem>>, vector<8x128xf32>
      tpu.vector_store %arg3[%c984, %c0_374], %867 {strides = array<i32>} : memref<2048x128xf32, #tpu.memory_space<vmem>>, vector<8x128xf32>,
      %cst_375 = arith.constant 1.99193549 : f32
      %869 = vector.broadcast %cst_375 : f32 to vector<8x128xf32>
      %870 = arith.mulf %869, %11 : vector<8x128xf32>
      %871 = arith.mulf %870, %867 : vector<8x128xf32>
      %cst_376 = arith.constant 0.991935491 : f32
      %872 = vector.broadcast %cst_376 : f32 to vector<8x128xf32>
      %873 = arith.mulf %872, %860 : vector<8x128xf32>
      %874 = arith.subf %871, %873 : vector<8x128xf32>
      %c992 = arith.constant 992 : index
      %c0_377 = arith.constant 0 : index
      %875 = vector.load %arg3[%c992, %c0_377] : memref<2048x128xf32, #tpu.memory_space<vmem>>, vector<8x128xf32>
      tpu.vector_store %arg3[%c992, %c0_377], %874 {strides = array<i32>} : memref<2048x128xf32, #tpu.memory_space<vmem>>, vector<8x128xf32>,
      %cst_378 = arith.constant 1.992000e+00 : f32
      %876 = vector.broadcast %cst_378 : f32 to vector<8x128xf32>
      %877 = arith.mulf %876, %11 : vector<8x128xf32>
      %878 = arith.mulf %877, %874 : vector<8x128xf32>
      %cst_379 = arith.constant 0.991999983 : f32
      %879 = vector.broadcast %cst_379 : f32 to vector<8x128xf32>
      %880 = arith.mulf %879, %867 : vector<8x128xf32>
      %881 = arith.subf %878, %880 : vector<8x128xf32>
      %c1000 = arith.constant 1000 : index
      %c0_380 = arith.constant 0 : index
      %882 = vector.load %arg3[%c1000, %c0_380] : memref<2048x128xf32, #tpu.memory_space<vmem>>, vector<8x128xf32>
      tpu.vector_store %arg3[%c1000, %c0_380], %881 {strides = array<i32>} : memref<2048x128xf32, #tpu.memory_space<vmem>>, vector<8x128xf32>,
      %cst_381 = arith.constant 1.99206352 : f32
      %883 = vector.broadcast %cst_381 : f32 to vector<8x128xf32>
      %884 = arith.mulf %883, %11 : vector<8x128xf32>
      %885 = arith.mulf %884, %881 : vector<8x128xf32>
      %cst_382 = arith.constant 0.992063462 : f32
      %886 = vector.broadcast %cst_382 : f32 to vector<8x128xf32>
      %887 = arith.mulf %886, %874 : vector<8x128xf32>
      %888 = arith.subf %885, %887 : vector<8x128xf32>
      %c1008 = arith.constant 1008 : index
      %c0_383 = arith.constant 0 : index
      %889 = vector.load %arg3[%c1008, %c0_383] : memref<2048x128xf32, #tpu.memory_space<vmem>>, vector<8x128xf32>
      tpu.vector_store %arg3[%c1008, %c0_383], %888 {strides = array<i32>} : memref<2048x128xf32, #tpu.memory_space<vmem>>, vector<8x128xf32>,
      %cst_384 = arith.constant 1.99212599 : f32
      %890 = vector.broadcast %cst_384 : f32 to vector<8x128xf32>
      %891 = arith.mulf %890, %11 : vector<8x128xf32>
      %892 = arith.mulf %891, %888 : vector<8x128xf32>
      %cst_385 = arith.constant 0.992125988 : f32
      %893 = vector.broadcast %cst_385 : f32 to vector<8x128xf32>
      %894 = arith.mulf %893, %881 : vector<8x128xf32>
      %895 = arith.subf %892, %894 : vector<8x128xf32>
      %c1016 = arith.constant 1016 : index
      %c0_386 = arith.constant 0 : index
      %896 = vector.load %arg3[%c1016, %c0_386] : memref<2048x128xf32, #tpu.memory_space<vmem>>, vector<8x128xf32>
      tpu.vector_store %arg3[%c1016, %c0_386], %895 {strides = array<i32>} : memref<2048x128xf32, #tpu.memory_space<vmem>>, vector<8x128xf32>,
      %c1 = arith.constant 1 : index
      %897 = arith.index_cast %4 : i32 to index
      %c0_387 = arith.constant 0 : index
      %898 = vector.load %arg1[%c1, %897, %c0_387] : memref<2x32x128xf32, #tpu.memory_space<vmem>>, vector<1x8x128xf32>
      %899 = vector.shape_cast %898 : vector<1x8x128xf32> to vector<8x128xf32>
      %cst_388 = arith.constant 2.000000e+00 : f32
      %900 = vector.broadcast %cst_388 : f32 to vector<8x128xf32>
      %901 = arith.mulf %900, %899 : vector<8x128xf32>
      %cst_389 = arith.constant 1.000000e+00 : f32
      %902 = vector.broadcast %cst_389 : f32 to vector<8x128xf32>
      %903 = arith.subf %901, %902 : vector<8x128xf32>
      %cst_390 = arith.constant 1.000000e+00 : f32
      %904 = vector.broadcast %cst_390 : f32 to vector<8x128xf32>
      %c1024 = arith.constant 1024 : index
      %c0_391 = arith.constant 0 : index
      %905 = vector.load %arg3[%c1024, %c0_391] : memref<2048x128xf32, #tpu.memory_space<vmem>>, vector<8x128xf32>
      tpu.vector_store %arg3[%c1024, %c0_391], %904 {strides = array<i32>} : memref<2048x128xf32, #tpu.memory_space<vmem>>, vector<8x128xf32>,
      %c1032 = arith.constant 1032 : index
      %c0_392 = arith.constant 0 : index
      %906 = vector.load %arg3[%c1032, %c0_392] : memref<2048x128xf32, #tpu.memory_space<vmem>>, vector<8x128xf32>
      tpu.vector_store %arg3[%c1032, %c0_392], %903 {strides = array<i32>} : memref<2048x128xf32, #tpu.memory_space<vmem>>, vector<8x128xf32>,
      %cst_393 = arith.constant 1.500000e+00 : f32
      %907 = vector.broadcast %cst_393 : f32 to vector<8x128xf32>
      %908 = arith.mulf %907, %903 : vector<8x128xf32>
      %909 = arith.mulf %908, %903 : vector<8x128xf32>
      %cst_394 = arith.constant 5.000000e-01 : f32
      %910 = vector.broadcast %cst_394 : f32 to vector<8x128xf32>
      %911 = arith.mulf %910, %904 : vector<8x128xf32>
      %912 = arith.subf %909, %911 : vector<8x128xf32>
      %c1040 = arith.constant 1040 : index
      %c0_395 = arith.constant 0 : index
      %913 = vector.load %arg3[%c1040, %c0_395] : memref<2048x128xf32, #tpu.memory_space<vmem>>, vector<8x128xf32>
      tpu.vector_store %arg3[%c1040, %c0_395], %912 {strides = array<i32>} : memref<2048x128xf32, #tpu.memory_space<vmem>>, vector<8x128xf32>,
      %cst_396 = arith.constant 1.66666663 : f32
      %914 = vector.broadcast %cst_396 : f32 to vector<8x128xf32>
      %915 = arith.mulf %914, %903 : vector<8x128xf32>
      %916 = arith.mulf %915, %912 : vector<8x128xf32>
      %cst_397 = arith.constant 0.666666686 : f32
      %917 = vector.broadcast %cst_397 : f32 to vector<8x128xf32>
      %918 = arith.mulf %917, %903 : vector<8x128xf32>
      %919 = arith.subf %916, %918 : vector<8x128xf32>
      %c1048 = arith.constant 1048 : index
      %c0_398 = arith.constant 0 : index
      %920 = vector.load %arg3[%c1048, %c0_398] : memref<2048x128xf32, #tpu.memory_space<vmem>>, vector<8x128xf32>
      tpu.vector_store %arg3[%c1048, %c0_398], %919 {strides = array<i32>} : memref<2048x128xf32, #tpu.memory_space<vmem>>, vector<8x128xf32>,
      %cst_399 = arith.constant 1.750000e+00 : f32
      %921 = vector.broadcast %cst_399 : f32 to vector<8x128xf32>
      %922 = arith.mulf %921, %903 : vector<8x128xf32>
      %923 = arith.mulf %922, %919 : vector<8x128xf32>
      %cst_400 = arith.constant 7.500000e-01 : f32
      %924 = vector.broadcast %cst_400 : f32 to vector<8x128xf32>
      %925 = arith.mulf %924, %912 : vector<8x128xf32>
      %926 = arith.subf %923, %925 : vector<8x128xf32>
      %c1056 = arith.constant 1056 : index
      %c0_401 = arith.constant 0 : index
      %927 = vector.load %arg3[%c1056, %c0_401] : memref<2048x128xf32, #tpu.memory_space<vmem>>, vector<8x128xf32>
      tpu.vector_store %arg3[%c1056, %c0_401], %926 {strides = array<i32>} : memref<2048x128xf32, #tpu.memory_space<vmem>>, vector<8x128xf32>,
      %cst_402 = arith.constant 1.800000e+00 : f32
      %928 = vector.broadcast %cst_402 : f32 to vector<8x128xf32>
      %929 = arith.mulf %928, %903 : vector<8x128xf32>
      %930 = arith.mulf %929, %926 : vector<8x128xf32>
      %cst_403 = arith.constant 8.000000e-01 : f32
      %931 = vector.broadcast %cst_403 : f32 to vector<8x128xf32>
      %932 = arith.mulf %931, %919 : vector<8x128xf32>
      %933 = arith.subf %930, %932 : vector<8x128xf32>
      %c1064 = arith.constant 1064 : index
      %c0_404 = arith.constant 0 : index
      %934 = vector.load %arg3[%c1064, %c0_404] : memref<2048x128xf32, #tpu.memory_space<vmem>>, vector<8x128xf32>
      tpu.vector_store %arg3[%c1064, %c0_404], %933 {strides = array<i32>} : memref<2048x128xf32, #tpu.memory_space<vmem>>, vector<8x128xf32>,
      %cst_405 = arith.constant 1.83333337 : f32
      %935 = vector.broadcast %cst_405 : f32 to vector<8x128xf32>
      %936 = arith.mulf %935, %903 : vector<8x128xf32>
      %937 = arith.mulf %936, %933 : vector<8x128xf32>
      %cst_406 = arith.constant 0.833333313 : f32
      %938 = vector.broadcast %cst_406 : f32 to vector<8x128xf32>
      %939 = arith.mulf %938, %926 : vector<8x128xf32>
      %940 = arith.subf %937, %939 : vector<8x128xf32>
      %c1072 = arith.constant 1072 : index
      %c0_407 = arith.constant 0 : index
      %941 = vector.load %arg3[%c1072, %c0_407] : memref<2048x128xf32, #tpu.memory_space<vmem>>, vector<8x128xf32>
      tpu.vector_store %arg3[%c1072, %c0_407], %940 {strides = array<i32>} : memref<2048x128xf32, #tpu.memory_space<vmem>>, vector<8x128xf32>,
      %cst_408 = arith.constant 1.85714281 : f32
      %942 = vector.broadcast %cst_408 : f32 to vector<8x128xf32>
      %943 = arith.mulf %942, %903 : vector<8x128xf32>
      %944 = arith.mulf %943, %940 : vector<8x128xf32>
      %cst_409 = arith.constant 0.857142865 : f32
      %945 = vector.broadcast %cst_409 : f32 to vector<8x128xf32>
      %946 = arith.mulf %945, %933 : vector<8x128xf32>
      %947 = arith.subf %944, %946 : vector<8x128xf32>
      %c1080 = arith.constant 1080 : index
      %c0_410 = arith.constant 0 : index
      %948 = vector.load %arg3[%c1080, %c0_410] : memref<2048x128xf32, #tpu.memory_space<vmem>>, vector<8x128xf32>
      tpu.vector_store %arg3[%c1080, %c0_410], %947 {strides = array<i32>} : memref<2048x128xf32, #tpu.memory_space<vmem>>, vector<8x128xf32>,
      %cst_411 = arith.constant 1.875000e+00 : f32
      %949 = vector.broadcast %cst_411 : f32 to vector<8x128xf32>
      %950 = arith.mulf %949, %903 : vector<8x128xf32>
      %951 = arith.mulf %950, %947 : vector<8x128xf32>
      %cst_412 = arith.constant 8.750000e-01 : f32
      %952 = vector.broadcast %cst_412 : f32 to vector<8x128xf32>
      %953 = arith.mulf %952, %940 : vector<8x128xf32>
      %954 = arith.subf %951, %953 : vector<8x128xf32>
      %c1088 = arith.constant 1088 : index
      %c0_413 = arith.constant 0 : index
      %955 = vector.load %arg3[%c1088, %c0_413] : memref<2048x128xf32, #tpu.memory_space<vmem>>, vector<8x128xf32>
      tpu.vector_store %arg3[%c1088, %c0_413], %954 {strides = array<i32>} : memref<2048x128xf32, #tpu.memory_space<vmem>>, vector<8x128xf32>,
      %cst_414 = arith.constant 1.88888884 : f32
      %956 = vector.broadcast %cst_414 : f32 to vector<8x128xf32>
      %957 = arith.mulf %956, %903 : vector<8x128xf32>
      %958 = arith.mulf %957, %954 : vector<8x128xf32>
      %cst_415 = arith.constant 0.888888895 : f32
      %959 = vector.broadcast %cst_415 : f32 to vector<8x128xf32>
      %960 = arith.mulf %959, %947 : vector<8x128xf32>
      %961 = arith.subf %958, %960 : vector<8x128xf32>
      %c1096 = arith.constant 1096 : index
      %c0_416 = arith.constant 0 : index
      %962 = vector.load %arg3[%c1096, %c0_416] : memref<2048x128xf32, #tpu.memory_space<vmem>>, vector<8x128xf32>
      tpu.vector_store %arg3[%c1096, %c0_416], %961 {strides = array<i32>} : memref<2048x128xf32, #tpu.memory_space<vmem>>, vector<8x128xf32>,
      %cst_417 = arith.constant 1.900000e+00 : f32
      %963 = vector.broadcast %cst_417 : f32 to vector<8x128xf32>
      %964 = arith.mulf %963, %903 : vector<8x128xf32>
      %965 = arith.mulf %964, %961 : vector<8x128xf32>
      %cst_418 = arith.constant 0.899999976 : f32
      %966 = vector.broadcast %cst_418 : f32 to vector<8x128xf32>
      %967 = arith.mulf %966, %954 : vector<8x128xf32>
      %968 = arith.subf %965, %967 : vector<8x128xf32>
      %c1104 = arith.constant 1104 : index
      %c0_419 = arith.constant 0 : index
      %969 = vector.load %arg3[%c1104, %c0_419] : memref<2048x128xf32, #tpu.memory_space<vmem>>, vector<8x128xf32>
      tpu.vector_store %arg3[%c1104, %c0_419], %968 {strides = array<i32>} : memref<2048x128xf32, #tpu.memory_space<vmem>>, vector<8x128xf32>,
      %cst_420 = arith.constant 1.90909088 : f32
      %970 = vector.broadcast %cst_420 : f32 to vector<8x128xf32>
      %971 = arith.mulf %970, %903 : vector<8x128xf32>
      %972 = arith.mulf %971, %968 : vector<8x128xf32>
      %cst_421 = arith.constant 0.909090936 : f32
      %973 = vector.broadcast %cst_421 : f32 to vector<8x128xf32>
      %974 = arith.mulf %973, %961 : vector<8x128xf32>
      %975 = arith.subf %972, %974 : vector<8x128xf32>
      %c1112 = arith.constant 1112 : index
      %c0_422 = arith.constant 0 : index
      %976 = vector.load %arg3[%c1112, %c0_422] : memref<2048x128xf32, #tpu.memory_space<vmem>>, vector<8x128xf32>
      tpu.vector_store %arg3[%c1112, %c0_422], %975 {strides = array<i32>} : memref<2048x128xf32, #tpu.memory_space<vmem>>, vector<8x128xf32>,
      %cst_423 = arith.constant 1.91666663 : f32
      %977 = vector.broadcast %cst_423 : f32 to vector<8x128xf32>
      %978 = arith.mulf %977, %903 : vector<8x128xf32>
      %979 = arith.mulf %978, %975 : vector<8x128xf32>
      %cst_424 = arith.constant 0.916666686 : f32
      %980 = vector.broadcast %cst_424 : f32 to vector<8x128xf32>
      %981 = arith.mulf %980, %968 : vector<8x128xf32>
      %982 = arith.subf %979, %981 : vector<8x128xf32>
      %c1120 = arith.constant 1120 : index
      %c0_425 = arith.constant 0 : index
      %983 = vector.load %arg3[%c1120, %c0_425] : memref<2048x128xf32, #tpu.memory_space<vmem>>, vector<8x128xf32>
      tpu.vector_store %arg3[%c1120, %c0_425], %982 {strides = array<i32>} : memref<2048x128xf32, #tpu.memory_space<vmem>>, vector<8x128xf32>,
      %cst_426 = arith.constant 1.92307687 : f32
      %984 = vector.broadcast %cst_426 : f32 to vector<8x128xf32>
      %985 = arith.mulf %984, %903 : vector<8x128xf32>
      %986 = arith.mulf %985, %982 : vector<8x128xf32>
      %cst_427 = arith.constant 0.923076927 : f32
      %987 = vector.broadcast %cst_427 : f32 to vector<8x128xf32>
      %988 = arith.mulf %987, %975 : vector<8x128xf32>
      %989 = arith.subf %986, %988 : vector<8x128xf32>
      %c1128 = arith.constant 1128 : index
      %c0_428 = arith.constant 0 : index
      %990 = vector.load %arg3[%c1128, %c0_428] : memref<2048x128xf32, #tpu.memory_space<vmem>>, vector<8x128xf32>
      tpu.vector_store %arg3[%c1128, %c0_428], %989 {strides = array<i32>} : memref<2048x128xf32, #tpu.memory_space<vmem>>, vector<8x128xf32>,
      %cst_429 = arith.constant 1.92857146 : f32
      %991 = vector.broadcast %cst_429 : f32 to vector<8x128xf32>
      %992 = arith.mulf %991, %903 : vector<8x128xf32>
      %993 = arith.mulf %992, %989 : vector<8x128xf32>
      %cst_430 = arith.constant 0.928571403 : f32
      %994 = vector.broadcast %cst_430 : f32 to vector<8x128xf32>
      %995 = arith.mulf %994, %982 : vector<8x128xf32>
      %996 = arith.subf %993, %995 : vector<8x128xf32>
      %c1136 = arith.constant 1136 : index
      %c0_431 = arith.constant 0 : index
      %997 = vector.load %arg3[%c1136, %c0_431] : memref<2048x128xf32, #tpu.memory_space<vmem>>, vector<8x128xf32>
      tpu.vector_store %arg3[%c1136, %c0_431], %996 {strides = array<i32>} : memref<2048x128xf32, #tpu.memory_space<vmem>>, vector<8x128xf32>,
      %cst_432 = arith.constant 1.93333328 : f32
      %998 = vector.broadcast %cst_432 : f32 to vector<8x128xf32>
      %999 = arith.mulf %998, %903 : vector<8x128xf32>
      %1000 = arith.mulf %999, %996 : vector<8x128xf32>
      %cst_433 = arith.constant 0.933333337 : f32
      %1001 = vector.broadcast %cst_433 : f32 to vector<8x128xf32>
      %1002 = arith.mulf %1001, %989 : vector<8x128xf32>
      %1003 = arith.subf %1000, %1002 : vector<8x128xf32>
      %c1144 = arith.constant 1144 : index
      %c0_434 = arith.constant 0 : index
      %1004 = vector.load %arg3[%c1144, %c0_434] : memref<2048x128xf32, #tpu.memory_space<vmem>>, vector<8x128xf32>
      tpu.vector_store %arg3[%c1144, %c0_434], %1003 {strides = array<i32>} : memref<2048x128xf32, #tpu.memory_space<vmem>>, vector<8x128xf32>,
      %cst_435 = arith.constant 1.937500e+00 : f32
      %1005 = vector.broadcast %cst_435 : f32 to vector<8x128xf32>
      %1006 = arith.mulf %1005, %903 : vector<8x128xf32>
      %1007 = arith.mulf %1006, %1003 : vector<8x128xf32>
      %cst_436 = arith.constant 9.375000e-01 : f32
      %1008 = vector.broadcast %cst_436 : f32 to vector<8x128xf32>
      %1009 = arith.mulf %1008, %996 : vector<8x128xf32>
      %1010 = arith.subf %1007, %1009 : vector<8x128xf32>
      %c1152 = arith.constant 1152 : index
      %c0_437 = arith.constant 0 : index
      %1011 = vector.load %arg3[%c1152, %c0_437] : memref<2048x128xf32, #tpu.memory_space<vmem>>, vector<8x128xf32>
      tpu.vector_store %arg3[%c1152, %c0_437], %1010 {strides = array<i32>} : memref<2048x128xf32, #tpu.memory_space<vmem>>, vector<8x128xf32>,
      %cst_438 = arith.constant 1.94117641 : f32
      %1012 = vector.broadcast %cst_438 : f32 to vector<8x128xf32>
      %1013 = arith.mulf %1012, %903 : vector<8x128xf32>
      %1014 = arith.mulf %1013, %1010 : vector<8x128xf32>
      %cst_439 = arith.constant 0.941176474 : f32
      %1015 = vector.broadcast %cst_439 : f32 to vector<8x128xf32>
      %1016 = arith.mulf %1015, %1003 : vector<8x128xf32>
      %1017 = arith.subf %1014, %1016 : vector<8x128xf32>
      %c1160 = arith.constant 1160 : index
      %c0_440 = arith.constant 0 : index
      %1018 = vector.load %arg3[%c1160, %c0_440] : memref<2048x128xf32, #tpu.memory_space<vmem>>, vector<8x128xf32>
      tpu.vector_store %arg3[%c1160, %c0_440], %1017 {strides = array<i32>} : memref<2048x128xf32, #tpu.memory_space<vmem>>, vector<8x128xf32>,
      %cst_441 = arith.constant 1.94444442 : f32
      %1019 = vector.broadcast %cst_441 : f32 to vector<8x128xf32>
      %1020 = arith.mulf %1019, %903 : vector<8x128xf32>
      %1021 = arith.mulf %1020, %1017 : vector<8x128xf32>
      %cst_442 = arith.constant 0.944444418 : f32
      %1022 = vector.broadcast %cst_442 : f32 to vector<8x128xf32>
      %1023 = arith.mulf %1022, %1010 : vector<8x128xf32>
      %1024 = arith.subf %1021, %1023 : vector<8x128xf32>
      %c1168 = arith.constant 1168 : index
      %c0_443 = arith.constant 0 : index
      %1025 = vector.load %arg3[%c1168, %c0_443] : memref<2048x128xf32, #tpu.memory_space<vmem>>, vector<8x128xf32>
      tpu.vector_store %arg3[%c1168, %c0_443], %1024 {strides = array<i32>} : memref<2048x128xf32, #tpu.memory_space<vmem>>, vector<8x128xf32>,
      %cst_444 = arith.constant 1.94736838 : f32
      %1026 = vector.broadcast %cst_444 : f32 to vector<8x128xf32>
      %1027 = arith.mulf %1026, %903 : vector<8x128xf32>
      %1028 = arith.mulf %1027, %1024 : vector<8x128xf32>
      %cst_445 = arith.constant 0.947368443 : f32
      %1029 = vector.broadcast %cst_445 : f32 to vector<8x128xf32>
      %1030 = arith.mulf %1029, %1017 : vector<8x128xf32>
      %1031 = arith.subf %1028, %1030 : vector<8x128xf32>
      %c1176 = arith.constant 1176 : index
      %c0_446 = arith.constant 0 : index
      %1032 = vector.load %arg3[%c1176, %c0_446] : memref<2048x128xf32, #tpu.memory_space<vmem>>, vector<8x128xf32>
      tpu.vector_store %arg3[%c1176, %c0_446], %1031 {strides = array<i32>} : memref<2048x128xf32, #tpu.memory_space<vmem>>, vector<8x128xf32>,
      %cst_447 = arith.constant 1.950000e+00 : f32
      %1033 = vector.broadcast %cst_447 : f32 to vector<8x128xf32>
      %1034 = arith.mulf %1033, %903 : vector<8x128xf32>
      %1035 = arith.mulf %1034, %1031 : vector<8x128xf32>
      %cst_448 = arith.constant 0.949999988 : f32
      %1036 = vector.broadcast %cst_448 : f32 to vector<8x128xf32>
      %1037 = arith.mulf %1036, %1024 : vector<8x128xf32>
      %1038 = arith.subf %1035, %1037 : vector<8x128xf32>
      %c1184 = arith.constant 1184 : index
      %c0_449 = arith.constant 0 : index
      %1039 = vector.load %arg3[%c1184, %c0_449] : memref<2048x128xf32, #tpu.memory_space<vmem>>, vector<8x128xf32>
      tpu.vector_store %arg3[%c1184, %c0_449], %1038 {strides = array<i32>} : memref<2048x128xf32, #tpu.memory_space<vmem>>, vector<8x128xf32>,
      %cst_450 = arith.constant 1.9523809 : f32
      %1040 = vector.broadcast %cst_450 : f32 to vector<8x128xf32>
      %1041 = arith.mulf %1040, %903 : vector<8x128xf32>
      %1042 = arith.mulf %1041, %1038 : vector<8x128xf32>
      %cst_451 = arith.constant 0.952380955 : f32
      %1043 = vector.broadcast %cst_451 : f32 to vector<8x128xf32>
      %1044 = arith.mulf %1043, %1031 : vector<8x128xf32>
      %1045 = arith.subf %1042, %1044 : vector<8x128xf32>
      %c1192 = arith.constant 1192 : index
      %c0_452 = arith.constant 0 : index
      %1046 = vector.load %arg3[%c1192, %c0_452] : memref<2048x128xf32, #tpu.memory_space<vmem>>, vector<8x128xf32>
      tpu.vector_store %arg3[%c1192, %c0_452], %1045 {strides = array<i32>} : memref<2048x128xf32, #tpu.memory_space<vmem>>, vector<8x128xf32>,
      %cst_453 = arith.constant 1.9545455 : f32
      %1047 = vector.broadcast %cst_453 : f32 to vector<8x128xf32>
      %1048 = arith.mulf %1047, %903 : vector<8x128xf32>
      %1049 = arith.mulf %1048, %1045 : vector<8x128xf32>
      %cst_454 = arith.constant 0.954545438 : f32
      %1050 = vector.broadcast %cst_454 : f32 to vector<8x128xf32>
      %1051 = arith.mulf %1050, %1038 : vector<8x128xf32>
      %1052 = arith.subf %1049, %1051 : vector<8x128xf32>
      %c1200 = arith.constant 1200 : index
      %c0_455 = arith.constant 0 : index
      %1053 = vector.load %arg3[%c1200, %c0_455] : memref<2048x128xf32, #tpu.memory_space<vmem>>, vector<8x128xf32>
      tpu.vector_store %arg3[%c1200, %c0_455], %1052 {strides = array<i32>} : memref<2048x128xf32, #tpu.memory_space<vmem>>, vector<8x128xf32>,
      %cst_456 = arith.constant 1.95652175 : f32
      %1054 = vector.broadcast %cst_456 : f32 to vector<8x128xf32>
      %1055 = arith.mulf %1054, %903 : vector<8x128xf32>
      %1056 = arith.mulf %1055, %1052 : vector<8x128xf32>
      %cst_457 = arith.constant 0.956521749 : f32
      %1057 = vector.broadcast %cst_457 : f32 to vector<8x128xf32>
      %1058 = arith.mulf %1057, %1045 : vector<8x128xf32>
      %1059 = arith.subf %1056, %1058 : vector<8x128xf32>
      %c1208 = arith.constant 1208 : index
      %c0_458 = arith.constant 0 : index
      %1060 = vector.load %arg3[%c1208, %c0_458] : memref<2048x128xf32, #tpu.memory_space<vmem>>, vector<8x128xf32>
      tpu.vector_store %arg3[%c1208, %c0_458], %1059 {strides = array<i32>} : memref<2048x128xf32, #tpu.memory_space<vmem>>, vector<8x128xf32>,
      %cst_459 = arith.constant 1.95833337 : f32
      %1061 = vector.broadcast %cst_459 : f32 to vector<8x128xf32>
      %1062 = arith.mulf %1061, %903 : vector<8x128xf32>
      %1063 = arith.mulf %1062, %1059 : vector<8x128xf32>
      %cst_460 = arith.constant 0.958333313 : f32
      %1064 = vector.broadcast %cst_460 : f32 to vector<8x128xf32>
      %1065 = arith.mulf %1064, %1052 : vector<8x128xf32>
      %1066 = arith.subf %1063, %1065 : vector<8x128xf32>
      %c1216 = arith.constant 1216 : index
      %c0_461 = arith.constant 0 : index
      %1067 = vector.load %arg3[%c1216, %c0_461] : memref<2048x128xf32, #tpu.memory_space<vmem>>, vector<8x128xf32>
      tpu.vector_store %arg3[%c1216, %c0_461], %1066 {strides = array<i32>} : memref<2048x128xf32, #tpu.memory_space<vmem>>, vector<8x128xf32>,
      %cst_462 = arith.constant 1.960000e+00 : f32
      %1068 = vector.broadcast %cst_462 : f32 to vector<8x128xf32>
      %1069 = arith.mulf %1068, %903 : vector<8x128xf32>
      %1070 = arith.mulf %1069, %1066 : vector<8x128xf32>
      %cst_463 = arith.constant 0.959999978 : f32
      %1071 = vector.broadcast %cst_463 : f32 to vector<8x128xf32>
      %1072 = arith.mulf %1071, %1059 : vector<8x128xf32>
      %1073 = arith.subf %1070, %1072 : vector<8x128xf32>
      %c1224 = arith.constant 1224 : index
      %c0_464 = arith.constant 0 : index
      %1074 = vector.load %arg3[%c1224, %c0_464] : memref<2048x128xf32, #tpu.memory_space<vmem>>, vector<8x128xf32>
      tpu.vector_store %arg3[%c1224, %c0_464], %1073 {strides = array<i32>} : memref<2048x128xf32, #tpu.memory_space<vmem>>, vector<8x128xf32>,
      %cst_465 = arith.constant 1.96153843 : f32
      %1075 = vector.broadcast %cst_465 : f32 to vector<8x128xf32>
      %1076 = arith.mulf %1075, %903 : vector<8x128xf32>
      %1077 = arith.mulf %1076, %1073 : vector<8x128xf32>
      %cst_466 = arith.constant 0.961538434 : f32
      %1078 = vector.broadcast %cst_466 : f32 to vector<8x128xf32>
      %1079 = arith.mulf %1078, %1066 : vector<8x128xf32>
      %1080 = arith.subf %1077, %1079 : vector<8x128xf32>
      %c1232 = arith.constant 1232 : index
      %c0_467 = arith.constant 0 : index
      %1081 = vector.load %arg3[%c1232, %c0_467] : memref<2048x128xf32, #tpu.memory_space<vmem>>, vector<8x128xf32>
      tpu.vector_store %arg3[%c1232, %c0_467], %1080 {strides = array<i32>} : memref<2048x128xf32, #tpu.memory_space<vmem>>, vector<8x128xf32>,
      %cst_468 = arith.constant 1.96296299 : f32
      %1082 = vector.broadcast %cst_468 : f32 to vector<8x128xf32>
      %1083 = arith.mulf %1082, %903 : vector<8x128xf32>
      %1084 = arith.mulf %1083, %1080 : vector<8x128xf32>
      %cst_469 = arith.constant 0.962962985 : f32
      %1085 = vector.broadcast %cst_469 : f32 to vector<8x128xf32>
      %1086 = arith.mulf %1085, %1073 : vector<8x128xf32>
      %1087 = arith.subf %1084, %1086 : vector<8x128xf32>
      %c1240 = arith.constant 1240 : index
      %c0_470 = arith.constant 0 : index
      %1088 = vector.load %arg3[%c1240, %c0_470] : memref<2048x128xf32, #tpu.memory_space<vmem>>, vector<8x128xf32>
      tpu.vector_store %arg3[%c1240, %c0_470], %1087 {strides = array<i32>} : memref<2048x128xf32, #tpu.memory_space<vmem>>, vector<8x128xf32>,
      %cst_471 = arith.constant 1.96428573 : f32
      %1089 = vector.broadcast %cst_471 : f32 to vector<8x128xf32>
      %1090 = arith.mulf %1089, %903 : vector<8x128xf32>
      %1091 = arith.mulf %1090, %1087 : vector<8x128xf32>
      %cst_472 = arith.constant 0.964285731 : f32
      %1092 = vector.broadcast %cst_472 : f32 to vector<8x128xf32>
      %1093 = arith.mulf %1092, %1080 : vector<8x128xf32>
      %1094 = arith.subf %1091, %1093 : vector<8x128xf32>
      %c1248 = arith.constant 1248 : index
      %c0_473 = arith.constant 0 : index
      %1095 = vector.load %arg3[%c1248, %c0_473] : memref<2048x128xf32, #tpu.memory_space<vmem>>, vector<8x128xf32>
      tpu.vector_store %arg3[%c1248, %c0_473], %1094 {strides = array<i32>} : memref<2048x128xf32, #tpu.memory_space<vmem>>, vector<8x128xf32>,
      %cst_474 = arith.constant 1.96551728 : f32
      %1096 = vector.broadcast %cst_474 : f32 to vector<8x128xf32>
      %1097 = arith.mulf %1096, %903 : vector<8x128xf32>
      %1098 = arith.mulf %1097, %1094 : vector<8x128xf32>
      %cst_475 = arith.constant 0.965517222 : f32
      %1099 = vector.broadcast %cst_475 : f32 to vector<8x128xf32>
      %1100 = arith.mulf %1099, %1087 : vector<8x128xf32>
      %1101 = arith.subf %1098, %1100 : vector<8x128xf32>
      %c1256 = arith.constant 1256 : index
      %c0_476 = arith.constant 0 : index
      %1102 = vector.load %arg3[%c1256, %c0_476] : memref<2048x128xf32, #tpu.memory_space<vmem>>, vector<8x128xf32>
      tpu.vector_store %arg3[%c1256, %c0_476], %1101 {strides = array<i32>} : memref<2048x128xf32, #tpu.memory_space<vmem>>, vector<8x128xf32>,
      %cst_477 = arith.constant 1.9666667 : f32
      %1103 = vector.broadcast %cst_477 : f32 to vector<8x128xf32>
      %1104 = arith.mulf %1103, %903 : vector<8x128xf32>
      %1105 = arith.mulf %1104, %1101 : vector<8x128xf32>
      %cst_478 = arith.constant 0.966666638 : f32
      %1106 = vector.broadcast %cst_478 : f32 to vector<8x128xf32>
      %1107 = arith.mulf %1106, %1094 : vector<8x128xf32>
      %1108 = arith.subf %1105, %1107 : vector<8x128xf32>
      %c1264 = arith.constant 1264 : index
      %c0_479 = arith.constant 0 : index
      %1109 = vector.load %arg3[%c1264, %c0_479] : memref<2048x128xf32, #tpu.memory_space<vmem>>, vector<8x128xf32>
      tpu.vector_store %arg3[%c1264, %c0_479], %1108 {strides = array<i32>} : memref<2048x128xf32, #tpu.memory_space<vmem>>, vector<8x128xf32>,
      %cst_480 = arith.constant 1.96774197 : f32
      %1110 = vector.broadcast %cst_480 : f32 to vector<8x128xf32>
      %1111 = arith.mulf %1110, %903 : vector<8x128xf32>
      %1112 = arith.mulf %1111, %1108 : vector<8x128xf32>
      %cst_481 = arith.constant 0.967741906 : f32
      %1113 = vector.broadcast %cst_481 : f32 to vector<8x128xf32>
      %1114 = arith.mulf %1113, %1101 : vector<8x128xf32>
      %1115 = arith.subf %1112, %1114 : vector<8x128xf32>
      %c1272 = arith.constant 1272 : index
      %c0_482 = arith.constant 0 : index
      %1116 = vector.load %arg3[%c1272, %c0_482] : memref<2048x128xf32, #tpu.memory_space<vmem>>, vector<8x128xf32>
      tpu.vector_store %arg3[%c1272, %c0_482], %1115 {strides = array<i32>} : memref<2048x128xf32, #tpu.memory_space<vmem>>, vector<8x128xf32>,
      %cst_483 = arith.constant 1.968750e+00 : f32
      %1117 = vector.broadcast %cst_483 : f32 to vector<8x128xf32>
      %1118 = arith.mulf %1117, %903 : vector<8x128xf32>
      %1119 = arith.mulf %1118, %1115 : vector<8x128xf32>
      %cst_484 = arith.constant 9.687500e-01 : f32
      %1120 = vector.broadcast %cst_484 : f32 to vector<8x128xf32>
      %1121 = arith.mulf %1120, %1108 : vector<8x128xf32>
      %1122 = arith.subf %1119, %1121 : vector<8x128xf32>
      %c1280 = arith.constant 1280 : index
      %c0_485 = arith.constant 0 : index
      %1123 = vector.load %arg3[%c1280, %c0_485] : memref<2048x128xf32, #tpu.memory_space<vmem>>, vector<8x128xf32>
      tpu.vector_store %arg3[%c1280, %c0_485], %1122 {strides = array<i32>} : memref<2048x128xf32, #tpu.memory_space<vmem>>, vector<8x128xf32>,
      %cst_486 = arith.constant 1.969697 : f32
      %1124 = vector.broadcast %cst_486 : f32 to vector<8x128xf32>
      %1125 = arith.mulf %1124, %903 : vector<8x128xf32>
      %1126 = arith.mulf %1125, %1122 : vector<8x128xf32>
      %cst_487 = arith.constant 0.969696998 : f32
      %1127 = vector.broadcast %cst_487 : f32 to vector<8x128xf32>
      %1128 = arith.mulf %1127, %1115 : vector<8x128xf32>
      %1129 = arith.subf %1126, %1128 : vector<8x128xf32>
      %c1288 = arith.constant 1288 : index
      %c0_488 = arith.constant 0 : index
      %1130 = vector.load %arg3[%c1288, %c0_488] : memref<2048x128xf32, #tpu.memory_space<vmem>>, vector<8x128xf32>
      tpu.vector_store %arg3[%c1288, %c0_488], %1129 {strides = array<i32>} : memref<2048x128xf32, #tpu.memory_space<vmem>>, vector<8x128xf32>,
      %cst_489 = arith.constant 1.97058821 : f32
      %1131 = vector.broadcast %cst_489 : f32 to vector<8x128xf32>
      %1132 = arith.mulf %1131, %903 : vector<8x128xf32>
      %1133 = arith.mulf %1132, %1129 : vector<8x128xf32>
      %cst_490 = arith.constant 0.970588207 : f32
      %1134 = vector.broadcast %cst_490 : f32 to vector<8x128xf32>
      %1135 = arith.mulf %1134, %1122 : vector<8x128xf32>
      %1136 = arith.subf %1133, %1135 : vector<8x128xf32>
      %c1296 = arith.constant 1296 : index
      %c0_491 = arith.constant 0 : index
      %1137 = vector.load %arg3[%c1296, %c0_491] : memref<2048x128xf32, #tpu.memory_space<vmem>>, vector<8x128xf32>
      tpu.vector_store %arg3[%c1296, %c0_491], %1136 {strides = array<i32>} : memref<2048x128xf32, #tpu.memory_space<vmem>>, vector<8x128xf32>,
      %cst_492 = arith.constant 1.97142851 : f32
      %1138 = vector.broadcast %cst_492 : f32 to vector<8x128xf32>
      %1139 = arith.mulf %1138, %903 : vector<8x128xf32>
      %1140 = arith.mulf %1139, %1136 : vector<8x128xf32>
      %cst_493 = arith.constant 0.971428573 : f32
      %1141 = vector.broadcast %cst_493 : f32 to vector<8x128xf32>
      %1142 = arith.mulf %1141, %1129 : vector<8x128xf32>
      %1143 = arith.subf %1140, %1142 : vector<8x128xf32>
      %c1304 = arith.constant 1304 : index
      %c0_494 = arith.constant 0 : index
      %1144 = vector.load %arg3[%c1304, %c0_494] : memref<2048x128xf32, #tpu.memory_space<vmem>>, vector<8x128xf32>
      tpu.vector_store %arg3[%c1304, %c0_494], %1143 {strides = array<i32>} : memref<2048x128xf32, #tpu.memory_space<vmem>>, vector<8x128xf32>,
      %cst_495 = arith.constant 1.97222221 : f32
      %1145 = vector.broadcast %cst_495 : f32 to vector<8x128xf32>
      %1146 = arith.mulf %1145, %903 : vector<8x128xf32>
      %1147 = arith.mulf %1146, %1143 : vector<8x128xf32>
      %cst_496 = arith.constant 0.972222208 : f32
      %1148 = vector.broadcast %cst_496 : f32 to vector<8x128xf32>
      %1149 = arith.mulf %1148, %1136 : vector<8x128xf32>
      %1150 = arith.subf %1147, %1149 : vector<8x128xf32>
      %c1312 = arith.constant 1312 : index
      %c0_497 = arith.constant 0 : index
      %1151 = vector.load %arg3[%c1312, %c0_497] : memref<2048x128xf32, #tpu.memory_space<vmem>>, vector<8x128xf32>
      tpu.vector_store %arg3[%c1312, %c0_497], %1150 {strides = array<i32>} : memref<2048x128xf32, #tpu.memory_space<vmem>>, vector<8x128xf32>,
      %cst_498 = arith.constant 1.97297299 : f32
      %1152 = vector.broadcast %cst_498 : f32 to vector<8x128xf32>
      %1153 = arith.mulf %1152, %903 : vector<8x128xf32>
      %1154 = arith.mulf %1153, %1150 : vector<8x128xf32>
      %cst_499 = arith.constant 0.972972989 : f32
      %1155 = vector.broadcast %cst_499 : f32 to vector<8x128xf32>
      %1156 = arith.mulf %1155, %1143 : vector<8x128xf32>
      %1157 = arith.subf %1154, %1156 : vector<8x128xf32>
      %c1320 = arith.constant 1320 : index
      %c0_500 = arith.constant 0 : index
      %1158 = vector.load %arg3[%c1320, %c0_500] : memref<2048x128xf32, #tpu.memory_space<vmem>>, vector<8x128xf32>
      tpu.vector_store %arg3[%c1320, %c0_500], %1157 {strides = array<i32>} : memref<2048x128xf32, #tpu.memory_space<vmem>>, vector<8x128xf32>,
      %cst_501 = arith.constant 1.97368419 : f32
      %1159 = vector.broadcast %cst_501 : f32 to vector<8x128xf32>
      %1160 = arith.mulf %1159, %903 : vector<8x128xf32>
      %1161 = arith.mulf %1160, %1157 : vector<8x128xf32>
      %cst_502 = arith.constant 0.973684191 : f32
      %1162 = vector.broadcast %cst_502 : f32 to vector<8x128xf32>
      %1163 = arith.mulf %1162, %1150 : vector<8x128xf32>
      %1164 = arith.subf %1161, %1163 : vector<8x128xf32>
      %c1328 = arith.constant 1328 : index
      %c0_503 = arith.constant 0 : index
      %1165 = vector.load %arg3[%c1328, %c0_503] : memref<2048x128xf32, #tpu.memory_space<vmem>>, vector<8x128xf32>
      tpu.vector_store %arg3[%c1328, %c0_503], %1164 {strides = array<i32>} : memref<2048x128xf32, #tpu.memory_space<vmem>>, vector<8x128xf32>,
      %cst_504 = arith.constant 1.97435892 : f32
      %1166 = vector.broadcast %cst_504 : f32 to vector<8x128xf32>
      %1167 = arith.mulf %1166, %903 : vector<8x128xf32>
      %1168 = arith.mulf %1167, %1164 : vector<8x128xf32>
      %cst_505 = arith.constant 0.974358975 : f32
      %1169 = vector.broadcast %cst_505 : f32 to vector<8x128xf32>
      %1170 = arith.mulf %1169, %1157 : vector<8x128xf32>
      %1171 = arith.subf %1168, %1170 : vector<8x128xf32>
      %c1336 = arith.constant 1336 : index
      %c0_506 = arith.constant 0 : index
      %1172 = vector.load %arg3[%c1336, %c0_506] : memref<2048x128xf32, #tpu.memory_space<vmem>>, vector<8x128xf32>
      tpu.vector_store %arg3[%c1336, %c0_506], %1171 {strides = array<i32>} : memref<2048x128xf32, #tpu.memory_space<vmem>>, vector<8x128xf32>,
      %cst_507 = arith.constant 1.975000e+00 : f32
      %1173 = vector.broadcast %cst_507 : f32 to vector<8x128xf32>
      %1174 = arith.mulf %1173, %903 : vector<8x128xf32>
      %1175 = arith.mulf %1174, %1171 : vector<8x128xf32>
      %cst_508 = arith.constant 9.750000e-01 : f32
      %1176 = vector.broadcast %cst_508 : f32 to vector<8x128xf32>
      %1177 = arith.mulf %1176, %1164 : vector<8x128xf32>
      %1178 = arith.subf %1175, %1177 : vector<8x128xf32>
      %c1344 = arith.constant 1344 : index
      %c0_509 = arith.constant 0 : index
      %1179 = vector.load %arg3[%c1344, %c0_509] : memref<2048x128xf32, #tpu.memory_space<vmem>>, vector<8x128xf32>
      tpu.vector_store %arg3[%c1344, %c0_509], %1178 {strides = array<i32>} : memref<2048x128xf32, #tpu.memory_space<vmem>>, vector<8x128xf32>,
      %cst_510 = arith.constant 1.97560978 : f32
      %1180 = vector.broadcast %cst_510 : f32 to vector<8x128xf32>
      %1181 = arith.mulf %1180, %903 : vector<8x128xf32>
      %1182 = arith.mulf %1181, %1178 : vector<8x128xf32>
      %cst_511 = arith.constant 0.975609779 : f32
      %1183 = vector.broadcast %cst_511 : f32 to vector<8x128xf32>
      %1184 = arith.mulf %1183, %1171 : vector<8x128xf32>
      %1185 = arith.subf %1182, %1184 : vector<8x128xf32>
      %c1352 = arith.constant 1352 : index
      %c0_512 = arith.constant 0 : index
      %1186 = vector.load %arg3[%c1352, %c0_512] : memref<2048x128xf32, #tpu.memory_space<vmem>>, vector<8x128xf32>
      tpu.vector_store %arg3[%c1352, %c0_512], %1185 {strides = array<i32>} : memref<2048x128xf32, #tpu.memory_space<vmem>>, vector<8x128xf32>,
      %cst_513 = arith.constant 1.97619045 : f32
      %1187 = vector.broadcast %cst_513 : f32 to vector<8x128xf32>
      %1188 = arith.mulf %1187, %903 : vector<8x128xf32>
      %1189 = arith.mulf %1188, %1185 : vector<8x128xf32>
      %cst_514 = arith.constant 0.976190447 : f32
      %1190 = vector.broadcast %cst_514 : f32 to vector<8x128xf32>
      %1191 = arith.mulf %1190, %1178 : vector<8x128xf32>
      %1192 = arith.subf %1189, %1191 : vector<8x128xf32>
      %c1360 = arith.constant 1360 : index
      %c0_515 = arith.constant 0 : index
      %1193 = vector.load %arg3[%c1360, %c0_515] : memref<2048x128xf32, #tpu.memory_space<vmem>>, vector<8x128xf32>
      tpu.vector_store %arg3[%c1360, %c0_515], %1192 {strides = array<i32>} : memref<2048x128xf32, #tpu.memory_space<vmem>>, vector<8x128xf32>,
      %cst_516 = arith.constant 1.97674417 : f32
      %1194 = vector.broadcast %cst_516 : f32 to vector<8x128xf32>
      %1195 = arith.mulf %1194, %903 : vector<8x128xf32>
      %1196 = arith.mulf %1195, %1192 : vector<8x128xf32>
      %cst_517 = arith.constant 0.976744174 : f32
      %1197 = vector.broadcast %cst_517 : f32 to vector<8x128xf32>
      %1198 = arith.mulf %1197, %1185 : vector<8x128xf32>
      %1199 = arith.subf %1196, %1198 : vector<8x128xf32>
      %c1368 = arith.constant 1368 : index
      %c0_518 = arith.constant 0 : index
      %1200 = vector.load %arg3[%c1368, %c0_518] : memref<2048x128xf32, #tpu.memory_space<vmem>>, vector<8x128xf32>
      tpu.vector_store %arg3[%c1368, %c0_518], %1199 {strides = array<i32>} : memref<2048x128xf32, #tpu.memory_space<vmem>>, vector<8x128xf32>,
      %cst_519 = arith.constant 1.97727275 : f32
      %1201 = vector.broadcast %cst_519 : f32 to vector<8x128xf32>
      %1202 = arith.mulf %1201, %903 : vector<8x128xf32>
      %1203 = arith.mulf %1202, %1199 : vector<8x128xf32>
      %cst_520 = arith.constant 0.977272748 : f32
      %1204 = vector.broadcast %cst_520 : f32 to vector<8x128xf32>
      %1205 = arith.mulf %1204, %1192 : vector<8x128xf32>
      %1206 = arith.subf %1203, %1205 : vector<8x128xf32>
      %c1376 = arith.constant 1376 : index
      %c0_521 = arith.constant 0 : index
      %1207 = vector.load %arg3[%c1376, %c0_521] : memref<2048x128xf32, #tpu.memory_space<vmem>>, vector<8x128xf32>
      tpu.vector_store %arg3[%c1376, %c0_521], %1206 {strides = array<i32>} : memref<2048x128xf32, #tpu.memory_space<vmem>>, vector<8x128xf32>,
      %cst_522 = arith.constant 1.97777772 : f32
      %1208 = vector.broadcast %cst_522 : f32 to vector<8x128xf32>
      %1209 = arith.mulf %1208, %903 : vector<8x128xf32>
      %1210 = arith.mulf %1209, %1206 : vector<8x128xf32>
      %cst_523 = arith.constant 0.977777779 : f32
      %1211 = vector.broadcast %cst_523 : f32 to vector<8x128xf32>
      %1212 = arith.mulf %1211, %1199 : vector<8x128xf32>
      %1213 = arith.subf %1210, %1212 : vector<8x128xf32>
      %c1384 = arith.constant 1384 : index
      %c0_524 = arith.constant 0 : index
      %1214 = vector.load %arg3[%c1384, %c0_524] : memref<2048x128xf32, #tpu.memory_space<vmem>>, vector<8x128xf32>
      tpu.vector_store %arg3[%c1384, %c0_524], %1213 {strides = array<i32>} : memref<2048x128xf32, #tpu.memory_space<vmem>>, vector<8x128xf32>,
      %cst_525 = arith.constant 1.97826087 : f32
      %1215 = vector.broadcast %cst_525 : f32 to vector<8x128xf32>
      %1216 = arith.mulf %1215, %903 : vector<8x128xf32>
      %1217 = arith.mulf %1216, %1213 : vector<8x128xf32>
      %cst_526 = arith.constant 0.978260874 : f32
      %1218 = vector.broadcast %cst_526 : f32 to vector<8x128xf32>
      %1219 = arith.mulf %1218, %1206 : vector<8x128xf32>
      %1220 = arith.subf %1217, %1219 : vector<8x128xf32>
      %c1392 = arith.constant 1392 : index
      %c0_527 = arith.constant 0 : index
      %1221 = vector.load %arg3[%c1392, %c0_527] : memref<2048x128xf32, #tpu.memory_space<vmem>>, vector<8x128xf32>
      tpu.vector_store %arg3[%c1392, %c0_527], %1220 {strides = array<i32>} : memref<2048x128xf32, #tpu.memory_space<vmem>>, vector<8x128xf32>,
      %cst_528 = arith.constant 1.97872341 : f32
      %1222 = vector.broadcast %cst_528 : f32 to vector<8x128xf32>
      %1223 = arith.mulf %1222, %903 : vector<8x128xf32>
      %1224 = arith.mulf %1223, %1220 : vector<8x128xf32>
      %cst_529 = arith.constant 0.978723406 : f32
      %1225 = vector.broadcast %cst_529 : f32 to vector<8x128xf32>
      %1226 = arith.mulf %1225, %1213 : vector<8x128xf32>
      %1227 = arith.subf %1224, %1226 : vector<8x128xf32>
      %c1400 = arith.constant 1400 : index
      %c0_530 = arith.constant 0 : index
      %1228 = vector.load %arg3[%c1400, %c0_530] : memref<2048x128xf32, #tpu.memory_space<vmem>>, vector<8x128xf32>
      tpu.vector_store %arg3[%c1400, %c0_530], %1227 {strides = array<i32>} : memref<2048x128xf32, #tpu.memory_space<vmem>>, vector<8x128xf32>,
      %cst_531 = arith.constant 1.97916663 : f32
      %1229 = vector.broadcast %cst_531 : f32 to vector<8x128xf32>
      %1230 = arith.mulf %1229, %903 : vector<8x128xf32>
      %1231 = arith.mulf %1230, %1227 : vector<8x128xf32>
      %cst_532 = arith.constant 0.979166686 : f32
      %1232 = vector.broadcast %cst_532 : f32 to vector<8x128xf32>
      %1233 = arith.mulf %1232, %1220 : vector<8x128xf32>
      %1234 = arith.subf %1231, %1233 : vector<8x128xf32>
      %c1408 = arith.constant 1408 : index
      %c0_533 = arith.constant 0 : index
      %1235 = vector.load %arg3[%c1408, %c0_533] : memref<2048x128xf32, #tpu.memory_space<vmem>>, vector<8x128xf32>
      tpu.vector_store %arg3[%c1408, %c0_533], %1234 {strides = array<i32>} : memref<2048x128xf32, #tpu.memory_space<vmem>>, vector<8x128xf32>,
      %cst_534 = arith.constant 1.97959185 : f32
      %1236 = vector.broadcast %cst_534 : f32 to vector<8x128xf32>
      %1237 = arith.mulf %1236, %903 : vector<8x128xf32>
      %1238 = arith.mulf %1237, %1234 : vector<8x128xf32>
      %cst_535 = arith.constant 0.979591846 : f32
      %1239 = vector.broadcast %cst_535 : f32 to vector<8x128xf32>
      %1240 = arith.mulf %1239, %1227 : vector<8x128xf32>
      %1241 = arith.subf %1238, %1240 : vector<8x128xf32>
      %c1416 = arith.constant 1416 : index
      %c0_536 = arith.constant 0 : index
      %1242 = vector.load %arg3[%c1416, %c0_536] : memref<2048x128xf32, #tpu.memory_space<vmem>>, vector<8x128xf32>
      tpu.vector_store %arg3[%c1416, %c0_536], %1241 {strides = array<i32>} : memref<2048x128xf32, #tpu.memory_space<vmem>>, vector<8x128xf32>,
      %cst_537 = arith.constant 1.980000e+00 : f32
      %1243 = vector.broadcast %cst_537 : f32 to vector<8x128xf32>
      %1244 = arith.mulf %1243, %903 : vector<8x128xf32>
      %1245 = arith.mulf %1244, %1241 : vector<8x128xf32>
      %cst_538 = arith.constant 9.800000e-01 : f32
      %1246 = vector.broadcast %cst_538 : f32 to vector<8x128xf32>
      %1247 = arith.mulf %1246, %1234 : vector<8x128xf32>
      %1248 = arith.subf %1245, %1247 : vector<8x128xf32>
      %c1424 = arith.constant 1424 : index
      %c0_539 = arith.constant 0 : index
      %1249 = vector.load %arg3[%c1424, %c0_539] : memref<2048x128xf32, #tpu.memory_space<vmem>>, vector<8x128xf32>
      tpu.vector_store %arg3[%c1424, %c0_539], %1248 {strides = array<i32>} : memref<2048x128xf32, #tpu.memory_space<vmem>>, vector<8x128xf32>,
      %cst_540 = arith.constant 1.9803921 : f32
      %1250 = vector.broadcast %cst_540 : f32 to vector<8x128xf32>
      %1251 = arith.mulf %1250, %903 : vector<8x128xf32>
      %1252 = arith.mulf %1251, %1248 : vector<8x128xf32>
      %cst_541 = arith.constant 0.980392158 : f32
      %1253 = vector.broadcast %cst_541 : f32 to vector<8x128xf32>
      %1254 = arith.mulf %1253, %1241 : vector<8x128xf32>
      %1255 = arith.subf %1252, %1254 : vector<8x128xf32>
      %c1432 = arith.constant 1432 : index
      %c0_542 = arith.constant 0 : index
      %1256 = vector.load %arg3[%c1432, %c0_542] : memref<2048x128xf32, #tpu.memory_space<vmem>>, vector<8x128xf32>
      tpu.vector_store %arg3[%c1432, %c0_542], %1255 {strides = array<i32>} : memref<2048x128xf32, #tpu.memory_space<vmem>>, vector<8x128xf32>,
      %cst_543 = arith.constant 1.98076928 : f32
      %1257 = vector.broadcast %cst_543 : f32 to vector<8x128xf32>
      %1258 = arith.mulf %1257, %903 : vector<8x128xf32>
      %1259 = arith.mulf %1258, %1255 : vector<8x128xf32>
      %cst_544 = arith.constant 0.980769217 : f32
      %1260 = vector.broadcast %cst_544 : f32 to vector<8x128xf32>
      %1261 = arith.mulf %1260, %1248 : vector<8x128xf32>
      %1262 = arith.subf %1259, %1261 : vector<8x128xf32>
      %c1440 = arith.constant 1440 : index
      %c0_545 = arith.constant 0 : index
      %1263 = vector.load %arg3[%c1440, %c0_545] : memref<2048x128xf32, #tpu.memory_space<vmem>>, vector<8x128xf32>
      tpu.vector_store %arg3[%c1440, %c0_545], %1262 {strides = array<i32>} : memref<2048x128xf32, #tpu.memory_space<vmem>>, vector<8x128xf32>,
      %cst_546 = arith.constant 1.98113203 : f32
      %1264 = vector.broadcast %cst_546 : f32 to vector<8x128xf32>
      %1265 = arith.mulf %1264, %903 : vector<8x128xf32>
      %1266 = arith.mulf %1265, %1262 : vector<8x128xf32>
      %cst_547 = arith.constant 0.98113209 : f32
      %1267 = vector.broadcast %cst_547 : f32 to vector<8x128xf32>
      %1268 = arith.mulf %1267, %1255 : vector<8x128xf32>
      %1269 = arith.subf %1266, %1268 : vector<8x128xf32>
      %c1448 = arith.constant 1448 : index
      %c0_548 = arith.constant 0 : index
      %1270 = vector.load %arg3[%c1448, %c0_548] : memref<2048x128xf32, #tpu.memory_space<vmem>>, vector<8x128xf32>
      tpu.vector_store %arg3[%c1448, %c0_548], %1269 {strides = array<i32>} : memref<2048x128xf32, #tpu.memory_space<vmem>>, vector<8x128xf32>,
      %cst_549 = arith.constant 1.98148143 : f32
      %1271 = vector.broadcast %cst_549 : f32 to vector<8x128xf32>
      %1272 = arith.mulf %1271, %903 : vector<8x128xf32>
      %1273 = arith.mulf %1272, %1269 : vector<8x128xf32>
      %cst_550 = arith.constant 0.981481492 : f32
      %1274 = vector.broadcast %cst_550 : f32 to vector<8x128xf32>
      %1275 = arith.mulf %1274, %1262 : vector<8x128xf32>
      %1276 = arith.subf %1273, %1275 : vector<8x128xf32>
      %c1456 = arith.constant 1456 : index
      %c0_551 = arith.constant 0 : index
      %1277 = vector.load %arg3[%c1456, %c0_551] : memref<2048x128xf32, #tpu.memory_space<vmem>>, vector<8x128xf32>
      tpu.vector_store %arg3[%c1456, %c0_551], %1276 {strides = array<i32>} : memref<2048x128xf32, #tpu.memory_space<vmem>>, vector<8x128xf32>,
      %cst_552 = arith.constant 1.9818182 : f32
      %1278 = vector.broadcast %cst_552 : f32 to vector<8x128xf32>
      %1279 = arith.mulf %1278, %903 : vector<8x128xf32>
      %1280 = arith.mulf %1279, %1276 : vector<8x128xf32>
      %cst_553 = arith.constant 0.981818199 : f32
      %1281 = vector.broadcast %cst_553 : f32 to vector<8x128xf32>
      %1282 = arith.mulf %1281, %1269 : vector<8x128xf32>
      %1283 = arith.subf %1280, %1282 : vector<8x128xf32>
      %c1464 = arith.constant 1464 : index
      %c0_554 = arith.constant 0 : index
      %1284 = vector.load %arg3[%c1464, %c0_554] : memref<2048x128xf32, #tpu.memory_space<vmem>>, vector<8x128xf32>
      tpu.vector_store %arg3[%c1464, %c0_554], %1283 {strides = array<i32>} : memref<2048x128xf32, #tpu.memory_space<vmem>>, vector<8x128xf32>,
      %cst_555 = arith.constant 1.98214281 : f32
      %1285 = vector.broadcast %cst_555 : f32 to vector<8x128xf32>
      %1286 = arith.mulf %1285, %903 : vector<8x128xf32>
      %1287 = arith.mulf %1286, %1283 : vector<8x128xf32>
      %cst_556 = arith.constant 0.982142865 : f32
      %1288 = vector.broadcast %cst_556 : f32 to vector<8x128xf32>
      %1289 = arith.mulf %1288, %1276 : vector<8x128xf32>
      %1290 = arith.subf %1287, %1289 : vector<8x128xf32>
      %c1472 = arith.constant 1472 : index
      %c0_557 = arith.constant 0 : index
      %1291 = vector.load %arg3[%c1472, %c0_557] : memref<2048x128xf32, #tpu.memory_space<vmem>>, vector<8x128xf32>
      tpu.vector_store %arg3[%c1472, %c0_557], %1290 {strides = array<i32>} : memref<2048x128xf32, #tpu.memory_space<vmem>>, vector<8x128xf32>,
      %cst_558 = arith.constant 1.98245609 : f32
      %1292 = vector.broadcast %cst_558 : f32 to vector<8x128xf32>
      %1293 = arith.mulf %1292, %903 : vector<8x128xf32>
      %1294 = arith.mulf %1293, %1290 : vector<8x128xf32>
      %cst_559 = arith.constant 0.982456147 : f32
      %1295 = vector.broadcast %cst_559 : f32 to vector<8x128xf32>
      %1296 = arith.mulf %1295, %1283 : vector<8x128xf32>
      %1297 = arith.subf %1294, %1296 : vector<8x128xf32>
      %c1480 = arith.constant 1480 : index
      %c0_560 = arith.constant 0 : index
      %1298 = vector.load %arg3[%c1480, %c0_560] : memref<2048x128xf32, #tpu.memory_space<vmem>>, vector<8x128xf32>
      tpu.vector_store %arg3[%c1480, %c0_560], %1297 {strides = array<i32>} : memref<2048x128xf32, #tpu.memory_space<vmem>>, vector<8x128xf32>,
      %cst_561 = arith.constant 1.98275864 : f32
      %1299 = vector.broadcast %cst_561 : f32 to vector<8x128xf32>
      %1300 = arith.mulf %1299, %903 : vector<8x128xf32>
      %1301 = arith.mulf %1300, %1297 : vector<8x128xf32>
      %cst_562 = arith.constant 0.982758641 : f32
      %1302 = vector.broadcast %cst_562 : f32 to vector<8x128xf32>
      %1303 = arith.mulf %1302, %1290 : vector<8x128xf32>
      %1304 = arith.subf %1301, %1303 : vector<8x128xf32>
      %c1488 = arith.constant 1488 : index
      %c0_563 = arith.constant 0 : index
      %1305 = vector.load %arg3[%c1488, %c0_563] : memref<2048x128xf32, #tpu.memory_space<vmem>>, vector<8x128xf32>
      tpu.vector_store %arg3[%c1488, %c0_563], %1304 {strides = array<i32>} : memref<2048x128xf32, #tpu.memory_space<vmem>>, vector<8x128xf32>,
      %cst_564 = arith.constant 1.98305082 : f32
      %1306 = vector.broadcast %cst_564 : f32 to vector<8x128xf32>
      %1307 = arith.mulf %1306, %903 : vector<8x128xf32>
      %1308 = arith.mulf %1307, %1304 : vector<8x128xf32>
      %cst_565 = arith.constant 0.983050823 : f32
      %1309 = vector.broadcast %cst_565 : f32 to vector<8x128xf32>
      %1310 = arith.mulf %1309, %1297 : vector<8x128xf32>
      %1311 = arith.subf %1308, %1310 : vector<8x128xf32>
      %c1496 = arith.constant 1496 : index
      %c0_566 = arith.constant 0 : index
      %1312 = vector.load %arg3[%c1496, %c0_566] : memref<2048x128xf32, #tpu.memory_space<vmem>>, vector<8x128xf32>
      tpu.vector_store %arg3[%c1496, %c0_566], %1311 {strides = array<i32>} : memref<2048x128xf32, #tpu.memory_space<vmem>>, vector<8x128xf32>,
      %cst_567 = arith.constant 1.98333335 : f32
      %1313 = vector.broadcast %cst_567 : f32 to vector<8x128xf32>
      %1314 = arith.mulf %1313, %903 : vector<8x128xf32>
      %1315 = arith.mulf %1314, %1311 : vector<8x128xf32>
      %cst_568 = arith.constant 0.983333349 : f32
      %1316 = vector.broadcast %cst_568 : f32 to vector<8x128xf32>
      %1317 = arith.mulf %1316, %1304 : vector<8x128xf32>
      %1318 = arith.subf %1315, %1317 : vector<8x128xf32>
      %c1504 = arith.constant 1504 : index
      %c0_569 = arith.constant 0 : index
      %1319 = vector.load %arg3[%c1504, %c0_569] : memref<2048x128xf32, #tpu.memory_space<vmem>>, vector<8x128xf32>
      tpu.vector_store %arg3[%c1504, %c0_569], %1318 {strides = array<i32>} : memref<2048x128xf32, #tpu.memory_space<vmem>>, vector<8x128xf32>,
      %cst_570 = arith.constant 1.98360658 : f32
      %1320 = vector.broadcast %cst_570 : f32 to vector<8x128xf32>
      %1321 = arith.mulf %1320, %903 : vector<8x128xf32>
      %1322 = arith.mulf %1321, %1318 : vector<8x128xf32>
      %cst_571 = arith.constant 0.983606576 : f32
      %1323 = vector.broadcast %cst_571 : f32 to vector<8x128xf32>
      %1324 = arith.mulf %1323, %1311 : vector<8x128xf32>
      %1325 = arith.subf %1322, %1324 : vector<8x128xf32>
      %c1512 = arith.constant 1512 : index
      %c0_572 = arith.constant 0 : index
      %1326 = vector.load %arg3[%c1512, %c0_572] : memref<2048x128xf32, #tpu.memory_space<vmem>>, vector<8x128xf32>
      tpu.vector_store %arg3[%c1512, %c0_572], %1325 {strides = array<i32>} : memref<2048x128xf32, #tpu.memory_space<vmem>>, vector<8x128xf32>,
      %cst_573 = arith.constant 1.98387098 : f32
      %1327 = vector.broadcast %cst_573 : f32 to vector<8x128xf32>
      %1328 = arith.mulf %1327, %903 : vector<8x128xf32>
      %1329 = arith.mulf %1328, %1325 : vector<8x128xf32>
      %cst_574 = arith.constant 0.983870983 : f32
      %1330 = vector.broadcast %cst_574 : f32 to vector<8x128xf32>
      %1331 = arith.mulf %1330, %1318 : vector<8x128xf32>
      %1332 = arith.subf %1329, %1331 : vector<8x128xf32>
      %c1520 = arith.constant 1520 : index
      %c0_575 = arith.constant 0 : index
      %1333 = vector.load %arg3[%c1520, %c0_575] : memref<2048x128xf32, #tpu.memory_space<vmem>>, vector<8x128xf32>
      tpu.vector_store %arg3[%c1520, %c0_575], %1332 {strides = array<i32>} : memref<2048x128xf32, #tpu.memory_space<vmem>>, vector<8x128xf32>,
      %cst_576 = arith.constant 1.98412693 : f32
      %1334 = vector.broadcast %cst_576 : f32 to vector<8x128xf32>
      %1335 = arith.mulf %1334, %903 : vector<8x128xf32>
      %1336 = arith.mulf %1335, %1332 : vector<8x128xf32>
      %cst_577 = arith.constant 0.984126985 : f32
      %1337 = vector.broadcast %cst_577 : f32 to vector<8x128xf32>
      %1338 = arith.mulf %1337, %1325 : vector<8x128xf32>
      %1339 = arith.subf %1336, %1338 : vector<8x128xf32>
      %c1528 = arith.constant 1528 : index
      %c0_578 = arith.constant 0 : index
      %1340 = vector.load %arg3[%c1528, %c0_578] : memref<2048x128xf32, #tpu.memory_space<vmem>>, vector<8x128xf32>
      tpu.vector_store %arg3[%c1528, %c0_578], %1339 {strides = array<i32>} : memref<2048x128xf32, #tpu.memory_space<vmem>>, vector<8x128xf32>,
      %cst_579 = arith.constant 1.984375 : f32
      %1341 = vector.broadcast %cst_579 : f32 to vector<8x128xf32>
      %1342 = arith.mulf %1341, %903 : vector<8x128xf32>
      %1343 = arith.mulf %1342, %1339 : vector<8x128xf32>
      %cst_580 = arith.constant 9.843750e-01 : f32
      %1344 = vector.broadcast %cst_580 : f32 to vector<8x128xf32>
      %1345 = arith.mulf %1344, %1332 : vector<8x128xf32>
      %1346 = arith.subf %1343, %1345 : vector<8x128xf32>
      %c1536 = arith.constant 1536 : index
      %c0_581 = arith.constant 0 : index
      %1347 = vector.load %arg3[%c1536, %c0_581] : memref<2048x128xf32, #tpu.memory_space<vmem>>, vector<8x128xf32>
      tpu.vector_store %arg3[%c1536, %c0_581], %1346 {strides = array<i32>} : memref<2048x128xf32, #tpu.memory_space<vmem>>, vector<8x128xf32>,
      %cst_582 = arith.constant 1.98461533 : f32
      %1348 = vector.broadcast %cst_582 : f32 to vector<8x128xf32>
      %1349 = arith.mulf %1348, %903 : vector<8x128xf32>
      %1350 = arith.mulf %1349, %1346 : vector<8x128xf32>
      %cst_583 = arith.constant 0.984615385 : f32
      %1351 = vector.broadcast %cst_583 : f32 to vector<8x128xf32>
      %1352 = arith.mulf %1351, %1339 : vector<8x128xf32>
      %1353 = arith.subf %1350, %1352 : vector<8x128xf32>
      %c1544 = arith.constant 1544 : index
      %c0_584 = arith.constant 0 : index
      %1354 = vector.load %arg3[%c1544, %c0_584] : memref<2048x128xf32, #tpu.memory_space<vmem>>, vector<8x128xf32>
      tpu.vector_store %arg3[%c1544, %c0_584], %1353 {strides = array<i32>} : memref<2048x128xf32, #tpu.memory_space<vmem>>, vector<8x128xf32>,
      %cst_585 = arith.constant 1.9848485 : f32
      %1355 = vector.broadcast %cst_585 : f32 to vector<8x128xf32>
      %1356 = arith.mulf %1355, %903 : vector<8x128xf32>
      %1357 = arith.mulf %1356, %1353 : vector<8x128xf32>
      %cst_586 = arith.constant 0.984848499 : f32
      %1358 = vector.broadcast %cst_586 : f32 to vector<8x128xf32>
      %1359 = arith.mulf %1358, %1346 : vector<8x128xf32>
      %1360 = arith.subf %1357, %1359 : vector<8x128xf32>
      %c1552 = arith.constant 1552 : index
      %c0_587 = arith.constant 0 : index
      %1361 = vector.load %arg3[%c1552, %c0_587] : memref<2048x128xf32, #tpu.memory_space<vmem>>, vector<8x128xf32>
      tpu.vector_store %arg3[%c1552, %c0_587], %1360 {strides = array<i32>} : memref<2048x128xf32, #tpu.memory_space<vmem>>, vector<8x128xf32>,
      %cst_588 = arith.constant 1.98507464 : f32
      %1362 = vector.broadcast %cst_588 : f32 to vector<8x128xf32>
      %1363 = arith.mulf %1362, %903 : vector<8x128xf32>
      %1364 = arith.mulf %1363, %1360 : vector<8x128xf32>
      %cst_589 = arith.constant 0.985074639 : f32
      %1365 = vector.broadcast %cst_589 : f32 to vector<8x128xf32>
      %1366 = arith.mulf %1365, %1353 : vector<8x128xf32>
      %1367 = arith.subf %1364, %1366 : vector<8x128xf32>
      %c1560 = arith.constant 1560 : index
      %c0_590 = arith.constant 0 : index
      %1368 = vector.load %arg3[%c1560, %c0_590] : memref<2048x128xf32, #tpu.memory_space<vmem>>, vector<8x128xf32>
      tpu.vector_store %arg3[%c1560, %c0_590], %1367 {strides = array<i32>} : memref<2048x128xf32, #tpu.memory_space<vmem>>, vector<8x128xf32>,
      %cst_591 = arith.constant 1.9852941 : f32
      %1369 = vector.broadcast %cst_591 : f32 to vector<8x128xf32>
      %1370 = arith.mulf %1369, %903 : vector<8x128xf32>
      %1371 = arith.mulf %1370, %1367 : vector<8x128xf32>
      %cst_592 = arith.constant 0.985294103 : f32
      %1372 = vector.broadcast %cst_592 : f32 to vector<8x128xf32>
      %1373 = arith.mulf %1372, %1360 : vector<8x128xf32>
      %1374 = arith.subf %1371, %1373 : vector<8x128xf32>
      %c1568 = arith.constant 1568 : index
      %c0_593 = arith.constant 0 : index
      %1375 = vector.load %arg3[%c1568, %c0_593] : memref<2048x128xf32, #tpu.memory_space<vmem>>, vector<8x128xf32>
      tpu.vector_store %arg3[%c1568, %c0_593], %1374 {strides = array<i32>} : memref<2048x128xf32, #tpu.memory_space<vmem>>, vector<8x128xf32>,
      %cst_594 = arith.constant 1.98550725 : f32
      %1376 = vector.broadcast %cst_594 : f32 to vector<8x128xf32>
      %1377 = arith.mulf %1376, %903 : vector<8x128xf32>
      %1378 = arith.mulf %1377, %1374 : vector<8x128xf32>
      %cst_595 = arith.constant 0.985507249 : f32
      %1379 = vector.broadcast %cst_595 : f32 to vector<8x128xf32>
      %1380 = arith.mulf %1379, %1367 : vector<8x128xf32>
      %1381 = arith.subf %1378, %1380 : vector<8x128xf32>
      %c1576 = arith.constant 1576 : index
      %c0_596 = arith.constant 0 : index
      %1382 = vector.load %arg3[%c1576, %c0_596] : memref<2048x128xf32, #tpu.memory_space<vmem>>, vector<8x128xf32>
      tpu.vector_store %arg3[%c1576, %c0_596], %1381 {strides = array<i32>} : memref<2048x128xf32, #tpu.memory_space<vmem>>, vector<8x128xf32>,
      %cst_597 = arith.constant 1.98571432 : f32
      %1383 = vector.broadcast %cst_597 : f32 to vector<8x128xf32>
      %1384 = arith.mulf %1383, %903 : vector<8x128xf32>
      %1385 = arith.mulf %1384, %1381 : vector<8x128xf32>
      %cst_598 = arith.constant 0.985714256 : f32
      %1386 = vector.broadcast %cst_598 : f32 to vector<8x128xf32>
      %1387 = arith.mulf %1386, %1374 : vector<8x128xf32>
      %1388 = arith.subf %1385, %1387 : vector<8x128xf32>
      %c1584 = arith.constant 1584 : index
      %c0_599 = arith.constant 0 : index
      %1389 = vector.load %arg3[%c1584, %c0_599] : memref<2048x128xf32, #tpu.memory_space<vmem>>, vector<8x128xf32>
      tpu.vector_store %arg3[%c1584, %c0_599], %1388 {strides = array<i32>} : memref<2048x128xf32, #tpu.memory_space<vmem>>, vector<8x128xf32>,
      %cst_600 = arith.constant 1.98591554 : f32
      %1390 = vector.broadcast %cst_600 : f32 to vector<8x128xf32>
      %1391 = arith.mulf %1390, %903 : vector<8x128xf32>
      %1392 = arith.mulf %1391, %1388 : vector<8x128xf32>
      %cst_601 = arith.constant 0.985915482 : f32
      %1393 = vector.broadcast %cst_601 : f32 to vector<8x128xf32>
      %1394 = arith.mulf %1393, %1381 : vector<8x128xf32>
      %1395 = arith.subf %1392, %1394 : vector<8x128xf32>
      %c1592 = arith.constant 1592 : index
      %c0_602 = arith.constant 0 : index
      %1396 = vector.load %arg3[%c1592, %c0_602] : memref<2048x128xf32, #tpu.memory_space<vmem>>, vector<8x128xf32>
      tpu.vector_store %arg3[%c1592, %c0_602], %1395 {strides = array<i32>} : memref<2048x128xf32, #tpu.memory_space<vmem>>, vector<8x128xf32>,
      %cst_603 = arith.constant 1.98611116 : f32
      %1397 = vector.broadcast %cst_603 : f32 to vector<8x128xf32>
      %1398 = arith.mulf %1397, %903 : vector<8x128xf32>
      %1399 = arith.mulf %1398, %1395 : vector<8x128xf32>
      %cst_604 = arith.constant 0.986111104 : f32
      %1400 = vector.broadcast %cst_604 : f32 to vector<8x128xf32>
      %1401 = arith.mulf %1400, %1388 : vector<8x128xf32>
      %1402 = arith.subf %1399, %1401 : vector<8x128xf32>
      %c1600 = arith.constant 1600 : index
      %c0_605 = arith.constant 0 : index
      %1403 = vector.load %arg3[%c1600, %c0_605] : memref<2048x128xf32, #tpu.memory_space<vmem>>, vector<8x128xf32>
      tpu.vector_store %arg3[%c1600, %c0_605], %1402 {strides = array<i32>} : memref<2048x128xf32, #tpu.memory_space<vmem>>, vector<8x128xf32>,
      %cst_606 = arith.constant 1.98630142 : f32
      %1404 = vector.broadcast %cst_606 : f32 to vector<8x128xf32>
      %1405 = arith.mulf %1404, %903 : vector<8x128xf32>
      %1406 = arith.mulf %1405, %1402 : vector<8x128xf32>
      %cst_607 = arith.constant 0.986301362 : f32
      %1407 = vector.broadcast %cst_607 : f32 to vector<8x128xf32>
      %1408 = arith.mulf %1407, %1395 : vector<8x128xf32>
      %1409 = arith.subf %1406, %1408 : vector<8x128xf32>
      %c1608 = arith.constant 1608 : index
      %c0_608 = arith.constant 0 : index
      %1410 = vector.load %arg3[%c1608, %c0_608] : memref<2048x128xf32, #tpu.memory_space<vmem>>, vector<8x128xf32>
      tpu.vector_store %arg3[%c1608, %c0_608], %1409 {strides = array<i32>} : memref<2048x128xf32, #tpu.memory_space<vmem>>, vector<8x128xf32>,
      %cst_609 = arith.constant 1.98648643 : f32
      %1411 = vector.broadcast %cst_609 : f32 to vector<8x128xf32>
      %1412 = arith.mulf %1411, %903 : vector<8x128xf32>
      %1413 = arith.mulf %1412, %1409 : vector<8x128xf32>
      %cst_610 = arith.constant 0.986486494 : f32
      %1414 = vector.broadcast %cst_610 : f32 to vector<8x128xf32>
      %1415 = arith.mulf %1414, %1402 : vector<8x128xf32>
      %1416 = arith.subf %1413, %1415 : vector<8x128xf32>
      %c1616 = arith.constant 1616 : index
      %c0_611 = arith.constant 0 : index
      %1417 = vector.load %arg3[%c1616, %c0_611] : memref<2048x128xf32, #tpu.memory_space<vmem>>, vector<8x128xf32>
      tpu.vector_store %arg3[%c1616, %c0_611], %1416 {strides = array<i32>} : memref<2048x128xf32, #tpu.memory_space<vmem>>, vector<8x128xf32>,
      %cst_612 = arith.constant 1.98666668 : f32
      %1418 = vector.broadcast %cst_612 : f32 to vector<8x128xf32>
      %1419 = arith.mulf %1418, %903 : vector<8x128xf32>
      %1420 = arith.mulf %1419, %1416 : vector<8x128xf32>
      %cst_613 = arith.constant 0.986666679 : f32
      %1421 = vector.broadcast %cst_613 : f32 to vector<8x128xf32>
      %1422 = arith.mulf %1421, %1409 : vector<8x128xf32>
      %1423 = arith.subf %1420, %1422 : vector<8x128xf32>
      %c1624 = arith.constant 1624 : index
      %c0_614 = arith.constant 0 : index
      %1424 = vector.load %arg3[%c1624, %c0_614] : memref<2048x128xf32, #tpu.memory_space<vmem>>, vector<8x128xf32>
      tpu.vector_store %arg3[%c1624, %c0_614], %1423 {strides = array<i32>} : memref<2048x128xf32, #tpu.memory_space<vmem>>, vector<8x128xf32>,
      %cst_615 = arith.constant 1.98684216 : f32
      %1425 = vector.broadcast %cst_615 : f32 to vector<8x128xf32>
      %1426 = arith.mulf %1425, %903 : vector<8x128xf32>
      %1427 = arith.mulf %1426, %1423 : vector<8x128xf32>
      %cst_616 = arith.constant 0.986842095 : f32
      %1428 = vector.broadcast %cst_616 : f32 to vector<8x128xf32>
      %1429 = arith.mulf %1428, %1416 : vector<8x128xf32>
      %1430 = arith.subf %1427, %1429 : vector<8x128xf32>
      %c1632 = arith.constant 1632 : index
      %c0_617 = arith.constant 0 : index
      %1431 = vector.load %arg3[%c1632, %c0_617] : memref<2048x128xf32, #tpu.memory_space<vmem>>, vector<8x128xf32>
      tpu.vector_store %arg3[%c1632, %c0_617], %1430 {strides = array<i32>} : memref<2048x128xf32, #tpu.memory_space<vmem>>, vector<8x128xf32>,
      %cst_618 = arith.constant 1.98701298 : f32
      %1432 = vector.broadcast %cst_618 : f32 to vector<8x128xf32>
      %1433 = arith.mulf %1432, %903 : vector<8x128xf32>
      %1434 = arith.mulf %1433, %1430 : vector<8x128xf32>
      %cst_619 = arith.constant 0.987012982 : f32
      %1435 = vector.broadcast %cst_619 : f32 to vector<8x128xf32>
      %1436 = arith.mulf %1435, %1423 : vector<8x128xf32>
      %1437 = arith.subf %1434, %1436 : vector<8x128xf32>
      %c1640 = arith.constant 1640 : index
      %c0_620 = arith.constant 0 : index
      %1438 = vector.load %arg3[%c1640, %c0_620] : memref<2048x128xf32, #tpu.memory_space<vmem>>, vector<8x128xf32>
      tpu.vector_store %arg3[%c1640, %c0_620], %1437 {strides = array<i32>} : memref<2048x128xf32, #tpu.memory_space<vmem>>, vector<8x128xf32>,
      %cst_621 = arith.constant 1.98717952 : f32
      %1439 = vector.broadcast %cst_621 : f32 to vector<8x128xf32>
      %1440 = arith.mulf %1439, %903 : vector<8x128xf32>
      %1441 = arith.mulf %1440, %1437 : vector<8x128xf32>
      %cst_622 = arith.constant 0.987179458 : f32
      %1442 = vector.broadcast %cst_622 : f32 to vector<8x128xf32>
      %1443 = arith.mulf %1442, %1430 : vector<8x128xf32>
      %1444 = arith.subf %1441, %1443 : vector<8x128xf32>
      %c1648 = arith.constant 1648 : index
      %c0_623 = arith.constant 0 : index
      %1445 = vector.load %arg3[%c1648, %c0_623] : memref<2048x128xf32, #tpu.memory_space<vmem>>, vector<8x128xf32>
      tpu.vector_store %arg3[%c1648, %c0_623], %1444 {strides = array<i32>} : memref<2048x128xf32, #tpu.memory_space<vmem>>, vector<8x128xf32>,
      %cst_624 = arith.constant 1.98734176 : f32
      %1446 = vector.broadcast %cst_624 : f32 to vector<8x128xf32>
      %1447 = arith.mulf %1446, %903 : vector<8x128xf32>
      %1448 = arith.mulf %1447, %1444 : vector<8x128xf32>
      %cst_625 = arith.constant 0.987341761 : f32
      %1449 = vector.broadcast %cst_625 : f32 to vector<8x128xf32>
      %1450 = arith.mulf %1449, %1437 : vector<8x128xf32>
      %1451 = arith.subf %1448, %1450 : vector<8x128xf32>
      %c1656 = arith.constant 1656 : index
      %c0_626 = arith.constant 0 : index
      %1452 = vector.load %arg3[%c1656, %c0_626] : memref<2048x128xf32, #tpu.memory_space<vmem>>, vector<8x128xf32>
      tpu.vector_store %arg3[%c1656, %c0_626], %1451 {strides = array<i32>} : memref<2048x128xf32, #tpu.memory_space<vmem>>, vector<8x128xf32>,
      %cst_627 = arith.constant 1.987500e+00 : f32
      %1453 = vector.broadcast %cst_627 : f32 to vector<8x128xf32>
      %1454 = arith.mulf %1453, %903 : vector<8x128xf32>
      %1455 = arith.mulf %1454, %1451 : vector<8x128xf32>
      %cst_628 = arith.constant 9.875000e-01 : f32
      %1456 = vector.broadcast %cst_628 : f32 to vector<8x128xf32>
      %1457 = arith.mulf %1456, %1444 : vector<8x128xf32>
      %1458 = arith.subf %1455, %1457 : vector<8x128xf32>
      %c1664 = arith.constant 1664 : index
      %c0_629 = arith.constant 0 : index
      %1459 = vector.load %arg3[%c1664, %c0_629] : memref<2048x128xf32, #tpu.memory_space<vmem>>, vector<8x128xf32>
      tpu.vector_store %arg3[%c1664, %c0_629], %1458 {strides = array<i32>} : memref<2048x128xf32, #tpu.memory_space<vmem>>, vector<8x128xf32>,
      %cst_630 = arith.constant 1.98765433 : f32
      %1460 = vector.broadcast %cst_630 : f32 to vector<8x128xf32>
      %1461 = arith.mulf %1460, %903 : vector<8x128xf32>
      %1462 = arith.mulf %1461, %1458 : vector<8x128xf32>
      %cst_631 = arith.constant 0.987654328 : f32
      %1463 = vector.broadcast %cst_631 : f32 to vector<8x128xf32>
      %1464 = arith.mulf %1463, %1451 : vector<8x128xf32>
      %1465 = arith.subf %1462, %1464 : vector<8x128xf32>
      %c1672 = arith.constant 1672 : index
      %c0_632 = arith.constant 0 : index
      %1466 = vector.load %arg3[%c1672, %c0_632] : memref<2048x128xf32, #tpu.memory_space<vmem>>, vector<8x128xf32>
      tpu.vector_store %arg3[%c1672, %c0_632], %1465 {strides = array<i32>} : memref<2048x128xf32, #tpu.memory_space<vmem>>, vector<8x128xf32>,
      %cst_633 = arith.constant 1.98780489 : f32
      %1467 = vector.broadcast %cst_633 : f32 to vector<8x128xf32>
      %1468 = arith.mulf %1467, %903 : vector<8x128xf32>
      %1469 = arith.mulf %1468, %1465 : vector<8x128xf32>
      %cst_634 = arith.constant 0.987804889 : f32
      %1470 = vector.broadcast %cst_634 : f32 to vector<8x128xf32>
      %1471 = arith.mulf %1470, %1458 : vector<8x128xf32>
      %1472 = arith.subf %1469, %1471 : vector<8x128xf32>
      %c1680 = arith.constant 1680 : index
      %c0_635 = arith.constant 0 : index
      %1473 = vector.load %arg3[%c1680, %c0_635] : memref<2048x128xf32, #tpu.memory_space<vmem>>, vector<8x128xf32>
      tpu.vector_store %arg3[%c1680, %c0_635], %1472 {strides = array<i32>} : memref<2048x128xf32, #tpu.memory_space<vmem>>, vector<8x128xf32>,
      %cst_636 = arith.constant 1.98795176 : f32
      %1474 = vector.broadcast %cst_636 : f32 to vector<8x128xf32>
      %1475 = arith.mulf %1474, %903 : vector<8x128xf32>
      %1476 = arith.mulf %1475, %1472 : vector<8x128xf32>
      %cst_637 = arith.constant 0.987951815 : f32
      %1477 = vector.broadcast %cst_637 : f32 to vector<8x128xf32>
      %1478 = arith.mulf %1477, %1465 : vector<8x128xf32>
      %1479 = arith.subf %1476, %1478 : vector<8x128xf32>
      %c1688 = arith.constant 1688 : index
      %c0_638 = arith.constant 0 : index
      %1480 = vector.load %arg3[%c1688, %c0_638] : memref<2048x128xf32, #tpu.memory_space<vmem>>, vector<8x128xf32>
      tpu.vector_store %arg3[%c1688, %c0_638], %1479 {strides = array<i32>} : memref<2048x128xf32, #tpu.memory_space<vmem>>, vector<8x128xf32>,
      %cst_639 = arith.constant 1.98809528 : f32
      %1481 = vector.broadcast %cst_639 : f32 to vector<8x128xf32>
      %1482 = arith.mulf %1481, %903 : vector<8x128xf32>
      %1483 = arith.mulf %1482, %1479 : vector<8x128xf32>
      %cst_640 = arith.constant 0.988095223 : f32
      %1484 = vector.broadcast %cst_640 : f32 to vector<8x128xf32>
      %1485 = arith.mulf %1484, %1472 : vector<8x128xf32>
      %1486 = arith.subf %1483, %1485 : vector<8x128xf32>
      %c1696 = arith.constant 1696 : index
      %c0_641 = arith.constant 0 : index
      %1487 = vector.load %arg3[%c1696, %c0_641] : memref<2048x128xf32, #tpu.memory_space<vmem>>, vector<8x128xf32>
      tpu.vector_store %arg3[%c1696, %c0_641], %1486 {strides = array<i32>} : memref<2048x128xf32, #tpu.memory_space<vmem>>, vector<8x128xf32>,
      %cst_642 = arith.constant 1.98823524 : f32
      %1488 = vector.broadcast %cst_642 : f32 to vector<8x128xf32>
      %1489 = arith.mulf %1488, %903 : vector<8x128xf32>
      %1490 = arith.mulf %1489, %1486 : vector<8x128xf32>
      %cst_643 = arith.constant 0.988235294 : f32
      %1491 = vector.broadcast %cst_643 : f32 to vector<8x128xf32>
      %1492 = arith.mulf %1491, %1479 : vector<8x128xf32>
      %1493 = arith.subf %1490, %1492 : vector<8x128xf32>
      %c1704 = arith.constant 1704 : index
      %c0_644 = arith.constant 0 : index
      %1494 = vector.load %arg3[%c1704, %c0_644] : memref<2048x128xf32, #tpu.memory_space<vmem>>, vector<8x128xf32>
      tpu.vector_store %arg3[%c1704, %c0_644], %1493 {strides = array<i32>} : memref<2048x128xf32, #tpu.memory_space<vmem>>, vector<8x128xf32>,
      %cst_645 = arith.constant 1.98837209 : f32
      %1495 = vector.broadcast %cst_645 : f32 to vector<8x128xf32>
      %1496 = arith.mulf %1495, %903 : vector<8x128xf32>
      %1497 = arith.mulf %1496, %1493 : vector<8x128xf32>
      %cst_646 = arith.constant 0.988372087 : f32
      %1498 = vector.broadcast %cst_646 : f32 to vector<8x128xf32>
      %1499 = arith.mulf %1498, %1486 : vector<8x128xf32>
      %1500 = arith.subf %1497, %1499 : vector<8x128xf32>
      %c1712 = arith.constant 1712 : index
      %c0_647 = arith.constant 0 : index
      %1501 = vector.load %arg3[%c1712, %c0_647] : memref<2048x128xf32, #tpu.memory_space<vmem>>, vector<8x128xf32>
      tpu.vector_store %arg3[%c1712, %c0_647], %1500 {strides = array<i32>} : memref<2048x128xf32, #tpu.memory_space<vmem>>, vector<8x128xf32>,
      %cst_648 = arith.constant 1.98850572 : f32
      %1502 = vector.broadcast %cst_648 : f32 to vector<8x128xf32>
      %1503 = arith.mulf %1502, %903 : vector<8x128xf32>
      %1504 = arith.mulf %1503, %1500 : vector<8x128xf32>
      %cst_649 = arith.constant 0.988505721 : f32
      %1505 = vector.broadcast %cst_649 : f32 to vector<8x128xf32>
      %1506 = arith.mulf %1505, %1493 : vector<8x128xf32>
      %1507 = arith.subf %1504, %1506 : vector<8x128xf32>
      %c1720 = arith.constant 1720 : index
      %c0_650 = arith.constant 0 : index
      %1508 = vector.load %arg3[%c1720, %c0_650] : memref<2048x128xf32, #tpu.memory_space<vmem>>, vector<8x128xf32>
      tpu.vector_store %arg3[%c1720, %c0_650], %1507 {strides = array<i32>} : memref<2048x128xf32, #tpu.memory_space<vmem>>, vector<8x128xf32>,
      %cst_651 = arith.constant 1.98863637 : f32
      %1509 = vector.broadcast %cst_651 : f32 to vector<8x128xf32>
      %1510 = arith.mulf %1509, %903 : vector<8x128xf32>
      %1511 = arith.mulf %1510, %1507 : vector<8x128xf32>
      %cst_652 = arith.constant 0.988636374 : f32
      %1512 = vector.broadcast %cst_652 : f32 to vector<8x128xf32>
      %1513 = arith.mulf %1512, %1500 : vector<8x128xf32>
      %1514 = arith.subf %1511, %1513 : vector<8x128xf32>
      %c1728 = arith.constant 1728 : index
      %c0_653 = arith.constant 0 : index
      %1515 = vector.load %arg3[%c1728, %c0_653] : memref<2048x128xf32, #tpu.memory_space<vmem>>, vector<8x128xf32>
      tpu.vector_store %arg3[%c1728, %c0_653], %1514 {strides = array<i32>} : memref<2048x128xf32, #tpu.memory_space<vmem>>, vector<8x128xf32>,
      %cst_654 = arith.constant 1.98876405 : f32
      %1516 = vector.broadcast %cst_654 : f32 to vector<8x128xf32>
      %1517 = arith.mulf %1516, %903 : vector<8x128xf32>
      %1518 = arith.mulf %1517, %1514 : vector<8x128xf32>
      %cst_655 = arith.constant 0.988764047 : f32
      %1519 = vector.broadcast %cst_655 : f32 to vector<8x128xf32>
      %1520 = arith.mulf %1519, %1507 : vector<8x128xf32>
      %1521 = arith.subf %1518, %1520 : vector<8x128xf32>
      %c1736 = arith.constant 1736 : index
      %c0_656 = arith.constant 0 : index
      %1522 = vector.load %arg3[%c1736, %c0_656] : memref<2048x128xf32, #tpu.memory_space<vmem>>, vector<8x128xf32>
      tpu.vector_store %arg3[%c1736, %c0_656], %1521 {strides = array<i32>} : memref<2048x128xf32, #tpu.memory_space<vmem>>, vector<8x128xf32>,
      %cst_657 = arith.constant 1.98888886 : f32
      %1523 = vector.broadcast %cst_657 : f32 to vector<8x128xf32>
      %1524 = arith.mulf %1523, %903 : vector<8x128xf32>
      %1525 = arith.mulf %1524, %1521 : vector<8x128xf32>
      %cst_658 = arith.constant 0.988888859 : f32
      %1526 = vector.broadcast %cst_658 : f32 to vector<8x128xf32>
      %1527 = arith.mulf %1526, %1514 : vector<8x128xf32>
      %1528 = arith.subf %1525, %1527 : vector<8x128xf32>
      %c1744 = arith.constant 1744 : index
      %c0_659 = arith.constant 0 : index
      %1529 = vector.load %arg3[%c1744, %c0_659] : memref<2048x128xf32, #tpu.memory_space<vmem>>, vector<8x128xf32>
      tpu.vector_store %arg3[%c1744, %c0_659], %1528 {strides = array<i32>} : memref<2048x128xf32, #tpu.memory_space<vmem>>, vector<8x128xf32>,
      %cst_660 = arith.constant 1.98901093 : f32
      %1530 = vector.broadcast %cst_660 : f32 to vector<8x128xf32>
      %1531 = arith.mulf %1530, %903 : vector<8x128xf32>
      %1532 = arith.mulf %1531, %1528 : vector<8x128xf32>
      %cst_661 = arith.constant 0.989010989 : f32
      %1533 = vector.broadcast %cst_661 : f32 to vector<8x128xf32>
      %1534 = arith.mulf %1533, %1521 : vector<8x128xf32>
      %1535 = arith.subf %1532, %1534 : vector<8x128xf32>
      %c1752 = arith.constant 1752 : index
      %c0_662 = arith.constant 0 : index
      %1536 = vector.load %arg3[%c1752, %c0_662] : memref<2048x128xf32, #tpu.memory_space<vmem>>, vector<8x128xf32>
      tpu.vector_store %arg3[%c1752, %c0_662], %1535 {strides = array<i32>} : memref<2048x128xf32, #tpu.memory_space<vmem>>, vector<8x128xf32>,
      %cst_663 = arith.constant 1.98913038 : f32
      %1537 = vector.broadcast %cst_663 : f32 to vector<8x128xf32>
      %1538 = arith.mulf %1537, %903 : vector<8x128xf32>
      %1539 = arith.mulf %1538, %1535 : vector<8x128xf32>
      %cst_664 = arith.constant 0.989130437 : f32
      %1540 = vector.broadcast %cst_664 : f32 to vector<8x128xf32>
      %1541 = arith.mulf %1540, %1528 : vector<8x128xf32>
      %1542 = arith.subf %1539, %1541 : vector<8x128xf32>
      %c1760 = arith.constant 1760 : index
      %c0_665 = arith.constant 0 : index
      %1543 = vector.load %arg3[%c1760, %c0_665] : memref<2048x128xf32, #tpu.memory_space<vmem>>, vector<8x128xf32>
      tpu.vector_store %arg3[%c1760, %c0_665], %1542 {strides = array<i32>} : memref<2048x128xf32, #tpu.memory_space<vmem>>, vector<8x128xf32>,
      %cst_666 = arith.constant 1.98924732 : f32
      %1544 = vector.broadcast %cst_666 : f32 to vector<8x128xf32>
      %1545 = arith.mulf %1544, %903 : vector<8x128xf32>
      %1546 = arith.mulf %1545, %1542 : vector<8x128xf32>
      %cst_667 = arith.constant 0.989247322 : f32
      %1547 = vector.broadcast %cst_667 : f32 to vector<8x128xf32>
      %1548 = arith.mulf %1547, %1535 : vector<8x128xf32>
      %1549 = arith.subf %1546, %1548 : vector<8x128xf32>
      %c1768 = arith.constant 1768 : index
      %c0_668 = arith.constant 0 : index
      %1550 = vector.load %arg3[%c1768, %c0_668] : memref<2048x128xf32, #tpu.memory_space<vmem>>, vector<8x128xf32>
      tpu.vector_store %arg3[%c1768, %c0_668], %1549 {strides = array<i32>} : memref<2048x128xf32, #tpu.memory_space<vmem>>, vector<8x128xf32>,
      %cst_669 = arith.constant 1.98936164 : f32
      %1551 = vector.broadcast %cst_669 : f32 to vector<8x128xf32>
      %1552 = arith.mulf %1551, %903 : vector<8x128xf32>
      %1553 = arith.mulf %1552, %1549 : vector<8x128xf32>
      %cst_670 = arith.constant 0.989361703 : f32
      %1554 = vector.broadcast %cst_670 : f32 to vector<8x128xf32>
      %1555 = arith.mulf %1554, %1542 : vector<8x128xf32>
      %1556 = arith.subf %1553, %1555 : vector<8x128xf32>
      %c1776 = arith.constant 1776 : index
      %c0_671 = arith.constant 0 : index
      %1557 = vector.load %arg3[%c1776, %c0_671] : memref<2048x128xf32, #tpu.memory_space<vmem>>, vector<8x128xf32>
      tpu.vector_store %arg3[%c1776, %c0_671], %1556 {strides = array<i32>} : memref<2048x128xf32, #tpu.memory_space<vmem>>, vector<8x128xf32>,
      %cst_672 = arith.constant 1.9894737 : f32
      %1558 = vector.broadcast %cst_672 : f32 to vector<8x128xf32>
      %1559 = arith.mulf %1558, %903 : vector<8x128xf32>
      %1560 = arith.mulf %1559, %1556 : vector<8x128xf32>
      %cst_673 = arith.constant 0.9894737 : f32
      %1561 = vector.broadcast %cst_673 : f32 to vector<8x128xf32>
      %1562 = arith.mulf %1561, %1549 : vector<8x128xf32>
      %1563 = arith.subf %1560, %1562 : vector<8x128xf32>
      %c1784 = arith.constant 1784 : index
      %c0_674 = arith.constant 0 : index
      %1564 = vector.load %arg3[%c1784, %c0_674] : memref<2048x128xf32, #tpu.memory_space<vmem>>, vector<8x128xf32>
      tpu.vector_store %arg3[%c1784, %c0_674], %1563 {strides = array<i32>} : memref<2048x128xf32, #tpu.memory_space<vmem>>, vector<8x128xf32>,
      %cst_675 = arith.constant 1.98958337 : f32
      %1565 = vector.broadcast %cst_675 : f32 to vector<8x128xf32>
      %1566 = arith.mulf %1565, %903 : vector<8x128xf32>
      %1567 = arith.mulf %1566, %1563 : vector<8x128xf32>
      %cst_676 = arith.constant 0.989583313 : f32
      %1568 = vector.broadcast %cst_676 : f32 to vector<8x128xf32>
      %1569 = arith.mulf %1568, %1556 : vector<8x128xf32>
      %1570 = arith.subf %1567, %1569 : vector<8x128xf32>
      %c1792 = arith.constant 1792 : index
      %c0_677 = arith.constant 0 : index
      %1571 = vector.load %arg3[%c1792, %c0_677] : memref<2048x128xf32, #tpu.memory_space<vmem>>, vector<8x128xf32>
      tpu.vector_store %arg3[%c1792, %c0_677], %1570 {strides = array<i32>} : memref<2048x128xf32, #tpu.memory_space<vmem>>, vector<8x128xf32>,
      %cst_678 = arith.constant 1.98969078 : f32
      %1572 = vector.broadcast %cst_678 : f32 to vector<8x128xf32>
      %1573 = arith.mulf %1572, %903 : vector<8x128xf32>
      %1574 = arith.mulf %1573, %1570 : vector<8x128xf32>
      %cst_679 = arith.constant 0.989690721 : f32
      %1575 = vector.broadcast %cst_679 : f32 to vector<8x128xf32>
      %1576 = arith.mulf %1575, %1563 : vector<8x128xf32>
      %1577 = arith.subf %1574, %1576 : vector<8x128xf32>
      %c1800 = arith.constant 1800 : index
      %c0_680 = arith.constant 0 : index
      %1578 = vector.load %arg3[%c1800, %c0_680] : memref<2048x128xf32, #tpu.memory_space<vmem>>, vector<8x128xf32>
      tpu.vector_store %arg3[%c1800, %c0_680], %1577 {strides = array<i32>} : memref<2048x128xf32, #tpu.memory_space<vmem>>, vector<8x128xf32>,
      %cst_681 = arith.constant 1.98979592 : f32
      %1579 = vector.broadcast %cst_681 : f32 to vector<8x128xf32>
      %1580 = arith.mulf %1579, %903 : vector<8x128xf32>
      %1581 = arith.mulf %1580, %1577 : vector<8x128xf32>
      %cst_682 = arith.constant 0.989795923 : f32
      %1582 = vector.broadcast %cst_682 : f32 to vector<8x128xf32>
      %1583 = arith.mulf %1582, %1570 : vector<8x128xf32>
      %1584 = arith.subf %1581, %1583 : vector<8x128xf32>
      %c1808 = arith.constant 1808 : index
      %c0_683 = arith.constant 0 : index
      %1585 = vector.load %arg3[%c1808, %c0_683] : memref<2048x128xf32, #tpu.memory_space<vmem>>, vector<8x128xf32>
      tpu.vector_store %arg3[%c1808, %c0_683], %1584 {strides = array<i32>} : memref<2048x128xf32, #tpu.memory_space<vmem>>, vector<8x128xf32>,
      %cst_684 = arith.constant 1.98989904 : f32
      %1586 = vector.broadcast %cst_684 : f32 to vector<8x128xf32>
      %1587 = arith.mulf %1586, %903 : vector<8x128xf32>
      %1588 = arith.mulf %1587, %1584 : vector<8x128xf32>
      %cst_685 = arith.constant 0.989898979 : f32
      %1589 = vector.broadcast %cst_685 : f32 to vector<8x128xf32>
      %1590 = arith.mulf %1589, %1577 : vector<8x128xf32>
      %1591 = arith.subf %1588, %1590 : vector<8x128xf32>
      %c1816 = arith.constant 1816 : index
      %c0_686 = arith.constant 0 : index
      %1592 = vector.load %arg3[%c1816, %c0_686] : memref<2048x128xf32, #tpu.memory_space<vmem>>, vector<8x128xf32>
      tpu.vector_store %arg3[%c1816, %c0_686], %1591 {strides = array<i32>} : memref<2048x128xf32, #tpu.memory_space<vmem>>, vector<8x128xf32>,
      %cst_687 = arith.constant 1.990000e+00 : f32
      %1593 = vector.broadcast %cst_687 : f32 to vector<8x128xf32>
      %1594 = arith.mulf %1593, %903 : vector<8x128xf32>
      %1595 = arith.mulf %1594, %1591 : vector<8x128xf32>
      %cst_688 = arith.constant 9.900000e-01 : f32
      %1596 = vector.broadcast %cst_688 : f32 to vector<8x128xf32>
      %1597 = arith.mulf %1596, %1584 : vector<8x128xf32>
      %1598 = arith.subf %1595, %1597 : vector<8x128xf32>
      %c1824 = arith.constant 1824 : index
      %c0_689 = arith.constant 0 : index
      %1599 = vector.load %arg3[%c1824, %c0_689] : memref<2048x128xf32, #tpu.memory_space<vmem>>, vector<8x128xf32>
      tpu.vector_store %arg3[%c1824, %c0_689], %1598 {strides = array<i32>} : memref<2048x128xf32, #tpu.memory_space<vmem>>, vector<8x128xf32>,
      %cst_690 = arith.constant 1.99009895 : f32
      %1600 = vector.broadcast %cst_690 : f32 to vector<8x128xf32>
      %1601 = arith.mulf %1600, %903 : vector<8x128xf32>
      %1602 = arith.mulf %1601, %1598 : vector<8x128xf32>
      %cst_691 = arith.constant 9.900990e-01 : f32
      %1603 = vector.broadcast %cst_691 : f32 to vector<8x128xf32>
      %1604 = arith.mulf %1603, %1591 : vector<8x128xf32>
      %1605 = arith.subf %1602, %1604 : vector<8x128xf32>
      %c1832 = arith.constant 1832 : index
      %c0_692 = arith.constant 0 : index
      %1606 = vector.load %arg3[%c1832, %c0_692] : memref<2048x128xf32, #tpu.memory_space<vmem>>, vector<8x128xf32>
      tpu.vector_store %arg3[%c1832, %c0_692], %1605 {strides = array<i32>} : memref<2048x128xf32, #tpu.memory_space<vmem>>, vector<8x128xf32>,
      %cst_693 = arith.constant 1.99019611 : f32
      %1607 = vector.broadcast %cst_693 : f32 to vector<8x128xf32>
      %1608 = arith.mulf %1607, %903 : vector<8x128xf32>
      %1609 = arith.mulf %1608, %1605 : vector<8x128xf32>
      %cst_694 = arith.constant 0.990196049 : f32
      %1610 = vector.broadcast %cst_694 : f32 to vector<8x128xf32>
      %1611 = arith.mulf %1610, %1598 : vector<8x128xf32>
      %1612 = arith.subf %1609, %1611 : vector<8x128xf32>
      %c1840 = arith.constant 1840 : index
      %c0_695 = arith.constant 0 : index
      %1613 = vector.load %arg3[%c1840, %c0_695] : memref<2048x128xf32, #tpu.memory_space<vmem>>, vector<8x128xf32>
      tpu.vector_store %arg3[%c1840, %c0_695], %1612 {strides = array<i32>} : memref<2048x128xf32, #tpu.memory_space<vmem>>, vector<8x128xf32>,
      %cst_696 = arith.constant 1.99029124 : f32
      %1614 = vector.broadcast %cst_696 : f32 to vector<8x128xf32>
      %1615 = arith.mulf %1614, %903 : vector<8x128xf32>
      %1616 = arith.mulf %1615, %1612 : vector<8x128xf32>
      %cst_697 = arith.constant 0.990291237 : f32
      %1617 = vector.broadcast %cst_697 : f32 to vector<8x128xf32>
      %1618 = arith.mulf %1617, %1605 : vector<8x128xf32>
      %1619 = arith.subf %1616, %1618 : vector<8x128xf32>
      %c1848 = arith.constant 1848 : index
      %c0_698 = arith.constant 0 : index
      %1620 = vector.load %arg3[%c1848, %c0_698] : memref<2048x128xf32, #tpu.memory_space<vmem>>, vector<8x128xf32>
      tpu.vector_store %arg3[%c1848, %c0_698], %1619 {strides = array<i32>} : memref<2048x128xf32, #tpu.memory_space<vmem>>, vector<8x128xf32>,
      %cst_699 = arith.constant 1.99038458 : f32
      %1621 = vector.broadcast %cst_699 : f32 to vector<8x128xf32>
      %1622 = arith.mulf %1621, %903 : vector<8x128xf32>
      %1623 = arith.mulf %1622, %1619 : vector<8x128xf32>
      %cst_700 = arith.constant 0.990384638 : f32
      %1624 = vector.broadcast %cst_700 : f32 to vector<8x128xf32>
      %1625 = arith.mulf %1624, %1612 : vector<8x128xf32>
      %1626 = arith.subf %1623, %1625 : vector<8x128xf32>
      %c1856 = arith.constant 1856 : index
      %c0_701 = arith.constant 0 : index
      %1627 = vector.load %arg3[%c1856, %c0_701] : memref<2048x128xf32, #tpu.memory_space<vmem>>, vector<8x128xf32>
      tpu.vector_store %arg3[%c1856, %c0_701], %1626 {strides = array<i32>} : memref<2048x128xf32, #tpu.memory_space<vmem>>, vector<8x128xf32>,
      %cst_702 = arith.constant 1.99047613 : f32
      %1628 = vector.broadcast %cst_702 : f32 to vector<8x128xf32>
      %1629 = arith.mulf %1628, %903 : vector<8x128xf32>
      %1630 = arith.mulf %1629, %1626 : vector<8x128xf32>
      %cst_703 = arith.constant 0.990476191 : f32
      %1631 = vector.broadcast %cst_703 : f32 to vector<8x128xf32>
      %1632 = arith.mulf %1631, %1619 : vector<8x128xf32>
      %1633 = arith.subf %1630, %1632 : vector<8x128xf32>
      %c1864 = arith.constant 1864 : index
      %c0_704 = arith.constant 0 : index
      %1634 = vector.load %arg3[%c1864, %c0_704] : memref<2048x128xf32, #tpu.memory_space<vmem>>, vector<8x128xf32>
      tpu.vector_store %arg3[%c1864, %c0_704], %1633 {strides = array<i32>} : memref<2048x128xf32, #tpu.memory_space<vmem>>, vector<8x128xf32>,
      %cst_705 = arith.constant 1.99056602 : f32
      %1635 = vector.broadcast %cst_705 : f32 to vector<8x128xf32>
      %1636 = arith.mulf %1635, %903 : vector<8x128xf32>
      %1637 = arith.mulf %1636, %1633 : vector<8x128xf32>
      %cst_706 = arith.constant 9.905660e-01 : f32
      %1638 = vector.broadcast %cst_706 : f32 to vector<8x128xf32>
      %1639 = arith.mulf %1638, %1626 : vector<8x128xf32>
      %1640 = arith.subf %1637, %1639 : vector<8x128xf32>
      %c1872 = arith.constant 1872 : index
      %c0_707 = arith.constant 0 : index
      %1641 = vector.load %arg3[%c1872, %c0_707] : memref<2048x128xf32, #tpu.memory_space<vmem>>, vector<8x128xf32>
      tpu.vector_store %arg3[%c1872, %c0_707], %1640 {strides = array<i32>} : memref<2048x128xf32, #tpu.memory_space<vmem>>, vector<8x128xf32>,
      %cst_708 = arith.constant 1.99065423 : f32
      %1642 = vector.broadcast %cst_708 : f32 to vector<8x128xf32>
      %1643 = arith.mulf %1642, %903 : vector<8x128xf32>
      %1644 = arith.mulf %1643, %1640 : vector<8x128xf32>
      %cst_709 = arith.constant 0.99065423 : f32
      %1645 = vector.broadcast %cst_709 : f32 to vector<8x128xf32>
      %1646 = arith.mulf %1645, %1633 : vector<8x128xf32>
      %1647 = arith.subf %1644, %1646 : vector<8x128xf32>
      %c1880 = arith.constant 1880 : index
      %c0_710 = arith.constant 0 : index
      %1648 = vector.load %arg3[%c1880, %c0_710] : memref<2048x128xf32, #tpu.memory_space<vmem>>, vector<8x128xf32>
      tpu.vector_store %arg3[%c1880, %c0_710], %1647 {strides = array<i32>} : memref<2048x128xf32, #tpu.memory_space<vmem>>, vector<8x128xf32>,
      %cst_711 = arith.constant 1.99074078 : f32
      %1649 = vector.broadcast %cst_711 : f32 to vector<8x128xf32>
      %1650 = arith.mulf %1649, %903 : vector<8x128xf32>
      %1651 = arith.mulf %1650, %1647 : vector<8x128xf32>
      %cst_712 = arith.constant 0.990740716 : f32
      %1652 = vector.broadcast %cst_712 : f32 to vector<8x128xf32>
      %1653 = arith.mulf %1652, %1640 : vector<8x128xf32>
      %1654 = arith.subf %1651, %1653 : vector<8x128xf32>
      %c1888 = arith.constant 1888 : index
      %c0_713 = arith.constant 0 : index
      %1655 = vector.load %arg3[%c1888, %c0_713] : memref<2048x128xf32, #tpu.memory_space<vmem>>, vector<8x128xf32>
      tpu.vector_store %arg3[%c1888, %c0_713], %1654 {strides = array<i32>} : memref<2048x128xf32, #tpu.memory_space<vmem>>, vector<8x128xf32>,
      %cst_714 = arith.constant 1.99082565 : f32
      %1656 = vector.broadcast %cst_714 : f32 to vector<8x128xf32>
      %1657 = arith.mulf %1656, %903 : vector<8x128xf32>
      %1658 = arith.mulf %1657, %1654 : vector<8x128xf32>
      %cst_715 = arith.constant 0.990825712 : f32
      %1659 = vector.broadcast %cst_715 : f32 to vector<8x128xf32>
      %1660 = arith.mulf %1659, %1647 : vector<8x128xf32>
      %1661 = arith.subf %1658, %1660 : vector<8x128xf32>
      %c1896 = arith.constant 1896 : index
      %c0_716 = arith.constant 0 : index
      %1662 = vector.load %arg3[%c1896, %c0_716] : memref<2048x128xf32, #tpu.memory_space<vmem>>, vector<8x128xf32>
      tpu.vector_store %arg3[%c1896, %c0_716], %1661 {strides = array<i32>} : memref<2048x128xf32, #tpu.memory_space<vmem>>, vector<8x128xf32>,
      %cst_717 = arith.constant 1.9909091 : f32
      %1663 = vector.broadcast %cst_717 : f32 to vector<8x128xf32>
      %1664 = arith.mulf %1663, %903 : vector<8x128xf32>
      %1665 = arith.mulf %1664, %1661 : vector<8x128xf32>
      %cst_718 = arith.constant 0.990909099 : f32
      %1666 = vector.broadcast %cst_718 : f32 to vector<8x128xf32>
      %1667 = arith.mulf %1666, %1654 : vector<8x128xf32>
      %1668 = arith.subf %1665, %1667 : vector<8x128xf32>
      %c1904 = arith.constant 1904 : index
      %c0_719 = arith.constant 0 : index
      %1669 = vector.load %arg3[%c1904, %c0_719] : memref<2048x128xf32, #tpu.memory_space<vmem>>, vector<8x128xf32>
      tpu.vector_store %arg3[%c1904, %c0_719], %1668 {strides = array<i32>} : memref<2048x128xf32, #tpu.memory_space<vmem>>, vector<8x128xf32>,
      %cst_720 = arith.constant 1.990991 : f32
      %1670 = vector.broadcast %cst_720 : f32 to vector<8x128xf32>
      %1671 = arith.mulf %1670, %903 : vector<8x128xf32>
      %1672 = arith.mulf %1671, %1668 : vector<8x128xf32>
      %cst_721 = arith.constant 0.990990996 : f32
      %1673 = vector.broadcast %cst_721 : f32 to vector<8x128xf32>
      %1674 = arith.mulf %1673, %1661 : vector<8x128xf32>
      %1675 = arith.subf %1672, %1674 : vector<8x128xf32>
      %c1912 = arith.constant 1912 : index
      %c0_722 = arith.constant 0 : index
      %1676 = vector.load %arg3[%c1912, %c0_722] : memref<2048x128xf32, #tpu.memory_space<vmem>>, vector<8x128xf32>
      tpu.vector_store %arg3[%c1912, %c0_722], %1675 {strides = array<i32>} : memref<2048x128xf32, #tpu.memory_space<vmem>>, vector<8x128xf32>,
      %cst_723 = arith.constant 1.99107146 : f32
      %1677 = vector.broadcast %cst_723 : f32 to vector<8x128xf32>
      %1678 = arith.mulf %1677, %903 : vector<8x128xf32>
      %1679 = arith.mulf %1678, %1675 : vector<8x128xf32>
      %cst_724 = arith.constant 0.991071403 : f32
      %1680 = vector.broadcast %cst_724 : f32 to vector<8x128xf32>
      %1681 = arith.mulf %1680, %1668 : vector<8x128xf32>
      %1682 = arith.subf %1679, %1681 : vector<8x128xf32>
      %c1920 = arith.constant 1920 : index
      %c0_725 = arith.constant 0 : index
      %1683 = vector.load %arg3[%c1920, %c0_725] : memref<2048x128xf32, #tpu.memory_space<vmem>>, vector<8x128xf32>
      tpu.vector_store %arg3[%c1920, %c0_725], %1682 {strides = array<i32>} : memref<2048x128xf32, #tpu.memory_space<vmem>>, vector<8x128xf32>,
      %cst_726 = arith.constant 1.9911505 : f32
      %1684 = vector.broadcast %cst_726 : f32 to vector<8x128xf32>
      %1685 = arith.mulf %1684, %903 : vector<8x128xf32>
      %1686 = arith.mulf %1685, %1682 : vector<8x128xf32>
      %cst_727 = arith.constant 0.991150438 : f32
      %1687 = vector.broadcast %cst_727 : f32 to vector<8x128xf32>
      %1688 = arith.mulf %1687, %1675 : vector<8x128xf32>
      %1689 = arith.subf %1686, %1688 : vector<8x128xf32>
      %c1928 = arith.constant 1928 : index
      %c0_728 = arith.constant 0 : index
      %1690 = vector.load %arg3[%c1928, %c0_728] : memref<2048x128xf32, #tpu.memory_space<vmem>>, vector<8x128xf32>
      tpu.vector_store %arg3[%c1928, %c0_728], %1689 {strides = array<i32>} : memref<2048x128xf32, #tpu.memory_space<vmem>>, vector<8x128xf32>,
      %cst_729 = arith.constant 1.9912281 : f32
      %1691 = vector.broadcast %cst_729 : f32 to vector<8x128xf32>
      %1692 = arith.mulf %1691, %903 : vector<8x128xf32>
      %1693 = arith.mulf %1692, %1689 : vector<8x128xf32>
      %cst_730 = arith.constant 0.991228044 : f32
      %1694 = vector.broadcast %cst_730 : f32 to vector<8x128xf32>
      %1695 = arith.mulf %1694, %1682 : vector<8x128xf32>
      %1696 = arith.subf %1693, %1695 : vector<8x128xf32>
      %c1936 = arith.constant 1936 : index
      %c0_731 = arith.constant 0 : index
      %1697 = vector.load %arg3[%c1936, %c0_731] : memref<2048x128xf32, #tpu.memory_space<vmem>>, vector<8x128xf32>
      tpu.vector_store %arg3[%c1936, %c0_731], %1696 {strides = array<i32>} : memref<2048x128xf32, #tpu.memory_space<vmem>>, vector<8x128xf32>,
      %cst_732 = arith.constant 1.9913044 : f32
      %1698 = vector.broadcast %cst_732 : f32 to vector<8x128xf32>
      %1699 = arith.mulf %1698, %903 : vector<8x128xf32>
      %1700 = arith.mulf %1699, %1696 : vector<8x128xf32>
      %cst_733 = arith.constant 0.991304337 : f32
      %1701 = vector.broadcast %cst_733 : f32 to vector<8x128xf32>
      %1702 = arith.mulf %1701, %1689 : vector<8x128xf32>
      %1703 = arith.subf %1700, %1702 : vector<8x128xf32>
      %c1944 = arith.constant 1944 : index
      %c0_734 = arith.constant 0 : index
      %1704 = vector.load %arg3[%c1944, %c0_734] : memref<2048x128xf32, #tpu.memory_space<vmem>>, vector<8x128xf32>
      tpu.vector_store %arg3[%c1944, %c0_734], %1703 {strides = array<i32>} : memref<2048x128xf32, #tpu.memory_space<vmem>>, vector<8x128xf32>,
      %cst_735 = arith.constant 1.99137926 : f32
      %1705 = vector.broadcast %cst_735 : f32 to vector<8x128xf32>
      %1706 = arith.mulf %1705, %903 : vector<8x128xf32>
      %1707 = arith.mulf %1706, %1703 : vector<8x128xf32>
      %cst_736 = arith.constant 0.99137932 : f32
      %1708 = vector.broadcast %cst_736 : f32 to vector<8x128xf32>
      %1709 = arith.mulf %1708, %1696 : vector<8x128xf32>
      %1710 = arith.subf %1707, %1709 : vector<8x128xf32>
      %c1952 = arith.constant 1952 : index
      %c0_737 = arith.constant 0 : index
      %1711 = vector.load %arg3[%c1952, %c0_737] : memref<2048x128xf32, #tpu.memory_space<vmem>>, vector<8x128xf32>
      tpu.vector_store %arg3[%c1952, %c0_737], %1710 {strides = array<i32>} : memref<2048x128xf32, #tpu.memory_space<vmem>>, vector<8x128xf32>,
      %cst_738 = arith.constant 1.99145293 : f32
      %1712 = vector.broadcast %cst_738 : f32 to vector<8x128xf32>
      %1713 = arith.mulf %1712, %903 : vector<8x128xf32>
      %1714 = arith.mulf %1713, %1710 : vector<8x128xf32>
      %cst_739 = arith.constant 0.991452991 : f32
      %1715 = vector.broadcast %cst_739 : f32 to vector<8x128xf32>
      %1716 = arith.mulf %1715, %1703 : vector<8x128xf32>
      %1717 = arith.subf %1714, %1716 : vector<8x128xf32>
      %c1960 = arith.constant 1960 : index
      %c0_740 = arith.constant 0 : index
      %1718 = vector.load %arg3[%c1960, %c0_740] : memref<2048x128xf32, #tpu.memory_space<vmem>>, vector<8x128xf32>
      tpu.vector_store %arg3[%c1960, %c0_740], %1717 {strides = array<i32>} : memref<2048x128xf32, #tpu.memory_space<vmem>>, vector<8x128xf32>,
      %cst_741 = arith.constant 1.99152541 : f32
      %1719 = vector.broadcast %cst_741 : f32 to vector<8x128xf32>
      %1720 = arith.mulf %1719, %903 : vector<8x128xf32>
      %1721 = arith.mulf %1720, %1717 : vector<8x128xf32>
      %cst_742 = arith.constant 0.991525411 : f32
      %1722 = vector.broadcast %cst_742 : f32 to vector<8x128xf32>
      %1723 = arith.mulf %1722, %1710 : vector<8x128xf32>
      %1724 = arith.subf %1721, %1723 : vector<8x128xf32>
      %c1968 = arith.constant 1968 : index
      %c0_743 = arith.constant 0 : index
      %1725 = vector.load %arg3[%c1968, %c0_743] : memref<2048x128xf32, #tpu.memory_space<vmem>>, vector<8x128xf32>
      tpu.vector_store %arg3[%c1968, %c0_743], %1724 {strides = array<i32>} : memref<2048x128xf32, #tpu.memory_space<vmem>>, vector<8x128xf32>,
      %cst_744 = arith.constant 1.99159658 : f32
      %1726 = vector.broadcast %cst_744 : f32 to vector<8x128xf32>
      %1727 = arith.mulf %1726, %903 : vector<8x128xf32>
      %1728 = arith.mulf %1727, %1724 : vector<8x128xf32>
      %cst_745 = arith.constant 0.991596639 : f32
      %1729 = vector.broadcast %cst_745 : f32 to vector<8x128xf32>
      %1730 = arith.mulf %1729, %1717 : vector<8x128xf32>
      %1731 = arith.subf %1728, %1730 : vector<8x128xf32>
      %c1976 = arith.constant 1976 : index
      %c0_746 = arith.constant 0 : index
      %1732 = vector.load %arg3[%c1976, %c0_746] : memref<2048x128xf32, #tpu.memory_space<vmem>>, vector<8x128xf32>
      tpu.vector_store %arg3[%c1976, %c0_746], %1731 {strides = array<i32>} : memref<2048x128xf32, #tpu.memory_space<vmem>>, vector<8x128xf32>,
      %cst_747 = arith.constant 1.99166667 : f32
      %1733 = vector.broadcast %cst_747 : f32 to vector<8x128xf32>
      %1734 = arith.mulf %1733, %903 : vector<8x128xf32>
      %1735 = arith.mulf %1734, %1731 : vector<8x128xf32>
      %cst_748 = arith.constant 0.991666674 : f32
      %1736 = vector.broadcast %cst_748 : f32 to vector<8x128xf32>
      %1737 = arith.mulf %1736, %1724 : vector<8x128xf32>
      %1738 = arith.subf %1735, %1737 : vector<8x128xf32>
      %c1984 = arith.constant 1984 : index
      %c0_749 = arith.constant 0 : index
      %1739 = vector.load %arg3[%c1984, %c0_749] : memref<2048x128xf32, #tpu.memory_space<vmem>>, vector<8x128xf32>
      tpu.vector_store %arg3[%c1984, %c0_749], %1738 {strides = array<i32>} : memref<2048x128xf32, #tpu.memory_space<vmem>>, vector<8x128xf32>,
      %cst_750 = arith.constant 1.99173558 : f32
      %1740 = vector.broadcast %cst_750 : f32 to vector<8x128xf32>
      %1741 = arith.mulf %1740, %903 : vector<8x128xf32>
      %1742 = arith.mulf %1741, %1738 : vector<8x128xf32>
      %cst_751 = arith.constant 0.991735517 : f32
      %1743 = vector.broadcast %cst_751 : f32 to vector<8x128xf32>
      %1744 = arith.mulf %1743, %1731 : vector<8x128xf32>
      %1745 = arith.subf %1742, %1744 : vector<8x128xf32>
      %c1992 = arith.constant 1992 : index
      %c0_752 = arith.constant 0 : index
      %1746 = vector.load %arg3[%c1992, %c0_752] : memref<2048x128xf32, #tpu.memory_space<vmem>>, vector<8x128xf32>
      tpu.vector_store %arg3[%c1992, %c0_752], %1745 {strides = array<i32>} : memref<2048x128xf32, #tpu.memory_space<vmem>>, vector<8x128xf32>,
      %cst_753 = arith.constant 1.99180329 : f32
      %1747 = vector.broadcast %cst_753 : f32 to vector<8x128xf32>
      %1748 = arith.mulf %1747, %903 : vector<8x128xf32>
      %1749 = arith.mulf %1748, %1745 : vector<8x128xf32>
      %cst_754 = arith.constant 0.991803288 : f32
      %1750 = vector.broadcast %cst_754 : f32 to vector<8x128xf32>
      %1751 = arith.mulf %1750, %1738 : vector<8x128xf32>
      %1752 = arith.subf %1749, %1751 : vector<8x128xf32>
      %c2000 = arith.constant 2000 : index
      %c0_755 = arith.constant 0 : index
      %1753 = vector.load %arg3[%c2000, %c0_755] : memref<2048x128xf32, #tpu.memory_space<vmem>>, vector<8x128xf32>
      tpu.vector_store %arg3[%c2000, %c0_755], %1752 {strides = array<i32>} : memref<2048x128xf32, #tpu.memory_space<vmem>>, vector<8x128xf32>,
      %cst_756 = arith.constant 1.99186993 : f32
      %1754 = vector.broadcast %cst_756 : f32 to vector<8x128xf32>
      %1755 = arith.mulf %1754, %903 : vector<8x128xf32>
      %1756 = arith.mulf %1755, %1752 : vector<8x128xf32>
      %cst_757 = arith.constant 0.991869926 : f32
      %1757 = vector.broadcast %cst_757 : f32 to vector<8x128xf32>
      %1758 = arith.mulf %1757, %1745 : vector<8x128xf32>
      %1759 = arith.subf %1756, %1758 : vector<8x128xf32>
      %c2008 = arith.constant 2008 : index
      %c0_758 = arith.constant 0 : index
      %1760 = vector.load %arg3[%c2008, %c0_758] : memref<2048x128xf32, #tpu.memory_space<vmem>>, vector<8x128xf32>
      tpu.vector_store %arg3[%c2008, %c0_758], %1759 {strides = array<i32>} : memref<2048x128xf32, #tpu.memory_space<vmem>>, vector<8x128xf32>,
      %cst_759 = arith.constant 1.99193549 : f32
      %1761 = vector.broadcast %cst_759 : f32 to vector<8x128xf32>
      %1762 = arith.mulf %1761, %903 : vector<8x128xf32>
      %1763 = arith.mulf %1762, %1759 : vector<8x128xf32>
      %cst_760 = arith.constant 0.991935491 : f32
      %1764 = vector.broadcast %cst_760 : f32 to vector<8x128xf32>
      %1765 = arith.mulf %1764, %1752 : vector<8x128xf32>
      %1766 = arith.subf %1763, %1765 : vector<8x128xf32>
      %c2016 = arith.constant 2016 : index
      %c0_761 = arith.constant 0 : index
      %1767 = vector.load %arg3[%c2016, %c0_761] : memref<2048x128xf32, #tpu.memory_space<vmem>>, vector<8x128xf32>
      tpu.vector_store %arg3[%c2016, %c0_761], %1766 {strides = array<i32>} : memref<2048x128xf32, #tpu.memory_space<vmem>>, vector<8x128xf32>,
      %cst_762 = arith.constant 1.992000e+00 : f32
      %1768 = vector.broadcast %cst_762 : f32 to vector<8x128xf32>
      %1769 = arith.mulf %1768, %903 : vector<8x128xf32>
      %1770 = arith.mulf %1769, %1766 : vector<8x128xf32>
      %cst_763 = arith.constant 0.991999983 : f32
      %1771 = vector.broadcast %cst_763 : f32 to vector<8x128xf32>
      %1772 = arith.mulf %1771, %1759 : vector<8x128xf32>
      %1773 = arith.subf %1770, %1772 : vector<8x128xf32>
      %c2024 = arith.constant 2024 : index
      %c0_764 = arith.constant 0 : index
      %1774 = vector.load %arg3[%c2024, %c0_764] : memref<2048x128xf32, #tpu.memory_space<vmem>>, vector<8x128xf32>
      tpu.vector_store %arg3[%c2024, %c0_764], %1773 {strides = array<i32>} : memref<2048x128xf32, #tpu.memory_space<vmem>>, vector<8x128xf32>,
      %cst_765 = arith.constant 1.99206352 : f32
      %1775 = vector.broadcast %cst_765 : f32 to vector<8x128xf32>
      %1776 = arith.mulf %1775, %903 : vector<8x128xf32>
      %1777 = arith.mulf %1776, %1773 : vector<8x128xf32>
      %cst_766 = arith.constant 0.992063462 : f32
      %1778 = vector.broadcast %cst_766 : f32 to vector<8x128xf32>
      %1779 = arith.mulf %1778, %1766 : vector<8x128xf32>
      %1780 = arith.subf %1777, %1779 : vector<8x128xf32>
      %c2032 = arith.constant 2032 : index
      %c0_767 = arith.constant 0 : index
      %1781 = vector.load %arg3[%c2032, %c0_767] : memref<2048x128xf32, #tpu.memory_space<vmem>>, vector<8x128xf32>
      tpu.vector_store %arg3[%c2032, %c0_767], %1780 {strides = array<i32>} : memref<2048x128xf32, #tpu.memory_space<vmem>>, vector<8x128xf32>,
      %cst_768 = arith.constant 1.99212599 : f32
      %1782 = vector.broadcast %cst_768 : f32 to vector<8x128xf32>
      %1783 = arith.mulf %1782, %903 : vector<8x128xf32>
      %1784 = arith.mulf %1783, %1780 : vector<8x128xf32>
      %cst_769 = arith.constant 0.992125988 : f32
      %1785 = vector.broadcast %cst_769 : f32 to vector<8x128xf32>
      %1786 = arith.mulf %1785, %1773 : vector<8x128xf32>
      %1787 = arith.subf %1784, %1786 : vector<8x128xf32>
      %c2040 = arith.constant 2040 : index
      %c0_770 = arith.constant 0 : index
      %1788 = vector.load %arg3[%c2040, %c0_770] : memref<2048x128xf32, #tpu.memory_space<vmem>>, vector<8x128xf32>
      tpu.vector_store %arg3[%c2040, %c0_770], %1787 {strides = array<i32>} : memref<2048x128xf32, #tpu.memory_space<vmem>>, vector<8x128xf32>,
      %c0_771 = arith.constant 0 : index
      %c0_772 = arith.constant 0 : index
      %1789 = tpu.strided_load %arg3[%c0_771, %c0_772] {strides = array<i32: 8, 1>} : memref<2048x128xf32, #tpu.memory_space<vmem>>, vector<128x128xf32>
      %c0_i32_773 = arith.constant 0 : i32
      %1790 = arith.addi %4, %c0_i32_773 : i32
      %c128_i32 = arith.constant 128 : i32
      %1791 = arith.muli %1790, %c128_i32 : i32
      %1792 = tpu.assume_multiple %1791, 128 : i32
      %1793 = tpu.transpose %1789, [1, 0] : vector<128x128xf32> -> vector<128x128xf32>
      %1794 = arith.index_cast %1792 : i32 to index
      %c0_774 = arith.constant 0 : index
      %1795 = vector.load %arg2[%1794, %c0_774] : memref<4096x256xf32, #tpu.memory_space<vmem>>, vector<128x128xf32>
      tpu.vector_store %arg2[%1794, %c0_774], %1793 {strides = array<i32>} : memref<4096x256xf32, #tpu.memory_space<vmem>>, vector<128x128xf32>,
      %c1_775 = arith.constant 1 : index
      %c0_776 = arith.constant 0 : index
      %1796 = tpu.strided_load %arg3[%c1_775, %c0_776] {strides = array<i32: 8, 1>} : memref<2048x128xf32, #tpu.memory_space<vmem>>, vector<128x128xf32>
      %c1_i32_777 = arith.constant 1 : i32
      %1797 = arith.addi %4, %c1_i32_777 : i32
      %c128_i32_778 = arith.constant 128 : i32
      %1798 = arith.muli %1797, %c128_i32_778 : i32
      %1799 = tpu.assume_multiple %1798, 128 : i32
      %1800 = tpu.transpose %1796, [1, 0] : vector<128x128xf32> -> vector<128x128xf32>
      %1801 = arith.index_cast %1799 : i32 to index
      %c0_779 = arith.constant 0 : index
      %1802 = vector.load %arg2[%1801, %c0_779] : memref<4096x256xf32, #tpu.memory_space<vmem>>, vector<128x128xf32>
      tpu.vector_store %arg2[%1801, %c0_779], %1800 {strides = array<i32>} : memref<4096x256xf32, #tpu.memory_space<vmem>>, vector<128x128xf32>,
      %c2 = arith.constant 2 : index
      %c0_780 = arith.constant 0 : index
      %1803 = tpu.strided_load %arg3[%c2, %c0_780] {strides = array<i32: 8, 1>} : memref<2048x128xf32, #tpu.memory_space<vmem>>, vector<128x128xf32>
      %c2_i32 = arith.constant 2 : i32
      %1804 = arith.addi %4, %c2_i32 : i32
      %c128_i32_781 = arith.constant 128 : i32
      %1805 = arith.muli %1804, %c128_i32_781 : i32
      %1806 = tpu.assume_multiple %1805, 128 : i32
      %1807 = tpu.transpose %1803, [1, 0] : vector<128x128xf32> -> vector<128x128xf32>
      %1808 = arith.index_cast %1806 : i32 to index
      %c0_782 = arith.constant 0 : index
      %1809 = vector.load %arg2[%1808, %c0_782] : memref<4096x256xf32, #tpu.memory_space<vmem>>, vector<128x128xf32>
      tpu.vector_store %arg2[%1808, %c0_782], %1807 {strides = array<i32>} : memref<4096x256xf32, #tpu.memory_space<vmem>>, vector<128x128xf32>,
      %c3 = arith.constant 3 : index
      %c0_783 = arith.constant 0 : index
      %1810 = tpu.strided_load %arg3[%c3, %c0_783] {strides = array<i32: 8, 1>} : memref<2048x128xf32, #tpu.memory_space<vmem>>, vector<128x128xf32>
      %c3_i32 = arith.constant 3 : i32
      %1811 = arith.addi %4, %c3_i32 : i32
      %c128_i32_784 = arith.constant 128 : i32
      %1812 = arith.muli %1811, %c128_i32_784 : i32
      %1813 = tpu.assume_multiple %1812, 128 : i32
      %1814 = tpu.transpose %1810, [1, 0] : vector<128x128xf32> -> vector<128x128xf32>
      %1815 = arith.index_cast %1813 : i32 to index
      %c0_785 = arith.constant 0 : index
      %1816 = vector.load %arg2[%1815, %c0_785] : memref<4096x256xf32, #tpu.memory_space<vmem>>, vector<128x128xf32>
      tpu.vector_store %arg2[%1815, %c0_785], %1814 {strides = array<i32>} : memref<4096x256xf32, #tpu.memory_space<vmem>>, vector<128x128xf32>,
      %c4 = arith.constant 4 : index
      %c0_786 = arith.constant 0 : index
      %1817 = tpu.strided_load %arg3[%c4, %c0_786] {strides = array<i32: 8, 1>} : memref<2048x128xf32, #tpu.memory_space<vmem>>, vector<128x128xf32>
      %c4_i32_787 = arith.constant 4 : i32
      %1818 = arith.addi %4, %c4_i32_787 : i32
      %c128_i32_788 = arith.constant 128 : i32
      %1819 = arith.muli %1818, %c128_i32_788 : i32
      %1820 = tpu.assume_multiple %1819, 128 : i32
      %1821 = tpu.transpose %1817, [1, 0] : vector<128x128xf32> -> vector<128x128xf32>
      %1822 = arith.index_cast %1820 : i32 to index
      %c0_789 = arith.constant 0 : index
      %1823 = vector.load %arg2[%1822, %c0_789] : memref<4096x256xf32, #tpu.memory_space<vmem>>, vector<128x128xf32>
      tpu.vector_store %arg2[%1822, %c0_789], %1821 {strides = array<i32>} : memref<4096x256xf32, #tpu.memory_space<vmem>>, vector<128x128xf32>,
      %c5 = arith.constant 5 : index
      %c0_790 = arith.constant 0 : index
      %1824 = tpu.strided_load %arg3[%c5, %c0_790] {strides = array<i32: 8, 1>} : memref<2048x128xf32, #tpu.memory_space<vmem>>, vector<128x128xf32>
      %c5_i32 = arith.constant 5 : i32
      %1825 = arith.addi %4, %c5_i32 : i32
      %c128_i32_791 = arith.constant 128 : i32
      %1826 = arith.muli %1825, %c128_i32_791 : i32
      %1827 = tpu.assume_multiple %1826, 128 : i32
      %1828 = tpu.transpose %1824, [1, 0] : vector<128x128xf32> -> vector<128x128xf32>
      %1829 = arith.index_cast %1827 : i32 to index
      %c0_792 = arith.constant 0 : index
      %1830 = vector.load %arg2[%1829, %c0_792] : memref<4096x256xf32, #tpu.memory_space<vmem>>, vector<128x128xf32>
      tpu.vector_store %arg2[%1829, %c0_792], %1828 {strides = array<i32>} : memref<4096x256xf32, #tpu.memory_space<vmem>>, vector<128x128xf32>,
      %c6 = arith.constant 6 : index
      %c0_793 = arith.constant 0 : index
      %1831 = tpu.strided_load %arg3[%c6, %c0_793] {strides = array<i32: 8, 1>} : memref<2048x128xf32, #tpu.memory_space<vmem>>, vector<128x128xf32>
      %c6_i32 = arith.constant 6 : i32
      %1832 = arith.addi %4, %c6_i32 : i32
      %c128_i32_794 = arith.constant 128 : i32
      %1833 = arith.muli %1832, %c128_i32_794 : i32
      %1834 = tpu.assume_multiple %1833, 128 : i32
      %1835 = tpu.transpose %1831, [1, 0] : vector<128x128xf32> -> vector<128x128xf32>
      %1836 = arith.index_cast %1834 : i32 to index
      %c0_795 = arith.constant 0 : index
      %1837 = vector.load %arg2[%1836, %c0_795] : memref<4096x256xf32, #tpu.memory_space<vmem>>, vector<128x128xf32>
      tpu.vector_store %arg2[%1836, %c0_795], %1835 {strides = array<i32>} : memref<4096x256xf32, #tpu.memory_space<vmem>>, vector<128x128xf32>,
      %c7 = arith.constant 7 : index
      %c0_796 = arith.constant 0 : index
      %1838 = tpu.strided_load %arg3[%c7, %c0_796] {strides = array<i32: 8, 1>} : memref<2048x128xf32, #tpu.memory_space<vmem>>, vector<128x128xf32>
      %c7_i32 = arith.constant 7 : i32
      %1839 = arith.addi %4, %c7_i32 : i32
      %c128_i32_797 = arith.constant 128 : i32
      %1840 = arith.muli %1839, %c128_i32_797 : i32
      %1841 = tpu.assume_multiple %1840, 128 : i32
      %1842 = tpu.transpose %1838, [1, 0] : vector<128x128xf32> -> vector<128x128xf32>
      %1843 = arith.index_cast %1841 : i32 to index
      %c0_798 = arith.constant 0 : index
      %1844 = vector.load %arg2[%1843, %c0_798] : memref<4096x256xf32, #tpu.memory_space<vmem>>, vector<128x128xf32>
      tpu.vector_store %arg2[%1843, %c0_798], %1842 {strides = array<i32>} : memref<4096x256xf32, #tpu.memory_space<vmem>>, vector<128x128xf32>,
      %c1024_799 = arith.constant 1024 : index
      %c0_800 = arith.constant 0 : index
      %1845 = tpu.strided_load %arg3[%c1024_799, %c0_800] {strides = array<i32: 8, 1>} : memref<2048x128xf32, #tpu.memory_space<vmem>>, vector<128x128xf32>
      %c0_i32_801 = arith.constant 0 : i32
      %1846 = arith.addi %4, %c0_i32_801 : i32
      %c128_i32_802 = arith.constant 128 : i32
      %1847 = arith.muli %1846, %c128_i32_802 : i32
      %1848 = tpu.assume_multiple %1847, 128 : i32
      %1849 = tpu.transpose %1845, [1, 0] : vector<128x128xf32> -> vector<128x128xf32>
      %1850 = arith.index_cast %1848 : i32 to index
      %c128_803 = arith.constant 128 : index
      %1851 = vector.load %arg2[%1850, %c128_803] : memref<4096x256xf32, #tpu.memory_space<vmem>>, vector<128x128xf32>
      tpu.vector_store %arg2[%1850, %c128_803], %1849 {strides = array<i32>} : memref<4096x256xf32, #tpu.memory_space<vmem>>, vector<128x128xf32>,
      %c1025 = arith.constant 1025 : index
      %c0_804 = arith.constant 0 : index
      %1852 = tpu.strided_load %arg3[%c1025, %c0_804] {strides = array<i32: 8, 1>} : memref<2048x128xf32, #tpu.memory_space<vmem>>, vector<128x128xf32>
      %c1_i32_805 = arith.constant 1 : i32
      %1853 = arith.addi %4, %c1_i32_805 : i32
      %c128_i32_806 = arith.constant 128 : i32
      %1854 = arith.muli %1853, %c128_i32_806 : i32
      %1855 = tpu.assume_multiple %1854, 128 : i32
      %1856 = tpu.transpose %1852, [1, 0] : vector<128x128xf32> -> vector<128x128xf32>
      %1857 = arith.index_cast %1855 : i32 to index
      %c128_807 = arith.constant 128 : index
      %1858 = vector.load %arg2[%1857, %c128_807] : memref<4096x256xf32, #tpu.memory_space<vmem>>, vector<128x128xf32>
      tpu.vector_store %arg2[%1857, %c128_807], %1856 {strides = array<i32>} : memref<4096x256xf32, #tpu.memory_space<vmem>>, vector<128x128xf32>,
      %c1026 = arith.constant 1026 : index
      %c0_808 = arith.constant 0 : index
      %1859 = tpu.strided_load %arg3[%c1026, %c0_808] {strides = array<i32: 8, 1>} : memref<2048x128xf32, #tpu.memory_space<vmem>>, vector<128x128xf32>
      %c2_i32_809 = arith.constant 2 : i32
      %1860 = arith.addi %4, %c2_i32_809 : i32
      %c128_i32_810 = arith.constant 128 : i32
      %1861 = arith.muli %1860, %c128_i32_810 : i32
      %1862 = tpu.assume_multiple %1861, 128 : i32
      %1863 = tpu.transpose %1859, [1, 0] : vector<128x128xf32> -> vector<128x128xf32>
      %1864 = arith.index_cast %1862 : i32 to index
      %c128_811 = arith.constant 128 : index
      %1865 = vector.load %arg2[%1864, %c128_811] : memref<4096x256xf32, #tpu.memory_space<vmem>>, vector<128x128xf32>
      tpu.vector_store %arg2[%1864, %c128_811], %1863 {strides = array<i32>} : memref<4096x256xf32, #tpu.memory_space<vmem>>, vector<128x128xf32>,
      %c1027 = arith.constant 1027 : index
      %c0_812 = arith.constant 0 : index
      %1866 = tpu.strided_load %arg3[%c1027, %c0_812] {strides = array<i32: 8, 1>} : memref<2048x128xf32, #tpu.memory_space<vmem>>, vector<128x128xf32>
      %c3_i32_813 = arith.constant 3 : i32
      %1867 = arith.addi %4, %c3_i32_813 : i32
      %c128_i32_814 = arith.constant 128 : i32
      %1868 = arith.muli %1867, %c128_i32_814 : i32
      %1869 = tpu.assume_multiple %1868, 128 : i32
      %1870 = tpu.transpose %1866, [1, 0] : vector<128x128xf32> -> vector<128x128xf32>
      %1871 = arith.index_cast %1869 : i32 to index
      %c128_815 = arith.constant 128 : index
      %1872 = vector.load %arg2[%1871, %c128_815] : memref<4096x256xf32, #tpu.memory_space<vmem>>, vector<128x128xf32>
      tpu.vector_store %arg2[%1871, %c128_815], %1870 {strides = array<i32>} : memref<4096x256xf32, #tpu.memory_space<vmem>>, vector<128x128xf32>,
      %c1028 = arith.constant 1028 : index
      %c0_816 = arith.constant 0 : index
      %1873 = tpu.strided_load %arg3[%c1028, %c0_816] {strides = array<i32: 8, 1>} : memref<2048x128xf32, #tpu.memory_space<vmem>>, vector<128x128xf32>
      %c4_i32_817 = arith.constant 4 : i32
      %1874 = arith.addi %4, %c4_i32_817 : i32
      %c128_i32_818 = arith.constant 128 : i32
      %1875 = arith.muli %1874, %c128_i32_818 : i32
      %1876 = tpu.assume_multiple %1875, 128 : i32
      %1877 = tpu.transpose %1873, [1, 0] : vector<128x128xf32> -> vector<128x128xf32>
      %1878 = arith.index_cast %1876 : i32 to index
      %c128_819 = arith.constant 128 : index
      %1879 = vector.load %arg2[%1878, %c128_819] : memref<4096x256xf32, #tpu.memory_space<vmem>>, vector<128x128xf32>
      tpu.vector_store %arg2[%1878, %c128_819], %1877 {strides = array<i32>} : memref<4096x256xf32, #tpu.memory_space<vmem>>, vector<128x128xf32>,
      %c1029 = arith.constant 1029 : index
      %c0_820 = arith.constant 0 : index
      %1880 = tpu.strided_load %arg3[%c1029, %c0_820] {strides = array<i32: 8, 1>} : memref<2048x128xf32, #tpu.memory_space<vmem>>, vector<128x128xf32>
      %c5_i32_821 = arith.constant 5 : i32
      %1881 = arith.addi %4, %c5_i32_821 : i32
      %c128_i32_822 = arith.constant 128 : i32
      %1882 = arith.muli %1881, %c128_i32_822 : i32
      %1883 = tpu.assume_multiple %1882, 128 : i32
      %1884 = tpu.transpose %1880, [1, 0] : vector<128x128xf32> -> vector<128x128xf32>
      %1885 = arith.index_cast %1883 : i32 to index
      %c128_823 = arith.constant 128 : index
      %1886 = vector.load %arg2[%1885, %c128_823] : memref<4096x256xf32, #tpu.memory_space<vmem>>, vector<128x128xf32>
      tpu.vector_store %arg2[%1885, %c128_823], %1884 {strides = array<i32>} : memref<4096x256xf32, #tpu.memory_space<vmem>>, vector<128x128xf32>,
      %c1030 = arith.constant 1030 : index
      %c0_824 = arith.constant 0 : index
      %1887 = tpu.strided_load %arg3[%c1030, %c0_824] {strides = array<i32: 8, 1>} : memref<2048x128xf32, #tpu.memory_space<vmem>>, vector<128x128xf32>
      %c6_i32_825 = arith.constant 6 : i32
      %1888 = arith.addi %4, %c6_i32_825 : i32
      %c128_i32_826 = arith.constant 128 : i32
      %1889 = arith.muli %1888, %c128_i32_826 : i32
      %1890 = tpu.assume_multiple %1889, 128 : i32
      %1891 = tpu.transpose %1887, [1, 0] : vector<128x128xf32> -> vector<128x128xf32>
      %1892 = arith.index_cast %1890 : i32 to index
      %c128_827 = arith.constant 128 : index
      %1893 = vector.load %arg2[%1892, %c128_827] : memref<4096x256xf32, #tpu.memory_space<vmem>>, vector<128x128xf32>
      tpu.vector_store %arg2[%1892, %c128_827], %1891 {strides = array<i32>} : memref<4096x256xf32, #tpu.memory_space<vmem>>, vector<128x128xf32>,
      %c1031 = arith.constant 1031 : index
      %c0_828 = arith.constant 0 : index
      %1894 = tpu.strided_load %arg3[%c1031, %c0_828] {strides = array<i32: 8, 1>} : memref<2048x128xf32, #tpu.memory_space<vmem>>, vector<128x128xf32>
      %c7_i32_829 = arith.constant 7 : i32
      %1895 = arith.addi %4, %c7_i32_829 : i32
      %c128_i32_830 = arith.constant 128 : i32
      %1896 = arith.muli %1895, %c128_i32_830 : i32
      %1897 = tpu.assume_multiple %1896, 128 : i32
      %1898 = tpu.transpose %1894, [1, 0] : vector<128x128xf32> -> vector<128x128xf32>
      %1899 = arith.index_cast %1897 : i32 to index
      %c128_831 = arith.constant 128 : index
      %1900 = vector.load %arg2[%1899, %c128_831] : memref<4096x256xf32, #tpu.memory_space<vmem>>, vector<128x128xf32>
      tpu.vector_store %arg2[%1899, %c128_831], %1898 {strides = array<i32>} : memref<4096x256xf32, #tpu.memory_space<vmem>>, vector<128x128xf32>,
    }
    %c4_i32_0 = arith.constant 4 : i32
    return
  }
  func.func @transform_0(%arg0: i32) -> (i32, i32, i32) {
    %c0_i32 = arith.constant 0 : i32
    %c0_i32_0 = arith.constant 0 : i32
    %c0_i32_1 = arith.constant 0 : i32
    return %c0_i32, %arg0, %c0_i32_0 : i32, i32, i32
  }
  func.func @transform_1(%arg0: i32) -> (i32, i32) {
    %c0_i32 = arith.constant 0 : i32
    %c0_i32_0 = arith.constant 0 : i32
    return %arg0, %c0_i32 : i32, i32
  }
}

</mosaic_0001>

<llo_original>
// kernel: tpu_custom_call.1
$region0: #{tpu_custom_call.1}
  #allocation0 [shape = 'u32[]', space=smem, size = 0x4, offset = 0x4, fixed_abs, tag = 'smem constant byte address 0x4 - core index']
  #allocation1 [shape = 'u32[144,128]{1,0:T(1,128)}', space=vmem, size = 0x12000, scoped, tag = 'internal scratch']
  #allocation2 [shape = 'f32[2048,128]{1,0:T(8,128)}', space=vmem, size = 0x100000, scoped, tag = 'scratch operand']
  %s0 = inlined_call_operand.hbm [shape: f32[2,32,128], index: 0, kind: input, shape index: {}]
  %s1 = inlined_call_operand.hbm [shape: f32[4096,256], index: 1, kind: output, shape index: {}]
  %s2 = sld [smem:[#allocation0]]
  $region25: #{tpu_custom_call.1} parent=0
    _
  %s4 = ssub.s32 1, %s2
  %s5 = scalar_select 0, %s4, %s2
  $region1: #{tpu_custom_call.1} parent=0
    #allocation3 [shape = 'u8[32768]{0}', space=vmem, size = 0x8000, scoped, tag = 'input window, operand 0, single buffered']
    #allocation4 [shape = 's32[1]{0}', space=sflag, size = 0x4, scoped, tag = 'scoped memory for tpu_custom_call.1']
    #allocation5 [shape = 's32[1]{0}', space=sflag, size = 0x4, scoped, tag = 'scoped memory for tpu_custom_call.1']
    #allocation6 [shape = 'u8[4194304]{0}', space=vmem, size = 0x400000, scoped, tag = 'output window, operand 0, single buffered']
    %6 = vsyncpa [#allocation4], 0
    %7 = vsyncpa [#allocation5], 0
    // Predicated region
    $region2: #{tpu_custom_call.1} parent=1 // pred_check
      _
    $region3: #{tpu_custom_call.1} parent=1 // pred_check_branch
      %9 = sbr.rel (0) target = $region5
    $region4: #{tpu_custom_call.1} parent=1 // pred_region
      %s11 = ssub.s32 1024, 1024
      %12 = vsyncadd [#allocation4], %s11
      %s13 = sshll.u32 [#allocation3], 4
      %s14 = int_to_ptr.vmem [resolvable:$true] %s13
      %19 = dma.hbm_to_vmem [thread:$0]  %s0, 1024, %s14, [#allocation4], 128, 128, 8
    $region5: #{tpu_custom_call.1} parent=1 // pred_fallthru
      _
    // Predicated region
    $region6: #{tpu_custom_call.1} parent=1 // pred_check
      _
    $region7: #{tpu_custom_call.1} parent=1 // pred_check_branch
      %21 = sbr.rel (0) target = $region9
    $region8: #{tpu_custom_call.1} parent=1 // pred_region
      %22 = dma.done [#allocation4], 1024
    $region9: #{tpu_custom_call.1} parent=1 // pred_fallthru
      _
    loop: start=0, step=1, limit=4
    $region10: #{tpu_custom_call.1} parent=1 // loop_pre_header
      _
    $region11: #{tpu_custom_call.1} parent=1 // loop_header
      %s24 = sphi 0, %s28
      %p25 = scmp.ge.s32.totalorder %s24, 4
    $region12: #{tpu_custom_call.1} parent=1 // loop_header_branch
      %27 = sbr.rel (%p25) target = $region16
    $region13: #{tpu_custom_call.1} parent=1 // loop_body
      %s29 = smul.u32 %s24, 8
      %s30 = scalar_lea.vmem [#allocation3], %s29
      %v31 = vld [vmem:[%s30] sm:$0xff]
      %v32 = vmul.f32 %v31, 2.0
      %v33 = vsub.f32 %v32, 1.0
      %34 = vst [vmem:[#allocation2] sm:$0xff] 1.0
      %35 = vst [vmem:[#allocation2 + $0x8] sm:$0xff] %v33
      %v36 = vmul.f32 %v33, 1.5
      %v37 = vmul.f32 %v36, %v33
      %v38 = vsub.f32 %v37, 0.5
      %39 = vst [vmem:[#allocation2 + $0x10] sm:$0xff] %v38
      %v40 = vmul.f32 %v33, 1.6666666
      %v41 = vmul.f32 %v40, %v38
      %v42 = vmul.f32 %v33, 0.6666667
      %v43 = vsub.f32 %v41, %v42
      %44 = vst [vmem:[#allocation2 + $0x18] sm:$0xff] %v43
      %v45 = vmul.f32 %v33, 1.75
      %v46 = vmul.f32 %v45, %v43
      %v47 = vmul.f32 %v38, 0.75
      %v48 = vsub.f32 %v46, %v47
      %49 = vst [vmem:[#allocation2 + $0x20] sm:$0xff] %v48
      %v50 = vmul.f32 %v33, 1.8
      %v51 = vmul.f32 %v50, %v48
      %v52 = vmul.f32 %v43, 0.8
      %v53 = vsub.f32 %v51, %v52
      %54 = vst [vmem:[#allocation2 + $0x28] sm:$0xff] %v53
      %v55 = vmul.f32 %v33, 1.8333334
      %v56 = vmul.f32 %v55, %v53
      %v57 = vmul.f32 %v48, 0.8333333
      %v58 = vsub.f32 %v56, %v57
      %59 = vst [vmem:[#allocation2 + $0x30] sm:$0xff] %v58
      %v60 = vmul.f32 %v33, 1.8571428
      %v61 = vmul.f32 %v60, %v58
      %v62 = vmul.f32 %v53, 0.85714287
      %v63 = vsub.f32 %v61, %v62
      %64 = vst [vmem:[#allocation2 + $0x38] sm:$0xff] %v63
      %v65 = vmul.f32 %v33, 1.875
      %v66 = vmul.f32 %v65, %v63
      %v67 = vmul.f32 %v58, 0.875
      %v68 = vsub.f32 %v66, %v67
      %69 = vst [vmem:[#allocation2 + $0x40] sm:$0xff] %v68
      %v70 = vmul.f32 %v33, 1.8888888
      %v71 = vmul.f32 %v70, %v68
      %v72 = vmul.f32 %v63, 0.8888889
      %v73 = vsub.f32 %v71, %v72
      %74 = vst [vmem:[#allocation2 + $0x48] sm:$0xff] %v73
      %v75 = vmul.f32 %v33, 1.9
      %v76 = vmul.f32 %v75, %v73
      %v77 = vmul.f32 %v68, 0.9
      %v78 = vsub.f32 %v76, %v77
      %79 = vst [vmem:[#allocation2 + $0x50] sm:$0xff] %v78
      %v80 = vmul.f32 %v33, 1.9090909
      %v81 = vmul.f32 %v80, %v78
      %v82 = vmul.f32 %v73, 0.90909094
      %v83 = vsub.f32 %v81, %v82
      %84 = vst [vmem:[#allocation2 + $0x58] sm:$0xff] %v83
      %v85 = vmul.f32 %v33, 1.9166666
      %v86 = vmul.f32 %v85, %v83
      %v87 = vmul.f32 %v78, 0.9166667
      %v88 = vsub.f32 %v86, %v87
      %89 = vst [vmem:[#allocation2 + $0x60] sm:$0xff] %v88
      %v90 = vmul.f32 %v33, 1.9230769
      %v91 = vmul.f32 %v90, %v88
      %v92 = vmul.f32 %v83, 0.9230769
      %v93 = vsub.f32 %v91, %v92
      %94 = vst [vmem:[#allocation2 + $0x68] sm:$0xff] %v93
      %v95 = vmul.f32 %v33, 1.9285715
      %v96 = vmul.f32 %v95, %v93
      %v97 = vmul.f32 %v88, 0.9285714
      %v98 = vsub.f32 %v96, %v97
      %99 = vst [vmem:[#allocation2 + $0x70] sm:$0xff] %v98
      %v100 = vmul.f32 %v33, 1.9333333
      %v101 = vmul.f32 %v100, %v98
      %v102 = vmul.f32 %v93, 0.93333334
      %v103 = vsub.f32 %v101, %v102
      %104 = vst [vmem:[#allocation2 + $0x78] sm:$0xff] %v103
      %v105 = vmul.f32 %v33, 1.9375
      %v106 = vmul.f32 %v105, %v103
      %v107 = vmul.f32 %v98, 0.9375
      %v108 = vsub.f32 %v106, %v107
      %109 = vst [vmem:[#allocation2 + $0x80] sm:$0xff] %v108
      %v110 = vmul.f32 %v33, 1.9411764
      %v111 = vmul.f32 %v110, %v108
      %v112 = vmul.f32 %v103, 0.9411765
      %v113 = vsub.f32 %v111, %v112
      %114 = vst [vmem:[#allocation2 + $0x88] sm:$0xff] %v113
      %v115 = vmul.f32 %v33, 1.9444444
      %v116 = vmul.f32 %v115, %v113
      %v117 = vmul.f32 %v108, 0.9444444
      %v118 = vsub.f32 %v116, %v117
      %119 = vst [vmem:[#allocation2 + $0x90] sm:$0xff] %v118
      %v120 = vmul.f32 %v33, 1.9473684
      %v121 = vmul.f32 %v120, %v118
      %v122 = vmul.f32 %v113, 0.94736844
      %v123 = vsub.f32 %v121, %v122
      %124 = vst [vmem:[#allocation2 + $0x98] sm:$0xff] %v123
      %v125 = vmul.f32 %v33, 1.95
      %v126 = vmul.f32 %v125, %v123
      %v127 = vmul.f32 %v118, 0.95
      %v128 = vsub.f32 %v126, %v127
      %129 = vst [vmem:[#allocation2 + $0xa0] sm:$0xff] %v128
      %v130 = vmul.f32 %v33, 1.9523809
      %v131 = vmul.f32 %v130, %v128
      %v132 = vmul.f32 %v123, 0.95238096
      %v133 = vsub.f32 %v131, %v132
      %134 = vst [vmem:[#allocation2 + $0xa8] sm:$0xff] %v133
      %v135 = vmul.f32 %v33, 1.9545455
      %v136 = vmul.f32 %v135, %v133
      %v137 = vmul.f32 %v128, 0.95454544
      %v138 = vsub.f32 %v136, %v137
      %139 = vst [vmem:[#allocation2 + $0xb0] sm:$0xff] %v138
      %v140 = vmul.f32 %v33, 1.9565217
      %v141 = vmul.f32 %v140, %v138
      %v142 = vmul.f32 %v133, 0.95652175
      %v143 = vsub.f32 %v141, %v142
      %144 = vst [vmem:[#allocation2 + $0xb8] sm:$0xff] %v143
      %v145 = vmul.f32 %v33, 1.9583334
      %v146 = vmul.f32 %v145, %v143
      %v147 = vmul.f32 %v138, 0.9583333
      %v148 = vsub.f32 %v146, %v147
      %149 = vst [vmem:[#allocation2 + $0xc0] sm:$0xff] %v148
      %v150 = vmul.f32 %v33, 1.96
      %v151 = vmul.f32 %v150, %v148
      %v152 = vmul.f32 %v143, 0.96
      %v153 = vsub.f32 %v151, %v152
      %154 = vst [vmem:[#allocation2 + $0xc8] sm:$0xff] %v153
      %v155 = vmul.f32 %v33, 1.9615384
      %v156 = vmul.f32 %v155, %v153
      %v157 = vmul.f32 %v148, 0.96153843
      %v158 = vsub.f32 %v156, %v157
      %159 = vst [vmem:[#allocation2 + $0xd0] sm:$0xff] %v158
      %v160 = vmul.f32 %v33, 1.962963
      %v161 = vmul.f32 %v160, %v158
      %v162 = vmul.f32 %v153, 0.962963
      %v163 = vsub.f32 %v161, %v162
      %164 = vst [vmem:[#allocation2 + $0xd8] sm:$0xff] %v163
      %v165 = vmul.f32 %v33, 1.9642857
      %v166 = vmul.f32 %v165, %v163
      %v167 = vmul.f32 %v158, 0.96428573
      %v168 = vsub.f32 %v166, %v167
      %169 = vst [vmem:[#allocation2 + $0xe0] sm:$0xff] %v168
      %v170 = vmul.f32 %v33, 1.9655173
      %v171 = vmul.f32 %v170, %v168
      %v172 = vmul.f32 %v163, 0.9655172
      %v173 = vsub.f32 %v171, %v172
      %174 = vst [vmem:[#allocation2 + $0xe8] sm:$0xff] %v173
      %v175 = vmul.f32 %v33, 1.9666667
      %v176 = vmul.f32 %v175, %v173
      %v177 = vmul.f32 %v168, 0.96666664
      %v178 = vsub.f32 %v176, %v177
      %179 = vst [vmem:[#allocation2 + $0xf0] sm:$0xff] %v178
      %v180 = vmul.f32 %v33, 1.967742
      %v181 = vmul.f32 %v180, %v178
      %v182 = vmul.f32 %v173, 0.9677419
      %v183 = vsub.f32 %v181, %v182
      %184 = vst [vmem:[#allocation2 + $0xf8] sm:$0xff] %v183
      %v185 = vmul.f32 %v33, 1.96875
      %v186 = vmul.f32 %v185, %v183
      %v187 = vmul.f32 %v178, 0.96875
      %v188 = vsub.f32 %v186, %v187
      %189 = vst [vmem:[#allocation2 + $0x100] sm:$0xff] %v188
      %v190 = vmul.f32 %v33, 1.969697
      %v191 = vmul.f32 %v190, %v188
      %v192 = vmul.f32 %v183, 0.969697
      %v193 = vsub.f32 %v191, %v192
      %194 = vst [vmem:[#allocation2 + $0x108] sm:$0xff] %v193
      %v195 = vmul.f32 %v33, 1.9705882
      %v196 = vmul.f32 %v195, %v193
      %v197 = vmul.f32 %v188, 0.9705882
      %v198 = vsub.f32 %v196, %v197
      %199 = vst [vmem:[#allocation2 + $0x110] sm:$0xff] %v198
      %v200 = vmul.f32 %v33, 1.9714285
      %v201 = vmul.f32 %v200, %v198
      %v202 = vmul.f32 %v193, 0.9714286
      %v203 = vsub.f32 %v201, %v202
      %204 = vst [vmem:[#allocation2 + $0x118] sm:$0xff] %v203
      %v205 = vmul.f32 %v33, 1.9722222
      %v206 = vmul.f32 %v205, %v203
      %v207 = vmul.f32 %v198, 0.9722222
      %v208 = vsub.f32 %v206, %v207
      %209 = vst [vmem:[#allocation2 + $0x120] sm:$0xff] %v208
      %v210 = vmul.f32 %v33, 1.972973
      %v211 = vmul.f32 %v210, %v208
      %v212 = vmul.f32 %v203, 0.972973
      %v213 = vsub.f32 %v211, %v212
      %214 = vst [vmem:[#allocation2 + $0x128] sm:$0xff] %v213
      %v215 = vmul.f32 %v33, 1.9736842
      %v216 = vmul.f32 %v215, %v213
      %v217 = vmul.f32 %v208, 0.9736842
      %v218 = vsub.f32 %v216, %v217
      %219 = vst [vmem:[#allocation2 + $0x130] sm:$0xff] %v218
      %v220 = vmul.f32 %v33, 1.9743589
      %v221 = vmul.f32 %v220, %v218
      %v222 = vmul.f32 %v213, 0.974359
      %v223 = vsub.f32 %v221, %v222
      %224 = vst [vmem:[#allocation2 + $0x138] sm:$0xff] %v223
      %v225 = vmul.f32 %v33, 1.975
      %v226 = vmul.f32 %v225, %v223
      %v227 = vmul.f32 %v218, 0.975
      %v228 = vsub.f32 %v226, %v227
      %229 = vst [vmem:[#allocation2 + $0x140] sm:$0xff] %v228
      %v230 = vmul.f32 %v33, 1.9756098
      %v231 = vmul.f32 %v230, %v228
      %v232 = vmul.f32 %v223, 0.9756098
      %v233 = vsub.f32 %v231, %v232
      %234 = vst [vmem:[#allocation2 + $0x148] sm:$0xff] %v233
      %v235 = vmul.f32 %v33, 1.9761904
      %v236 = vmul.f32 %v235, %v233
      %v237 = vmul.f32 %v228, 0.97619045
      %v238 = vsub.f32 %v236, %v237
      %239 = vst [vmem:[#allocation2 + $0x150] sm:$0xff] %v238
      %v240 = vmul.f32 %v33, 1.9767442
      %v241 = vmul.f32 %v240, %v238
      %v242 = vmul.f32 %v233, 0.9767442
      %v243 = vsub.f32 %v241, %v242
      %244 = vst [vmem:[#allocation2 + $0x158] sm:$0xff] %v243
      %v245 = vmul.f32 %v33, 1.9772727
      %v246 = vmul.f32 %v245, %v243
      %v247 = vmul.f32 %v238, 0.97727275
      %v248 = vsub.f32 %v246, %v247
      %249 = vst [vmem:[#allocation2 + $0x160] sm:$0xff] %v248
      %v250 = vmul.f32 %v33, 1.9777777
      %v251 = vmul.f32 %v250, %v248
      %v252 = vmul.f32 %v243, 0.9777778
      %v253 = vsub.f32 %v251, %v252
      %254 = vst [vmem:[#allocation2 + $0x168] sm:$0xff] %v253
      %v255 = vmul.f32 %v33, 1.9782609
      %v256 = vmul.f32 %v255, %v253
      %v257 = vmul.f32 %v248, 0.9782609
      %v258 = vsub.f32 %v256, %v257
      %259 = vst [vmem:[#allocation2 + $0x170] sm:$0xff] %v258
      %v260 = vmul.f32 %v33, 1.9787234
      %v261 = vmul.f32 %v260, %v258
      %v262 = vmul.f32 %v253, 0.9787234
      %v263 = vsub.f32 %v261, %v262
      %264 = vst [vmem:[#allocation2 + $0x178] sm:$0xff] %v263
      %v265 = vmul.f32 %v33, 1.9791666
      %v266 = vmul.f32 %v265, %v263
      %v267 = vmul.f32 %v258, 0.9791667
      %v268 = vsub.f32 %v266, %v267
      %269 = vst [vmem:[#allocation2 + $0x180] sm:$0xff] %v268
      %v270 = vmul.f32 %v33, 1.9795918
      %v271 = vmul.f32 %v270, %v268
      %v272 = vmul.f32 %v263, 0.97959185
      %v273 = vsub.f32 %v271, %v272
      %274 = vst [vmem:[#allocation2 + $0x188] sm:$0xff] %v273
      %v275 = vmul.f32 %v33, 1.98
      %v276 = vmul.f32 %v275, %v273
      %v277 = vmul.f32 %v268, 0.98
      %v278 = vsub.f32 %v276, %v277
      %279 = vst [vmem:[#allocation2 + $0x190] sm:$0xff] %v278
      %v280 = vmul.f32 %v33, 1.9803921
      %v281 = vmul.f32 %v280, %v278
      %v282 = vmul.f32 %v273, 0.98039216
      %v283 = vsub.f32 %v281, %v282
      %284 = vst [vmem:[#allocation2 + $0x198] sm:$0xff] %v283
      %v285 = vmul.f32 %v33, 1.9807693
      %v286 = vmul.f32 %v285, %v283
      %v287 = vmul.f32 %v278, 0.9807692
      %v288 = vsub.f32 %v286, %v287
      %289 = vst [vmem:[#allocation2 + $0x1a0] sm:$0xff] %v288
      %v290 = vmul.f32 %v33, 1.981132
      %v291 = vmul.f32 %v290, %v288
      %v292 = vmul.f32 %v283, 0.9811321
      %v293 = vsub.f32 %v291, %v292
      %294 = vst [vmem:[#allocation2 + $0x1a8] sm:$0xff] %v293
      %v295 = vmul.f32 %v33, 1.9814814
      %v296 = vmul.f32 %v295, %v293
      %v297 = vmul.f32 %v288, 0.9814815
      %v298 = vsub.f32 %v296, %v297
      %299 = vst [vmem:[#allocation2 + $0x1b0] sm:$0xff] %v298
      %v300 = vmul.f32 %v33, 1.9818182
      %v301 = vmul.f32 %v300, %v298
      %v302 = vmul.f32 %v293, 0.9818182
      %v303 = vsub.f32 %v301, %v302
      %304 = vst [vmem:[#allocation2 + $0x1b8] sm:$0xff] %v303
      %v305 = vmul.f32 %v33, 1.9821428
      %v306 = vmul.f32 %v305, %v303
      %v307 = vmul.f32 %v298, 0.98214287
      %v308 = vsub.f32 %v306, %v307
      %309 = vst [vmem:[#allocation2 + $0x1c0] sm:$0xff] %v308
      %v310 = vmul.f32 %v33, 1.9824561
      %v311 = vmul.f32 %v310, %v308
      %v312 = vmul.f32 %v303, 0.98245615
      %v313 = vsub.f32 %v311, %v312
      %314 = vst [vmem:[#allocation2 + $0x1c8] sm:$0xff] %v313
      %v315 = vmul.f32 %v33, 1.9827586
      %v316 = vmul.f32 %v315, %v313
      %v317 = vmul.f32 %v308, 0.98275864
      %v318 = vsub.f32 %v316, %v317
      %319 = vst [vmem:[#allocation2 + $0x1d0] sm:$0xff] %v318
      %v320 = vmul.f32 %v33, 1.9830508
      %v321 = vmul.f32 %v320, %v318
      %v322 = vmul.f32 %v313, 0.9830508
      %v323 = vsub.f32 %v321, %v322
      %324 = vst [vmem:[#allocation2 + $0x1d8] sm:$0xff] %v323
      %v325 = vmul.f32 %v33, 1.9833333
      %v326 = vmul.f32 %v325, %v323
      %v327 = vmul.f32 %v318, 0.98333335
      %v328 = vsub.f32 %v326, %v327
      %329 = vst [vmem:[#allocation2 + $0x1e0] sm:$0xff] %v328
      %v330 = vmul.f32 %v33, 1.9836066
      %v331 = vmul.f32 %v330, %v328
      %v332 = vmul.f32 %v323, 0.9836066
      %v333 = vsub.f32 %v331, %v332
      %334 = vst [vmem:[#allocation2 + $0x1e8] sm:$0xff] %v333
      %v335 = vmul.f32 %v33, 1.983871
      %v336 = vmul.f32 %v335, %v333
      %v337 = vmul.f32 %v328, 0.983871
      %v338 = vsub.f32 %v336, %v337
      %339 = vst [vmem:[#allocation2 + $0x1f0] sm:$0xff] %v338
      %v340 = vmul.f32 %v33, 1.9841269
      %v341 = vmul.f32 %v340, %v338
      %v342 = vmul.f32 %v333, 0.984127
      %v343 = vsub.f32 %v341, %v342
      %344 = vst [vmem:[#allocation2 + $0x1f8] sm:$0xff] %v343
      %v345 = vmul.f32 %v33, 1.984375
      %v346 = vmul.f32 %v345, %v343
      %v347 = vmul.f32 %v338, 0.984375
      %v348 = vsub.f32 %v346, %v347
      %349 = vst [vmem:[#allocation2 + $0x200] sm:$0xff] %v348
      %v350 = vmul.f32 %v33, 1.9846153
      %v351 = vmul.f32 %v350, %v348
      %v352 = vmul.f32 %v343, 0.9846154
      %v353 = vsub.f32 %v351, %v352
      %354 = vst [vmem:[#allocation2 + $0x208] sm:$0xff] %v353
      %v355 = vmul.f32 %v33, 1.9848485
      %v356 = vmul.f32 %v355, %v353
      %v357 = vmul.f32 %v348, 0.9848485
      %v358 = vsub.f32 %v356, %v357
      %359 = vst [vmem:[#allocation2 + $0x210] sm:$0xff] %v358
      %v360 = vmul.f32 %v33, 1.9850746
      %v361 = vmul.f32 %v360, %v358
      %v362 = vmul.f32 %v353, 0.98507464
      %v363 = vsub.f32 %v361, %v362
      %364 = vst [vmem:[#allocation2 + $0x218] sm:$0xff] %v363
      %v365 = vmul.f32 %v33, 1.9852941
      %v366 = vmul.f32 %v365, %v363
      %v367 = vmul.f32 %v358, 0.9852941
      %v368 = vsub.f32 %v366, %v367
      %369 = vst [vmem:[#allocation2 + $0x220] sm:$0xff] %v368
      %v370 = vmul.f32 %v33, 1.9855072
      %v371 = vmul.f32 %v370, %v368
      %v372 = vmul.f32 %v363, 0.98550725
      %v373 = vsub.f32 %v371, %v372
      %374 = vst [vmem:[#allocation2 + $0x228] sm:$0xff] %v373
      %v375 = vmul.f32 %v33, 1.9857143
      %v376 = vmul.f32 %v375, %v373
      %v377 = vmul.f32 %v368, 0.98571426
      %v378 = vsub.f32 %v376, %v377
      %379 = vst [vmem:[#allocation2 + $0x230] sm:$0xff] %v378
      %v380 = vmul.f32 %v33, 1.9859155
      %v381 = vmul.f32 %v380, %v378
      %v382 = vmul.f32 %v373, 0.9859155
      %v383 = vsub.f32 %v381, %v382
      %384 = vst [vmem:[#allocation2 + $0x238] sm:$0xff] %v383
      %v385 = vmul.f32 %v33, 1.9861112
      %v386 = vmul.f32 %v385, %v383
      %v387 = vmul.f32 %v378, 0.9861111
      %v388 = vsub.f32 %v386, %v387
      %389 = vst [vmem:[#allocation2 + $0x240] sm:$0xff] %v388
      %v390 = vmul.f32 %v33, 1.9863014
      %v391 = vmul.f32 %v390, %v388
      %v392 = vmul.f32 %v383, 0.98630136
      %v393 = vsub.f32 %v391, %v392
      %394 = vst [vmem:[#allocation2 + $0x248] sm:$0xff] %v393
      %v395 = vmul.f32 %v33, 1.9864864
      %v396 = vmul.f32 %v395, %v393
      %v397 = vmul.f32 %v388, 0.9864865
      %v398 = vsub.f32 %v396, %v397
      %399 = vst [vmem:[#allocation2 + $0x250] sm:$0xff] %v398
      %v400 = vmul.f32 %v33, 1.9866667
      %v401 = vmul.f32 %v400, %v398
      %v402 = vmul.f32 %v393, 0.9866667
      %v403 = vsub.f32 %v401, %v402
      %404 = vst [vmem:[#allocation2 + $0x258] sm:$0xff] %v403
      %v405 = vmul.f32 %v33, 1.9868422
      %v406 = vmul.f32 %v405, %v403
      %v407 = vmul.f32 %v398, 0.9868421
      %v408 = vsub.f32 %v406, %v407
      %409 = vst [vmem:[#allocation2 + $0x260] sm:$0xff] %v408
      %v410 = vmul.f32 %v33, 1.987013
      %v411 = vmul.f32 %v410, %v408
      %v412 = vmul.f32 %v403, 0.987013
      %v413 = vsub.f32 %v411, %v412
      %414 = vst [vmem:[#allocation2 + $0x268] sm:$0xff] %v413
      %v415 = vmul.f32 %v33, 1.9871795
      %v416 = vmul.f32 %v415, %v413
      %v417 = vmul.f32 %v408, 0.98717946
      %v418 = vsub.f32 %v416, %v417
      %419 = vst [vmem:[#allocation2 + $0x270] sm:$0xff] %v418
      %v420 = vmul.f32 %v33, 1.9873418
      %v421 = vmul.f32 %v420, %v418
      %v422 = vmul.f32 %v413, 0.98734176
      %v423 = vsub.f32 %v421, %v422
      %424 = vst [vmem:[#allocation2 + $0x278] sm:$0xff] %v423
      %v425 = vmul.f32 %v33, 1.9875
      %v426 = vmul.f32 %v425, %v423
      %v427 = vmul.f32 %v418, 0.9875
      %v428 = vsub.f32 %v426, %v427
      %429 = vst [vmem:[#allocation2 + $0x280] sm:$0xff] %v428
      %v430 = vmul.f32 %v33, 1.9876543
      %v431 = vmul.f32 %v430, %v428
      %v432 = vmul.f32 %v423, 0.9876543
      %v433 = vsub.f32 %v431, %v432
      %434 = vst [vmem:[#allocation2 + $0x288] sm:$0xff] %v433
      %v435 = vmul.f32 %v33, 1.9878049
      %v436 = vmul.f32 %v435, %v433
      %v437 = vmul.f32 %v428, 0.9878049
      %v438 = vsub.f32 %v436, %v437
      %439 = vst [vmem:[#allocation2 + $0x290] sm:$0xff] %v438
      %v440 = vmul.f32 %v33, 1.9879518
      %v441 = vmul.f32 %v440, %v438
      %v442 = vmul.f32 %v433, 0.9879518
      %v443 = vsub.f32 %v441, %v442
      %444 = vst [vmem:[#allocation2 + $0x298] sm:$0xff] %v443
      %v445 = vmul.f32 %v33, 1.9880953
      %v446 = vmul.f32 %v445, %v443
      %v447 = vmul.f32 %v438, 0.9880952
      %v448 = vsub.f32 %v446, %v447
      %449 = vst [vmem:[#allocation2 + $0x2a0] sm:$0xff] %v448
      %v450 = vmul.f32 %v33, 1.9882352
      %v451 = vmul.f32 %v450, %v448
      %v452 = vmul.f32 %v443, 0.9882353
      %v453 = vsub.f32 %v451, %v452
      %454 = vst [vmem:[#allocation2 + $0x2a8] sm:$0xff] %v453
      %v455 = vmul.f32 %v33, 1.9883721
      %v456 = vmul.f32 %v455, %v453
      %v457 = vmul.f32 %v448, 0.9883721
      %v458 = vsub.f32 %v456, %v457
      %459 = vst [vmem:[#allocation2 + $0x2b0] sm:$0xff] %v458
      %v460 = vmul.f32 %v33, 1.9885057
      %v461 = vmul.f32 %v460, %v458
      %v462 = vmul.f32 %v453, 0.9885057
      %v463 = vsub.f32 %v461, %v462
      %464 = vst [vmem:[#allocation2 + $0x2b8] sm:$0xff] %v463
      %v465 = vmul.f32 %v33, 1.9886364
      %v466 = vmul.f32 %v465, %v463
      %v467 = vmul.f32 %v458, 0.9886364
      %v468 = vsub.f32 %v466, %v467
      %469 = vst [vmem:[#allocation2 + $0x2c0] sm:$0xff] %v468
      %v470 = vmul.f32 %v33, 1.988764
      %v471 = vmul.f32 %v470, %v468
      %v472 = vmul.f32 %v463, 0.98876405
      %v473 = vsub.f32 %v471, %v472
      %474 = vst [vmem:[#allocation2 + $0x2c8] sm:$0xff] %v473
      %v475 = vmul.f32 %v33, 1.9888889
      %v476 = vmul.f32 %v475, %v473
      %v477 = vmul.f32 %v468, 0.98888886
      %v478 = vsub.f32 %v476, %v477
      %479 = vst [vmem:[#allocation2 + $0x2d0] sm:$0xff] %v478
      %v480 = vmul.f32 %v33, 1.9890109
      %v481 = vmul.f32 %v480, %v478
      %v482 = vmul.f32 %v473, 0.989011
      %v483 = vsub.f32 %v481, %v482
      %484 = vst [vmem:[#allocation2 + $0x2d8] sm:$0xff] %v483
      %v485 = vmul.f32 %v33, 1.9891304
      %v486 = vmul.f32 %v485, %v483
      %v487 = vmul.f32 %v478, 0.98913044
      %v488 = vsub.f32 %v486, %v487
      %489 = vst [vmem:[#allocation2 + $0x2e0] sm:$0xff] %v488
      %v490 = vmul.f32 %v33, 1.9892473
      %v491 = vmul.f32 %v490, %v488
      %v492 = vmul.f32 %v483, 0.9892473
      %v493 = vsub.f32 %v491, %v492
      %494 = vst [vmem:[#allocation2 + $0x2e8] sm:$0xff] %v493
      %v495 = vmul.f32 %v33, 1.9893616
      %v496 = vmul.f32 %v495, %v493
      %v497 = vmul.f32 %v488, 0.9893617
      %v498 = vsub.f32 %v496, %v497
      %499 = vst [vmem:[#allocation2 + $0x2f0] sm:$0xff] %v498
      %v500 = vmul.f32 %v33, 1.9894737
      %v501 = vmul.f32 %v500, %v498
      %v502 = vmul.f32 %v493, 0.9894737
      %v503 = vsub.f32 %v501, %v502
      %504 = vst [vmem:[#allocation2 + $0x2f8] sm:$0xff] %v503
      %v505 = vmul.f32 %v33, 1.9895834
      %v506 = vmul.f32 %v505, %v503
      %v507 = vmul.f32 %v498, 0.9895833
      %v508 = vsub.f32 %v506, %v507
      %509 = vst [vmem:[#allocation2 + $0x300] sm:$0xff] %v508
      %v510 = vmul.f32 %v33, 1.9896908
      %v511 = vmul.f32 %v510, %v508
      %v512 = vmul.f32 %v503, 0.9896907
      %v513 = vsub.f32 %v511, %v512
      %514 = vst [vmem:[#allocation2 + $0x308] sm:$0xff] %v513
      %v515 = vmul.f32 %v33, 1.9897959
      %v516 = vmul.f32 %v515, %v513
      %v517 = vmul.f32 %v508, 0.9897959
      %v518 = vsub.f32 %v516, %v517
      %519 = vst [vmem:[#allocation2 + $0x310] sm:$0xff] %v518
      %v520 = vmul.f32 %v33, 1.989899
      %v521 = vmul.f32 %v520, %v518
      %v522 = vmul.f32 %v513, 0.989899
      %v523 = vsub.f32 %v521, %v522
      %524 = vst [vmem:[#allocation2 + $0x318] sm:$0xff] %v523
      %v525 = vmul.f32 %v33, 1.99
      %v526 = vmul.f32 %v525, %v523
      %v527 = vmul.f32 %v518, 0.99
      %v528 = vsub.f32 %v526, %v527
      %529 = vst [vmem:[#allocation2 + $0x320] sm:$0xff] %v528
      %v530 = vmul.f32 %v33, 1.990099
      %v531 = vmul.f32 %v530, %v528
      %v532 = vmul.f32 %v523, 0.990099
      %v533 = vsub.f32 %v531, %v532
      %534 = vst [vmem:[#allocation2 + $0x328] sm:$0xff] %v533
      %v535 = vmul.f32 %v33, 1.9901961
      %v536 = vmul.f32 %v535, %v533
      %v537 = vmul.f32 %v528, 0.99019605
      %v538 = vsub.f32 %v536, %v537
      %539 = vst [vmem:[#allocation2 + $0x330] sm:$0xff] %v538
      %v540 = vmul.f32 %v33, 1.9902912
      %v541 = vmul.f32 %v540, %v538
      %v542 = vmul.f32 %v533, 0.99029124
      %v543 = vsub.f32 %v541, %v542
      %544 = vst [vmem:[#allocation2 + $0x338] sm:$0xff] %v543
      %v545 = vmul.f32 %v33, 1.9903846
      %v546 = vmul.f32 %v545, %v543
      %v547 = vmul.f32 %v538, 0.99038464
      %v548 = vsub.f32 %v546, %v547
      %549 = vst [vmem:[#allocation2 + $0x340] sm:$0xff] %v548
      %v550 = vmul.f32 %v33, 1.9904761
      %v551 = vmul.f32 %v550, %v548
      %v552 = vmul.f32 %v543, 0.9904762
      %v553 = vsub.f32 %v551, %v552
      %554 = vst [vmem:[#allocation2 + $0x348] sm:$0xff] %v553
      %v555 = vmul.f32 %v33, 1.990566
      %v556 = vmul.f32 %v555, %v553
      %v557 = vmul.f32 %v548, 0.990566
      %v558 = vsub.f32 %v556, %v557
      %559 = vst [vmem:[#allocation2 + $0x350] sm:$0xff] %v558
      %v560 = vmul.f32 %v33, 1.9906542
      %v561 = vmul.f32 %v560, %v558
      %v562 = vmul.f32 %v553, 0.99065423
      %v563 = vsub.f32 %v561, %v562
      %564 = vst [vmem:[#allocation2 + $0x358] sm:$0xff] %v563
      %v565 = vmul.f32 %v33, 1.9907408
      %v566 = vmul.f32 %v565, %v563
      %v567 = vmul.f32 %v558, 0.9907407
      %v568 = vsub.f32 %v566, %v567
      %569 = vst [vmem:[#allocation2 + $0x360] sm:$0xff] %v568
      %v570 = vmul.f32 %v33, 1.9908257
      %v571 = vmul.f32 %v570, %v568
      %v572 = vmul.f32 %v563, 0.9908257
      %v573 = vsub.f32 %v571, %v572
      %574 = vst [vmem:[#allocation2 + $0x368] sm:$0xff] %v573
      %v575 = vmul.f32 %v33, 1.9909091
      %v576 = vmul.f32 %v575, %v573
      %v577 = vmul.f32 %v568, 0.9909091
      %v578 = vsub.f32 %v576, %v577
      %579 = vst [vmem:[#allocation2 + $0x370] sm:$0xff] %v578
      %v580 = vmul.f32 %v33, 1.990991
      %v581 = vmul.f32 %v580, %v578
      %v582 = vmul.f32 %v573, 0.990991
      %v583 = vsub.f32 %v581, %v582
      %584 = vst [vmem:[#allocation2 + $0x378] sm:$0xff] %v583
      %v585 = vmul.f32 %v33, 1.9910715
      %v586 = vmul.f32 %v585, %v583
      %v587 = vmul.f32 %v578, 0.9910714
      %v588 = vsub.f32 %v586, %v587
      %589 = vst [vmem:[#allocation2 + $0x380] sm:$0xff] %v588
      %v590 = vmul.f32 %v33, 1.9911505
      %v591 = vmul.f32 %v590, %v588
      %v592 = vmul.f32 %v583, 0.99115044
      %v593 = vsub.f32 %v591, %v592
      %594 = vst [vmem:[#allocation2 + $0x388] sm:$0xff] %v593
      %v595 = vmul.f32 %v33, 1.9912281
      %v596 = vmul.f32 %v595, %v593
      %v597 = vmul.f32 %v588, 0.99122804
      %v598 = vsub.f32 %v596, %v597
      %599 = vst [vmem:[#allocation2 + $0x390] sm:$0xff] %v598
      %v600 = vmul.f32 %v33, 1.9913044
      %v601 = vmul.f32 %v600, %v598
      %v602 = vmul.f32 %v593, 0.99130434
      %v603 = vsub.f32 %v601, %v602
      %604 = vst [vmem:[#allocation2 + $0x398] sm:$0xff] %v603
      %v605 = vmul.f32 %v33, 1.9913793
      %v606 = vmul.f32 %v605, %v603
      %v607 = vmul.f32 %v598, 0.9913793
      %v608 = vsub.f32 %v606, %v607
      %609 = vst [vmem:[#allocation2 + $0x3a0] sm:$0xff] %v608
      %v610 = vmul.f32 %v33, 1.9914529
      %v611 = vmul.f32 %v610, %v608
      %v612 = vmul.f32 %v603, 0.991453
      %v613 = vsub.f32 %v611, %v612
      %614 = vst [vmem:[#allocation2 + $0x3a8] sm:$0xff] %v613
      %v615 = vmul.f32 %v33, 1.9915254
      %v616 = vmul.f32 %v615, %v613
      %v617 = vmul.f32 %v608, 0.9915254
      %v618 = vsub.f32 %v616, %v617
      %619 = vst [vmem:[#allocation2 + $0x3b0] sm:$0xff] %v618
      %v620 = vmul.f32 %v33, 1.9915966
      %v621 = vmul.f32 %v620, %v618
      %v622 = vmul.f32 %v613, 0.99159664
      %v623 = vsub.f32 %v621, %v622
      %624 = vst [vmem:[#allocation2 + $0x3b8] sm:$0xff] %v623
      %v625 = vmul.f32 %v33, 1.9916667
      %v626 = vmul.f32 %v625, %v623
      %v627 = vmul.f32 %v618, 0.9916667
      %v628 = vsub.f32 %v626, %v627
      %629 = vst [vmem:[#allocation2 + $0x3c0] sm:$0xff] %v628
      %v630 = vmul.f32 %v33, 1.9917356
      %v631 = vmul.f32 %v630, %v628
      %v632 = vmul.f32 %v623, 0.9917355
      %v633 = vsub.f32 %v631, %v632
      %634 = vst [vmem:[#allocation2 + $0x3c8] sm:$0xff] %v633
      %v635 = vmul.f32 %v33, 1.9918033
      %v636 = vmul.f32 %v635, %v633
      %v637 = vmul.f32 %v628, 0.9918033
      %v638 = vsub.f32 %v636, %v637
      %639 = vst [vmem:[#allocation2 + $0x3d0] sm:$0xff] %v638
      %v640 = vmul.f32 %v33, 1.9918699
      %v641 = vmul.f32 %v640, %v638
      %v642 = vmul.f32 %v633, 0.9918699
      %v643 = vsub.f32 %v641, %v642
      %644 = vst [vmem:[#allocation2 + $0x3d8] sm:$0xff] %v643
      %v645 = vmul.f32 %v33, 1.9919355
      %v646 = vmul.f32 %v645, %v643
      %v647 = vmul.f32 %v638, 0.9919355
      %v648 = vsub.f32 %v646, %v647
      %649 = vst [vmem:[#allocation2 + $0x3e0] sm:$0xff] %v648
      %v650 = vmul.f32 %v33, 1.992
      %v651 = vmul.f32 %v650, %v648
      %v652 = vmul.f32 %v643, 0.992
      %v653 = vsub.f32 %v651, %v652
      %654 = vst [vmem:[#allocation2 + $0x3e8] sm:$0xff] %v653
      %v655 = vmul.f32 %v33, 1.9920635
      %v656 = vmul.f32 %v655, %v653
      %v657 = vmul.f32 %v648, 0.99206346
      %v658 = vsub.f32 %v656, %v657
      %659 = vst [vmem:[#allocation2 + $0x3f0] sm:$0xff] %v658
      %v660 = vmul.f32 %v33, 1.992126
      %v661 = vmul.f32 %v660, %v658
      %v662 = vmul.f32 %v653, 0.992126
      %v663 = vsub.f32 %v661, %v662
      %664 = vst [vmem:[#allocation2 + $0x3f8] sm:$0xff] %v663
      %s665 = sadd.s32 %s29, 32
      %s666 = scalar_lea.vmem [#allocation3], %s665
      %v667 = vld [vmem:[%s666] sm:$0xff]
      %v668 = vmul.f32 %v667, 2.0
      %v669 = vsub.f32 %v668, 1.0
      %670 = vst [vmem:[#allocation2 + $0x400] sm:$0xff] 1.0
      %671 = vst [vmem:[#allocation2 + $0x408] sm:$0xff] %v669
      %v672 = vmul.f32 %v669, 1.5
      %v673 = vmul.f32 %v672, %v669
      %v674 = vsub.f32 %v673, 0.5
      %675 = vst [vmem:[#allocation2 + $0x410] sm:$0xff] %v674
      %v676 = vmul.f32 %v669, 1.6666666
      %v677 = vmul.f32 %v676, %v674
      %v678 = vmul.f32 %v669, 0.6666667
      %v679 = vsub.f32 %v677, %v678
      %680 = vst [vmem:[#allocation2 + $0x418] sm:$0xff] %v679
      %v681 = vmul.f32 %v669, 1.75
      %v682 = vmul.f32 %v681, %v679
      %v683 = vmul.f32 %v674, 0.75
      %v684 = vsub.f32 %v682, %v683
      %685 = vst [vmem:[#allocation2 + $0x420] sm:$0xff] %v684
      %v686 = vmul.f32 %v669, 1.8
      %v687 = vmul.f32 %v686, %v684
      %v688 = vmul.f32 %v679, 0.8
      %v689 = vsub.f32 %v687, %v688
      %690 = vst [vmem:[#allocation2 + $0x428] sm:$0xff] %v689
      %v691 = vmul.f32 %v669, 1.8333334
      %v692 = vmul.f32 %v691, %v689
      %v693 = vmul.f32 %v684, 0.8333333
      %v694 = vsub.f32 %v692, %v693
      %695 = vst [vmem:[#allocation2 + $0x430] sm:$0xff] %v694
      %v696 = vmul.f32 %v669, 1.8571428
      %v697 = vmul.f32 %v696, %v694
      %v698 = vmul.f32 %v689, 0.85714287
      %v699 = vsub.f32 %v697, %v698
      %700 = vst [vmem:[#allocation2 + $0x438] sm:$0xff] %v699
      %v701 = vmul.f32 %v669, 1.875
      %v702 = vmul.f32 %v701, %v699
      %v703 = vmul.f32 %v694, 0.875
      %v704 = vsub.f32 %v702, %v703
      %705 = vst [vmem:[#allocation2 + $0x440] sm:$0xff] %v704
      %v706 = vmul.f32 %v669, 1.8888888
      %v707 = vmul.f32 %v706, %v704
      %v708 = vmul.f32 %v699, 0.8888889
      %v709 = vsub.f32 %v707, %v708
      %710 = vst [vmem:[#allocation2 + $0x448] sm:$0xff] %v709
      %v711 = vmul.f32 %v669, 1.9
      %v712 = vmul.f32 %v711, %v709
      %v713 = vmul.f32 %v704, 0.9
      %v714 = vsub.f32 %v712, %v713
      %715 = vst [vmem:[#allocation2 + $0x450] sm:$0xff] %v714
      %v716 = vmul.f32 %v669, 1.9090909
      %v717 = vmul.f32 %v716, %v714
      %v718 = vmul.f32 %v709, 0.90909094
      %v719 = vsub.f32 %v717, %v718
      %720 = vst [vmem:[#allocation2 + $0x458] sm:$0xff] %v719
      %v721 = vmul.f32 %v669, 1.9166666
      %v722 = vmul.f32 %v721, %v719
      %v723 = vmul.f32 %v714, 0.9166667
      %v724 = vsub.f32 %v722, %v723
      %725 = vst [vmem:[#allocation2 + $0x460] sm:$0xff] %v724
      %v726 = vmul.f32 %v669, 1.9230769
      %v727 = vmul.f32 %v726, %v724
      %v728 = vmul.f32 %v719, 0.9230769
      %v729 = vsub.f32 %v727, %v728
      %730 = vst [vmem:[#allocation2 + $0x468] sm:$0xff] %v729
      %v731 = vmul.f32 %v669, 1.9285715
      %v732 = vmul.f32 %v731, %v729
      %v733 = vmul.f32 %v724, 0.9285714
      %v734 = vsub.f32 %v732, %v733
      %735 = vst [vmem:[#allocation2 + $0x470] sm:$0xff] %v734
      %v736 = vmul.f32 %v669, 1.9333333
      %v737 = vmul.f32 %v736, %v734
      %v738 = vmul.f32 %v729, 0.93333334
      %v739 = vsub.f32 %v737, %v738
      %740 = vst [vmem:[#allocation2 + $0x478] sm:$0xff] %v739
      %v741 = vmul.f32 %v669, 1.9375
      %v742 = vmul.f32 %v741, %v739
      %v743 = vmul.f32 %v734, 0.9375
      %v744 = vsub.f32 %v742, %v743
      %745 = vst [vmem:[#allocation2 + $0x480] sm:$0xff] %v744
      %v746 = vmul.f32 %v669, 1.9411764
      %v747 = vmul.f32 %v746, %v744
      %v748 = vmul.f32 %v739, 0.9411765
      %v749 = vsub.f32 %v747, %v748
      %750 = vst [vmem:[#allocation2 + $0x488] sm:$0xff] %v749
      %v751 = vmul.f32 %v669, 1.9444444
      %v752 = vmul.f32 %v751, %v749
      %v753 = vmul.f32 %v744, 0.9444444
      %v754 = vsub.f32 %v752, %v753
      %755 = vst [vmem:[#allocation2 + $0x490] sm:$0xff] %v754
      %v756 = vmul.f32 %v669, 1.9473684
      %v757 = vmul.f32 %v756, %v754
      %v758 = vmul.f32 %v749, 0.94736844
      %v759 = vsub.f32 %v757, %v758
      %760 = vst [vmem:[#allocation2 + $0x498] sm:$0xff] %v759
      %v761 = vmul.f32 %v669, 1.95
      %v762 = vmul.f32 %v761, %v759
      %v763 = vmul.f32 %v754, 0.95
      %v764 = vsub.f32 %v762, %v763
      %765 = vst [vmem:[#allocation2 + $0x4a0] sm:$0xff] %v764
      %v766 = vmul.f32 %v669, 1.9523809
      %v767 = vmul.f32 %v766, %v764
      %v768 = vmul.f32 %v759, 0.95238096
      %v769 = vsub.f32 %v767, %v768
      %770 = vst [vmem:[#allocation2 + $0x4a8] sm:$0xff] %v769
      %v771 = vmul.f32 %v669, 1.9545455
      %v772 = vmul.f32 %v771, %v769
      %v773 = vmul.f32 %v764, 0.95454544
      %v774 = vsub.f32 %v772, %v773
      %775 = vst [vmem:[#allocation2 + $0x4b0] sm:$0xff] %v774
      %v776 = vmul.f32 %v669, 1.9565217
      %v777 = vmul.f32 %v776, %v774
      %v778 = vmul.f32 %v769, 0.95652175
      %v779 = vsub.f32 %v777, %v778
      %780 = vst [vmem:[#allocation2 + $0x4b8] sm:$0xff] %v779
      %v781 = vmul.f32 %v669, 1.9583334
      %v782 = vmul.f32 %v781, %v779
      %v783 = vmul.f32 %v774, 0.9583333
      %v784 = vsub.f32 %v782, %v783
      %785 = vst [vmem:[#allocation2 + $0x4c0] sm:$0xff] %v784
      %v786 = vmul.f32 %v669, 1.96
      %v787 = vmul.f32 %v786, %v784
      %v788 = vmul.f32 %v779, 0.96
      %v789 = vsub.f32 %v787, %v788
      %790 = vst [vmem:[#allocation2 + $0x4c8] sm:$0xff] %v789
      %v791 = vmul.f32 %v669, 1.9615384
      %v792 = vmul.f32 %v791, %v789
      %v793 = vmul.f32 %v784, 0.96153843
      %v794 = vsub.f32 %v792, %v793
      %795 = vst [vmem:[#allocation2 + $0x4d0] sm:$0xff] %v794
      %v796 = vmul.f32 %v669, 1.962963
      %v797 = vmul.f32 %v796, %v794
      %v798 = vmul.f32 %v789, 0.962963
      %v799 = vsub.f32 %v797, %v798
      %800 = vst [vmem:[#allocation2 + $0x4d8] sm:$0xff] %v799
      %v801 = vmul.f32 %v669, 1.9642857
      %v802 = vmul.f32 %v801, %v799
      %v803 = vmul.f32 %v794, 0.96428573
      %v804 = vsub.f32 %v802, %v803
      %805 = vst [vmem:[#allocation2 + $0x4e0] sm:$0xff] %v804
      %v806 = vmul.f32 %v669, 1.9655173
      %v807 = vmul.f32 %v806, %v804
      %v808 = vmul.f32 %v799, 0.9655172
      %v809 = vsub.f32 %v807, %v808
      %810 = vst [vmem:[#allocation2 + $0x4e8] sm:$0xff] %v809
      %v811 = vmul.f32 %v669, 1.9666667
      %v812 = vmul.f32 %v811, %v809
      %v813 = vmul.f32 %v804, 0.96666664
      %v814 = vsub.f32 %v812, %v813
      %815 = vst [vmem:[#allocation2 + $0x4f0] sm:$0xff] %v814
      %v816 = vmul.f32 %v669, 1.967742
      %v817 = vmul.f32 %v816, %v814
      %v818 = vmul.f32 %v809, 0.9677419
      %v819 = vsub.f32 %v817, %v818
      %820 = vst [vmem:[#allocation2 + $0x4f8] sm:$0xff] %v819
      %v821 = vmul.f32 %v669, 1.96875
      %v822 = vmul.f32 %v821, %v819
      %v823 = vmul.f32 %v814, 0.96875
      %v824 = vsub.f32 %v822, %v823
      %825 = vst [vmem:[#allocation2 + $0x500] sm:$0xff] %v824
      %v826 = vmul.f32 %v669, 1.969697
      %v827 = vmul.f32 %v826, %v824
      %v828 = vmul.f32 %v819, 0.969697
      %v829 = vsub.f32 %v827, %v828
      %830 = vst [vmem:[#allocation2 + $0x508] sm:$0xff] %v829
      %v831 = vmul.f32 %v669, 1.9705882
      %v832 = vmul.f32 %v831, %v829
      %v833 = vmul.f32 %v824, 0.9705882
      %v834 = vsub.f32 %v832, %v833
      %835 = vst [vmem:[#allocation2 + $0x510] sm:$0xff] %v834
      %v836 = vmul.f32 %v669, 1.9714285
      %v837 = vmul.f32 %v836, %v834
      %v838 = vmul.f32 %v829, 0.9714286
      %v839 = vsub.f32 %v837, %v838
      %840 = vst [vmem:[#allocation2 + $0x518] sm:$0xff] %v839
      %v841 = vmul.f32 %v669, 1.9722222
      %v842 = vmul.f32 %v841, %v839
      %v843 = vmul.f32 %v834, 0.9722222
      %v844 = vsub.f32 %v842, %v843
      %845 = vst [vmem:[#allocation2 + $0x520] sm:$0xff] %v844
      %v846 = vmul.f32 %v669, 1.972973
      %v847 = vmul.f32 %v846, %v844
      %v848 = vmul.f32 %v839, 0.972973
      %v849 = vsub.f32 %v847, %v848
      %850 = vst [vmem:[#allocation2 + $0x528] sm:$0xff] %v849
      %v851 = vmul.f32 %v669, 1.9736842
      %v852 = vmul.f32 %v851, %v849
      %v853 = vmul.f32 %v844, 0.9736842
      %v854 = vsub.f32 %v852, %v853
      %855 = vst [vmem:[#allocation2 + $0x530] sm:$0xff] %v854
      %v856 = vmul.f32 %v669, 1.9743589
      %v857 = vmul.f32 %v856, %v854
      %v858 = vmul.f32 %v849, 0.974359
      %v859 = vsub.f32 %v857, %v858
      %860 = vst [vmem:[#allocation2 + $0x538] sm:$0xff] %v859
      %v861 = vmul.f32 %v669, 1.975
      %v862 = vmul.f32 %v861, %v859
      %v863 = vmul.f32 %v854, 0.975
      %v864 = vsub.f32 %v862, %v863
      %865 = vst [vmem:[#allocation2 + $0x540] sm:$0xff] %v864
      %v866 = vmul.f32 %v669, 1.9756098
      %v867 = vmul.f32 %v866, %v864
      %v868 = vmul.f32 %v859, 0.9756098
      %v869 = vsub.f32 %v867, %v868
      %870 = vst [vmem:[#allocation2 + $0x548] sm:$0xff] %v869
      %v871 = vmul.f32 %v669, 1.9761904
      %v872 = vmul.f32 %v871, %v869
      %v873 = vmul.f32 %v864, 0.97619045
      %v874 = vsub.f32 %v872, %v873
      %875 = vst [vmem:[#allocation2 + $0x550] sm:$0xff] %v874
      %v876 = vmul.f32 %v669, 1.9767442
      %v877 = vmul.f32 %v876, %v874
      %v878 = vmul.f32 %v869, 0.9767442
      %v879 = vsub.f32 %v877, %v878
      %880 = vst [vmem:[#allocation2 + $0x558] sm:$0xff] %v879
      %v881 = vmul.f32 %v669, 1.9772727
      %v882 = vmul.f32 %v881, %v879
      %v883 = vmul.f32 %v874, 0.97727275
      %v884 = vsub.f32 %v882, %v883
      %885 = vst [vmem:[#allocation2 + $0x560] sm:$0xff] %v884
      %v886 = vmul.f32 %v669, 1.9777777
      %v887 = vmul.f32 %v886, %v884
      %v888 = vmul.f32 %v879, 0.9777778
      %v889 = vsub.f32 %v887, %v888
      %890 = vst [vmem:[#allocation2 + $0x568] sm:$0xff] %v889
      %v891 = vmul.f32 %v669, 1.9782609
      %v892 = vmul.f32 %v891, %v889
      %v893 = vmul.f32 %v884, 0.9782609
      %v894 = vsub.f32 %v892, %v893
      %895 = vst [vmem:[#allocation2 + $0x570] sm:$0xff] %v894
      %v896 = vmul.f32 %v669, 1.9787234
      %v897 = vmul.f32 %v896, %v894
      %v898 = vmul.f32 %v889, 0.9787234
      %v899 = vsub.f32 %v897, %v898
      %900 = vst [vmem:[#allocation2 + $0x578] sm:$0xff] %v899
      %v901 = vmul.f32 %v669, 1.9791666
      %v902 = vmul.f32 %v901, %v899
      %v903 = vmul.f32 %v894, 0.9791667
      %v904 = vsub.f32 %v902, %v903
      %905 = vst [vmem:[#allocation2 + $0x580] sm:$0xff] %v904
      %v906 = vmul.f32 %v669, 1.9795918
      %v907 = vmul.f32 %v906, %v904
      %v908 = vmul.f32 %v899, 0.97959185
      %v909 = vsub.f32 %v907, %v908
      %910 = vst [vmem:[#allocation2 + $0x588] sm:$0xff] %v909
      %v911 = vmul.f32 %v669, 1.98
      %v912 = vmul.f32 %v911, %v909
      %v913 = vmul.f32 %v904, 0.98
      %v914 = vsub.f32 %v912, %v913
      %915 = vst [vmem:[#allocation2 + $0x590] sm:$0xff] %v914
      %v916 = vmul.f32 %v669, 1.9803921
      %v917 = vmul.f32 %v916, %v914
      %v918 = vmul.f32 %v909, 0.98039216
      %v919 = vsub.f32 %v917, %v918
      %920 = vst [vmem:[#allocation2 + $0x598] sm:$0xff] %v919
      %v921 = vmul.f32 %v669, 1.9807693
      %v922 = vmul.f32 %v921, %v919
      %v923 = vmul.f32 %v914, 0.9807692
      %v924 = vsub.f32 %v922, %v923
      %925 = vst [vmem:[#allocation2 + $0x5a0] sm:$0xff] %v924
      %v926 = vmul.f32 %v669, 1.981132
      %v927 = vmul.f32 %v926, %v924
      %v928 = vmul.f32 %v919, 0.9811321
      %v929 = vsub.f32 %v927, %v928
      %930 = vst [vmem:[#allocation2 + $0x5a8] sm:$0xff] %v929
      %v931 = vmul.f32 %v669, 1.9814814
      %v932 = vmul.f32 %v931, %v929
      %v933 = vmul.f32 %v924, 0.9814815
      %v934 = vsub.f32 %v932, %v933
      %935 = vst [vmem:[#allocation2 + $0x5b0] sm:$0xff] %v934
      %v936 = vmul.f32 %v669, 1.9818182
      %v937 = vmul.f32 %v936, %v934
      %v938 = vmul.f32 %v929, 0.9818182
      %v939 = vsub.f32 %v937, %v938
      %940 = vst [vmem:[#allocation2 + $0x5b8] sm:$0xff] %v939
      %v941 = vmul.f32 %v669, 1.9821428
      %v942 = vmul.f32 %v941, %v939
      %v943 = vmul.f32 %v934, 0.98214287
      %v944 = vsub.f32 %v942, %v943
      %945 = vst [vmem:[#allocation2 + $0x5c0] sm:$0xff] %v944
      %v946 = vmul.f32 %v669, 1.9824561
      %v947 = vmul.f32 %v946, %v944
      %v948 = vmul.f32 %v939, 0.98245615
      %v949 = vsub.f32 %v947, %v948
      %950 = vst [vmem:[#allocation2 + $0x5c8] sm:$0xff] %v949
      %v951 = vmul.f32 %v669, 1.9827586
      %v952 = vmul.f32 %v951, %v949
      %v953 = vmul.f32 %v944, 0.98275864
      %v954 = vsub.f32 %v952, %v953
      %955 = vst [vmem:[#allocation2 + $0x5d0] sm:$0xff] %v954
      %v956 = vmul.f32 %v669, 1.9830508
      %v957 = vmul.f32 %v956, %v954
      %v958 = vmul.f32 %v949, 0.9830508
      %v959 = vsub.f32 %v957, %v958
      %960 = vst [vmem:[#allocation2 + $0x5d8] sm:$0xff] %v959
      %v961 = vmul.f32 %v669, 1.9833333
      %v962 = vmul.f32 %v961, %v959
      %v963 = vmul.f32 %v954, 0.98333335
      %v964 = vsub.f32 %v962, %v963
      %965 = vst [vmem:[#allocation2 + $0x5e0] sm:$0xff] %v964
      %v966 = vmul.f32 %v669, 1.9836066
      %v967 = vmul.f32 %v966, %v964
      %v968 = vmul.f32 %v959, 0.9836066
      %v969 = vsub.f32 %v967, %v968
      %970 = vst [vmem:[#allocation2 + $0x5e8] sm:$0xff] %v969
      %v971 = vmul.f32 %v669, 1.983871
      %v972 = vmul.f32 %v971, %v969
      %v973 = vmul.f32 %v964, 0.983871
      %v974 = vsub.f32 %v972, %v973
      %975 = vst [vmem:[#allocation2 + $0x5f0] sm:$0xff] %v974
      %v976 = vmul.f32 %v669, 1.9841269
      %v977 = vmul.f32 %v976, %v974
      %v978 = vmul.f32 %v969, 0.984127
      %v979 = vsub.f32 %v977, %v978
      %980 = vst [vmem:[#allocation2 + $0x5f8] sm:$0xff] %v979
      %v981 = vmul.f32 %v669, 1.984375
      %v982 = vmul.f32 %v981, %v979
      %v983 = vmul.f32 %v974, 0.984375
      %v984 = vsub.f32 %v982, %v983
      %985 = vst [vmem:[#allocation2 + $0x600] sm:$0xff] %v984
      %v986 = vmul.f32 %v669, 1.9846153
      %v987 = vmul.f32 %v986, %v984
      %v988 = vmul.f32 %v979, 0.9846154
      %v989 = vsub.f32 %v987, %v988
      %990 = vst [vmem:[#allocation2 + $0x608] sm:$0xff] %v989
      %v991 = vmul.f32 %v669, 1.9848485
      %v992 = vmul.f32 %v991, %v989
      %v993 = vmul.f32 %v984, 0.9848485
      %v994 = vsub.f32 %v992, %v993
      %995 = vst [vmem:[#allocation2 + $0x610] sm:$0xff] %v994
      %v996 = vmul.f32 %v669, 1.9850746
      %v997 = vmul.f32 %v996, %v994
      %v998 = vmul.f32 %v989, 0.98507464
      %v999 = vsub.f32 %v997, %v998
      %1000 = vst [vmem:[#allocation2 + $0x618] sm:$0xff] %v999
      %v1001 = vmul.f32 %v669, 1.9852941
      %v1002 = vmul.f32 %v1001, %v999
      %v1003 = vmul.f32 %v994, 0.9852941
      %v1004 = vsub.f32 %v1002, %v1003
      %1005 = vst [vmem:[#allocation2 + $0x620] sm:$0xff] %v1004
      %v1006 = vmul.f32 %v669, 1.9855072
      %v1007 = vmul.f32 %v1006, %v1004
      %v1008 = vmul.f32 %v999, 0.98550725
      %v1009 = vsub.f32 %v1007, %v1008
      %1010 = vst [vmem:[#allocation2 + $0x628] sm:$0xff] %v1009
      %v1011 = vmul.f32 %v669, 1.9857143
      %v1012 = vmul.f32 %v1011, %v1009
      %v1013 = vmul.f32 %v1004, 0.98571426
      %v1014 = vsub.f32 %v1012, %v1013
      %1015 = vst [vmem:[#allocation2 + $0x630] sm:$0xff] %v1014
      %v1016 = vmul.f32 %v669, 1.9859155
      %v1017 = vmul.f32 %v1016, %v1014
      %v1018 = vmul.f32 %v1009, 0.9859155
      %v1019 = vsub.f32 %v1017, %v1018
      %1020 = vst [vmem:[#allocation2 + $0x638] sm:$0xff] %v1019
      %v1021 = vmul.f32 %v669, 1.9861112
      %v1022 = vmul.f32 %v1021, %v1019
      %v1023 = vmul.f32 %v1014, 0.9861111
      %v1024 = vsub.f32 %v1022, %v1023
      %1025 = vst [vmem:[#allocation2 + $0x640] sm:$0xff] %v1024
      %v1026 = vmul.f32 %v669, 1.9863014
      %v1027 = vmul.f32 %v1026, %v1024
      %v1028 = vmul.f32 %v1019, 0.98630136
      %v1029 = vsub.f32 %v1027, %v1028
      %1030 = vst [vmem:[#allocation2 + $0x648] sm:$0xff] %v1029
      %v1031 = vmul.f32 %v669, 1.9864864
      %v1032 = vmul.f32 %v1031, %v1029
      %v1033 = vmul.f32 %v1024, 0.9864865
      %v1034 = vsub.f32 %v1032, %v1033
      %1035 = vst [vmem:[#allocation2 + $0x650] sm:$0xff] %v1034
      %v1036 = vmul.f32 %v669, 1.9866667
      %v1037 = vmul.f32 %v1036, %v1034
      %v1038 = vmul.f32 %v1029, 0.9866667
      %v1039 = vsub.f32 %v1037, %v1038
      %1040 = vst [vmem:[#allocation2 + $0x658] sm:$0xff] %v1039
      %v1041 = vmul.f32 %v669, 1.9868422
      %v1042 = vmul.f32 %v1041, %v1039
      %v1043 = vmul.f32 %v1034, 0.9868421
      %v1044 = vsub.f32 %v1042, %v1043
      %1045 = vst [vmem:[#allocation2 + $0x660] sm:$0xff] %v1044
      %v1046 = vmul.f32 %v669, 1.987013
      %v1047 = vmul.f32 %v1046, %v1044
      %v1048 = vmul.f32 %v1039, 0.987013
      %v1049 = vsub.f32 %v1047, %v1048
      %1050 = vst [vmem:[#allocation2 + $0x668] sm:$0xff] %v1049
      %v1051 = vmul.f32 %v669, 1.9871795
      %v1052 = vmul.f32 %v1051, %v1049
      %v1053 = vmul.f32 %v1044, 0.98717946
      %v1054 = vsub.f32 %v1052, %v1053
      %1055 = vst [vmem:[#allocation2 + $0x670] sm:$0xff] %v1054
      %v1056 = vmul.f32 %v669, 1.9873418
      %v1057 = vmul.f32 %v1056, %v1054
      %v1058 = vmul.f32 %v1049, 0.98734176
      %v1059 = vsub.f32 %v1057, %v1058
      %1060 = vst [vmem:[#allocation2 + $0x678] sm:$0xff] %v1059
      %v1061 = vmul.f32 %v669, 1.9875
      %v1062 = vmul.f32 %v1061, %v1059
      %v1063 = vmul.f32 %v1054, 0.9875
      %v1064 = vsub.f32 %v1062, %v1063
      %1065 = vst [vmem:[#allocation2 + $0x680] sm:$0xff] %v1064
      %v1066 = vmul.f32 %v669, 1.9876543
      %v1067 = vmul.f32 %v1066, %v1064
      %v1068 = vmul.f32 %v1059, 0.9876543
      %v1069 = vsub.f32 %v1067, %v1068
      %1070 = vst [vmem:[#allocation2 + $0x688] sm:$0xff] %v1069
      %v1071 = vmul.f32 %v669, 1.9878049
      %v1072 = vmul.f32 %v1071, %v1069
      %v1073 = vmul.f32 %v1064, 0.9878049
      %v1074 = vsub.f32 %v1072, %v1073
      %1075 = vst [vmem:[#allocation2 + $0x690] sm:$0xff] %v1074
      %v1076 = vmul.f32 %v669, 1.9879518
      %v1077 = vmul.f32 %v1076, %v1074
      %v1078 = vmul.f32 %v1069, 0.9879518
      %v1079 = vsub.f32 %v1077, %v1078
      %1080 = vst [vmem:[#allocation2 + $0x698] sm:$0xff] %v1079
      %v1081 = vmul.f32 %v669, 1.9880953
      %v1082 = vmul.f32 %v1081, %v1079
      %v1083 = vmul.f32 %v1074, 0.9880952
      %v1084 = vsub.f32 %v1082, %v1083
      %1085 = vst [vmem:[#allocation2 + $0x6a0] sm:$0xff] %v1084
      %v1086 = vmul.f32 %v669, 1.9882352
      %v1087 = vmul.f32 %v1086, %v1084
      %v1088 = vmul.f32 %v1079, 0.9882353
      %v1089 = vsub.f32 %v1087, %v1088
      %1090 = vst [vmem:[#allocation2 + $0x6a8] sm:$0xff] %v1089
      %v1091 = vmul.f32 %v669, 1.9883721
      %v1092 = vmul.f32 %v1091, %v1089
      %v1093 = vmul.f32 %v1084, 0.9883721
      %v1094 = vsub.f32 %v1092, %v1093
      %1095 = vst [vmem:[#allocation2 + $0x6b0] sm:$0xff] %v1094
      %v1096 = vmul.f32 %v669, 1.9885057
      %v1097 = vmul.f32 %v1096, %v1094
      %v1098 = vmul.f32 %v1089, 0.9885057
      %v1099 = vsub.f32 %v1097, %v1098
      %1100 = vst [vmem:[#allocation2 + $0x6b8] sm:$0xff] %v1099
      %v1101 = vmul.f32 %v669, 1.9886364
      %v1102 = vmul.f32 %v1101, %v1099
      %v1103 = vmul.f32 %v1094, 0.9886364
      %v1104 = vsub.f32 %v1102, %v1103
      %1105 = vst [vmem:[#allocation2 + $0x6c0] sm:$0xff] %v1104
      %v1106 = vmul.f32 %v669, 1.988764
      %v1107 = vmul.f32 %v1106, %v1104
      %v1108 = vmul.f32 %v1099, 0.98876405
      %v1109 = vsub.f32 %v1107, %v1108
      %1110 = vst [vmem:[#allocation2 + $0x6c8] sm:$0xff] %v1109
      %v1111 = vmul.f32 %v669, 1.9888889
      %v1112 = vmul.f32 %v1111, %v1109
      %v1113 = vmul.f32 %v1104, 0.98888886
      %v1114 = vsub.f32 %v1112, %v1113
      %1115 = vst [vmem:[#allocation2 + $0x6d0] sm:$0xff] %v1114
      %v1116 = vmul.f32 %v669, 1.9890109
      %v1117 = vmul.f32 %v1116, %v1114
      %v1118 = vmul.f32 %v1109, 0.989011
      %v1119 = vsub.f32 %v1117, %v1118
      %1120 = vst [vmem:[#allocation2 + $0x6d8] sm:$0xff] %v1119
      %v1121 = vmul.f32 %v669, 1.9891304
      %v1122 = vmul.f32 %v1121, %v1119
      %v1123 = vmul.f32 %v1114, 0.98913044
      %v1124 = vsub.f32 %v1122, %v1123
      %1125 = vst [vmem:[#allocation2 + $0x6e0] sm:$0xff] %v1124
      %v1126 = vmul.f32 %v669, 1.9892473
      %v1127 = vmul.f32 %v1126, %v1124
      %v1128 = vmul.f32 %v1119, 0.9892473
      %v1129 = vsub.f32 %v1127, %v1128
      %1130 = vst [vmem:[#allocation2 + $0x6e8] sm:$0xff] %v1129
      %v1131 = vmul.f32 %v669, 1.9893616
      %v1132 = vmul.f32 %v1131, %v1129
      %v1133 = vmul.f32 %v1124, 0.9893617
      %v1134 = vsub.f32 %v1132, %v1133
      %1135 = vst [vmem:[#allocation2 + $0x6f0] sm:$0xff] %v1134
      %v1136 = vmul.f32 %v669, 1.9894737
      %v1137 = vmul.f32 %v1136, %v1134
      %v1138 = vmul.f32 %v1129, 0.9894737
      %v1139 = vsub.f32 %v1137, %v1138
      %1140 = vst [vmem:[#allocation2 + $0x6f8] sm:$0xff] %v1139
      %v1141 = vmul.f32 %v669, 1.9895834
      %v1142 = vmul.f32 %v1141, %v1139
      %v1143 = vmul.f32 %v1134, 0.9895833
      %v1144 = vsub.f32 %v1142, %v1143
      %1145 = vst [vmem:[#allocation2 + $0x700] sm:$0xff] %v1144
      %v1146 = vmul.f32 %v669, 1.9896908
      %v1147 = vmul.f32 %v1146, %v1144
      %v1148 = vmul.f32 %v1139, 0.9896907
      %v1149 = vsub.f32 %v1147, %v1148
      %1150 = vst [vmem:[#allocation2 + $0x708] sm:$0xff] %v1149
      %v1151 = vmul.f32 %v669, 1.9897959
      %v1152 = vmul.f32 %v1151, %v1149
      %v1153 = vmul.f32 %v1144, 0.9897959
      %v1154 = vsub.f32 %v1152, %v1153
      %1155 = vst [vmem:[#allocation2 + $0x710] sm:$0xff] %v1154
      %v1156 = vmul.f32 %v669, 1.989899
      %v1157 = vmul.f32 %v1156, %v1154
      %v1158 = vmul.f32 %v1149, 0.989899
      %v1159 = vsub.f32 %v1157, %v1158
      %1160 = vst [vmem:[#allocation2 + $0x718] sm:$0xff] %v1159
      %v1161 = vmul.f32 %v669, 1.99
      %v1162 = vmul.f32 %v1161, %v1159
      %v1163 = vmul.f32 %v1154, 0.99
      %v1164 = vsub.f32 %v1162, %v1163
      %1165 = vst [vmem:[#allocation2 + $0x720] sm:$0xff] %v1164
      %v1166 = vmul.f32 %v669, 1.990099
      %v1167 = vmul.f32 %v1166, %v1164
      %v1168 = vmul.f32 %v1159, 0.990099
      %v1169 = vsub.f32 %v1167, %v1168
      %1170 = vst [vmem:[#allocation2 + $0x728] sm:$0xff] %v1169
      %v1171 = vmul.f32 %v669, 1.9901961
      %v1172 = vmul.f32 %v1171, %v1169
      %v1173 = vmul.f32 %v1164, 0.99019605
      %v1174 = vsub.f32 %v1172, %v1173
      %1175 = vst [vmem:[#allocation2 + $0x730] sm:$0xff] %v1174
      %v1176 = vmul.f32 %v669, 1.9902912
      %v1177 = vmul.f32 %v1176, %v1174
      %v1178 = vmul.f32 %v1169, 0.99029124
      %v1179 = vsub.f32 %v1177, %v1178
      %1180 = vst [vmem:[#allocation2 + $0x738] sm:$0xff] %v1179
      %v1181 = vmul.f32 %v669, 1.9903846
      %v1182 = vmul.f32 %v1181, %v1179
      %v1183 = vmul.f32 %v1174, 0.99038464
      %v1184 = vsub.f32 %v1182, %v1183
      %1185 = vst [vmem:[#allocation2 + $0x740] sm:$0xff] %v1184
      %v1186 = vmul.f32 %v669, 1.9904761
      %v1187 = vmul.f32 %v1186, %v1184
      %v1188 = vmul.f32 %v1179, 0.9904762
      %v1189 = vsub.f32 %v1187, %v1188
      %1190 = vst [vmem:[#allocation2 + $0x748] sm:$0xff] %v1189
      %v1191 = vmul.f32 %v669, 1.990566
      %v1192 = vmul.f32 %v1191, %v1189
      %v1193 = vmul.f32 %v1184, 0.990566
      %v1194 = vsub.f32 %v1192, %v1193
      %1195 = vst [vmem:[#allocation2 + $0x750] sm:$0xff] %v1194
      %v1196 = vmul.f32 %v669, 1.9906542
      %v1197 = vmul.f32 %v1196, %v1194
      %v1198 = vmul.f32 %v1189, 0.99065423
      %v1199 = vsub.f32 %v1197, %v1198
      %1200 = vst [vmem:[#allocation2 + $0x758] sm:$0xff] %v1199
      %v1201 = vmul.f32 %v669, 1.9907408
      %v1202 = vmul.f32 %v1201, %v1199
      %v1203 = vmul.f32 %v1194, 0.9907407
      %v1204 = vsub.f32 %v1202, %v1203
      %1205 = vst [vmem:[#allocation2 + $0x760] sm:$0xff] %v1204
      %v1206 = vmul.f32 %v669, 1.9908257
      %v1207 = vmul.f32 %v1206, %v1204
      %v1208 = vmul.f32 %v1199, 0.9908257
      %v1209 = vsub.f32 %v1207, %v1208
      %1210 = vst [vmem:[#allocation2 + $0x768] sm:$0xff] %v1209
      %v1211 = vmul.f32 %v669, 1.9909091
      %v1212 = vmul.f32 %v1211, %v1209
      %v1213 = vmul.f32 %v1204, 0.9909091
      %v1214 = vsub.f32 %v1212, %v1213
      %1215 = vst [vmem:[#allocation2 + $0x770] sm:$0xff] %v1214
      %v1216 = vmul.f32 %v669, 1.990991
      %v1217 = vmul.f32 %v1216, %v1214
      %v1218 = vmul.f32 %v1209, 0.990991
      %v1219 = vsub.f32 %v1217, %v1218
      %1220 = vst [vmem:[#allocation2 + $0x778] sm:$0xff] %v1219
      %v1221 = vmul.f32 %v669, 1.9910715
      %v1222 = vmul.f32 %v1221, %v1219
      %v1223 = vmul.f32 %v1214, 0.9910714
      %v1224 = vsub.f32 %v1222, %v1223
      %1225 = vst [vmem:[#allocation2 + $0x780] sm:$0xff] %v1224
      %v1226 = vmul.f32 %v669, 1.9911505
      %v1227 = vmul.f32 %v1226, %v1224
      %v1228 = vmul.f32 %v1219, 0.99115044
      %v1229 = vsub.f32 %v1227, %v1228
      %1230 = vst [vmem:[#allocation2 + $0x788] sm:$0xff] %v1229
      %v1231 = vmul.f32 %v669, 1.9912281
      %v1232 = vmul.f32 %v1231, %v1229
      %v1233 = vmul.f32 %v1224, 0.99122804
      %v1234 = vsub.f32 %v1232, %v1233
      %1235 = vst [vmem:[#allocation2 + $0x790] sm:$0xff] %v1234
      %v1236 = vmul.f32 %v669, 1.9913044
      %v1237 = vmul.f32 %v1236, %v1234
      %v1238 = vmul.f32 %v1229, 0.99130434
      %v1239 = vsub.f32 %v1237, %v1238
      %1240 = vst [vmem:[#allocation2 + $0x798] sm:$0xff] %v1239
      %v1241 = vmul.f32 %v669, 1.9913793
      %v1242 = vmul.f32 %v1241, %v1239
      %v1243 = vmul.f32 %v1234, 0.9913793
      %v1244 = vsub.f32 %v1242, %v1243
      %1245 = vst [vmem:[#allocation2 + $0x7a0] sm:$0xff] %v1244
      %v1246 = vmul.f32 %v669, 1.9914529
      %v1247 = vmul.f32 %v1246, %v1244
      %v1248 = vmul.f32 %v1239, 0.991453
      %v1249 = vsub.f32 %v1247, %v1248
      %1250 = vst [vmem:[#allocation2 + $0x7a8] sm:$0xff] %v1249
      %v1251 = vmul.f32 %v669, 1.9915254
      %v1252 = vmul.f32 %v1251, %v1249
      %v1253 = vmul.f32 %v1244, 0.9915254
      %v1254 = vsub.f32 %v1252, %v1253
      %1255 = vst [vmem:[#allocation2 + $0x7b0] sm:$0xff] %v1254
      %v1256 = vmul.f32 %v669, 1.9915966
      %v1257 = vmul.f32 %v1256, %v1254
      %v1258 = vmul.f32 %v1249, 0.99159664
      %v1259 = vsub.f32 %v1257, %v1258
      %1260 = vst [vmem:[#allocation2 + $0x7b8] sm:$0xff] %v1259
      %v1261 = vmul.f32 %v669, 1.9916667
      %v1262 = vmul.f32 %v1261, %v1259
      %v1263 = vmul.f32 %v1254, 0.9916667
      %v1264 = vsub.f32 %v1262, %v1263
      %1265 = vst [vmem:[#allocation2 + $0x7c0] sm:$0xff] %v1264
      %v1266 = vmul.f32 %v669, 1.9917356
      %v1267 = vmul.f32 %v1266, %v1264
      %v1268 = vmul.f32 %v1259, 0.9917355
      %v1269 = vsub.f32 %v1267, %v1268
      %1270 = vst [vmem:[#allocation2 + $0x7c8] sm:$0xff] %v1269
      %v1271 = vmul.f32 %v669, 1.9918033
      %v1272 = vmul.f32 %v1271, %v1269
      %v1273 = vmul.f32 %v1264, 0.9918033
      %v1274 = vsub.f32 %v1272, %v1273
      %1275 = vst [vmem:[#allocation2 + $0x7d0] sm:$0xff] %v1274
      %v1276 = vmul.f32 %v669, 1.9918699
      %v1277 = vmul.f32 %v1276, %v1274
      %v1278 = vmul.f32 %v1269, 0.9918699
      %v1279 = vsub.f32 %v1277, %v1278
      %1280 = vst [vmem:[#allocation2 + $0x7d8] sm:$0xff] %v1279
      %v1281 = vmul.f32 %v669, 1.9919355
      %v1282 = vmul.f32 %v1281, %v1279
      %v1283 = vmul.f32 %v1274, 0.9919355
      %v1284 = vsub.f32 %v1282, %v1283
      %1285 = vst [vmem:[#allocation2 + $0x7e0] sm:$0xff] %v1284
      %v1286 = vmul.f32 %v669, 1.992
      %v1287 = vmul.f32 %v1286, %v1284
      %v1288 = vmul.f32 %v1279, 0.992
      %v1289 = vsub.f32 %v1287, %v1288
      %1290 = vst [vmem:[#allocation2 + $0x7e8] sm:$0xff] %v1289
      %v1291 = vmul.f32 %v669, 1.9920635
      %v1292 = vmul.f32 %v1291, %v1289
      %v1293 = vmul.f32 %v1284, 0.99206346
      %v1294 = vsub.f32 %v1292, %v1293
      %1295 = vst [vmem:[#allocation2 + $0x7f0] sm:$0xff] %v1294
      %v1296 = vmul.f32 %v669, 1.992126
      %v1297 = vmul.f32 %v1296, %v1294
      %v1298 = vmul.f32 %v1289, 0.992126
      %v1299 = vsub.f32 %v1297, %v1298
      %1300 = vst [vmem:[#allocation2 + $0x7f8] sm:$0xff] %v1299
      %v1301 = vld [vmem:[#allocation2] ss:$8 sm:$0xf]
      %v1302 = vld [vmem:[#allocation2] ss:$8 sm:$0xf0]
      %v1303 = vor.u32 %v1301, %v1302
      %s1304 = scalar_lea.vmem [#allocation2], 64
      %v1305 = vld [vmem:[%s1304] ss:$8 sm:$0xf]
      %v1306 = vld [vmem:[%s1304] ss:$8 sm:$0xf0]
      %v1307 = vor.u32 %v1305, %v1306
      %s1308 = scalar_lea.vmem [#allocation2], 128
      %v1309 = vld [vmem:[%s1308] ss:$8 sm:$0xf]
      %v1310 = vld [vmem:[%s1308] ss:$8 sm:$0xf0]
      %v1311 = vor.u32 %v1309, %v1310
      %s1312 = scalar_lea.vmem [#allocation2], 192
      %v1313 = vld [vmem:[%s1312] ss:$8 sm:$0xf]
      %v1314 = vld [vmem:[%s1312] ss:$8 sm:$0xf0]
      %v1315 = vor.u32 %v1313, %v1314
      %s1316 = scalar_lea.vmem [#allocation2], 256
      %v1317 = vld [vmem:[%s1316] ss:$8 sm:$0xf]
      %v1318 = vld [vmem:[%s1316] ss:$8 sm:$0xf0]
      %v1319 = vor.u32 %v1317, %v1318
      %s1320 = scalar_lea.vmem [#allocation2], 320
      %v1321 = vld [vmem:[%s1320] ss:$8 sm:$0xf]
      %v1322 = vld [vmem:[%s1320] ss:$8 sm:$0xf0]
      %v1323 = vor.u32 %v1321, %v1322
      %s1324 = scalar_lea.vmem [#allocation2], 384
      %v1325 = vld [vmem:[%s1324] ss:$8 sm:$0xf]
      %v1326 = vld [vmem:[%s1324] ss:$8 sm:$0xf0]
      %v1327 = vor.u32 %v1325, %v1326
      %s1328 = scalar_lea.vmem [#allocation2], 448
      %v1329 = vld [vmem:[%s1328] ss:$8 sm:$0xf]
      %v1330 = vld [vmem:[%s1328] ss:$8 sm:$0xf0]
      %v1331 = vor.u32 %v1329, %v1330
      %s1332 = scalar_lea.vmem [#allocation2], 512
      %v1333 = vld [vmem:[%s1332] ss:$8 sm:$0xf]
      %v1334 = vld [vmem:[%s1332] ss:$8 sm:$0xf0]
      %v1335 = vor.u32 %v1333, %v1334
      %s1336 = scalar_lea.vmem [#allocation2], 576
      %v1337 = vld [vmem:[%s1336] ss:$8 sm:$0xf]
      %v1338 = vld [vmem:[%s1336] ss:$8 sm:$0xf0]
      %v1339 = vor.u32 %v1337, %v1338
      %s1340 = scalar_lea.vmem [#allocation2], 640
      %v1341 = vld [vmem:[%s1340] ss:$8 sm:$0xf]
      %v1342 = vld [vmem:[%s1340] ss:$8 sm:$0xf0]
      %v1343 = vor.u32 %v1341, %v1342
      %s1344 = scalar_lea.vmem [#allocation2], 704
      %v1345 = vld [vmem:[%s1344] ss:$8 sm:$0xf]
      %v1346 = vld [vmem:[%s1344] ss:$8 sm:$0xf0]
      %v1347 = vor.u32 %v1345, %v1346
      %s1348 = scalar_lea.vmem [#allocation2], 768
      %v1349 = vld [vmem:[%s1348] ss:$8 sm:$0xf]
      %v1350 = vld [vmem:[%s1348] ss:$8 sm:$0xf0]
      %v1351 = vor.u32 %v1349, %v1350
      %s1352 = scalar_lea.vmem [#allocation2], 832
      %v1353 = vld [vmem:[%s1352] ss:$8 sm:$0xf]
      %v1354 = vld [vmem:[%s1352] ss:$8 sm:$0xf0]
      %v1355 = vor.u32 %v1353, %v1354
      %s1356 = scalar_lea.vmem [#allocation2], 896
      %v1357 = vld [vmem:[%s1356] ss:$8 sm:$0xf]
      %v1358 = vld [vmem:[%s1356] ss:$8 sm:$0xf0]
      %v1359 = vor.u32 %v1357, %v1358
      %s1360 = scalar_lea.vmem [#allocation2], 960
      %v1361 = vld [vmem:[%s1360] ss:$8 sm:$0xf]
      %v1362 = vld [vmem:[%s1360] ss:$8 sm:$0xf0]
      %v1363 = vor.u32 %v1361, %v1362
      %s1364 = smul.u32 %s29, 128
      %1365 = vxpose.xlu0.b32.start [1/16] %v1303, 128
      %1366 = vxpose.xlu0.b32.cont [2/16] %v1307, 128
      %1367 = vxpose.xlu0.b32.cont [3/16] %v1311, 128
      %1368 = vxpose.xlu0.b32.cont [4/16] %v1315, 128
      %1369 = vxpose.xlu0.b32.cont [5/16] %v1319, 128
      %1370 = vxpose.xlu0.b32.cont [6/16] %v1323, 128
      %1371 = vxpose.xlu0.b32.cont [7/16] %v1327, 128
      %1372 = vxpose.xlu0.b32.cont [8/16] %v1331, 128
      %1373 = vxpose.xlu0.b32.cont [9/16] %v1335, 128
      %1374 = vxpose.xlu0.b32.cont [10/16] %v1339, 128
      %1375 = vxpose.xlu0.b32.cont [11/16] %v1343, 128
      %1376 = vxpose.xlu0.b32.cont [12/16] %v1347, 128
      %1377 = vxpose.xlu0.b32.cont [13/16] %v1351, 128
      %1378 = vxpose.xlu0.b32.cont [14/16] %v1355, 128
      %1379 = vxpose.xlu0.b32.cont [15/16] %v1359, 128
      %1380 = vxpose.xlu0.b32.end [16/16] %v1363, 128
      %v1381 = vpop.trf.xlu0
      %v1382 = vpop.trf.xlu0
      %v1383 = vpop.trf.xlu0
      %v1384 = vpop.trf.xlu0
      %v1385 = vpop.trf.xlu0
      %v1386 = vpop.trf.xlu0
      %v1387 = vpop.trf.xlu0
      %v1388 = vpop.trf.xlu0
      %v1389 = vpop.trf.xlu0
      %v1390 = vpop.trf.xlu0
      %v1391 = vpop.trf.xlu0
      %v1392 = vpop.trf.xlu0
      %v1393 = vpop.trf.xlu0
      %v1394 = vpop.trf.xlu0
      %v1395 = vpop.trf.xlu0
      %v1396 = vpop.trf.xlu0
      %s1397 = sshra.s32 %s1364, 3
      %s1398 = sand.u32 %s1364, 7
      %s1399 = smul.u32 %s1397, 2
      %s1400 = smul.addr %s1399, 8
      %s1401 = scalar_lea.vmem [#allocation6], %s1400
      %1402 = vst [vmem:[%s1401] sm:$0xff] %v1381
      %1403 = vst [vmem:[%s1401 + $0x10] sm:$0xff] %v1382
      %1404 = vst [vmem:[%s1401 + $0x20] sm:$0xff] %v1383
      %1405 = vst [vmem:[%s1401 + $0x30] sm:$0xff] %v1384
      %1406 = vst [vmem:[%s1401 + $0x40] sm:$0xff] %v1385
      %1407 = vst [vmem:[%s1401 + $0x50] sm:$0xff] %v1386
      %1408 = vst [vmem:[%s1401 + $0x60] sm:$0xff] %v1387
      %1409 = vst [vmem:[%s1401 + $0x70] sm:$0xff] %v1388
      %1410 = vst [vmem:[%s1401 + $0x80] sm:$0xff] %v1389
      %1411 = vst [vmem:[%s1401 + $0x90] sm:$0xff] %v1390
      %1412 = vst [vmem:[%s1401 + $0xa0] sm:$0xff] %v1391
      %1413 = vst [vmem:[%s1401 + $0xb0] sm:$0xff] %v1392
      %1414 = vst [vmem:[%s1401 + $0xc0] sm:$0xff] %v1393
      %1415 = vst [vmem:[%s1401 + $0xd0] sm:$0xff] %v1394
      %1416 = vst [vmem:[%s1401 + $0xe0] sm:$0xff] %v1395
      %1417 = vst [vmem:[%s1401 + $0xf0] sm:$0xff] %v1396
      %s1418 = scalar_lea.vmem [#allocation2], 1
      %v1419 = vld [vmem:[%s1418] ss:$8 sm:$0xf]
      %v1420 = vld [vmem:[%s1418] ss:$8 sm:$0xf0]
      %v1421 = vor.u32 %v1419, %v1420
      %s1422 = scalar_lea.vmem [#allocation2], 65
      %v1423 = vld [vmem:[%s1422] ss:$8 sm:$0xf]
      %v1424 = vld [vmem:[%s1422] ss:$8 sm:$0xf0]
      %v1425 = vor.u32 %v1423, %v1424
      %s1426 = scalar_lea.vmem [#allocation2], 129
      %v1427 = vld [vmem:[%s1426] ss:$8 sm:$0xf]
      %v1428 = vld [vmem:[%s1426] ss:$8 sm:$0xf0]
      %v1429 = vor.u32 %v1427, %v1428
      %s1430 = scalar_lea.vmem [#allocation2], 193
      %v1431 = vld [vmem:[%s1430] ss:$8 sm:$0xf]
      %v1432 = vld [vmem:[%s1430] ss:$8 sm:$0xf0]
      %v1433 = vor.u32 %v1431, %v1432
      %s1434 = scalar_lea.vmem [#allocation2], 257
      %v1435 = vld [vmem:[%s1434] ss:$8 sm:$0xf]
      %v1436 = vld [vmem:[%s1434] ss:$8 sm:$0xf0]
      %v1437 = vor.u32 %v1435, %v1436
      %s1438 = scalar_lea.vmem [#allocation2], 321
      %v1439 = vld [vmem:[%s1438] ss:$8 sm:$0xf]
      %v1440 = vld [vmem:[%s1438] ss:$8 sm:$0xf0]
      %v1441 = vor.u32 %v1439, %v1440
      %s1442 = scalar_lea.vmem [#allocation2], 385
      %v1443 = vld [vmem:[%s1442] ss:$8 sm:$0xf]
      %v1444 = vld [vmem:[%s1442] ss:$8 sm:$0xf0]
      %v1445 = vor.u32 %v1443, %v1444
      %s1446 = scalar_lea.vmem [#allocation2], 449
      %v1447 = vld [vmem:[%s1446] ss:$8 sm:$0xf]
      %v1448 = vld [vmem:[%s1446] ss:$8 sm:$0xf0]
      %v1449 = vor.u32 %v1447, %v1448
      %s1450 = scalar_lea.vmem [#allocation2], 513
      %v1451 = vld [vmem:[%s1450] ss:$8 sm:$0xf]
      %v1452 = vld [vmem:[%s1450] ss:$8 sm:$0xf0]
      %v1453 = vor.u32 %v1451, %v1452
      %s1454 = scalar_lea.vmem [#allocation2], 577
      %v1455 = vld [vmem:[%s1454] ss:$8 sm:$0xf]
      %v1456 = vld [vmem:[%s1454] ss:$8 sm:$0xf0]
      %v1457 = vor.u32 %v1455, %v1456
      %s1458 = scalar_lea.vmem [#allocation2], 641
      %v1459 = vld [vmem:[%s1458] ss:$8 sm:$0xf]
      %v1460 = vld [vmem:[%s1458] ss:$8 sm:$0xf0]
      %v1461 = vor.u32 %v1459, %v1460
      %s1462 = scalar_lea.vmem [#allocation2], 705
      %v1463 = vld [vmem:[%s1462] ss:$8 sm:$0xf]
      %v1464 = vld [vmem:[%s1462] ss:$8 sm:$0xf0]
      %v1465 = vor.u32 %v1463, %v1464
      %s1466 = scalar_lea.vmem [#allocation2], 769
      %v1467 = vld [vmem:[%s1466] ss:$8 sm:$0xf]
      %v1468 = vld [vmem:[%s1466] ss:$8 sm:$0xf0]
      %v1469 = vor.u32 %v1467, %v1468
      %s1470 = scalar_lea.vmem [#allocation2], 833
      %v1471 = vld [vmem:[%s1470] ss:$8 sm:$0xf]
      %v1472 = vld [vmem:[%s1470] ss:$8 sm:$0xf0]
      %v1473 = vor.u32 %v1471, %v1472
      %s1474 = scalar_lea.vmem [#allocation2], 897
      %v1475 = vld [vmem:[%s1474] ss:$8 sm:$0xf]
      %v1476 = vld [vmem:[%s1474] ss:$8 sm:$0xf0]
      %v1477 = vor.u32 %v1475, %v1476
      %s1478 = scalar_lea.vmem [#allocation2], 961
      %v1479 = vld [vmem:[%s1478] ss:$8 sm:$0xf]
      %v1480 = vld [vmem:[%s1478] ss:$8 sm:$0xf0]
      %v1481 = vor.u32 %v1479, %v1480
      %s1482 = sadd.s32 %s29, 1
      %s1483 = smul.u32 %s1482, 128
      %1484 = vxpose.xlu0.b32.start [1/16] %v1421, 128
      %1485 = vxpose.xlu0.b32.cont [2/16] %v1425, 128
      %1486 = vxpose.xlu0.b32.cont [3/16] %v1429, 128
      %1487 = vxpose.xlu0.b32.cont [4/16] %v1433, 128
      %1488 = vxpose.xlu0.b32.cont [5/16] %v1437, 128
      %1489 = vxpose.xlu0.b32.cont [6/16] %v1441, 128
      %1490 = vxpose.xlu0.b32.cont [7/16] %v1445, 128
      %1491 = vxpose.xlu0.b32.cont [8/16] %v1449, 128
      %1492 = vxpose.xlu0.b32.cont [9/16] %v1453, 128
      %1493 = vxpose.xlu0.b32.cont [10/16] %v1457, 128
      %1494 = vxpose.xlu0.b32.cont [11/16] %v1461, 128
      %1495 = vxpose.xlu0.b32.cont [12/16] %v1465, 128
      %1496 = vxpose.xlu0.b32.cont [13/16] %v1469, 128
      %1497 = vxpose.xlu0.b32.cont [14/16] %v1473, 128
      %1498 = vxpose.xlu0.b32.cont [15/16] %v1477, 128
      %1499 = vxpose.xlu0.b32.end [16/16] %v1481, 128
      %v1500 = vpop.trf.xlu0
      %v1501 = vpop.trf.xlu0
      %v1502 = vpop.trf.xlu0
      %v1503 = vpop.trf.xlu0
      %v1504 = vpop.trf.xlu0
      %v1505 = vpop.trf.xlu0
      %v1506 = vpop.trf.xlu0
      %v1507 = vpop.trf.xlu0
      %v1508 = vpop.trf.xlu0
      %v1509 = vpop.trf.xlu0
      %v1510 = vpop.trf.xlu0
      %v1511 = vpop.trf.xlu0
      %v1512 = vpop.trf.xlu0
      %v1513 = vpop.trf.xlu0
      %v1514 = vpop.trf.xlu0
      %v1515 = vpop.trf.xlu0
      %s1516 = sshra.s32 %s1483, 3
      %s1517 = sand.u32 %s1483, 7
      %s1518 = smul.u32 %s1516, 2
      %s1519 = smul.addr %s1518, 8
      %s1520 = scalar_lea.vmem [#allocation6], %s1519
      %1521 = vst [vmem:[%s1520] sm:$0xff] %v1500
      %1522 = vst [vmem:[%s1520 + $0x10] sm:$0xff] %v1501
      %1523 = vst [vmem:[%s1520 + $0x20] sm:$0xff] %v1502
      %1524 = vst [vmem:[%s1520 + $0x30] sm:$0xff] %v1503
      %1525 = vst [vmem:[%s1520 + $0x40] sm:$0xff] %v1504
      %1526 = vst [vmem:[%s1520 + $0x50] sm:$0xff] %v1505
      %1527 = vst [vmem:[%s1520 + $0x60] sm:$0xff] %v1506
      %1528 = vst [vmem:[%s1520 + $0x70] sm:$0xff] %v1507
      %1529 = vst [vmem:[%s1520 + $0x80] sm:$0xff] %v1508
      %1530 = vst [vmem:[%s1520 + $0x90] sm:$0xff] %v1509
      %1531 = vst [vmem:[%s1520 + $0xa0] sm:$0xff] %v1510
      %1532 = vst [vmem:[%s1520 + $0xb0] sm:$0xff] %v1511
      %1533 = vst [vmem:[%s1520 + $0xc0] sm:$0xff] %v1512
      %1534 = vst [vmem:[%s1520 + $0xd0] sm:$0xff] %v1513
      %1535 = vst [vmem:[%s1520 + $0xe0] sm:$0xff] %v1514
      %1536 = vst [vmem:[%s1520 + $0xf0] sm:$0xff] %v1515
      %s1537 = scalar_lea.vmem [#allocation2], 2
      %v1538 = vld [vmem:[%s1537] ss:$8 sm:$0xf]
      %v1539 = vld [vmem:[%s1537] ss:$8 sm:$0xf0]
      %v1540 = vor.u32 %v1538, %v1539
      %s1541 = scalar_lea.vmem [#allocation2], 66
      %v1542 = vld [vmem:[%s1541] ss:$8 sm:$0xf]
      %v1543 = vld [vmem:[%s1541] ss:$8 sm:$0xf0]
      %v1544 = vor.u32 %v1542, %v1543
      %s1545 = scalar_lea.vmem [#allocation2], 130
      %v1546 = vld [vmem:[%s1545] ss:$8 sm:$0xf]
      %v1547 = vld [vmem:[%s1545] ss:$8 sm:$0xf0]
      %v1548 = vor.u32 %v1546, %v1547
      %s1549 = scalar_lea.vmem [#allocation2], 194
      %v1550 = vld [vmem:[%s1549] ss:$8 sm:$0xf]
      %v1551 = vld [vmem:[%s1549] ss:$8 sm:$0xf0]
      %v1552 = vor.u32 %v1550, %v1551
      %s1553 = scalar_lea.vmem [#allocation2], 258
      %v1554 = vld [vmem:[%s1553] ss:$8 sm:$0xf]
      %v1555 = vld [vmem:[%s1553] ss:$8 sm:$0xf0]
      %v1556 = vor.u32 %v1554, %v1555
      %s1557 = scalar_lea.vmem [#allocation2], 322
      %v1558 = vld [vmem:[%s1557] ss:$8 sm:$0xf]
      %v1559 = vld [vmem:[%s1557] ss:$8 sm:$0xf0]
      %v1560 = vor.u32 %v1558, %v1559
      %s1561 = scalar_lea.vmem [#allocation2], 386
      %v1562 = vld [vmem:[%s1561] ss:$8 sm:$0xf]
      %v1563 = vld [vmem:[%s1561] ss:$8 sm:$0xf0]
      %v1564 = vor.u32 %v1562, %v1563
      %s1565 = scalar_lea.vmem [#allocation2], 450
      %v1566 = vld [vmem:[%s1565] ss:$8 sm:$0xf]
      %v1567 = vld [vmem:[%s1565] ss:$8 sm:$0xf0]
      %v1568 = vor.u32 %v1566, %v1567
      %s1569 = scalar_lea.vmem [#allocation2], 514
      %v1570 = vld [vmem:[%s1569] ss:$8 sm:$0xf]
      %v1571 = vld [vmem:[%s1569] ss:$8 sm:$0xf0]
      %v1572 = vor.u32 %v1570, %v1571
      %s1573 = scalar_lea.vmem [#allocation2], 578
      %v1574 = vld [vmem:[%s1573] ss:$8 sm:$0xf]
      %v1575 = vld [vmem:[%s1573] ss:$8 sm:$0xf0]
      %v1576 = vor.u32 %v1574, %v1575
      %s1577 = scalar_lea.vmem [#allocation2], 642
      %v1578 = vld [vmem:[%s1577] ss:$8 sm:$0xf]
      %v1579 = vld [vmem:[%s1577] ss:$8 sm:$0xf0]
      %v1580 = vor.u32 %v1578, %v1579
      %s1581 = scalar_lea.vmem [#allocation2], 706
      %v1582 = vld [vmem:[%s1581] ss:$8 sm:$0xf]
      %v1583 = vld [vmem:[%s1581] ss:$8 sm:$0xf0]
      %v1584 = vor.u32 %v1582, %v1583
      %s1585 = scalar_lea.vmem [#allocation2], 770
      %v1586 = vld [vmem:[%s1585] ss:$8 sm:$0xf]
      %v1587 = vld [vmem:[%s1585] ss:$8 sm:$0xf0]
      %v1588 = vor.u32 %v1586, %v1587
      %s1589 = scalar_lea.vmem [#allocation2], 834
      %v1590 = vld [vmem:[%s1589] ss:$8 sm:$0xf]
      %v1591 = vld [vmem:[%s1589] ss:$8 sm:$0xf0]
      %v1592 = vor.u32 %v1590, %v1591
      %s1593 = scalar_lea.vmem [#allocation2], 898
      %v1594 = vld [vmem:[%s1593] ss:$8 sm:$0xf]
      %v1595 = vld [vmem:[%s1593] ss:$8 sm:$0xf0]
      %v1596 = vor.u32 %v1594, %v1595
      %s1597 = scalar_lea.vmem [#allocation2], 962
      %v1598 = vld [vmem:[%s1597] ss:$8 sm:$0xf]
      %v1599 = vld [vmem:[%s1597] ss:$8 sm:$0xf0]
      %v1600 = vor.u32 %v1598, %v1599
      %s1601 = sadd.s32 %s29, 2
      %s1602 = smul.u32 %s1601, 128
      %1603 = vxpose.xlu0.b32.start [1/16] %v1540, 128
      %1604 = vxpose.xlu0.b32.cont [2/16] %v1544, 128
      %1605 = vxpose.xlu0.b32.cont [3/16] %v1548, 128
      %1606 = vxpose.xlu0.b32.cont [4/16] %v1552, 128
      %1607 = vxpose.xlu0.b32.cont [5/16] %v1556, 128
      %1608 = vxpose.xlu0.b32.cont [6/16] %v1560, 128
      %1609 = vxpose.xlu0.b32.cont [7/16] %v1564, 128
      %1610 = vxpose.xlu0.b32.cont [8/16] %v1568, 128
      %1611 = vxpose.xlu0.b32.cont [9/16] %v1572, 128
      %1612 = vxpose.xlu0.b32.cont [10/16] %v1576, 128
      %1613 = vxpose.xlu0.b32.cont [11/16] %v1580, 128
      %1614 = vxpose.xlu0.b32.cont [12/16] %v1584, 128
      %1615 = vxpose.xlu0.b32.cont [13/16] %v1588, 128
      %1616 = vxpose.xlu0.b32.cont [14/16] %v1592, 128
      %1617 = vxpose.xlu0.b32.cont [15/16] %v1596, 128
      %1618 = vxpose.xlu0.b32.end [16/16] %v1600, 128
      %v1619 = vpop.trf.xlu0
      %v1620 = vpop.trf.xlu0
      %v1621 = vpop.trf.xlu0
      %v1622 = vpop.trf.xlu0
      %v1623 = vpop.trf.xlu0
      %v1624 = vpop.trf.xlu0
      %v1625 = vpop.trf.xlu0
      %v1626 = vpop.trf.xlu0
      %v1627 = vpop.trf.xlu0
      %v1628 = vpop.trf.xlu0
      %v1629 = vpop.trf.xlu0
      %v1630 = vpop.trf.xlu0
      %v1631 = vpop.trf.xlu0
      %v1632 = vpop.trf.xlu0
      %v1633 = vpop.trf.xlu0
      %v1634 = vpop.trf.xlu0
      %s1635 = sshra.s32 %s1602, 3
      %s1636 = sand.u32 %s1602, 7
      %s1637 = smul.u32 %s1635, 2
      %s1638 = smul.addr %s1637, 8
      %s1639 = scalar_lea.vmem [#allocation6], %s1638
      %1640 = vst [vmem:[%s1639] sm:$0xff] %v1619
      %1641 = vst [vmem:[%s1639 + $0x10] sm:$0xff] %v1620
      %1642 = vst [vmem:[%s1639 + $0x20] sm:$0xff] %v1621
      %1643 = vst [vmem:[%s1639 + $0x30] sm:$0xff] %v1622
      %1644 = vst [vmem:[%s1639 + $0x40] sm:$0xff] %v1623
      %1645 = vst [vmem:[%s1639 + $0x50] sm:$0xff] %v1624
      %1646 = vst [vmem:[%s1639 + $0x60] sm:$0xff] %v1625
      %1647 = vst [vmem:[%s1639 + $0x70] sm:$0xff] %v1626
      %1648 = vst [vmem:[%s1639 + $0x80] sm:$0xff] %v1627
      %1649 = vst [vmem:[%s1639 + $0x90] sm:$0xff] %v1628
      %1650 = vst [vmem:[%s1639 + $0xa0] sm:$0xff] %v1629
      %1651 = vst [vmem:[%s1639 + $0xb0] sm:$0xff] %v1630
      %1652 = vst [vmem:[%s1639 + $0xc0] sm:$0xff] %v1631
      %1653 = vst [vmem:[%s1639 + $0xd0] sm:$0xff] %v1632
      %1654 = vst [vmem:[%s1639 + $0xe0] sm:$0xff] %v1633
      %1655 = vst [vmem:[%s1639 + $0xf0] sm:$0xff] %v1634
      %s1656 = scalar_lea.vmem [#allocation2], 3
      %v1657 = vld [vmem:[%s1656] ss:$8 sm:$0xf]
      %v1658 = vld [vmem:[%s1656] ss:$8 sm:$0xf0]
      %v1659 = vor.u32 %v1657, %v1658
      %s1660 = scalar_lea.vmem [#allocation2], 67
      %v1661 = vld [vmem:[%s1660] ss:$8 sm:$0xf]
      %v1662 = vld [vmem:[%s1660] ss:$8 sm:$0xf0]
      %v1663 = vor.u32 %v1661, %v1662
      %s1664 = scalar_lea.vmem [#allocation2], 131
      %v1665 = vld [vmem:[%s1664] ss:$8 sm:$0xf]
      %v1666 = vld [vmem:[%s1664] ss:$8 sm:$0xf0]
      %v1667 = vor.u32 %v1665, %v1666
      %s1668 = scalar_lea.vmem [#allocation2], 195
      %v1669 = vld [vmem:[%s1668] ss:$8 sm:$0xf]
      %v1670 = vld [vmem:[%s1668] ss:$8 sm:$0xf0]
      %v1671 = vor.u32 %v1669, %v1670
      %s1672 = scalar_lea.vmem [#allocation2], 259
      %v1673 = vld [vmem:[%s1672] ss:$8 sm:$0xf]
      %v1674 = vld [vmem:[%s1672] ss:$8 sm:$0xf0]
      %v1675 = vor.u32 %v1673, %v1674
      %s1676 = scalar_lea.vmem [#allocation2], 323
      %v1677 = vld [vmem:[%s1676] ss:$8 sm:$0xf]
      %v1678 = vld [vmem:[%s1676] ss:$8 sm:$0xf0]
      %v1679 = vor.u32 %v1677, %v1678
      %s1680 = scalar_lea.vmem [#allocation2], 387
      %v1681 = vld [vmem:[%s1680] ss:$8 sm:$0xf]
      %v1682 = vld [vmem:[%s1680] ss:$8 sm:$0xf0]
      %v1683 = vor.u32 %v1681, %v1682
      %s1684 = scalar_lea.vmem [#allocation2], 451
      %v1685 = vld [vmem:[%s1684] ss:$8 sm:$0xf]
      %v1686 = vld [vmem:[%s1684] ss:$8 sm:$0xf0]
      %v1687 = vor.u32 %v1685, %v1686
      %s1688 = scalar_lea.vmem [#allocation2], 515
      %v1689 = vld [vmem:[%s1688] ss:$8 sm:$0xf]
      %v1690 = vld [vmem:[%s1688] ss:$8 sm:$0xf0]
      %v1691 = vor.u32 %v1689, %v1690
      %s1692 = scalar_lea.vmem [#allocation2], 579
      %v1693 = vld [vmem:[%s1692] ss:$8 sm:$0xf]
      %v1694 = vld [vmem:[%s1692] ss:$8 sm:$0xf0]
      %v1695 = vor.u32 %v1693, %v1694
      %s1696 = scalar_lea.vmem [#allocation2], 643
      %v1697 = vld [vmem:[%s1696] ss:$8 sm:$0xf]
      %v1698 = vld [vmem:[%s1696] ss:$8 sm:$0xf0]
      %v1699 = vor.u32 %v1697, %v1698
      %s1700 = scalar_lea.vmem [#allocation2], 707
      %v1701 = vld [vmem:[%s1700] ss:$8 sm:$0xf]
      %v1702 = vld [vmem:[%s1700] ss:$8 sm:$0xf0]
      %v1703 = vor.u32 %v1701, %v1702
      %s1704 = scalar_lea.vmem [#allocation2], 771
      %v1705 = vld [vmem:[%s1704] ss:$8 sm:$0xf]
      %v1706 = vld [vmem:[%s1704] ss:$8 sm:$0xf0]
      %v1707 = vor.u32 %v1705, %v1706
      %s1708 = scalar_lea.vmem [#allocation2], 835
      %v1709 = vld [vmem:[%s1708] ss:$8 sm:$0xf]
      %v1710 = vld [vmem:[%s1708] ss:$8 sm:$0xf0]
      %v1711 = vor.u32 %v1709, %v1710
      %s1712 = scalar_lea.vmem [#allocation2], 899
      %v1713 = vld [vmem:[%s1712] ss:$8 sm:$0xf]
      %v1714 = vld [vmem:[%s1712] ss:$8 sm:$0xf0]
      %v1715 = vor.u32 %v1713, %v1714
      %s1716 = scalar_lea.vmem [#allocation2], 963
      %v1717 = vld [vmem:[%s1716] ss:$8 sm:$0xf]
      %v1718 = vld [vmem:[%s1716] ss:$8 sm:$0xf0]
      %v1719 = vor.u32 %v1717, %v1718
      %s1720 = sadd.s32 %s29, 3
      %s1721 = smul.u32 %s1720, 128
      %1722 = vxpose.xlu0.b32.start [1/16] %v1659, 128
      %1723 = vxpose.xlu0.b32.cont [2/16] %v1663, 128
      %1724 = vxpose.xlu0.b32.cont [3/16] %v1667, 128
      %1725 = vxpose.xlu0.b32.cont [4/16] %v1671, 128
      %1726 = vxpose.xlu0.b32.cont [5/16] %v1675, 128
      %1727 = vxpose.xlu0.b32.cont [6/16] %v1679, 128
      %1728 = vxpose.xlu0.b32.cont [7/16] %v1683, 128
      %1729 = vxpose.xlu0.b32.cont [8/16] %v1687, 128
      %1730 = vxpose.xlu0.b32.cont [9/16] %v1691, 128
      %1731 = vxpose.xlu0.b32.cont [10/16] %v1695, 128
      %1732 = vxpose.xlu0.b32.cont [11/16] %v1699, 128
      %1733 = vxpose.xlu0.b32.cont [12/16] %v1703, 128
      %1734 = vxpose.xlu0.b32.cont [13/16] %v1707, 128
      %1735 = vxpose.xlu0.b32.cont [14/16] %v1711, 128
      %1736 = vxpose.xlu0.b32.cont [15/16] %v1715, 128
      %1737 = vxpose.xlu0.b32.end [16/16] %v1719, 128
      %v1738 = vpop.trf.xlu0
      %v1739 = vpop.trf.xlu0
      %v1740 = vpop.trf.xlu0
      %v1741 = vpop.trf.xlu0
      %v1742 = vpop.trf.xlu0
      %v1743 = vpop.trf.xlu0
      %v1744 = vpop.trf.xlu0
      %v1745 = vpop.trf.xlu0
      %v1746 = vpop.trf.xlu0
      %v1747 = vpop.trf.xlu0
      %v1748 = vpop.trf.xlu0
      %v1749 = vpop.trf.xlu0
      %v1750 = vpop.trf.xlu0
      %v1751 = vpop.trf.xlu0
      %v1752 = vpop.trf.xlu0
      %v1753 = vpop.trf.xlu0
      %s1754 = sshra.s32 %s1721, 3
      %s1755 = sand.u32 %s1721, 7
      %s1756 = smul.u32 %s1754, 2
      %s1757 = smul.addr %s1756, 8
      %s1758 = scalar_lea.vmem [#allocation6], %s1757
      %1759 = vst [vmem:[%s1758] sm:$0xff] %v1738
      %1760 = vst [vmem:[%s1758 + $0x10] sm:$0xff] %v1739
      %1761 = vst [vmem:[%s1758 + $0x20] sm:$0xff] %v1740
      %1762 = vst [vmem:[%s1758 + $0x30] sm:$0xff] %v1741
      %1763 = vst [vmem:[%s1758 + $0x40] sm:$0xff] %v1742
      %1764 = vst [vmem:[%s1758 + $0x50] sm:$0xff] %v1743
      %1765 = vst [vmem:[%s1758 + $0x60] sm:$0xff] %v1744
      %1766 = vst [vmem:[%s1758 + $0x70] sm:$0xff] %v1745
      %1767 = vst [vmem:[%s1758 + $0x80] sm:$0xff] %v1746
      %1768 = vst [vmem:[%s1758 + $0x90] sm:$0xff] %v1747
      %1769 = vst [vmem:[%s1758 + $0xa0] sm:$0xff] %v1748
      %1770 = vst [vmem:[%s1758 + $0xb0] sm:$0xff] %v1749
      %1771 = vst [vmem:[%s1758 + $0xc0] sm:$0xff] %v1750
      %1772 = vst [vmem:[%s1758 + $0xd0] sm:$0xff] %v1751
      %1773 = vst [vmem:[%s1758 + $0xe0] sm:$0xff] %v1752
      %1774 = vst [vmem:[%s1758 + $0xf0] sm:$0xff] %v1753
      %s1775 = scalar_lea.vmem [#allocation2], 4
      %v1776 = vld [vmem:[%s1775] ss:$8 sm:$0xf]
      %v1777 = vld [vmem:[%s1775] ss:$8 sm:$0xf0]
      %v1778 = vor.u32 %v1776, %v1777
      %s1779 = scalar_lea.vmem [#allocation2], 68
      %v1780 = vld [vmem:[%s1779] ss:$8 sm:$0xf]
      %v1781 = vld [vmem:[%s1779] ss:$8 sm:$0xf0]
      %v1782 = vor.u32 %v1780, %v1781
      %s1783 = scalar_lea.vmem [#allocation2], 132
      %v1784 = vld [vmem:[%s1783] ss:$8 sm:$0xf]
      %v1785 = vld [vmem:[%s1783] ss:$8 sm:$0xf0]
      %v1786 = vor.u32 %v1784, %v1785
      %s1787 = scalar_lea.vmem [#allocation2], 196
      %v1788 = vld [vmem:[%s1787] ss:$8 sm:$0xf]
      %v1789 = vld [vmem:[%s1787] ss:$8 sm:$0xf0]
      %v1790 = vor.u32 %v1788, %v1789
      %s1791 = scalar_lea.vmem [#allocation2], 260
      %v1792 = vld [vmem:[%s1791] ss:$8 sm:$0xf]
      %v1793 = vld [vmem:[%s1791] ss:$8 sm:$0xf0]
      %v1794 = vor.u32 %v1792, %v1793
      %s1795 = scalar_lea.vmem [#allocation2], 324
      %v1796 = vld [vmem:[%s1795] ss:$8 sm:$0xf]
      %v1797 = vld [vmem:[%s1795] ss:$8 sm:$0xf0]
      %v1798 = vor.u32 %v1796, %v1797
      %s1799 = scalar_lea.vmem [#allocation2], 388
      %v1800 = vld [vmem:[%s1799] ss:$8 sm:$0xf]
      %v1801 = vld [vmem:[%s1799] ss:$8 sm:$0xf0]
      %v1802 = vor.u32 %v1800, %v1801
      %s1803 = scalar_lea.vmem [#allocation2], 452
      %v1804 = vld [vmem:[%s1803] ss:$8 sm:$0xf]
      %v1805 = vld [vmem:[%s1803] ss:$8 sm:$0xf0]
      %v1806 = vor.u32 %v1804, %v1805
      %s1807 = scalar_lea.vmem [#allocation2], 516
      %v1808 = vld [vmem:[%s1807] ss:$8 sm:$0xf]
      %v1809 = vld [vmem:[%s1807] ss:$8 sm:$0xf0]
      %v1810 = vor.u32 %v1808, %v1809
      %s1811 = scalar_lea.vmem [#allocation2], 580
      %v1812 = vld [vmem:[%s1811] ss:$8 sm:$0xf]
      %v1813 = vld [vmem:[%s1811] ss:$8 sm:$0xf0]
      %v1814 = vor.u32 %v1812, %v1813
      %s1815 = scalar_lea.vmem [#allocation2], 644
      %v1816 = vld [vmem:[%s1815] ss:$8 sm:$0xf]
      %v1817 = vld [vmem:[%s1815] ss:$8 sm:$0xf0]
      %v1818 = vor.u32 %v1816, %v1817
      %s1819 = scalar_lea.vmem [#allocation2], 708
      %v1820 = vld [vmem:[%s1819] ss:$8 sm:$0xf]
      %v1821 = vld [vmem:[%s1819] ss:$8 sm:$0xf0]
      %v1822 = vor.u32 %v1820, %v1821
      %s1823 = scalar_lea.vmem [#allocation2], 772
      %v1824 = vld [vmem:[%s1823] ss:$8 sm:$0xf]
      %v1825 = vld [vmem:[%s1823] ss:$8 sm:$0xf0]
      %v1826 = vor.u32 %v1824, %v1825
      %s1827 = scalar_lea.vmem [#allocation2], 836
      %v1828 = vld [vmem:[%s1827] ss:$8 sm:$0xf]
      %v1829 = vld [vmem:[%s1827] ss:$8 sm:$0xf0]
      %v1830 = vor.u32 %v1828, %v1829
      %s1831 = scalar_lea.vmem [#allocation2], 900
      %v1832 = vld [vmem:[%s1831] ss:$8 sm:$0xf]
      %v1833 = vld [vmem:[%s1831] ss:$8 sm:$0xf0]
      %v1834 = vor.u32 %v1832, %v1833
      %s1835 = scalar_lea.vmem [#allocation2], 964
      %v1836 = vld [vmem:[%s1835] ss:$8 sm:$0xf]
      %v1837 = vld [vmem:[%s1835] ss:$8 sm:$0xf0]
      %v1838 = vor.u32 %v1836, %v1837
      %s1839 = sadd.s32 %s29, 4
      %s1840 = smul.u32 %s1839, 128
      %1841 = vxpose.xlu0.b32.start [1/16] %v1778, 128
      %1842 = vxpose.xlu0.b32.cont [2/16] %v1782, 128
      %1843 = vxpose.xlu0.b32.cont [3/16] %v1786, 128
      %1844 = vxpose.xlu0.b32.cont [4/16] %v1790, 128
      %1845 = vxpose.xlu0.b32.cont [5/16] %v1794, 128
      %1846 = vxpose.xlu0.b32.cont [6/16] %v1798, 128
      %1847 = vxpose.xlu0.b32.cont [7/16] %v1802, 128
      %1848 = vxpose.xlu0.b32.cont [8/16] %v1806, 128
      %1849 = vxpose.xlu0.b32.cont [9/16] %v1810, 128
      %1850 = vxpose.xlu0.b32.cont [10/16] %v1814, 128
      %1851 = vxpose.xlu0.b32.cont [11/16] %v1818, 128
      %1852 = vxpose.xlu0.b32.cont [12/16] %v1822, 128
      %1853 = vxpose.xlu0.b32.cont [13/16] %v1826, 128
      %1854 = vxpose.xlu0.b32.cont [14/16] %v1830, 128
      %1855 = vxpose.xlu0.b32.cont [15/16] %v1834, 128
      %1856 = vxpose.xlu0.b32.end [16/16] %v1838, 128
      %v1857 = vpop.trf.xlu0
      %v1858 = vpop.trf.xlu0
      %v1859 = vpop.trf.xlu0
      %v1860 = vpop.trf.xlu0
      %v1861 = vpop.trf.xlu0
      %v1862 = vpop.trf.xlu0
      %v1863 = vpop.trf.xlu0
      %v1864 = vpop.trf.xlu0
      %v1865 = vpop.trf.xlu0
      %v1866 = vpop.trf.xlu0
      %v1867 = vpop.trf.xlu0
      %v1868 = vpop.trf.xlu0
      %v1869 = vpop.trf.xlu0
      %v1870 = vpop.trf.xlu0
      %v1871 = vpop.trf.xlu0
      %v1872 = vpop.trf.xlu0
      %s1873 = sshra.s32 %s1840, 3
      %s1874 = sand.u32 %s1840, 7
      %s1875 = smul.u32 %s1873, 2
      %s1876 = smul.addr %s1875, 8
      %s1877 = scalar_lea.vmem [#allocation6], %s1876
      %1878 = vst [vmem:[%s1877] sm:$0xff] %v1857
      %1879 = vst [vmem:[%s1877 + $0x10] sm:$0xff] %v1858
      %1880 = vst [vmem:[%s1877 + $0x20] sm:$0xff] %v1859
      %1881 = vst [vmem:[%s1877 + $0x30] sm:$0xff] %v1860
      %1882 = vst [vmem:[%s1877 + $0x40] sm:$0xff] %v1861
      %1883 = vst [vmem:[%s1877 + $0x50] sm:$0xff] %v1862
      %1884 = vst [vmem:[%s1877 + $0x60] sm:$0xff] %v1863
      %1885 = vst [vmem:[%s1877 + $0x70] sm:$0xff] %v1864
      %1886 = vst [vmem:[%s1877 + $0x80] sm:$0xff] %v1865
      %1887 = vst [vmem:[%s1877 + $0x90] sm:$0xff] %v1866
      %1888 = vst [vmem:[%s1877 + $0xa0] sm:$0xff] %v1867
      %1889 = vst [vmem:[%s1877 + $0xb0] sm:$0xff] %v1868
      %1890 = vst [vmem:[%s1877 + $0xc0] sm:$0xff] %v1869
      %1891 = vst [vmem:[%s1877 + $0xd0] sm:$0xff] %v1870
      %1892 = vst [vmem:[%s1877 + $0xe0] sm:$0xff] %v1871
      %1893 = vst [vmem:[%s1877 + $0xf0] sm:$0xff] %v1872
      %s1894 = scalar_lea.vmem [#allocation2], 5
      %v1895 = vld [vmem:[%s1894] ss:$8 sm:$0xf]
      %v1896 = vld [vmem:[%s1894] ss:$8 sm:$0xf0]
      %v1897 = vor.u32 %v1895, %v1896
      %s1898 = scalar_lea.vmem [#allocation2], 69
      %v1899 = vld [vmem:[%s1898] ss:$8 sm:$0xf]
      %v1900 = vld [vmem:[%s1898] ss:$8 sm:$0xf0]
      %v1901 = vor.u32 %v1899, %v1900
      %s1902 = scalar_lea.vmem [#allocation2], 133
      %v1903 = vld [vmem:[%s1902] ss:$8 sm:$0xf]
      %v1904 = vld [vmem:[%s1902] ss:$8 sm:$0xf0]
      %v1905 = vor.u32 %v1903, %v1904
      %s1906 = scalar_lea.vmem [#allocation2], 197
      %v1907 = vld [vmem:[%s1906] ss:$8 sm:$0xf]
      %v1908 = vld [vmem:[%s1906] ss:$8 sm:$0xf0]
      %v1909 = vor.u32 %v1907, %v1908
      %s1910 = scalar_lea.vmem [#allocation2], 261
      %v1911 = vld [vmem:[%s1910] ss:$8 sm:$0xf]
      %v1912 = vld [vmem:[%s1910] ss:$8 sm:$0xf0]
      %v1913 = vor.u32 %v1911, %v1912
      %s1914 = scalar_lea.vmem [#allocation2], 325
      %v1915 = vld [vmem:[%s1914] ss:$8 sm:$0xf]
      %v1916 = vld [vmem:[%s1914] ss:$8 sm:$0xf0]
      %v1917 = vor.u32 %v1915, %v1916
      %s1918 = scalar_lea.vmem [#allocation2], 389
      %v1919 = vld [vmem:[%s1918] ss:$8 sm:$0xf]
      %v1920 = vld [vmem:[%s1918] ss:$8 sm:$0xf0]
      %v1921 = vor.u32 %v1919, %v1920
      %s1922 = scalar_lea.vmem [#allocation2], 453
      %v1923 = vld [vmem:[%s1922] ss:$8 sm:$0xf]
      %v1924 = vld [vmem:[%s1922] ss:$8 sm:$0xf0]
      %v1925 = vor.u32 %v1923, %v1924
      %s1926 = scalar_lea.vmem [#allocation2], 517
      %v1927 = vld [vmem:[%s1926] ss:$8 sm:$0xf]
      %v1928 = vld [vmem:[%s1926] ss:$8 sm:$0xf0]
      %v1929 = vor.u32 %v1927, %v1928
      %s1930 = scalar_lea.vmem [#allocation2], 581
      %v1931 = vld [vmem:[%s1930] ss:$8 sm:$0xf]
      %v1932 = vld [vmem:[%s1930] ss:$8 sm:$0xf0]
      %v1933 = vor.u32 %v1931, %v1932
      %s1934 = scalar_lea.vmem [#allocation2], 645
      %v1935 = vld [vmem:[%s1934] ss:$8 sm:$0xf]
      %v1936 = vld [vmem:[%s1934] ss:$8 sm:$0xf0]
      %v1937 = vor.u32 %v1935, %v1936
      %s1938 = scalar_lea.vmem [#allocation2], 709
      %v1939 = vld [vmem:[%s1938] ss:$8 sm:$0xf]
      %v1940 = vld [vmem:[%s1938] ss:$8 sm:$0xf0]
      %v1941 = vor.u32 %v1939, %v1940
      %s1942 = scalar_lea.vmem [#allocation2], 773
      %v1943 = vld [vmem:[%s1942] ss:$8 sm:$0xf]
      %v1944 = vld [vmem:[%s1942] ss:$8 sm:$0xf0]
      %v1945 = vor.u32 %v1943, %v1944
      %s1946 = scalar_lea.vmem [#allocation2], 837
      %v1947 = vld [vmem:[%s1946] ss:$8 sm:$0xf]
      %v1948 = vld [vmem:[%s1946] ss:$8 sm:$0xf0]
      %v1949 = vor.u32 %v1947, %v1948
      %s1950 = scalar_lea.vmem [#allocation2], 901
      %v1951 = vld [vmem:[%s1950] ss:$8 sm:$0xf]
      %v1952 = vld [vmem:[%s1950] ss:$8 sm:$0xf0]
      %v1953 = vor.u32 %v1951, %v1952
      %s1954 = scalar_lea.vmem [#allocation2], 965
      %v1955 = vld [vmem:[%s1954] ss:$8 sm:$0xf]
      %v1956 = vld [vmem:[%s1954] ss:$8 sm:$0xf0]
      %v1957 = vor.u32 %v1955, %v1956
      %s1958 = sadd.s32 %s29, 5
      %s1959 = smul.u32 %s1958, 128
      %1960 = vxpose.xlu0.b32.start [1/16] %v1897, 128
      %1961 = vxpose.xlu0.b32.cont [2/16] %v1901, 128
      %1962 = vxpose.xlu0.b32.cont [3/16] %v1905, 128
      %1963 = vxpose.xlu0.b32.cont [4/16] %v1909, 128
      %1964 = vxpose.xlu0.b32.cont [5/16] %v1913, 128
      %1965 = vxpose.xlu0.b32.cont [6/16] %v1917, 128
      %1966 = vxpose.xlu0.b32.cont [7/16] %v1921, 128
      %1967 = vxpose.xlu0.b32.cont [8/16] %v1925, 128
      %1968 = vxpose.xlu0.b32.cont [9/16] %v1929, 128
      %1969 = vxpose.xlu0.b32.cont [10/16] %v1933, 128
      %1970 = vxpose.xlu0.b32.cont [11/16] %v1937, 128
      %1971 = vxpose.xlu0.b32.cont [12/16] %v1941, 128
      %1972 = vxpose.xlu0.b32.cont [13/16] %v1945, 128
      %1973 = vxpose.xlu0.b32.cont [14/16] %v1949, 128
      %1974 = vxpose.xlu0.b32.cont [15/16] %v1953, 128
      %1975 = vxpose.xlu0.b32.end [16/16] %v1957, 128
      %v1976 = vpop.trf.xlu0
      %v1977 = vpop.trf.xlu0
      %v1978 = vpop.trf.xlu0
      %v1979 = vpop.trf.xlu0
      %v1980 = vpop.trf.xlu0
      %v1981 = vpop.trf.xlu0
      %v1982 = vpop.trf.xlu0
      %v1983 = vpop.trf.xlu0
      %v1984 = vpop.trf.xlu0
      %v1985 = vpop.trf.xlu0
      %v1986 = vpop.trf.xlu0
      %v1987 = vpop.trf.xlu0
      %v1988 = vpop.trf.xlu0
      %v1989 = vpop.trf.xlu0
      %v1990 = vpop.trf.xlu0
      %v1991 = vpop.trf.xlu0
      %s1992 = sshra.s32 %s1959, 3
      %s1993 = sand.u32 %s1959, 7
      %s1994 = smul.u32 %s1992, 2
      %s1995 = smul.addr %s1994, 8
      %s1996 = scalar_lea.vmem [#allocation6], %s1995
      %1997 = vst [vmem:[%s1996] sm:$0xff] %v1976
      %1998 = vst [vmem:[%s1996 + $0x10] sm:$0xff] %v1977
      %1999 = vst [vmem:[%s1996 + $0x20] sm:$0xff] %v1978
      %2000 = vst [vmem:[%s1996 + $0x30] sm:$0xff] %v1979
      %2001 = vst [vmem:[%s1996 + $0x40] sm:$0xff] %v1980
      %2002 = vst [vmem:[%s1996 + $0x50] sm:$0xff] %v1981
      %2003 = vst [vmem:[%s1996 + $0x60] sm:$0xff] %v1982
      %2004 = vst [vmem:[%s1996 + $0x70] sm:$0xff] %v1983
      %2005 = vst [vmem:[%s1996 + $0x80] sm:$0xff] %v1984
      %2006 = vst [vmem:[%s1996 + $0x90] sm:$0xff] %v1985
      %2007 = vst [vmem:[%s1996 + $0xa0] sm:$0xff] %v1986
      %2008 = vst [vmem:[%s1996 + $0xb0] sm:$0xff] %v1987
      %2009 = vst [vmem:[%s1996 + $0xc0] sm:$0xff] %v1988
      %2010 = vst [vmem:[%s1996 + $0xd0] sm:$0xff] %v1989
      %2011 = vst [vmem:[%s1996 + $0xe0] sm:$0xff] %v1990
      %2012 = vst [vmem:[%s1996 + $0xf0] sm:$0xff] %v1991
      %s2013 = scalar_lea.vmem [#allocation2], 6
      %v2014 = vld [vmem:[%s2013] ss:$8 sm:$0xf]
      %v2015 = vld [vmem:[%s2013] ss:$8 sm:$0xf0]
      %v2016 = vor.u32 %v2014, %v2015
      %s2017 = scalar_lea.vmem [#allocation2], 70
      %v2018 = vld [vmem:[%s2017] ss:$8 sm:$0xf]
      %v2019 = vld [vmem:[%s2017] ss:$8 sm:$0xf0]
      %v2020 = vor.u32 %v2018, %v2019
      %s2021 = scalar_lea.vmem [#allocation2], 134
      %v2022 = vld [vmem:[%s2021] ss:$8 sm:$0xf]
      %v2023 = vld [vmem:[%s2021] ss:$8 sm:$0xf0]
      %v2024 = vor.u32 %v2022, %v2023
      %s2025 = scalar_lea.vmem [#allocation2], 198
      %v2026 = vld [vmem:[%s2025] ss:$8 sm:$0xf]
      %v2027 = vld [vmem:[%s2025] ss:$8 sm:$0xf0]
      %v2028 = vor.u32 %v2026, %v2027
      %s2029 = scalar_lea.vmem [#allocation2], 262
      %v2030 = vld [vmem:[%s2029] ss:$8 sm:$0xf]
      %v2031 = vld [vmem:[%s2029] ss:$8 sm:$0xf0]
      %v2032 = vor.u32 %v2030, %v2031
      %s2033 = scalar_lea.vmem [#allocation2], 326
      %v2034 = vld [vmem:[%s2033] ss:$8 sm:$0xf]
      %v2035 = vld [vmem:[%s2033] ss:$8 sm:$0xf0]
      %v2036 = vor.u32 %v2034, %v2035
      %s2037 = scalar_lea.vmem [#allocation2], 390
      %v2038 = vld [vmem:[%s2037] ss:$8 sm:$0xf]
      %v2039 = vld [vmem:[%s2037] ss:$8 sm:$0xf0]
      %v2040 = vor.u32 %v2038, %v2039
      %s2041 = scalar_lea.vmem [#allocation2], 454
      %v2042 = vld [vmem:[%s2041] ss:$8 sm:$0xf]
      %v2043 = vld [vmem:[%s2041] ss:$8 sm:$0xf0]
      %v2044 = vor.u32 %v2042, %v2043
      %s2045 = scalar_lea.vmem [#allocation2], 518
      %v2046 = vld [vmem:[%s2045] ss:$8 sm:$0xf]
      %v2047 = vld [vmem:[%s2045] ss:$8 sm:$0xf0]
      %v2048 = vor.u32 %v2046, %v2047
      %s2049 = scalar_lea.vmem [#allocation2], 582
      %v2050 = vld [vmem:[%s2049] ss:$8 sm:$0xf]
      %v2051 = vld [vmem:[%s2049] ss:$8 sm:$0xf0]
      %v2052 = vor.u32 %v2050, %v2051
      %s2053 = scalar_lea.vmem [#allocation2], 646
      %v2054 = vld [vmem:[%s2053] ss:$8 sm:$0xf]
      %v2055 = vld [vmem:[%s2053] ss:$8 sm:$0xf0]
      %v2056 = vor.u32 %v2054, %v2055
      %s2057 = scalar_lea.vmem [#allocation2], 710
      %v2058 = vld [vmem:[%s2057] ss:$8 sm:$0xf]
      %v2059 = vld [vmem:[%s2057] ss:$8 sm:$0xf0]
      %v2060 = vor.u32 %v2058, %v2059
      %s2061 = scalar_lea.vmem [#allocation2], 774
      %v2062 = vld [vmem:[%s2061] ss:$8 sm:$0xf]
      %v2063 = vld [vmem:[%s2061] ss:$8 sm:$0xf0]
      %v2064 = vor.u32 %v2062, %v2063
      %s2065 = scalar_lea.vmem [#allocation2], 838
      %v2066 = vld [vmem:[%s2065] ss:$8 sm:$0xf]
      %v2067 = vld [vmem:[%s2065] ss:$8 sm:$0xf0]
      %v2068 = vor.u32 %v2066, %v2067
      %s2069 = scalar_lea.vmem [#allocation2], 902
      %v2070 = vld [vmem:[%s2069] ss:$8 sm:$0xf]
      %v2071 = vld [vmem:[%s2069] ss:$8 sm:$0xf0]
      %v2072 = vor.u32 %v2070, %v2071
      %s2073 = scalar_lea.vmem [#allocation2], 966
      %v2074 = vld [vmem:[%s2073] ss:$8 sm:$0xf]
      %v2075 = vld [vmem:[%s2073] ss:$8 sm:$0xf0]
      %v2076 = vor.u32 %v2074, %v2075
      %s2077 = sadd.s32 %s29, 6
      %s2078 = smul.u32 %s2077, 128
      %2079 = vxpose.xlu0.b32.start [1/16] %v2016, 128
      %2080 = vxpose.xlu0.b32.cont [2/16] %v2020, 128
      %2081 = vxpose.xlu0.b32.cont [3/16] %v2024, 128
      %2082 = vxpose.xlu0.b32.cont [4/16] %v2028, 128
      %2083 = vxpose.xlu0.b32.cont [5/16] %v2032, 128
      %2084 = vxpose.xlu0.b32.cont [6/16] %v2036, 128
      %2085 = vxpose.xlu0.b32.cont [7/16] %v2040, 128
      %2086 = vxpose.xlu0.b32.cont [8/16] %v2044, 128
      %2087 = vxpose.xlu0.b32.cont [9/16] %v2048, 128
      %2088 = vxpose.xlu0.b32.cont [10/16] %v2052, 128
      %2089 = vxpose.xlu0.b32.cont [11/16] %v2056, 128
      %2090 = vxpose.xlu0.b32.cont [12/16] %v2060, 128
      %2091 = vxpose.xlu0.b32.cont [13/16] %v2064, 128
      %2092 = vxpose.xlu0.b32.cont [14/16] %v2068, 128
      %2093 = vxpose.xlu0.b32.cont [15/16] %v2072, 128
      %2094 = vxpose.xlu0.b32.end [16/16] %v2076, 128
      %v2095 = vpop.trf.xlu0
      %v2096 = vpop.trf.xlu0
      %v2097 = vpop.trf.xlu0
      %v2098 = vpop.trf.xlu0
      %v2099 = vpop.trf.xlu0
      %v2100 = vpop.trf.xlu0
      %v2101 = vpop.trf.xlu0
      %v2102 = vpop.trf.xlu0
      %v2103 = vpop.trf.xlu0
      %v2104 = vpop.trf.xlu0
      %v2105 = vpop.trf.xlu0
      %v2106 = vpop.trf.xlu0
      %v2107 = vpop.trf.xlu0
      %v2108 = vpop.trf.xlu0
      %v2109 = vpop.trf.xlu0
      %v2110 = vpop.trf.xlu0
      %s2111 = sshra.s32 %s2078, 3
      %s2112 = sand.u32 %s2078, 7
      %s2113 = smul.u32 %s2111, 2
      %s2114 = smul.addr %s2113, 8
      %s2115 = scalar_lea.vmem [#allocation6], %s2114
      %2116 = vst [vmem:[%s2115] sm:$0xff] %v2095
      %2117 = vst [vmem:[%s2115 + $0x10] sm:$0xff] %v2096
      %2118 = vst [vmem:[%s2115 + $0x20] sm:$0xff] %v2097
      %2119 = vst [vmem:[%s2115 + $0x30] sm:$0xff] %v2098
      %2120 = vst [vmem:[%s2115 + $0x40] sm:$0xff] %v2099
      %2121 = vst [vmem:[%s2115 + $0x50] sm:$0xff] %v2100
      %2122 = vst [vmem:[%s2115 + $0x60] sm:$0xff] %v2101
      %2123 = vst [vmem:[%s2115 + $0x70] sm:$0xff] %v2102
      %2124 = vst [vmem:[%s2115 + $0x80] sm:$0xff] %v2103
      %2125 = vst [vmem:[%s2115 + $0x90] sm:$0xff] %v2104
      %2126 = vst [vmem:[%s2115 + $0xa0] sm:$0xff] %v2105
      %2127 = vst [vmem:[%s2115 + $0xb0] sm:$0xff] %v2106
      %2128 = vst [vmem:[%s2115 + $0xc0] sm:$0xff] %v2107
      %2129 = vst [vmem:[%s2115 + $0xd0] sm:$0xff] %v2108
      %2130 = vst [vmem:[%s2115 + $0xe0] sm:$0xff] %v2109
      %2131 = vst [vmem:[%s2115 + $0xf0] sm:$0xff] %v2110
      %s2132 = scalar_lea.vmem [#allocation2], 7
      %v2133 = vld [vmem:[%s2132] ss:$8 sm:$0xf]
      %v2134 = vld [vmem:[%s2132] ss:$8 sm:$0xf0]
      %v2135 = vor.u32 %v2133, %v2134
      %s2136 = scalar_lea.vmem [#allocation2], 71
      %v2137 = vld [vmem:[%s2136] ss:$8 sm:$0xf]
      %v2138 = vld [vmem:[%s2136] ss:$8 sm:$0xf0]
      %v2139 = vor.u32 %v2137, %v2138
      %s2140 = scalar_lea.vmem [#allocation2], 135
      %v2141 = vld [vmem:[%s2140] ss:$8 sm:$0xf]
      %v2142 = vld [vmem:[%s2140] ss:$8 sm:$0xf0]
      %v2143 = vor.u32 %v2141, %v2142
      %s2144 = scalar_lea.vmem [#allocation2], 199
      %v2145 = vld [vmem:[%s2144] ss:$8 sm:$0xf]
      %v2146 = vld [vmem:[%s2144] ss:$8 sm:$0xf0]
      %v2147 = vor.u32 %v2145, %v2146
      %s2148 = scalar_lea.vmem [#allocation2], 263
      %v2149 = vld [vmem:[%s2148] ss:$8 sm:$0xf]
      %v2150 = vld [vmem:[%s2148] ss:$8 sm:$0xf0]
      %v2151 = vor.u32 %v2149, %v2150
      %s2152 = scalar_lea.vmem [#allocation2], 327
      %v2153 = vld [vmem:[%s2152] ss:$8 sm:$0xf]
      %v2154 = vld [vmem:[%s2152] ss:$8 sm:$0xf0]
      %v2155 = vor.u32 %v2153, %v2154
      %s2156 = scalar_lea.vmem [#allocation2], 391
      %v2157 = vld [vmem:[%s2156] ss:$8 sm:$0xf]
      %v2158 = vld [vmem:[%s2156] ss:$8 sm:$0xf0]
      %v2159 = vor.u32 %v2157, %v2158
      %s2160 = scalar_lea.vmem [#allocation2], 455
      %v2161 = vld [vmem:[%s2160] ss:$8 sm:$0xf]
      %v2162 = vld [vmem:[%s2160] ss:$8 sm:$0xf0]
      %v2163 = vor.u32 %v2161, %v2162
      %s2164 = scalar_lea.vmem [#allocation2], 519
      %v2165 = vld [vmem:[%s2164] ss:$8 sm:$0xf]
      %v2166 = vld [vmem:[%s2164] ss:$8 sm:$0xf0]
      %v2167 = vor.u32 %v2165, %v2166
      %s2168 = scalar_lea.vmem [#allocation2], 583
      %v2169 = vld [vmem:[%s2168] ss:$8 sm:$0xf]
      %v2170 = vld [vmem:[%s2168] ss:$8 sm:$0xf0]
      %v2171 = vor.u32 %v2169, %v2170
      %s2172 = scalar_lea.vmem [#allocation2], 647
      %v2173 = vld [vmem:[%s2172] ss:$8 sm:$0xf]
      %v2174 = vld [vmem:[%s2172] ss:$8 sm:$0xf0]
      %v2175 = vor.u32 %v2173, %v2174
      %s2176 = scalar_lea.vmem [#allocation2], 711
      %v2177 = vld [vmem:[%s2176] ss:$8 sm:$0xf]
      %v2178 = vld [vmem:[%s2176] ss:$8 sm:$0xf0]
      %v2179 = vor.u32 %v2177, %v2178
      %s2180 = scalar_lea.vmem [#allocation2], 775
      %v2181 = vld [vmem:[%s2180] ss:$8 sm:$0xf]
      %v2182 = vld [vmem:[%s2180] ss:$8 sm:$0xf0]
      %v2183 = vor.u32 %v2181, %v2182
      %s2184 = scalar_lea.vmem [#allocation2], 839
      %v2185 = vld [vmem:[%s2184] ss:$8 sm:$0xf]
      %v2186 = vld [vmem:[%s2184] ss:$8 sm:$0xf0]
      %v2187 = vor.u32 %v2185, %v2186
      %s2188 = scalar_lea.vmem [#allocation2], 903
      %v2189 = vld [vmem:[%s2188] ss:$8 sm:$0xf]
      %v2190 = vld [vmem:[%s2188] ss:$8 sm:$0xf0]
      %v2191 = vor.u32 %v2189, %v2190
      %s2192 = scalar_lea.vmem [#allocation2], 967
      %v2193 = vld [vmem:[%s2192] ss:$8 sm:$0xf]
      %v2194 = vld [vmem:[%s2192] ss:$8 sm:$0xf0]
      %v2195 = vor.u32 %v2193, %v2194
      %s2196 = sadd.s32 %s29, 7
      %s2197 = smul.u32 %s2196, 128
      %2198 = vxpose.xlu0.b32.start [1/16] %v2135, 128
      %2199 = vxpose.xlu0.b32.cont [2/16] %v2139, 128
      %2200 = vxpose.xlu0.b32.cont [3/16] %v2143, 128
      %2201 = vxpose.xlu0.b32.cont [4/16] %v2147, 128
      %2202 = vxpose.xlu0.b32.cont [5/16] %v2151, 128
      %2203 = vxpose.xlu0.b32.cont [6/16] %v2155, 128
      %2204 = vxpose.xlu0.b32.cont [7/16] %v2159, 128
      %2205 = vxpose.xlu0.b32.cont [8/16] %v2163, 128
      %2206 = vxpose.xlu0.b32.cont [9/16] %v2167, 128
      %2207 = vxpose.xlu0.b32.cont [10/16] %v2171, 128
      %2208 = vxpose.xlu0.b32.cont [11/16] %v2175, 128
      %2209 = vxpose.xlu0.b32.cont [12/16] %v2179, 128
      %2210 = vxpose.xlu0.b32.cont [13/16] %v2183, 128
      %2211 = vxpose.xlu0.b32.cont [14/16] %v2187, 128
      %2212 = vxpose.xlu0.b32.cont [15/16] %v2191, 128
      %2213 = vxpose.xlu0.b32.end [16/16] %v2195, 128
      %v2214 = vpop.trf.xlu0
      %v2215 = vpop.trf.xlu0
      %v2216 = vpop.trf.xlu0
      %v2217 = vpop.trf.xlu0
      %v2218 = vpop.trf.xlu0
      %v2219 = vpop.trf.xlu0
      %v2220 = vpop.trf.xlu0
      %v2221 = vpop.trf.xlu0
      %v2222 = vpop.trf.xlu0
      %v2223 = vpop.trf.xlu0
      %v2224 = vpop.trf.xlu0
      %v2225 = vpop.trf.xlu0
      %v2226 = vpop.trf.xlu0
      %v2227 = vpop.trf.xlu0
      %v2228 = vpop.trf.xlu0
      %v2229 = vpop.trf.xlu0
      %s2230 = sshra.s32 %s2197, 3
      %s2231 = sand.u32 %s2197, 7
      %s2232 = smul.u32 %s2230, 2
      %s2233 = smul.addr %s2232, 8
      %s2234 = scalar_lea.vmem [#allocation6], %s2233
      %2235 = vst [vmem:[%s2234] sm:$0xff] %v2214
      %2236 = vst [vmem:[%s2234 + $0x10] sm:$0xff] %v2215
      %2237 = vst [vmem:[%s2234 + $0x20] sm:$0xff] %v2216
      %2238 = vst [vmem:[%s2234 + $0x30] sm:$0xff] %v2217
      %2239 = vst [vmem:[%s2234 + $0x40] sm:$0xff] %v2218
      %2240 = vst [vmem:[%s2234 + $0x50] sm:$0xff] %v2219
      %2241 = vst [vmem:[%s2234 + $0x60] sm:$0xff] %v2220
      %2242 = vst [vmem:[%s2234 + $0x70] sm:$0xff] %v2221
      %2243 = vst [vmem:[%s2234 + $0x80] sm:$0xff] %v2222
      %2244 = vst [vmem:[%s2234 + $0x90] sm:$0xff] %v2223
      %2245 = vst [vmem:[%s2234 + $0xa0] sm:$0xff] %v2224
      %2246 = vst [vmem:[%s2234 + $0xb0] sm:$0xff] %v2225
      %2247 = vst [vmem:[%s2234 + $0xc0] sm:$0xff] %v2226
      %2248 = vst [vmem:[%s2234 + $0xd0] sm:$0xff] %v2227
      %2249 = vst [vmem:[%s2234 + $0xe0] sm:$0xff] %v2228
      %2250 = vst [vmem:[%s2234 + $0xf0] sm:$0xff] %v2229
      %s2251 = scalar_lea.vmem [#allocation2], 1024
      %v2252 = vld [vmem:[%s2251] ss:$8 sm:$0xf]
      %v2253 = vld [vmem:[%s2251] ss:$8 sm:$0xf0]
      %v2254 = vor.u32 %v2252, %v2253
      %s2255 = scalar_lea.vmem [#allocation2], 1088
      %v2256 = vld [vmem:[%s2255] ss:$8 sm:$0xf]
      %v2257 = vld [vmem:[%s2255] ss:$8 sm:$0xf0]
      %v2258 = vor.u32 %v2256, %v2257
      %s2259 = scalar_lea.vmem [#allocation2], 1152
      %v2260 = vld [vmem:[%s2259] ss:$8 sm:$0xf]
      %v2261 = vld [vmem:[%s2259] ss:$8 sm:$0xf0]
      %v2262 = vor.u32 %v2260, %v2261
      %s2263 = scalar_lea.vmem [#allocation2], 1216
      %v2264 = vld [vmem:[%s2263] ss:$8 sm:$0xf]
      %v2265 = vld [vmem:[%s2263] ss:$8 sm:$0xf0]
      %v2266 = vor.u32 %v2264, %v2265
      %s2267 = scalar_lea.vmem [#allocation2], 1280
      %v2268 = vld [vmem:[%s2267] ss:$8 sm:$0xf]
      %v2269 = vld [vmem:[%s2267] ss:$8 sm:$0xf0]
      %v2270 = vor.u32 %v2268, %v2269
      %s2271 = scalar_lea.vmem [#allocation2], 1344
      %v2272 = vld [vmem:[%s2271] ss:$8 sm:$0xf]
      %v2273 = vld [vmem:[%s2271] ss:$8 sm:$0xf0]
      %v2274 = vor.u32 %v2272, %v2273
      %s2275 = scalar_lea.vmem [#allocation2], 1408
      %v2276 = vld [vmem:[%s2275] ss:$8 sm:$0xf]
      %v2277 = vld [vmem:[%s2275] ss:$8 sm:$0xf0]
      %v2278 = vor.u32 %v2276, %v2277
      %s2279 = scalar_lea.vmem [#allocation2], 1472
      %v2280 = vld [vmem:[%s2279] ss:$8 sm:$0xf]
      %v2281 = vld [vmem:[%s2279] ss:$8 sm:$0xf0]
      %v2282 = vor.u32 %v2280, %v2281
      %s2283 = scalar_lea.vmem [#allocation2], 1536
      %v2284 = vld [vmem:[%s2283] ss:$8 sm:$0xf]
      %v2285 = vld [vmem:[%s2283] ss:$8 sm:$0xf0]
      %v2286 = vor.u32 %v2284, %v2285
      %s2287 = scalar_lea.vmem [#allocation2], 1600
      %v2288 = vld [vmem:[%s2287] ss:$8 sm:$0xf]
      %v2289 = vld [vmem:[%s2287] ss:$8 sm:$0xf0]
      %v2290 = vor.u32 %v2288, %v2289
      %s2291 = scalar_lea.vmem [#allocation2], 1664
      %v2292 = vld [vmem:[%s2291] ss:$8 sm:$0xf]
      %v2293 = vld [vmem:[%s2291] ss:$8 sm:$0xf0]
      %v2294 = vor.u32 %v2292, %v2293
      %s2295 = scalar_lea.vmem [#allocation2], 1728
      %v2296 = vld [vmem:[%s2295] ss:$8 sm:$0xf]
      %v2297 = vld [vmem:[%s2295] ss:$8 sm:$0xf0]
      %v2298 = vor.u32 %v2296, %v2297
      %s2299 = scalar_lea.vmem [#allocation2], 1792
      %v2300 = vld [vmem:[%s2299] ss:$8 sm:$0xf]
      %v2301 = vld [vmem:[%s2299] ss:$8 sm:$0xf0]
      %v2302 = vor.u32 %v2300, %v2301
      %s2303 = scalar_lea.vmem [#allocation2], 1856
      %v2304 = vld [vmem:[%s2303] ss:$8 sm:$0xf]
      %v2305 = vld [vmem:[%s2303] ss:$8 sm:$0xf0]
      %v2306 = vor.u32 %v2304, %v2305
      %s2307 = scalar_lea.vmem [#allocation2], 1920
      %v2308 = vld [vmem:[%s2307] ss:$8 sm:$0xf]
      %v2309 = vld [vmem:[%s2307] ss:$8 sm:$0xf0]
      %v2310 = vor.u32 %v2308, %v2309
      %s2311 = scalar_lea.vmem [#allocation2], 1984
      %v2312 = vld [vmem:[%s2311] ss:$8 sm:$0xf]
      %v2313 = vld [vmem:[%s2311] ss:$8 sm:$0xf0]
      %v2314 = vor.u32 %v2312, %v2313
      %2315 = vxpose.xlu0.b32.start [1/16] %v2254, 128
      %2316 = vxpose.xlu0.b32.cont [2/16] %v2258, 128
      %2317 = vxpose.xlu0.b32.cont [3/16] %v2262, 128
      %2318 = vxpose.xlu0.b32.cont [4/16] %v2266, 128
      %2319 = vxpose.xlu0.b32.cont [5/16] %v2270, 128
      %2320 = vxpose.xlu0.b32.cont [6/16] %v2274, 128
      %2321 = vxpose.xlu0.b32.cont [7/16] %v2278, 128
      %2322 = vxpose.xlu0.b32.cont [8/16] %v2282, 128
      %2323 = vxpose.xlu0.b32.cont [9/16] %v2286, 128
      %2324 = vxpose.xlu0.b32.cont [10/16] %v2290, 128
      %2325 = vxpose.xlu0.b32.cont [11/16] %v2294, 128
      %2326 = vxpose.xlu0.b32.cont [12/16] %v2298, 128
      %2327 = vxpose.xlu0.b32.cont [13/16] %v2302, 128
      %2328 = vxpose.xlu0.b32.cont [14/16] %v2306, 128
      %2329 = vxpose.xlu0.b32.cont [15/16] %v2310, 128
      %2330 = vxpose.xlu0.b32.end [16/16] %v2314, 128
      %v2331 = vpop.trf.xlu0
      %v2332 = vpop.trf.xlu0
      %v2333 = vpop.trf.xlu0
      %v2334 = vpop.trf.xlu0
      %v2335 = vpop.trf.xlu0
      %v2336 = vpop.trf.xlu0
      %v2337 = vpop.trf.xlu0
      %v2338 = vpop.trf.xlu0
      %v2339 = vpop.trf.xlu0
      %v2340 = vpop.trf.xlu0
      %v2341 = vpop.trf.xlu0
      %v2342 = vpop.trf.xlu0
      %v2343 = vpop.trf.xlu0
      %v2344 = vpop.trf.xlu0
      %v2345 = vpop.trf.xlu0
      %v2346 = vpop.trf.xlu0
      %2347 = vst [vmem:[%s1401 + $0x8] sm:$0xff] %v2331
      %2348 = vst [vmem:[%s1401 + $0x18] sm:$0xff] %v2332
      %2349 = vst [vmem:[%s1401 + $0x28] sm:$0xff] %v2333
      %2350 = vst [vmem:[%s1401 + $0x38] sm:$0xff] %v2334
      %2351 = vst [vmem:[%s1401 + $0x48] sm:$0xff] %v2335
      %2352 = vst [vmem:[%s1401 + $0x58] sm:$0xff] %v2336
      %2353 = vst [vmem:[%s1401 + $0x68] sm:$0xff] %v2337
      %2354 = vst [vmem:[%s1401 + $0x78] sm:$0xff] %v2338
      %2355 = vst [vmem:[%s1401 + $0x88] sm:$0xff] %v2339
      %2356 = vst [vmem:[%s1401 + $0x98] sm:$0xff] %v2340
      %2357 = vst [vmem:[%s1401 + $0xa8] sm:$0xff] %v2341
      %2358 = vst [vmem:[%s1401 + $0xb8] sm:$0xff] %v2342
      %2359 = vst [vmem:[%s1401 + $0xc8] sm:$0xff] %v2343
      %2360 = vst [vmem:[%s1401 + $0xd8] sm:$0xff] %v2344
      %2361 = vst [vmem:[%s1401 + $0xe8] sm:$0xff] %v2345
      %2362 = vst [vmem:[%s1401 + $0xf8] sm:$0xff] %v2346
      %s2363 = scalar_lea.vmem [#allocation2], 1025
      %v2364 = vld [vmem:[%s2363] ss:$8 sm:$0xf]
      %v2365 = vld [vmem:[%s2363] ss:$8 sm:$0xf0]
      %v2366 = vor.u32 %v2364, %v2365
      %s2367 = scalar_lea.vmem [#allocation2], 1089
      %v2368 = vld [vmem:[%s2367] ss:$8 sm:$0xf]
      %v2369 = vld [vmem:[%s2367] ss:$8 sm:$0xf0]
      %v2370 = vor.u32 %v2368, %v2369
      %s2371 = scalar_lea.vmem [#allocation2], 1153
      %v2372 = vld [vmem:[%s2371] ss:$8 sm:$0xf]
      %v2373 = vld [vmem:[%s2371] ss:$8 sm:$0xf0]
      %v2374 = vor.u32 %v2372, %v2373
      %s2375 = scalar_lea.vmem [#allocation2], 1217
      %v2376 = vld [vmem:[%s2375] ss:$8 sm:$0xf]
      %v2377 = vld [vmem:[%s2375] ss:$8 sm:$0xf0]
      %v2378 = vor.u32 %v2376, %v2377
      %s2379 = scalar_lea.vmem [#allocation2], 1281
      %v2380 = vld [vmem:[%s2379] ss:$8 sm:$0xf]
      %v2381 = vld [vmem:[%s2379] ss:$8 sm:$0xf0]
      %v2382 = vor.u32 %v2380, %v2381
      %s2383 = scalar_lea.vmem [#allocation2], 1345
      %v2384 = vld [vmem:[%s2383] ss:$8 sm:$0xf]
      %v2385 = vld [vmem:[%s2383] ss:$8 sm:$0xf0]
      %v2386 = vor.u32 %v2384, %v2385
      %s2387 = scalar_lea.vmem [#allocation2], 1409
      %v2388 = vld [vmem:[%s2387] ss:$8 sm:$0xf]
      %v2389 = vld [vmem:[%s2387] ss:$8 sm:$0xf0]
      %v2390 = vor.u32 %v2388, %v2389
      %s2391 = scalar_lea.vmem [#allocation2], 1473
      %v2392 = vld [vmem:[%s2391] ss:$8 sm:$0xf]
      %v2393 = vld [vmem:[%s2391] ss:$8 sm:$0xf0]
      %v2394 = vor.u32 %v2392, %v2393
      %s2395 = scalar_lea.vmem [#allocation2], 1537
      %v2396 = vld [vmem:[%s2395] ss:$8 sm:$0xf]
      %v2397 = vld [vmem:[%s2395] ss:$8 sm:$0xf0]
      %v2398 = vor.u32 %v2396, %v2397
      %s2399 = scalar_lea.vmem [#allocation2], 1601
      %v2400 = vld [vmem:[%s2399] ss:$8 sm:$0xf]
      %v2401 = vld [vmem:[%s2399] ss:$8 sm:$0xf0]
      %v2402 = vor.u32 %v2400, %v2401
      %s2403 = scalar_lea.vmem [#allocation2], 1665
      %v2404 = vld [vmem:[%s2403] ss:$8 sm:$0xf]
      %v2405 = vld [vmem:[%s2403] ss:$8 sm:$0xf0]
      %v2406 = vor.u32 %v2404, %v2405
      %s2407 = scalar_lea.vmem [#allocation2], 1729
      %v2408 = vld [vmem:[%s2407] ss:$8 sm:$0xf]
      %v2409 = vld [vmem:[%s2407] ss:$8 sm:$0xf0]
      %v2410 = vor.u32 %v2408, %v2409
      %s2411 = scalar_lea.vmem [#allocation2], 1793
      %v2412 = vld [vmem:[%s2411] ss:$8 sm:$0xf]
      %v2413 = vld [vmem:[%s2411] ss:$8 sm:$0xf0]
      %v2414 = vor.u32 %v2412, %v2413
      %s2415 = scalar_lea.vmem [#allocation2], 1857
      %v2416 = vld [vmem:[%s2415] ss:$8 sm:$0xf]
      %v2417 = vld [vmem:[%s2415] ss:$8 sm:$0xf0]
      %v2418 = vor.u32 %v2416, %v2417
      %s2419 = scalar_lea.vmem [#allocation2], 1921
      %v2420 = vld [vmem:[%s2419] ss:$8 sm:$0xf]
      %v2421 = vld [vmem:[%s2419] ss:$8 sm:$0xf0]
      %v2422 = vor.u32 %v2420, %v2421
      %s2423 = scalar_lea.vmem [#allocation2], 1985
      %v2424 = vld [vmem:[%s2423] ss:$8 sm:$0xf]
      %v2425 = vld [vmem:[%s2423] ss:$8 sm:$0xf0]
      %v2426 = vor.u32 %v2424, %v2425
      %2427 = vxpose.xlu0.b32.start [1/16] %v2366, 128
      %2428 = vxpose.xlu0.b32.cont [2/16] %v2370, 128
      %2429 = vxpose.xlu0.b32.cont [3/16] %v2374, 128
      %2430 = vxpose.xlu0.b32.cont [4/16] %v2378, 128
      %2431 = vxpose.xlu0.b32.cont [5/16] %v2382, 128
      %2432 = vxpose.xlu0.b32.cont [6/16] %v2386, 128
      %2433 = vxpose.xlu0.b32.cont [7/16] %v2390, 128
      %2434 = vxpose.xlu0.b32.cont [8/16] %v2394, 128
      %2435 = vxpose.xlu0.b32.cont [9/16] %v2398, 128
      %2436 = vxpose.xlu0.b32.cont [10/16] %v2402, 128
      %2437 = vxpose.xlu0.b32.cont [11/16] %v2406, 128
      %2438 = vxpose.xlu0.b32.cont [12/16] %v2410, 128
      %2439 = vxpose.xlu0.b32.cont [13/16] %v2414, 128
      %2440 = vxpose.xlu0.b32.cont [14/16] %v2418, 128
      %2441 = vxpose.xlu0.b32.cont [15/16] %v2422, 128
      %2442 = vxpose.xlu0.b32.end [16/16] %v2426, 128
      %v2443 = vpop.trf.xlu0
      %v2444 = vpop.trf.xlu0
      %v2445 = vpop.trf.xlu0
      %v2446 = vpop.trf.xlu0
      %v2447 = vpop.trf.xlu0
      %v2448 = vpop.trf.xlu0
      %v2449 = vpop.trf.xlu0
      %v2450 = vpop.trf.xlu0
      %v2451 = vpop.trf.xlu0
      %v2452 = vpop.trf.xlu0
      %v2453 = vpop.trf.xlu0
      %v2454 = vpop.trf.xlu0
      %v2455 = vpop.trf.xlu0
      %v2456 = vpop.trf.xlu0
      %v2457 = vpop.trf.xlu0
      %v2458 = vpop.trf.xlu0
      %2459 = vst [vmem:[%s1520 + $0x8] sm:$0xff] %v2443
      %2460 = vst [vmem:[%s1520 + $0x18] sm:$0xff] %v2444
      %2461 = vst [vmem:[%s1520 + $0x28] sm:$0xff] %v2445
      %2462 = vst [vmem:[%s1520 + $0x38] sm:$0xff] %v2446
      %2463 = vst [vmem:[%s1520 + $0x48] sm:$0xff] %v2447
      %2464 = vst [vmem:[%s1520 + $0x58] sm:$0xff] %v2448
      %2465 = vst [vmem:[%s1520 + $0x68] sm:$0xff] %v2449
      %2466 = vst [vmem:[%s1520 + $0x78] sm:$0xff] %v2450
      %2467 = vst [vmem:[%s1520 + $0x88] sm:$0xff] %v2451
      %2468 = vst [vmem:[%s1520 + $0x98] sm:$0xff] %v2452
      %2469 = vst [vmem:[%s1520 + $0xa8] sm:$0xff] %v2453
      %2470 = vst [vmem:[%s1520 + $0xb8] sm:$0xff] %v2454
      %2471 = vst [vmem:[%s1520 + $0xc8] sm:$0xff] %v2455
      %2472 = vst [vmem:[%s1520 + $0xd8] sm:$0xff] %v2456
      %2473 = vst [vmem:[%s1520 + $0xe8] sm:$0xff] %v2457
      %2474 = vst [vmem:[%s1520 + $0xf8] sm:$0xff] %v2458
      %s2475 = scalar_lea.vmem [#allocation2], 1026
      %v2476 = vld [vmem:[%s2475] ss:$8 sm:$0xf]
      %v2477 = vld [vmem:[%s2475] ss:$8 sm:$0xf0]
      %v2478 = vor.u32 %v2476, %v2477
      %s2479 = scalar_lea.vmem [#allocation2], 1090
      %v2480 = vld [vmem:[%s2479] ss:$8 sm:$0xf]
      %v2481 = vld [vmem:[%s2479] ss:$8 sm:$0xf0]
      %v2482 = vor.u32 %v2480, %v2481
      %s2483 = scalar_lea.vmem [#allocation2], 1154
      %v2484 = vld [vmem:[%s2483] ss:$8 sm:$0xf]
      %v2485 = vld [vmem:[%s2483] ss:$8 sm:$0xf0]
      %v2486 = vor.u32 %v2484, %v2485
      %s2487 = scalar_lea.vmem [#allocation2], 1218
      %v2488 = vld [vmem:[%s2487] ss:$8 sm:$0xf]
      %v2489 = vld [vmem:[%s2487] ss:$8 sm:$0xf0]
      %v2490 = vor.u32 %v2488, %v2489
      %s2491 = scalar_lea.vmem [#allocation2], 1282
      %v2492 = vld [vmem:[%s2491] ss:$8 sm:$0xf]
      %v2493 = vld [vmem:[%s2491] ss:$8 sm:$0xf0]
      %v2494 = vor.u32 %v2492, %v2493
      %s2495 = scalar_lea.vmem [#allocation2], 1346
      %v2496 = vld [vmem:[%s2495] ss:$8 sm:$0xf]
      %v2497 = vld [vmem:[%s2495] ss:$8 sm:$0xf0]
      %v2498 = vor.u32 %v2496, %v2497
      %s2499 = scalar_lea.vmem [#allocation2], 1410
      %v2500 = vld [vmem:[%s2499] ss:$8 sm:$0xf]
      %v2501 = vld [vmem:[%s2499] ss:$8 sm:$0xf0]
      %v2502 = vor.u32 %v2500, %v2501
      %s2503 = scalar_lea.vmem [#allocation2], 1474
      %v2504 = vld [vmem:[%s2503] ss:$8 sm:$0xf]
      %v2505 = vld [vmem:[%s2503] ss:$8 sm:$0xf0]
      %v2506 = vor.u32 %v2504, %v2505
      %s2507 = scalar_lea.vmem [#allocation2], 1538
      %v2508 = vld [vmem:[%s2507] ss:$8 sm:$0xf]
      %v2509 = vld [vmem:[%s2507] ss:$8 sm:$0xf0]
      %v2510 = vor.u32 %v2508, %v2509
      %s2511 = scalar_lea.vmem [#allocation2], 1602
      %v2512 = vld [vmem:[%s2511] ss:$8 sm:$0xf]
      %v2513 = vld [vmem:[%s2511] ss:$8 sm:$0xf0]
      %v2514 = vor.u32 %v2512, %v2513
      %s2515 = scalar_lea.vmem [#allocation2], 1666
      %v2516 = vld [vmem:[%s2515] ss:$8 sm:$0xf]
      %v2517 = vld [vmem:[%s2515] ss:$8 sm:$0xf0]
      %v2518 = vor.u32 %v2516, %v2517
      %s2519 = scalar_lea.vmem [#allocation2], 1730
      %v2520 = vld [vmem:[%s2519] ss:$8 sm:$0xf]
      %v2521 = vld [vmem:[%s2519] ss:$8 sm:$0xf0]
      %v2522 = vor.u32 %v2520, %v2521
      %s2523 = scalar_lea.vmem [#allocation2], 1794
      %v2524 = vld [vmem:[%s2523] ss:$8 sm:$0xf]
      %v2525 = vld [vmem:[%s2523] ss:$8 sm:$0xf0]
      %v2526 = vor.u32 %v2524, %v2525
      %s2527 = scalar_lea.vmem [#allocation2], 1858
      %v2528 = vld [vmem:[%s2527] ss:$8 sm:$0xf]
      %v2529 = vld [vmem:[%s2527] ss:$8 sm:$0xf0]
      %v2530 = vor.u32 %v2528, %v2529
      %s2531 = scalar_lea.vmem [#allocation2], 1922
      %v2532 = vld [vmem:[%s2531] ss:$8 sm:$0xf]
      %v2533 = vld [vmem:[%s2531] ss:$8 sm:$0xf0]
      %v2534 = vor.u32 %v2532, %v2533
      %s2535 = scalar_lea.vmem [#allocation2], 1986
      %v2536 = vld [vmem:[%s2535] ss:$8 sm:$0xf]
      %v2537 = vld [vmem:[%s2535] ss:$8 sm:$0xf0]
      %v2538 = vor.u32 %v2536, %v2537
      %2539 = vxpose.xlu0.b32.start [1/16] %v2478, 128
      %2540 = vxpose.xlu0.b32.cont [2/16] %v2482, 128
      %2541 = vxpose.xlu0.b32.cont [3/16] %v2486, 128
      %2542 = vxpose.xlu0.b32.cont [4/16] %v2490, 128
      %2543 = vxpose.xlu0.b32.cont [5/16] %v2494, 128
      %2544 = vxpose.xlu0.b32.cont [6/16] %v2498, 128
      %2545 = vxpose.xlu0.b32.cont [7/16] %v2502, 128
      %2546 = vxpose.xlu0.b32.cont [8/16] %v2506, 128
      %2547 = vxpose.xlu0.b32.cont [9/16] %v2510, 128
      %2548 = vxpose.xlu0.b32.cont [10/16] %v2514, 128
      %2549 = vxpose.xlu0.b32.cont [11/16] %v2518, 128
      %2550 = vxpose.xlu0.b32.cont [12/16] %v2522, 128
      %2551 = vxpose.xlu0.b32.cont [13/16] %v2526, 128
      %2552 = vxpose.xlu0.b32.cont [14/16] %v2530, 128
      %2553 = vxpose.xlu0.b32.cont [15/16] %v2534, 128
      %2554 = vxpose.xlu0.b32.end [16/16] %v2538, 128
      %v2555 = vpop.trf.xlu0
      %v2556 = vpop.trf.xlu0
      %v2557 = vpop.trf.xlu0
      %v2558 = vpop.trf.xlu0
      %v2559 = vpop.trf.xlu0
      %v2560 = vpop.trf.xlu0
      %v2561 = vpop.trf.xlu0
      %v2562 = vpop.trf.xlu0
      %v2563 = vpop.trf.xlu0
      %v2564 = vpop.trf.xlu0
      %v2565 = vpop.trf.xlu0
      %v2566 = vpop.trf.xlu0
      %v2567 = vpop.trf.xlu0
      %v2568 = vpop.trf.xlu0
      %v2569 = vpop.trf.xlu0
      %v2570 = vpop.trf.xlu0
      %2571 = vst [vmem:[%s1639 + $0x8] sm:$0xff] %v2555
      %2572 = vst [vmem:[%s1639 + $0x18] sm:$0xff] %v2556
      %2573 = vst [vmem:[%s1639 + $0x28] sm:$0xff] %v2557
      %2574 = vst [vmem:[%s1639 + $0x38] sm:$0xff] %v2558
      %2575 = vst [vmem:[%s1639 + $0x48] sm:$0xff] %v2559
      %2576 = vst [vmem:[%s1639 + $0x58] sm:$0xff] %v2560
      %2577 = vst [vmem:[%s1639 + $0x68] sm:$0xff] %v2561
      %2578 = vst [vmem:[%s1639 + $0x78] sm:$0xff] %v2562
      %2579 = vst [vmem:[%s1639 + $0x88] sm:$0xff] %v2563
      %2580 = vst [vmem:[%s1639 + $0x98] sm:$0xff] %v2564
      %2581 = vst [vmem:[%s1639 + $0xa8] sm:$0xff] %v2565
      %2582 = vst [vmem:[%s1639 + $0xb8] sm:$0xff] %v2566
      %2583 = vst [vmem:[%s1639 + $0xc8] sm:$0xff] %v2567
      %2584 = vst [vmem:[%s1639 + $0xd8] sm:$0xff] %v2568
      %2585 = vst [vmem:[%s1639 + $0xe8] sm:$0xff] %v2569
      %2586 = vst [vmem:[%s1639 + $0xf8] sm:$0xff] %v2570
      %s2587 = scalar_lea.vmem [#allocation2], 1027
      %v2588 = vld [vmem:[%s2587] ss:$8 sm:$0xf]
      %v2589 = vld [vmem:[%s2587] ss:$8 sm:$0xf0]
      %v2590 = vor.u32 %v2588, %v2589
      %s2591 = scalar_lea.vmem [#allocation2], 1091
      %v2592 = vld [vmem:[%s2591] ss:$8 sm:$0xf]
      %v2593 = vld [vmem:[%s2591] ss:$8 sm:$0xf0]
      %v2594 = vor.u32 %v2592, %v2593
      %s2595 = scalar_lea.vmem [#allocation2], 1155
      %v2596 = vld [vmem:[%s2595] ss:$8 sm:$0xf]
      %v2597 = vld [vmem:[%s2595] ss:$8 sm:$0xf0]
      %v2598 = vor.u32 %v2596, %v2597
      %s2599 = scalar_lea.vmem [#allocation2], 1219
      %v2600 = vld [vmem:[%s2599] ss:$8 sm:$0xf]
      %v2601 = vld [vmem:[%s2599] ss:$8 sm:$0xf0]
      %v2602 = vor.u32 %v2600, %v2601
      %s2603 = scalar_lea.vmem [#allocation2], 1283
      %v2604 = vld [vmem:[%s2603] ss:$8 sm:$0xf]
      %v2605 = vld [vmem:[%s2603] ss:$8 sm:$0xf0]
      %v2606 = vor.u32 %v2604, %v2605
      %s2607 = scalar_lea.vmem [#allocation2], 1347
      %v2608 = vld [vmem:[%s2607] ss:$8 sm:$0xf]
      %v2609 = vld [vmem:[%s2607] ss:$8 sm:$0xf0]
      %v2610 = vor.u32 %v2608, %v2609
      %s2611 = scalar_lea.vmem [#allocation2], 1411
      %v2612 = vld [vmem:[%s2611] ss:$8 sm:$0xf]
      %v2613 = vld [vmem:[%s2611] ss:$8 sm:$0xf0]
      %v2614 = vor.u32 %v2612, %v2613
      %s2615 = scalar_lea.vmem [#allocation2], 1475
      %v2616 = vld [vmem:[%s2615] ss:$8 sm:$0xf]
      %v2617 = vld [vmem:[%s2615] ss:$8 sm:$0xf0]
      %v2618 = vor.u32 %v2616, %v2617
      %s2619 = scalar_lea.vmem [#allocation2], 1539
      %v2620 = vld [vmem:[%s2619] ss:$8 sm:$0xf]
      %v2621 = vld [vmem:[%s2619] ss:$8 sm:$0xf0]
      %v2622 = vor.u32 %v2620, %v2621
      %s2623 = scalar_lea.vmem [#allocation2], 1603
      %v2624 = vld [vmem:[%s2623] ss:$8 sm:$0xf]
      %v2625 = vld [vmem:[%s2623] ss:$8 sm:$0xf0]
      %v2626 = vor.u32 %v2624, %v2625
      %s2627 = scalar_lea.vmem [#allocation2], 1667
      %v2628 = vld [vmem:[%s2627] ss:$8 sm:$0xf]
      %v2629 = vld [vmem:[%s2627] ss:$8 sm:$0xf0]
      %v2630 = vor.u32 %v2628, %v2629
      %s2631 = scalar_lea.vmem [#allocation2], 1731
      %v2632 = vld [vmem:[%s2631] ss:$8 sm:$0xf]
      %v2633 = vld [vmem:[%s2631] ss:$8 sm:$0xf0]
      %v2634 = vor.u32 %v2632, %v2633
      %s2635 = scalar_lea.vmem [#allocation2], 1795
      %v2636 = vld [vmem:[%s2635] ss:$8 sm:$0xf]
      %v2637 = vld [vmem:[%s2635] ss:$8 sm:$0xf0]
      %v2638 = vor.u32 %v2636, %v2637
      %s2639 = scalar_lea.vmem [#allocation2], 1859
      %v2640 = vld [vmem:[%s2639] ss:$8 sm:$0xf]
      %v2641 = vld [vmem:[%s2639] ss:$8 sm:$0xf0]
      %v2642 = vor.u32 %v2640, %v2641
      %s2643 = scalar_lea.vmem [#allocation2], 1923
      %v2644 = vld [vmem:[%s2643] ss:$8 sm:$0xf]
      %v2645 = vld [vmem:[%s2643] ss:$8 sm:$0xf0]
      %v2646 = vor.u32 %v2644, %v2645
      %s2647 = scalar_lea.vmem [#allocation2], 1987
      %v2648 = vld [vmem:[%s2647] ss:$8 sm:$0xf]
      %v2649 = vld [vmem:[%s2647] ss:$8 sm:$0xf0]
      %v2650 = vor.u32 %v2648, %v2649
      %2651 = vxpose.xlu0.b32.start [1/16] %v2590, 128
      %2652 = vxpose.xlu0.b32.cont [2/16] %v2594, 128
      %2653 = vxpose.xlu0.b32.cont [3/16] %v2598, 128
      %2654 = vxpose.xlu0.b32.cont [4/16] %v2602, 128
      %2655 = vxpose.xlu0.b32.cont [5/16] %v2606, 128
      %2656 = vxpose.xlu0.b32.cont [6/16] %v2610, 128
      %2657 = vxpose.xlu0.b32.cont [7/16] %v2614, 128
      %2658 = vxpose.xlu0.b32.cont [8/16] %v2618, 128
      %2659 = vxpose.xlu0.b32.cont [9/16] %v2622, 128
      %2660 = vxpose.xlu0.b32.cont [10/16] %v2626, 128
      %2661 = vxpose.xlu0.b32.cont [11/16] %v2630, 128
      %2662 = vxpose.xlu0.b32.cont [12/16] %v2634, 128
      %2663 = vxpose.xlu0.b32.cont [13/16] %v2638, 128
      %2664 = vxpose.xlu0.b32.cont [14/16] %v2642, 128
      %2665 = vxpose.xlu0.b32.cont [15/16] %v2646, 128
      %2666 = vxpose.xlu0.b32.end [16/16] %v2650, 128
      %v2667 = vpop.trf.xlu0
      %v2668 = vpop.trf.xlu0
      %v2669 = vpop.trf.xlu0
      %v2670 = vpop.trf.xlu0
      %v2671 = vpop.trf.xlu0
      %v2672 = vpop.trf.xlu0
      %v2673 = vpop.trf.xlu0
      %v2674 = vpop.trf.xlu0
      %v2675 = vpop.trf.xlu0
      %v2676 = vpop.trf.xlu0
      %v2677 = vpop.trf.xlu0
      %v2678 = vpop.trf.xlu0
      %v2679 = vpop.trf.xlu0
      %v2680 = vpop.trf.xlu0
      %v2681 = vpop.trf.xlu0
      %v2682 = vpop.trf.xlu0
      %2683 = vst [vmem:[%s1758 + $0x8] sm:$0xff] %v2667
      %2684 = vst [vmem:[%s1758 + $0x18] sm:$0xff] %v2668
      %2685 = vst [vmem:[%s1758 + $0x28] sm:$0xff] %v2669
      %2686 = vst [vmem:[%s1758 + $0x38] sm:$0xff] %v2670
      %2687 = vst [vmem:[%s1758 + $0x48] sm:$0xff] %v2671
      %2688 = vst [vmem:[%s1758 + $0x58] sm:$0xff] %v2672
      %2689 = vst [vmem:[%s1758 + $0x68] sm:$0xff] %v2673
      %2690 = vst [vmem:[%s1758 + $0x78] sm:$0xff] %v2674
      %2691 = vst [vmem:[%s1758 + $0x88] sm:$0xff] %v2675
      %2692 = vst [vmem:[%s1758 + $0x98] sm:$0xff] %v2676
      %2693 = vst [vmem:[%s1758 + $0xa8] sm:$0xff] %v2677
      %2694 = vst [vmem:[%s1758 + $0xb8] sm:$0xff] %v2678
      %2695 = vst [vmem:[%s1758 + $0xc8] sm:$0xff] %v2679
      %2696 = vst [vmem:[%s1758 + $0xd8] sm:$0xff] %v2680
      %2697 = vst [vmem:[%s1758 + $0xe8] sm:$0xff] %v2681
      %2698 = vst [vmem:[%s1758 + $0xf8] sm:$0xff] %v2682
      %s2699 = scalar_lea.vmem [#allocation2], 1028
      %v2700 = vld [vmem:[%s2699] ss:$8 sm:$0xf]
      %v2701 = vld [vmem:[%s2699] ss:$8 sm:$0xf0]
      %v2702 = vor.u32 %v2700, %v2701
      %s2703 = scalar_lea.vmem [#allocation2], 1092
      %v2704 = vld [vmem:[%s2703] ss:$8 sm:$0xf]
      %v2705 = vld [vmem:[%s2703] ss:$8 sm:$0xf0]
      %v2706 = vor.u32 %v2704, %v2705
      %s2707 = scalar_lea.vmem [#allocation2], 1156
      %v2708 = vld [vmem:[%s2707] ss:$8 sm:$0xf]
      %v2709 = vld [vmem:[%s2707] ss:$8 sm:$0xf0]
      %v2710 = vor.u32 %v2708, %v2709
      %s2711 = scalar_lea.vmem [#allocation2], 1220
      %v2712 = vld [vmem:[%s2711] ss:$8 sm:$0xf]
      %v2713 = vld [vmem:[%s2711] ss:$8 sm:$0xf0]
      %v2714 = vor.u32 %v2712, %v2713
      %s2715 = scalar_lea.vmem [#allocation2], 1284
      %v2716 = vld [vmem:[%s2715] ss:$8 sm:$0xf]
      %v2717 = vld [vmem:[%s2715] ss:$8 sm:$0xf0]
      %v2718 = vor.u32 %v2716, %v2717
      %s2719 = scalar_lea.vmem [#allocation2], 1348
      %v2720 = vld [vmem:[%s2719] ss:$8 sm:$0xf]
      %v2721 = vld [vmem:[%s2719] ss:$8 sm:$0xf0]
      %v2722 = vor.u32 %v2720, %v2721
      %s2723 = scalar_lea.vmem [#allocation2], 1412
      %v2724 = vld [vmem:[%s2723] ss:$8 sm:$0xf]
      %v2725 = vld [vmem:[%s2723] ss:$8 sm:$0xf0]
      %v2726 = vor.u32 %v2724, %v2725
      %s2727 = scalar_lea.vmem [#allocation2], 1476
      %v2728 = vld [vmem:[%s2727] ss:$8 sm:$0xf]
      %v2729 = vld [vmem:[%s2727] ss:$8 sm:$0xf0]
      %v2730 = vor.u32 %v2728, %v2729
      %s2731 = scalar_lea.vmem [#allocation2], 1540
      %v2732 = vld [vmem:[%s2731] ss:$8 sm:$0xf]
      %v2733 = vld [vmem:[%s2731] ss:$8 sm:$0xf0]
      %v2734 = vor.u32 %v2732, %v2733
      %s2735 = scalar_lea.vmem [#allocation2], 1604
      %v2736 = vld [vmem:[%s2735] ss:$8 sm:$0xf]
      %v2737 = vld [vmem:[%s2735] ss:$8 sm:$0xf0]
      %v2738 = vor.u32 %v2736, %v2737
      %s2739 = scalar_lea.vmem [#allocation2], 1668
      %v2740 = vld [vmem:[%s2739] ss:$8 sm:$0xf]
      %v2741 = vld [vmem:[%s2739] ss:$8 sm:$0xf0]
      %v2742 = vor.u32 %v2740, %v2741
      %s2743 = scalar_lea.vmem [#allocation2], 1732
      %v2744 = vld [vmem:[%s2743] ss:$8 sm:$0xf]
      %v2745 = vld [vmem:[%s2743] ss:$8 sm:$0xf0]
      %v2746 = vor.u32 %v2744, %v2745
      %s2747 = scalar_lea.vmem [#allocation2], 1796
      %v2748 = vld [vmem:[%s2747] ss:$8 sm:$0xf]
      %v2749 = vld [vmem:[%s2747] ss:$8 sm:$0xf0]
      %v2750 = vor.u32 %v2748, %v2749
      %s2751 = scalar_lea.vmem [#allocation2], 1860
      %v2752 = vld [vmem:[%s2751] ss:$8 sm:$0xf]
      %v2753 = vld [vmem:[%s2751] ss:$8 sm:$0xf0]
      %v2754 = vor.u32 %v2752, %v2753
      %s2755 = scalar_lea.vmem [#allocation2], 1924
      %v2756 = vld [vmem:[%s2755] ss:$8 sm:$0xf]
      %v2757 = vld [vmem:[%s2755] ss:$8 sm:$0xf0]
      %v2758 = vor.u32 %v2756, %v2757
      %s2759 = scalar_lea.vmem [#allocation2], 1988
      %v2760 = vld [vmem:[%s2759] ss:$8 sm:$0xf]
      %v2761 = vld [vmem:[%s2759] ss:$8 sm:$0xf0]
      %v2762 = vor.u32 %v2760, %v2761
      %2763 = vxpose.xlu0.b32.start [1/16] %v2702, 128
      %2764 = vxpose.xlu0.b32.cont [2/16] %v2706, 128
      %2765 = vxpose.xlu0.b32.cont [3/16] %v2710, 128
      %2766 = vxpose.xlu0.b32.cont [4/16] %v2714, 128
      %2767 = vxpose.xlu0.b32.cont [5/16] %v2718, 128
      %2768 = vxpose.xlu0.b32.cont [6/16] %v2722, 128
      %2769 = vxpose.xlu0.b32.cont [7/16] %v2726, 128
      %2770 = vxpose.xlu0.b32.cont [8/16] %v2730, 128
      %2771 = vxpose.xlu0.b32.cont [9/16] %v2734, 128
      %2772 = vxpose.xlu0.b32.cont [10/16] %v2738, 128
      %2773 = vxpose.xlu0.b32.cont [11/16] %v2742, 128
      %2774 = vxpose.xlu0.b32.cont [12/16] %v2746, 128
      %2775 = vxpose.xlu0.b32.cont [13/16] %v2750, 128
      %2776 = vxpose.xlu0.b32.cont [14/16] %v2754, 128
      %2777 = vxpose.xlu0.b32.cont [15/16] %v2758, 128
      %2778 = vxpose.xlu0.b32.end [16/16] %v2762, 128
      %v2779 = vpop.trf.xlu0
      %v2780 = vpop.trf.xlu0
      %v2781 = vpop.trf.xlu0
      %v2782 = vpop.trf.xlu0
      %v2783 = vpop.trf.xlu0
      %v2784 = vpop.trf.xlu0
      %v2785 = vpop.trf.xlu0
      %v2786 = vpop.trf.xlu0
      %v2787 = vpop.trf.xlu0
      %v2788 = vpop.trf.xlu0
      %v2789 = vpop.trf.xlu0
      %v2790 = vpop.trf.xlu0
      %v2791 = vpop.trf.xlu0
      %v2792 = vpop.trf.xlu0
      %v2793 = vpop.trf.xlu0
      %v2794 = vpop.trf.xlu0
      %2795 = vst [vmem:[%s1877 + $0x8] sm:$0xff] %v2779
      %2796 = vst [vmem:[%s1877 + $0x18] sm:$0xff] %v2780
      %2797 = vst [vmem:[%s1877 + $0x28] sm:$0xff] %v2781
      %2798 = vst [vmem:[%s1877 + $0x38] sm:$0xff] %v2782
      %2799 = vst [vmem:[%s1877 + $0x48] sm:$0xff] %v2783
      %2800 = vst [vmem:[%s1877 + $0x58] sm:$0xff] %v2784
      %2801 = vst [vmem:[%s1877 + $0x68] sm:$0xff] %v2785
      %2802 = vst [vmem:[%s1877 + $0x78] sm:$0xff] %v2786
      %2803 = vst [vmem:[%s1877 + $0x88] sm:$0xff] %v2787
      %2804 = vst [vmem:[%s1877 + $0x98] sm:$0xff] %v2788
      %2805 = vst [vmem:[%s1877 + $0xa8] sm:$0xff] %v2789
      %2806 = vst [vmem:[%s1877 + $0xb8] sm:$0xff] %v2790
      %2807 = vst [vmem:[%s1877 + $0xc8] sm:$0xff] %v2791
      %2808 = vst [vmem:[%s1877 + $0xd8] sm:$0xff] %v2792
      %2809 = vst [vmem:[%s1877 + $0xe8] sm:$0xff] %v2793
      %2810 = vst [vmem:[%s1877 + $0xf8] sm:$0xff] %v2794
      %s2811 = scalar_lea.vmem [#allocation2], 1029
      %v2812 = vld [vmem:[%s2811] ss:$8 sm:$0xf]
      %v2813 = vld [vmem:[%s2811] ss:$8 sm:$0xf0]
      %v2814 = vor.u32 %v2812, %v2813
      %s2815 = scalar_lea.vmem [#allocation2], 1093
      %v2816 = vld [vmem:[%s2815] ss:$8 sm:$0xf]
      %v2817 = vld [vmem:[%s2815] ss:$8 sm:$0xf0]
      %v2818 = vor.u32 %v2816, %v2817
      %s2819 = scalar_lea.vmem [#allocation2], 1157
      %v2820 = vld [vmem:[%s2819] ss:$8 sm:$0xf]
      %v2821 = vld [vmem:[%s2819] ss:$8 sm:$0xf0]
      %v2822 = vor.u32 %v2820, %v2821
      %s2823 = scalar_lea.vmem [#allocation2], 1221
      %v2824 = vld [vmem:[%s2823] ss:$8 sm:$0xf]
      %v2825 = vld [vmem:[%s2823] ss:$8 sm:$0xf0]
      %v2826 = vor.u32 %v2824, %v2825
      %s2827 = scalar_lea.vmem [#allocation2], 1285
      %v2828 = vld [vmem:[%s2827] ss:$8 sm:$0xf]
      %v2829 = vld [vmem:[%s2827] ss:$8 sm:$0xf0]
      %v2830 = vor.u32 %v2828, %v2829
      %s2831 = scalar_lea.vmem [#allocation2], 1349
      %v2832 = vld [vmem:[%s2831] ss:$8 sm:$0xf]
      %v2833 = vld [vmem:[%s2831] ss:$8 sm:$0xf0]
      %v2834 = vor.u32 %v2832, %v2833
      %s2835 = scalar_lea.vmem [#allocation2], 1413
      %v2836 = vld [vmem:[%s2835] ss:$8 sm:$0xf]
      %v2837 = vld [vmem:[%s2835] ss:$8 sm:$0xf0]
      %v2838 = vor.u32 %v2836, %v2837
      %s2839 = scalar_lea.vmem [#allocation2], 1477
      %v2840 = vld [vmem:[%s2839] ss:$8 sm:$0xf]
      %v2841 = vld [vmem:[%s2839] ss:$8 sm:$0xf0]
      %v2842 = vor.u32 %v2840, %v2841
      %s2843 = scalar_lea.vmem [#allocation2], 1541
      %v2844 = vld [vmem:[%s2843] ss:$8 sm:$0xf]
      %v2845 = vld [vmem:[%s2843] ss:$8 sm:$0xf0]
      %v2846 = vor.u32 %v2844, %v2845
      %s2847 = scalar_lea.vmem [#allocation2], 1605
      %v2848 = vld [vmem:[%s2847] ss:$8 sm:$0xf]
      %v2849 = vld [vmem:[%s2847] ss:$8 sm:$0xf0]
      %v2850 = vor.u32 %v2848, %v2849
      %s2851 = scalar_lea.vmem [#allocation2], 1669
      %v2852 = vld [vmem:[%s2851] ss:$8 sm:$0xf]
      %v2853 = vld [vmem:[%s2851] ss:$8 sm:$0xf0]
      %v2854 = vor.u32 %v2852, %v2853
      %s2855 = scalar_lea.vmem [#allocation2], 1733
      %v2856 = vld [vmem:[%s2855] ss:$8 sm:$0xf]
      %v2857 = vld [vmem:[%s2855] ss:$8 sm:$0xf0]
      %v2858 = vor.u32 %v2856, %v2857
      %s2859 = scalar_lea.vmem [#allocation2], 1797
      %v2860 = vld [vmem:[%s2859] ss:$8 sm:$0xf]
      %v2861 = vld [vmem:[%s2859] ss:$8 sm:$0xf0]
      %v2862 = vor.u32 %v2860, %v2861
      %s2863 = scalar_lea.vmem [#allocation2], 1861
      %v2864 = vld [vmem:[%s2863] ss:$8 sm:$0xf]
      %v2865 = vld [vmem:[%s2863] ss:$8 sm:$0xf0]
      %v2866 = vor.u32 %v2864, %v2865
      %s2867 = scalar_lea.vmem [#allocation2], 1925
      %v2868 = vld [vmem:[%s2867] ss:$8 sm:$0xf]
      %v2869 = vld [vmem:[%s2867] ss:$8 sm:$0xf0]
      %v2870 = vor.u32 %v2868, %v2869
      %s2871 = scalar_lea.vmem [#allocation2], 1989
      %v2872 = vld [vmem:[%s2871] ss:$8 sm:$0xf]
      %v2873 = vld [vmem:[%s2871] ss:$8 sm:$0xf0]
      %v2874 = vor.u32 %v2872, %v2873
      %2875 = vxpose.xlu0.b32.start [1/16] %v2814, 128
      %2876 = vxpose.xlu0.b32.cont [2/16] %v2818, 128
      %2877 = vxpose.xlu0.b32.cont [3/16] %v2822, 128
      %2878 = vxpose.xlu0.b32.cont [4/16] %v2826, 128
      %2879 = vxpose.xlu0.b32.cont [5/16] %v2830, 128
      %2880 = vxpose.xlu0.b32.cont [6/16] %v2834, 128
      %2881 = vxpose.xlu0.b32.cont [7/16] %v2838, 128
      %2882 = vxpose.xlu0.b32.cont [8/16] %v2842, 128
      %2883 = vxpose.xlu0.b32.cont [9/16] %v2846, 128
      %2884 = vxpose.xlu0.b32.cont [10/16] %v2850, 128
      %2885 = vxpose.xlu0.b32.cont [11/16] %v2854, 128
      %2886 = vxpose.xlu0.b32.cont [12/16] %v2858, 128
      %2887 = vxpose.xlu0.b32.cont [13/16] %v2862, 128
      %2888 = vxpose.xlu0.b32.cont [14/16] %v2866, 128
      %2889 = vxpose.xlu0.b32.cont [15/16] %v2870, 128
      %2890 = vxpose.xlu0.b32.end [16/16] %v2874, 128
      %v2891 = vpop.trf.xlu0
      %v2892 = vpop.trf.xlu0
      %v2893 = vpop.trf.xlu0
      %v2894 = vpop.trf.xlu0
      %v2895 = vpop.trf.xlu0
      %v2896 = vpop.trf.xlu0
      %v2897 = vpop.trf.xlu0
      %v2898 = vpop.trf.xlu0
      %v2899 = vpop.trf.xlu0
      %v2900 = vpop.trf.xlu0
      %v2901 = vpop.trf.xlu0
      %v2902 = vpop.trf.xlu0
      %v2903 = vpop.trf.xlu0
      %v2904 = vpop.trf.xlu0
      %v2905 = vpop.trf.xlu0
      %v2906 = vpop.trf.xlu0
      %2907 = vst [vmem:[%s1996 + $0x8] sm:$0xff] %v2891
      %2908 = vst [vmem:[%s1996 + $0x18] sm:$0xff] %v2892
      %2909 = vst [vmem:[%s1996 + $0x28] sm:$0xff] %v2893
      %2910 = vst [vmem:[%s1996 + $0x38] sm:$0xff] %v2894
      %2911 = vst [vmem:[%s1996 + $0x48] sm:$0xff] %v2895
      %2912 = vst [vmem:[%s1996 + $0x58] sm:$0xff] %v2896
      %2913 = vst [vmem:[%s1996 + $0x68] sm:$0xff] %v2897
      %2914 = vst [vmem:[%s1996 + $0x78] sm:$0xff] %v2898
      %2915 = vst [vmem:[%s1996 + $0x88] sm:$0xff] %v2899
      %2916 = vst [vmem:[%s1996 + $0x98] sm:$0xff] %v2900
      %2917 = vst [vmem:[%s1996 + $0xa8] sm:$0xff] %v2901
      %2918 = vst [vmem:[%s1996 + $0xb8] sm:$0xff] %v2902
      %2919 = vst [vmem:[%s1996 + $0xc8] sm:$0xff] %v2903
      %2920 = vst [vmem:[%s1996 + $0xd8] sm:$0xff] %v2904
      %2921 = vst [vmem:[%s1996 + $0xe8] sm:$0xff] %v2905
      %2922 = vst [vmem:[%s1996 + $0xf8] sm:$0xff] %v2906
      %s2923 = scalar_lea.vmem [#allocation2], 1030
      %v2924 = vld [vmem:[%s2923] ss:$8 sm:$0xf]
      %v2925 = vld [vmem:[%s2923] ss:$8 sm:$0xf0]
      %v2926 = vor.u32 %v2924, %v2925
      %s2927 = scalar_lea.vmem [#allocation2], 1094
      %v2928 = vld [vmem:[%s2927] ss:$8 sm:$0xf]
      %v2929 = vld [vmem:[%s2927] ss:$8 sm:$0xf0]
      %v2930 = vor.u32 %v2928, %v2929
      %s2931 = scalar_lea.vmem [#allocation2], 1158
      %v2932 = vld [vmem:[%s2931] ss:$8 sm:$0xf]
      %v2933 = vld [vmem:[%s2931] ss:$8 sm:$0xf0]
      %v2934 = vor.u32 %v2932, %v2933
      %s2935 = scalar_lea.vmem [#allocation2], 1222
      %v2936 = vld [vmem:[%s2935] ss:$8 sm:$0xf]
      %v2937 = vld [vmem:[%s2935] ss:$8 sm:$0xf0]
      %v2938 = vor.u32 %v2936, %v2937
      %s2939 = scalar_lea.vmem [#allocation2], 1286
      %v2940 = vld [vmem:[%s2939] ss:$8 sm:$0xf]
      %v2941 = vld [vmem:[%s2939] ss:$8 sm:$0xf0]
      %v2942 = vor.u32 %v2940, %v2941
      %s2943 = scalar_lea.vmem [#allocation2], 1350
      %v2944 = vld [vmem:[%s2943] ss:$8 sm:$0xf]
      %v2945 = vld [vmem:[%s2943] ss:$8 sm:$0xf0]
      %v2946 = vor.u32 %v2944, %v2945
      %s2947 = scalar_lea.vmem [#allocation2], 1414
      %v2948 = vld [vmem:[%s2947] ss:$8 sm:$0xf]
      %v2949 = vld [vmem:[%s2947] ss:$8 sm:$0xf0]
      %v2950 = vor.u32 %v2948, %v2949
      %s2951 = scalar_lea.vmem [#allocation2], 1478
      %v2952 = vld [vmem:[%s2951] ss:$8 sm:$0xf]
      %v2953 = vld [vmem:[%s2951] ss:$8 sm:$0xf0]
      %v2954 = vor.u32 %v2952, %v2953
      %s2955 = scalar_lea.vmem [#allocation2], 1542
      %v2956 = vld [vmem:[%s2955] ss:$8 sm:$0xf]
      %v2957 = vld [vmem:[%s2955] ss:$8 sm:$0xf0]
      %v2958 = vor.u32 %v2956, %v2957
      %s2959 = scalar_lea.vmem [#allocation2], 1606
      %v2960 = vld [vmem:[%s2959] ss:$8 sm:$0xf]
      %v2961 = vld [vmem:[%s2959] ss:$8 sm:$0xf0]
      %v2962 = vor.u32 %v2960, %v2961
      %s2963 = scalar_lea.vmem [#allocation2], 1670
      %v2964 = vld [vmem:[%s2963] ss:$8 sm:$0xf]
      %v2965 = vld [vmem:[%s2963] ss:$8 sm:$0xf0]
      %v2966 = vor.u32 %v2964, %v2965
      %s2967 = scalar_lea.vmem [#allocation2], 1734
      %v2968 = vld [vmem:[%s2967] ss:$8 sm:$0xf]
      %v2969 = vld [vmem:[%s2967] ss:$8 sm:$0xf0]
      %v2970 = vor.u32 %v2968, %v2969
      %s2971 = scalar_lea.vmem [#allocation2], 1798
      %v2972 = vld [vmem:[%s2971] ss:$8 sm:$0xf]
      %v2973 = vld [vmem:[%s2971] ss:$8 sm:$0xf0]
      %v2974 = vor.u32 %v2972, %v2973
      %s2975 = scalar_lea.vmem [#allocation2], 1862
      %v2976 = vld [vmem:[%s2975] ss:$8 sm:$0xf]
      %v2977 = vld [vmem:[%s2975] ss:$8 sm:$0xf0]
      %v2978 = vor.u32 %v2976, %v2977
      %s2979 = scalar_lea.vmem [#allocation2], 1926
      %v2980 = vld [vmem:[%s2979] ss:$8 sm:$0xf]
      %v2981 = vld [vmem:[%s2979] ss:$8 sm:$0xf0]
      %v2982 = vor.u32 %v2980, %v2981
      %s2983 = scalar_lea.vmem [#allocation2], 1990
      %v2984 = vld [vmem:[%s2983] ss:$8 sm:$0xf]
      %v2985 = vld [vmem:[%s2983] ss:$8 sm:$0xf0]
      %v2986 = vor.u32 %v2984, %v2985
      %2987 = vxpose.xlu0.b32.start [1/16] %v2926, 128
      %2988 = vxpose.xlu0.b32.cont [2/16] %v2930, 128
      %2989 = vxpose.xlu0.b32.cont [3/16] %v2934, 128
      %2990 = vxpose.xlu0.b32.cont [4/16] %v2938, 128
      %2991 = vxpose.xlu0.b32.cont [5/16] %v2942, 128
      %2992 = vxpose.xlu0.b32.cont [6/16] %v2946, 128
      %2993 = vxpose.xlu0.b32.cont [7/16] %v2950, 128
      %2994 = vxpose.xlu0.b32.cont [8/16] %v2954, 128
      %2995 = vxpose.xlu0.b32.cont [9/16] %v2958, 128
      %2996 = vxpose.xlu0.b32.cont [10/16] %v2962, 128
      %2997 = vxpose.xlu0.b32.cont [11/16] %v2966, 128
      %2998 = vxpose.xlu0.b32.cont [12/16] %v2970, 128
      %2999 = vxpose.xlu0.b32.cont [13/16] %v2974, 128
      %3000 = vxpose.xlu0.b32.cont [14/16] %v2978, 128
      %3001 = vxpose.xlu0.b32.cont [15/16] %v2982, 128
      %3002 = vxpose.xlu0.b32.end [16/16] %v2986, 128
      %v3003 = vpop.trf.xlu0
      %v3004 = vpop.trf.xlu0
      %v3005 = vpop.trf.xlu0
      %v3006 = vpop.trf.xlu0
      %v3007 = vpop.trf.xlu0
      %v3008 = vpop.trf.xlu0
      %v3009 = vpop.trf.xlu0
      %v3010 = vpop.trf.xlu0
      %v3011 = vpop.trf.xlu0
      %v3012 = vpop.trf.xlu0
      %v3013 = vpop.trf.xlu0
      %v3014 = vpop.trf.xlu0
      %v3015 = vpop.trf.xlu0
      %v3016 = vpop.trf.xlu0
      %v3017 = vpop.trf.xlu0
      %v3018 = vpop.trf.xlu0
      %3019 = vst [vmem:[%s2115 + $0x8] sm:$0xff] %v3003
      %3020 = vst [vmem:[%s2115 + $0x18] sm:$0xff] %v3004
      %3021 = vst [vmem:[%s2115 + $0x28] sm:$0xff] %v3005
      %3022 = vst [vmem:[%s2115 + $0x38] sm:$0xff] %v3006
      %3023 = vst [vmem:[%s2115 + $0x48] sm:$0xff] %v3007
      %3024 = vst [vmem:[%s2115 + $0x58] sm:$0xff] %v3008
      %3025 = vst [vmem:[%s2115 + $0x68] sm:$0xff] %v3009
      %3026 = vst [vmem:[%s2115 + $0x78] sm:$0xff] %v3010
      %3027 = vst [vmem:[%s2115 + $0x88] sm:$0xff] %v3011
      %3028 = vst [vmem:[%s2115 + $0x98] sm:$0xff] %v3012
      %3029 = vst [vmem:[%s2115 + $0xa8] sm:$0xff] %v3013
      %3030 = vst [vmem:[%s2115 + $0xb8] sm:$0xff] %v3014
      %3031 = vst [vmem:[%s2115 + $0xc8] sm:$0xff] %v3015
      %3032 = vst [vmem:[%s2115 + $0xd8] sm:$0xff] %v3016
      %3033 = vst [vmem:[%s2115 + $0xe8] sm:$0xff] %v3017
      %3034 = vst [vmem:[%s2115 + $0xf8] sm:$0xff] %v3018
      %s3035 = scalar_lea.vmem [#allocation2], 1031
      %v3036 = vld [vmem:[%s3035] ss:$8 sm:$0xf]
      %v3037 = vld [vmem:[%s3035] ss:$8 sm:$0xf0]
      %v3038 = vor.u32 %v3036, %v3037
      %s3039 = scalar_lea.vmem [#allocation2], 1095
      %v3040 = vld [vmem:[%s3039] ss:$8 sm:$0xf]
      %v3041 = vld [vmem:[%s3039] ss:$8 sm:$0xf0]
      %v3042 = vor.u32 %v3040, %v3041
      %s3043 = scalar_lea.vmem [#allocation2], 1159
      %v3044 = vld [vmem:[%s3043] ss:$8 sm:$0xf]
      %v3045 = vld [vmem:[%s3043] ss:$8 sm:$0xf0]
      %v3046 = vor.u32 %v3044, %v3045
      %s3047 = scalar_lea.vmem [#allocation2], 1223
      %v3048 = vld [vmem:[%s3047] ss:$8 sm:$0xf]
      %v3049 = vld [vmem:[%s3047] ss:$8 sm:$0xf0]
      %v3050 = vor.u32 %v3048, %v3049
      %s3051 = scalar_lea.vmem [#allocation2], 1287
      %v3052 = vld [vmem:[%s3051] ss:$8 sm:$0xf]
      %v3053 = vld [vmem:[%s3051] ss:$8 sm:$0xf0]
      %v3054 = vor.u32 %v3052, %v3053
      %s3055 = scalar_lea.vmem [#allocation2], 1351
      %v3056 = vld [vmem:[%s3055] ss:$8 sm:$0xf]
      %v3057 = vld [vmem:[%s3055] ss:$8 sm:$0xf0]
      %v3058 = vor.u32 %v3056, %v3057
      %s3059 = scalar_lea.vmem [#allocation2], 1415
      %v3060 = vld [vmem:[%s3059] ss:$8 sm:$0xf]
      %v3061 = vld [vmem:[%s3059] ss:$8 sm:$0xf0]
      %v3062 = vor.u32 %v3060, %v3061
      %s3063 = scalar_lea.vmem [#allocation2], 1479
      %v3064 = vld [vmem:[%s3063] ss:$8 sm:$0xf]
      %v3065 = vld [vmem:[%s3063] ss:$8 sm:$0xf0]
      %v3066 = vor.u32 %v3064, %v3065
      %s3067 = scalar_lea.vmem [#allocation2], 1543
      %v3068 = vld [vmem:[%s3067] ss:$8 sm:$0xf]
      %v3069 = vld [vmem:[%s3067] ss:$8 sm:$0xf0]
      %v3070 = vor.u32 %v3068, %v3069
      %s3071 = scalar_lea.vmem [#allocation2], 1607
      %v3072 = vld [vmem:[%s3071] ss:$8 sm:$0xf]
      %v3073 = vld [vmem:[%s3071] ss:$8 sm:$0xf0]
      %v3074 = vor.u32 %v3072, %v3073
      %s3075 = scalar_lea.vmem [#allocation2], 1671
      %v3076 = vld [vmem:[%s3075] ss:$8 sm:$0xf]
      %v3077 = vld [vmem:[%s3075] ss:$8 sm:$0xf0]
      %v3078 = vor.u32 %v3076, %v3077
      %s3079 = scalar_lea.vmem [#allocation2], 1735
      %v3080 = vld [vmem:[%s3079] ss:$8 sm:$0xf]
      %v3081 = vld [vmem:[%s3079] ss:$8 sm:$0xf0]
      %v3082 = vor.u32 %v3080, %v3081
      %s3083 = scalar_lea.vmem [#allocation2], 1799
      %v3084 = vld [vmem:[%s3083] ss:$8 sm:$0xf]
      %v3085 = vld [vmem:[%s3083] ss:$8 sm:$0xf0]
      %v3086 = vor.u32 %v3084, %v3085
      %s3087 = scalar_lea.vmem [#allocation2], 1863
      %v3088 = vld [vmem:[%s3087] ss:$8 sm:$0xf]
      %v3089 = vld [vmem:[%s3087] ss:$8 sm:$0xf0]
      %v3090 = vor.u32 %v3088, %v3089
      %s3091 = scalar_lea.vmem [#allocation2], 1927
      %v3092 = vld [vmem:[%s3091] ss:$8 sm:$0xf]
      %v3093 = vld [vmem:[%s3091] ss:$8 sm:$0xf0]
      %v3094 = vor.u32 %v3092, %v3093
      %s3095 = scalar_lea.vmem [#allocation2], 1991
      %v3096 = vld [vmem:[%s3095] ss:$8 sm:$0xf]
      %v3097 = vld [vmem:[%s3095] ss:$8 sm:$0xf0]
      %v3098 = vor.u32 %v3096, %v3097
      %3099 = vxpose.xlu0.b32.start [1/16] %v3038, 128
      %3100 = vxpose.xlu0.b32.cont [2/16] %v3042, 128
      %3101 = vxpose.xlu0.b32.cont [3/16] %v3046, 128
      %3102 = vxpose.xlu0.b32.cont [4/16] %v3050, 128
      %3103 = vxpose.xlu0.b32.cont [5/16] %v3054, 128
      %3104 = vxpose.xlu0.b32.cont [6/16] %v3058, 128
      %3105 = vxpose.xlu0.b32.cont [7/16] %v3062, 128
      %3106 = vxpose.xlu0.b32.cont [8/16] %v3066, 128
      %3107 = vxpose.xlu0.b32.cont [9/16] %v3070, 128
      %3108 = vxpose.xlu0.b32.cont [10/16] %v3074, 128
      %3109 = vxpose.xlu0.b32.cont [11/16] %v3078, 128
      %3110 = vxpose.xlu0.b32.cont [12/16] %v3082, 128
      %3111 = vxpose.xlu0.b32.cont [13/16] %v3086, 128
      %3112 = vxpose.xlu0.b32.cont [14/16] %v3090, 128
      %3113 = vxpose.xlu0.b32.cont [15/16] %v3094, 128
      %3114 = vxpose.xlu0.b32.end [16/16] %v3098, 128
      %v3115 = vpop.trf.xlu0
      %v3116 = vpop.trf.xlu0
      %v3117 = vpop.trf.xlu0
      %v3118 = vpop.trf.xlu0
      %v3119 = vpop.trf.xlu0
      %v3120 = vpop.trf.xlu0
      %v3121 = vpop.trf.xlu0
      %v3122 = vpop.trf.xlu0
      %v3123 = vpop.trf.xlu0
      %v3124 = vpop.trf.xlu0
      %v3125 = vpop.trf.xlu0
      %v3126 = vpop.trf.xlu0
      %v3127 = vpop.trf.xlu0
      %v3128 = vpop.trf.xlu0
      %v3129 = vpop.trf.xlu0
      %v3130 = vpop.trf.xlu0
      %3131 = vst [vmem:[%s2234 + $0x8] sm:$0xff] %v3115
      %3132 = vst [vmem:[%s2234 + $0x18] sm:$0xff] %v3116
      %3133 = vst [vmem:[%s2234 + $0x28] sm:$0xff] %v3117
      %3134 = vst [vmem:[%s2234 + $0x38] sm:$0xff] %v3118
      %3135 = vst [vmem:[%s2234 + $0x48] sm:$0xff] %v3119
      %3136 = vst [vmem:[%s2234 + $0x58] sm:$0xff] %v3120
      %3137 = vst [vmem:[%s2234 + $0x68] sm:$0xff] %v3121
      %3138 = vst [vmem:[%s2234 + $0x78] sm:$0xff] %v3122
      %3139 = vst [vmem:[%s2234 + $0x88] sm:$0xff] %v3123
      %3140 = vst [vmem:[%s2234 + $0x98] sm:$0xff] %v3124
      %3141 = vst [vmem:[%s2234 + $0xa8] sm:$0xff] %v3125
      %3142 = vst [vmem:[%s2234 + $0xb8] sm:$0xff] %v3126
      %3143 = vst [vmem:[%s2234 + $0xc8] sm:$0xff] %v3127
      %3144 = vst [vmem:[%s2234 + $0xd8] sm:$0xff] %v3128
      %3145 = vst [vmem:[%s2234 + $0xe8] sm:$0xff] %v3129
      %3146 = vst [vmem:[%s2234 + $0xf8] sm:$0xff] %v3130
    $region14: #{tpu_custom_call.1} parent=1 // loop_footer
      %s28 = sadd.s32 1, %s24
    $region15: #{tpu_custom_call.1} parent=1 // loop_footer_branch
      %23 = sbr.rel target = $region11
    $region16: #{tpu_custom_call.1} parent=1 // loop_exit
      _
    // Predicated region
    $region17: #{tpu_custom_call.1} parent=1 // pred_check
      _
    $region18: #{tpu_custom_call.1} parent=1 // pred_check_branch
      %3148 = sbr.rel (0) target = $region20
    $region19: #{tpu_custom_call.1} parent=1 // pred_region
      %s3150 = ssub.s32 131072, 131072
      %3151 = vsyncadd [#allocation5], %s3150
      %s3152 = sshll.u32 [#allocation6], 4
      %s3153 = int_to_ptr.vmem [resolvable:$true] %s3152
      %3158 = dma.vmem_to_hbm [thread:$0]  %s3153, 131072, %s1, [#allocation5], 256, 256, 16
    $region20: #{tpu_custom_call.1} parent=1 // pred_fallthru
      _
    // Predicated region
    $region21: #{tpu_custom_call.1} parent=1 // pred_check
      _
    $region22: #{tpu_custom_call.1} parent=1 // pred_check_branch
      %3160 = sbr.rel (0) target = $region24
    $region23: #{tpu_custom_call.1} parent=1 // pred_region
      %3161 = dma.done [#allocation5], 131072
    $region24: #{tpu_custom_call.1} parent=1 // pred_fallthru
      _
    %3162 = vsyncpa [#allocation4], 1
    %3163 = vsyncpa [#allocation5], 1

</llo_original>
